<compile_context>
chip_gen: v7x
topology: tpu7x:2x2x1
jax: 0.10.0
libtpu: 0.0.40
codegen_flags: <defaults>
</compile_context>

<pallas_src>
import functools

import jax
import jax.numpy as jnp
from jax.experimental import pallas as pl
from jax.experimental.pallas import tpu as pltpu


# ----------------------------------------------------------------------------- helpers
def _sign(v):
    # HardSign forward value == sign(v); explicit form to keep lowering trivial.
    return jnp.where(v > 0, 1.0, jnp.where(v < 0, -1.0, 0.0)).astype(v.dtype)


def _bn_fold(gamma, beta, mean, var, eps=1e-5):
    k = gamma / jnp.sqrt(var + eps)
    return k, beta - mean * k


def _spatial_chunk(s, c, itemsize=4, target_bytes=2 * 1024 * 1024):
    """Largest chunk of the H*W axis that divides it, is a multiple of 8, and keeps
    one double-buffered x tile around a few MiB."""
    t = max(8, (target_bytes // max(1, c * itemsize)) // 8 * 8)
    if s <= t:
        return s
    while t >= 8 and s % t != 0:
        t -= 8
    return t if (t >= 8 and s % t == 0) else s


def _row_tile(rows, c, itemsize=4, target_bytes=2 * 1024 * 1024):
    t = max(8, (target_bytes // max(1, c * itemsize)) // 8 * 8)
    if rows <= t:
        return rows
    while t >= 8 and rows % t != 0:
        t -= 8
    return t if (t >= 8 and rows % t == 0) else rows


# --------------------------------------------------------------------------- SE kernel
def se_kernel(x_ref, w1_ref, b1_ref, w2_ref, b2_ref, o_ref, acc_ref, *, inv_hw, mode):
    """Squeeze-and-Expand head. x block: (1, chunk, C) — C on lanes.
    Spatial sum is accumulated in f32 scratch; matmuls + activation at the last chunk."""
    k = pl.program_id(1)

    @pl.when(k == 0)
    def _init():
        acc_ref[...] = jnp.zeros_like(acc_ref)

    # Per-chunk f32 sum over the spatial (sublane) axis — no full-block f32 copy.
    acc_ref[...] += jnp.sum(x_ref[...], axis=1, dtype=jnp.float32)  # (1, C)

    @pl.when(k == pl.num_programs(1) - 1)
    def _finalize():
        pooled = acc_ref[...] * inv_hw                                   # (1, C)
        h = jnp.dot(pooled, w1_ref[...], preferred_element_type=jnp.float32)
        h = jnp.maximum(h + b1_ref[...], 0.0)                            # ReLU
        y = jnp.dot(h, w2_ref[...], preferred_element_type=jnp.float32) + b2_ref[...]
        if mode == "sigmoid":
            y = 1.0 / (1.0 + jnp.exp(-y))
        else:  # hard_sigmoid: relu6(y + 3) / 6
            y = jnp.clip(y + 3.0, 0.0, 6.0) * (1.0 / 6.0)
        o_ref[0] = y.astype(o_ref.dtype)


def squeeze_and_expand(x_nsc, w1, b1, w2, b2, *, mode="hard_sigmoid", chunk=None,
                       vmem_limit_bytes=32 * 1024 * 1024):
    """x_nsc: (N, S, C) with C on the lane axis.  w1: (hidden, C, 1, 1), b1: (hidden,),
    w2: (cout, hidden, 1, 1), b2: (cout,).  Returns (N, 1, cout)."""
    N, S, C = x_nsc.shape
    hidden = w1.shape[0]
    cout = w2.shape[0]
    if chunk is None or S % chunk != 0:
        chunk = _spatial_chunk(S, C, x_nsc.dtype.itemsize)

    w1_t = w1.reshape(hidden, C).T.astype(jnp.float32)      # (C, hidden)
    w2_t = w2.reshape(cout, hidden).T.astype(jnp.float32)   # (hidden, cout)
    b1_r = b1.reshape(1, hidden).astype(jnp.float32)
    b2_r = b2.reshape(1, cout).astype(jnp.float32)

    kern = functools.partial(se_kernel, inv_hw=1.0 / S, mode=mode)
    itemsize = x_nsc.dtype.itemsize
    cost = pl.CostEstimate(
        flops=int(2 * N * C * hidden + 2 * N * hidden * cout + N * S * C),
        transcendentals=int(N * cout if mode == "sigmoid" else 0),
        bytes_accessed=int(N * S * C * itemsize
                           + 4 * (C * hidden + hidden * cout + hidden + cout)
                           + 4 * N * cout),
    )
    return pl.pallas_call(
        kern,
        out_shape=jax.ShapeDtypeStruct((N, 1, cout), jnp.float32),
        grid=(N, S // chunk),
        in_specs=[
            pl.BlockSpec((1, chunk, C), lambda n, k: (n, k, 0)),       # x tiles
            pl.BlockSpec((C, hidden), lambda n, k: (0, 0)),            # resident weights
            pl.BlockSpec((1, hidden), lambda n, k: (0, 0)),
            pl.BlockSpec((hidden, cout), lambda n, k: (0, 0)),
            pl.BlockSpec((1, cout), lambda n, k: (0, 0)),
        ],
        out_specs=pl.BlockSpec((1, 1, cout), lambda n, k: (n, 0, 0)),
        scratch_shapes=[pltpu.VMEM((1, C), jnp.float32)],
        compiler_params=pltpu.CompilerParams(
            dimension_semantics=("parallel", "arbitrary"),
            vmem_limit_bytes=vmem_limit_bytes,
        ),
        cost_estimate=cost,
    )(x_nsc, w1_t, b1_r, w2_t, b2_r)


# ------------------------------------------------------------------ elementwise kernels
def bias_sign_kernel(x_ref, b_ref, o_ref):
    o_ref[...] = _sign(x_ref[...] + b_ref[...]).astype(o_ref.dtype)


def bias_sign(x_rows, bias):
    rows, C = x_rows.shape
    t = _row_tile(rows, C)
    return pl.pallas_call(
        bias_sign_kernel,
        out_shape=jax.ShapeDtypeStruct((rows, C), jnp.float32),
        grid=(rows // t,),
        in_specs=[pl.BlockSpec((t, C), lambda i: (i, 0)),
                  pl.BlockSpec((1, C), lambda i: (0, 0))],
        out_specs=pl.BlockSpec((t, C), lambda i: (i, 0)),
        compiler_params=pltpu.CompilerParams(dimension_semantics=("parallel",)),
    )(x_rows.astype(jnp.float32), bias.reshape(1, C).astype(jnp.float32))


def bn_prelu_mix_res_kernel(y_ref, x_ref, k_ref, c_ref, a2_ref, s_ref, ar_ref,
                            xa_ref, mix_ref, res_ref):
    y = y_ref[...]
    x = x_ref[...]
    z = y * k_ref[...] + c_ref[...]                    # folded eval BatchNorm
    xa = jnp.where(z >= 0.0, z, z * a2_ref[...])       # PReLU (per-channel)
    s = s_ref[...]
    mix = s * x + (1.0 - s) * xa                       # scale-mix with the block input
    res = jnp.where(x >= 0.0, x, x * ar_ref[...])      # residual path (PReLU or id)
    xa_ref[...] = xa.astype(xa_ref.dtype)
    mix_ref[...] = mix.astype(mix_ref.dtype)
    res_ref[...] = res.astype(res_ref.dtype)


def bn_prelu_mix_res(y_rows, x_rows, bn_k, bn_c, prelu_a, scale_s, res_a):
    rows, C = y_rows.shape
    t = _row_tile(rows, C)
    row_spec = pl.BlockSpec((t, C), lambda i: (i, 0))
    chan_spec = pl.BlockSpec((1, C), lambda i: (0, 0))
    ch = lambda v: v.reshape(1, C).astype(jnp.float32)
    out_sh = jax.ShapeDtypeStruct((rows, C), jnp.float32)
    return pl.pallas_call(
        bn_prelu_mix_res_kernel,
        out_shape=(out_sh, out_sh, out_sh),
        grid=(rows // t,),
        in_specs=[row_spec, row_spec, chan_spec, chan_spec, chan_spec, chan_spec,
                  chan_spec],
        out_specs=(row_spec, row_spec, row_spec),
        compiler_params=pltpu.CompilerParams(dimension_semantics=("parallel",)),
    )(y_rows.astype(jnp.float32), x_rows.astype(jnp.float32),
      ch(bn_k), ch(bn_c), ch(prelu_a), ch(scale_s), ch(res_a))


def tail_kernel(xa_ref, res_ref, att_ref, k_ref, c_ref, o_ref, *, mul_residual):
    xa = xa_ref[...]                     # (1, chunk, C)
    res = res_ref[...]
    t = att_ref[...] * xa                # (1, 1, C) broadcast over the chunk
    if mul_residual:                     # Attention tail multiplies by residual pre-BN
        t = t * res
    t = t * k_ref[...] + c_ref[...]      # folded BN2
    o_ref[...] = (t + res).astype(o_ref.dtype)


def block_tail(xa_nsc, res_nsc, att_n1c, bn_k, bn_c, *, mul_residual, chunk):
    N, S, C = xa_nsc.shape
    x_spec = pl.BlockSpec((1, chunk, C), lambda n, k: (n, k, 0))
    att_spec = pl.BlockSpec((1, 1, C), lambda n, k: (n, 0, 0))
    chan_spec = pl.BlockSpec((1, 1, C), lambda n, k: (0, 0, 0))
    kern = functools.partial(tail_kernel, mul_residual=mul_residual)
    return pl.pallas_call(
        kern,
        out_shape=jax.ShapeDtypeStruct((N, S, C), jnp.float32),
        grid=(N, S // chunk),
        in_specs=[x_spec, x_spec, att_spec, chan_spec, chan_spec],
        out_specs=x_spec,
        compiler_params=pltpu.CompilerParams(
            dimension_semantics=("parallel", "arbitrary")),
    )(xa_nsc, res_nsc, att_n1c,
      bn_k.reshape(1, 1, C).astype(jnp.float32),
      bn_c.reshape(1, 1, C).astype(jnp.float32))


# ----------------------------------------------------------------------- binary convs
def conv3x3_kernel(xp_ref, w_ref, o_ref, *, W):
    """xp_ref: full padded (N, H+2, W+2, C) resident in VMEM; one output row per step."""
    n = pl.program_id(0)
    h = pl.program_id(1)
    co = o_ref.shape[-1]
    acc = jnp.zeros((W, co), jnp.float32)
    for dy in range(3):
        for dx in range(3):
            tap = xp_ref[n, h + dy, pl.ds(dx, W), :]                 # (W, C)
            wk = jnp.clip(w_ref[dy * 3 + dx], -1.0, 1.0)             # (C, Co)
            acc = acc + jnp.dot(tap, wk, preferred_element_type=jnp.float32)
    o_ref[0, 0] = acc.astype(o_ref.dtype)


def binary_conv3x3(xp, w):
    """xp: (N, H+2, W+2, C) zero-padded sign activations; w: (Co, C, 3, 3) torch layout."""
    N, Hp, Wp, C = xp.shape
    H, W = Hp - 2, Wp - 2
    Co = w.shape[0]
    w9 = jnp.transpose(w, (2, 3, 1, 0)).reshape(9, C, Co).astype(jnp.float32)
    kern = functools.partial(conv3x3_kernel, W=W)
    return pl.pallas_call(
        kern,
        out_shape=jax.ShapeDtypeStruct((N, H, W, Co), jnp.float32),
        grid=(N, H),
        in_specs=[pl.BlockSpec((N, Hp, Wp, C), lambda n, h: (0, 0, 0, 0)),  # resident
                  pl.BlockSpec((9, C, Co), lambda n, h: (0, 0, 0))],        # resident
        out_specs=pl.BlockSpec((1, 1, W, Co), lambda n, h: (n, h, 0, 0)),
        compiler_params=pltpu.CompilerParams(
            dimension_semantics=("parallel", "arbitrary")),
    )(xp.astype(jnp.float32), w9)


def sign_conv1x1_kernel(x_ref, b_ref, w_ref, o_ref):
    s = _sign(x_ref[...] + b_ref[...])
    w = jnp.clip(w_ref[...], -1.0, 1.0)
    o_ref[...] = jnp.dot(s, w, preferred_element_type=jnp.float32).astype(o_ref.dtype)


def binary_conv1x1(x_rows, bias, w):
    rows, C = x_rows.shape
    Co = w.shape[0]
    t = _row_tile(rows, C)
    w_t = w.reshape(Co, C).T.astype(jnp.float32)
    return pl.pallas_call(
        sign_conv1x1_kernel,
        out_shape=jax.ShapeDtypeStruct((rows, Co), jnp.float32),
        grid=(rows // t,),
        in_specs=[pl.BlockSpec((t, C), lambda i: (i, 0)),
                  pl.BlockSpec((1, C), lambda i: (0, 0)),
                  pl.BlockSpec((C, Co), lambda i: (0, 0))],
        out_specs=pl.BlockSpec((t, Co), lambda i: (i, 0)),
        compiler_params=pltpu.CompilerParams(dimension_semantics=("parallel",)),
    )(x_rows.astype(jnp.float32), bias.reshape(1, C).astype(jnp.float32), w_t)


# ------------------------------------------------------------------------ block wrappers
def attention_block(x_nhwc, p, *, se_chunk=None):
    N, H, W, C = x_nhwc.shape
    S = H * W
    chunk = se_chunk if (se_chunk and S % se_chunk == 0) else _spatial_chunk(S, C)
    x_rows = x_nhwc.reshape(N * S, C)

    xb = bias_sign(x_rows, p["move_bias"]).reshape(N, H, W, C)
    xp = jnp.pad(xb, ((0, 0), (1, 1), (1, 1), (0, 0)))
    y = binary_conv3x3(xp, p["conv_w"])                                   # (N, H, W, C)

    k1, c1 = _bn_fold(*p["bn1"])
    xa, mix, res = bn_prelu_mix_res(y.reshape(N * S, C), x_rows, k1, c1,
                                    p["prelu2"], p["scale"], p["prelu1"])
    att = squeeze_and_expand(mix.reshape(N, S, C), *p["se"],
                             mode="sigmoid", chunk=chunk)

    k2, c2 = _bn_fold(*p["bn2"])
    out = block_tail(xa.reshape(N, S, C), res.reshape(N, S, C), att, k2, c2,
                     mul_residual=True, chunk=chunk)
    return out.reshape(N, H, W, C)


def ffn_block(x_nhwc, p, *, se_chunk=None):
    N, H, W, C = x_nhwc.shape
    S = H * W
    chunk = se_chunk if (se_chunk and S % se_chunk == 0) else _spatial_chunk(S, C)
    x_rows = x_nhwc.reshape(N * S, C)

    y_rows = binary_conv1x1(x_rows, p["move_bias"], p["conv_w"])

    k1, c1 = _bn_fold(*p["bn1"])
    ones = jnp.ones((C,), jnp.float32)               # PReLU slope 1 -> residual = input
    xa, mix, res = bn_prelu_mix_res(y_rows, x_rows, k1, c1,
                                    p["prelu2"], p["scale"], ones)
    att = squeeze_and_expand(mix.reshape(N, S, C), *p["se"],
                             mode="sigmoid", chunk=chunk)

    k2, c2 = _bn_fold(*p["bn2"])
    out = block_tail(xa.reshape(N, S, C), res.reshape(N, S, C), att, k2, c2,
                     mul_residual=False, chunk=chunk)
    return out.reshape(N, H, W, C)


def basic_block_forward(x_nchw, params, *, se_chunk=None):
    """BasicBlock forward (eval). x: (N, C, H, W) NCHW -> (N, C, H, W)."""
    x = jnp.transpose(x_nchw, (0, 2, 3, 1))          # NCHW -> NHWC (C on the lane axis)
    x = attention_block(x, params["attn"], se_chunk=se_chunk)
    x = ffn_block(x, params["ffn"], se_chunk=se_chunk)
    return jnp.transpose(x, (0, 3, 1, 2))


# --------------------------------------------------------------------- plain-JAX reference
def _ref_prelu(x, a):
    return jnp.where(x >= 0, x, a[None, :, None, None] * x)


def _ref_bn(x, gamma, beta, mean, var, eps=1e-5):
    inv = gamma / jnp.sqrt(var + eps)
    return (x - mean[None, :, None, None]) * inv[None, :, None, None] \
        + beta[None, :, None, None]


def _ref_se(x, w1, b1, w2, b2, mode):
    hidden, cout = w1.shape[0], w2.shape[0]
    pooled = jnp.mean(x, axis=(2, 3))
    h = jnp.maximum(pooled @ w1.reshape(hidden, -1).T + b1, 0.0)
    y = h @ w2.reshape(cout, hidden).T + b2
    y = jax.nn.sigmoid(y) if mode == "sigmoid" else jnp.clip(y + 3.0, 0.0, 6.0) / 6.0
    return y[:, :, None, None]


def _ref_binary_conv(x, w, pad):
    wb = jnp.clip(w, -1.0, 1.0)
    return jax.lax.conv_general_dilated(
        x, wb, (1, 1), ((pad, pad), (pad, pad)),
        dimension_numbers=("NCHW", "OIHW", "NCHW"))


def _ref_attention(x, p):
    residual = _ref_prelu(x, p["prelu1"])
    xb = jnp.sign(x + p["move_bias"][None, :, None, None])
    y = _ref_binary_conv(xb, p["conv_w"], pad=1)
    y = _ref_prelu(_ref_bn(y, *p["bn1"]), p["prelu2"])
    s = p["scale"][None, :, None, None]
    mix = s * x + y * (1.0 - s)
    y = _ref_se(mix, *p["se"], mode="sigmoid") * y
    y = y * residual
    return _ref_bn(y, *p["bn2"]) + residual


def _ref_ffn(x, p):
    residual = x
    xb = jnp.sign(x + p["move_bias"][None, :, None, None])
    y = _ref_binary_conv(xb, p["conv_w"], pad=0)
    y = _ref_prelu(_ref_bn(y, *p["bn1"]), p["prelu2"])
    s = p["scale"][None, :, None, None]
    mix = s * x + (1.0 - s) * y
    y = _ref_se(mix, *p["se"], mode="sigmoid") * y
    return _ref_bn(y, *p["bn2"]) + residual


def basic_block_reference(x, params):
    return _ref_ffn(_ref_attention(x, params["attn"]), params["ffn"])


# ------------------------------------------------------------------------------- params
def make_params(key, C, hidden):
    ks = iter(jax.random.split(key, 64))

    def nrm(shape, scale=0.1):
        return scale * jax.random.normal(next(ks), shape, dtype=jnp.float32)

    def uni(shape, lo, hi):
        return jax.random.uniform(next(ks), shape, dtype=jnp.float32,
                                  minval=lo, maxval=hi)

    def bn():
        return (1.0 + nrm((C,)), nrm((C,)), nrm((C,)), uni((C,), 0.5, 1.5))

    def se():
        return (nrm((hidden, C, 1, 1)), nrm((hidden,)),
                nrm((C, hidden, 1, 1)), nrm((C,)))

    attn = dict(move_bias=nrm((C,)), prelu1=0.25 + nrm((C,), 0.05),
                conv_w=nrm((C, C, 3, 3), 0.05), bn1=bn(),
                prelu2=0.25 + nrm((C,), 0.05), scale=uni((C,), 0.2, 0.8),
                se=se(), bn2=bn())
    ffn = dict(move_bias=nrm((C,)), conv_w=nrm((C, C, 1, 1), 0.05), bn1=bn(),
               prelu2=0.25 + nrm((C,), 0.05), scale=uni((C,), 0.2, 0.8),
               se=se(), bn2=bn())
    return dict(attn=attn, ffn=ffn)


if __name__ == "__main__":
    batch, channels, ratio = 2, 64, 8
    H = W = 16
    hidden = channels // ratio  # 8

    key = jax.random.PRNGKey(0)
    kx, kp = jax.random.split(key)
    x = jax.random.normal(kx, (batch, channels, H, W), dtype=jnp.float32)
    params = make_params(kp, channels, hidden)

    # se_chunk=128 forces >=2 spatial chunks so the gridded SE accumulator is exercised.
    fwd = jax.jit(functools.partial(basic_block_forward, se_chunk=128))
    out = jax.block_until_ready(fwd(x, params))

    with jax.default_matmul_precision("highest"):
        ref = basic_block_reference(x, params)

    assert out.shape == (batch, channels, H, W), out.shape
    assert jnp.allclose(out, ref, atol=1e-2, rtol=1e-3), \
        f"mismatch vs reference: max abs err {float(jnp.max(jnp.abs(out - ref)))}"

    print("KERNEL_OK")
</pallas_src>

<mosaic_0001>
module attributes {stable_mosaic.version = 11 : i64} {
  func.func @conv3x3_kernel(%arg0: i32, %arg1: i32, %arg2: memref<2x18x18x64xf32, #tpu.memory_space<vmem>>, %arg3: memref<9x64x64xf32, #tpu.memory_space<vmem>>, %arg4: memref<1x1x16x64xf32, #tpu.memory_space<vmem>>) attributes {dimension_semantics = [#tpu.dimension_semantics<parallel>, #tpu.dimension_semantics<arbitrary>], iteration_bounds = array<i64: 2, 16>, scalar_prefetch = 0 : i64, scratch_operands = 0 : i64, tpu.core_type = #tpu.core_type<tc>, window_params = [{pipeline_mode = #tpu.pipeline_mode<synchronous>, transform_indices = @transform_0, window_bounds = array<i64: 2, 18, 18, 64>}, {pipeline_mode = #tpu.pipeline_mode<synchronous>, transform_indices = @transform_1, window_bounds = array<i64: 9, 64, 64>}, {transform_indices = @transform_2, window_bounds = array<i64: 1, 1, 16, 64>}]} {
    %cst = arith.constant 0.000000e+00 : f32
    %0 = vector.broadcast %cst : f32 to vector<16x64xf32>
    %c0_i32 = arith.constant 0 : i32
    %1 = arith.addi %arg1, %c0_i32 : i32
    %2 = arith.index_cast %arg0 : i32 to index
    %3 = arith.index_cast %1 : i32 to index
    %c0 = arith.constant 0 : index
    %c0_0 = arith.constant 0 : index
    %4 = vector.load %arg2[%2, %3, %c0, %c0_0] : memref<2x18x18x64xf32, #tpu.memory_space<vmem>>, vector<1x1x16x64xf32>
    %5 = vector.shape_cast %4 : vector<1x1x16x64xf32> to vector<16x64xf32>
    %c0_1 = arith.constant 0 : index
    %c0_2 = arith.constant 0 : index
    %c0_3 = arith.constant 0 : index
    %6 = vector.load %arg3[%c0_1, %c0_2, %c0_3] : memref<9x64x64xf32, #tpu.memory_space<vmem>>, vector<1x64x64xf32>
    %7 = vector.shape_cast %6 : vector<1x64x64xf32> to vector<64x64xf32>
    %cst_4 = arith.constant -1.000000e+00 : f32
    %cst_5 = arith.constant 1.000000e+00 : f32
    %8 = vector.broadcast %cst_4 : f32 to vector<64x64xf32>
    %9 = arith.maximumf %8, %7 : vector<64x64xf32>
    %10 = vector.broadcast %cst_5 : f32 to vector<64x64xf32>
    %11 = arith.minimumf %10, %9 : vector<64x64xf32>
    %cst_6 = arith.constant dense<0.000000e+00> : vector<16x64xf32>
    %12 = tpu.matmul %5, %11, %cst_6 {dimension_numbers = #tpu.dot_dimension_numbers<[1], [0], [0], [1], [0, 0, 1, 1], [], []>} : vector<16x64xf32>, vector<64x64xf32>, vector<16x64xf32> -> vector<16x64xf32>
    %13 = arith.addf %0, %12 : vector<16x64xf32>
    %c0_i32_7 = arith.constant 0 : i32
    %14 = arith.addi %arg1, %c0_i32_7 : i32
    %15 = arith.index_cast %arg0 : i32 to index
    %16 = arith.index_cast %14 : i32 to index
    %c1 = arith.constant 1 : index
    %c0_8 = arith.constant 0 : index
    %17 = vector.load %arg2[%15, %16, %c1, %c0_8] : memref<2x18x18x64xf32, #tpu.memory_space<vmem>>, vector<1x1x16x64xf32>
    %18 = vector.shape_cast %17 : vector<1x1x16x64xf32> to vector<16x64xf32>
    %c1_9 = arith.constant 1 : index
    %c0_10 = arith.constant 0 : index
    %c0_11 = arith.constant 0 : index
    %19 = vector.load %arg3[%c1_9, %c0_10, %c0_11] : memref<9x64x64xf32, #tpu.memory_space<vmem>>, vector<1x64x64xf32>
    %20 = vector.shape_cast %19 : vector<1x64x64xf32> to vector<64x64xf32>
    %cst_12 = arith.constant -1.000000e+00 : f32
    %cst_13 = arith.constant 1.000000e+00 : f32
    %21 = vector.broadcast %cst_12 : f32 to vector<64x64xf32>
    %22 = arith.maximumf %21, %20 : vector<64x64xf32>
    %23 = vector.broadcast %cst_13 : f32 to vector<64x64xf32>
    %24 = arith.minimumf %23, %22 : vector<64x64xf32>
    %cst_14 = arith.constant dense<0.000000e+00> : vector<16x64xf32>
    %25 = tpu.matmul %18, %24, %cst_14 {dimension_numbers = #tpu.dot_dimension_numbers<[1], [0], [0], [1], [0, 0, 1, 1], [], []>} : vector<16x64xf32>, vector<64x64xf32>, vector<16x64xf32> -> vector<16x64xf32>
    %26 = arith.addf %13, %25 : vector<16x64xf32>
    %c0_i32_15 = arith.constant 0 : i32
    %27 = arith.addi %arg1, %c0_i32_15 : i32
    %28 = arith.index_cast %arg0 : i32 to index
    %29 = arith.index_cast %27 : i32 to index
    %c2 = arith.constant 2 : index
    %c0_16 = arith.constant 0 : index
    %30 = vector.load %arg2[%28, %29, %c2, %c0_16] : memref<2x18x18x64xf32, #tpu.memory_space<vmem>>, vector<1x1x16x64xf32>
    %31 = vector.shape_cast %30 : vector<1x1x16x64xf32> to vector<16x64xf32>
    %c2_17 = arith.constant 2 : index
    %c0_18 = arith.constant 0 : index
    %c0_19 = arith.constant 0 : index
    %32 = vector.load %arg3[%c2_17, %c0_18, %c0_19] : memref<9x64x64xf32, #tpu.memory_space<vmem>>, vector<1x64x64xf32>
    %33 = vector.shape_cast %32 : vector<1x64x64xf32> to vector<64x64xf32>
    %cst_20 = arith.constant -1.000000e+00 : f32
    %cst_21 = arith.constant 1.000000e+00 : f32
    %34 = vector.broadcast %cst_20 : f32 to vector<64x64xf32>
    %35 = arith.maximumf %34, %33 : vector<64x64xf32>
    %36 = vector.broadcast %cst_21 : f32 to vector<64x64xf32>
    %37 = arith.minimumf %36, %35 : vector<64x64xf32>
    %cst_22 = arith.constant dense<0.000000e+00> : vector<16x64xf32>
    %38 = tpu.matmul %31, %37, %cst_22 {dimension_numbers = #tpu.dot_dimension_numbers<[1], [0], [0], [1], [0, 0, 1, 1], [], []>} : vector<16x64xf32>, vector<64x64xf32>, vector<16x64xf32> -> vector<16x64xf32>
    %39 = arith.addf %26, %38 : vector<16x64xf32>
    %c1_i32 = arith.constant 1 : i32
    %40 = arith.addi %arg1, %c1_i32 : i32
    %41 = arith.index_cast %arg0 : i32 to index
    %42 = arith.index_cast %40 : i32 to index
    %c0_23 = arith.constant 0 : index
    %c0_24 = arith.constant 0 : index
    %43 = vector.load %arg2[%41, %42, %c0_23, %c0_24] : memref<2x18x18x64xf32, #tpu.memory_space<vmem>>, vector<1x1x16x64xf32>
    %44 = vector.shape_cast %43 : vector<1x1x16x64xf32> to vector<16x64xf32>
    %c3 = arith.constant 3 : index
    %c0_25 = arith.constant 0 : index
    %c0_26 = arith.constant 0 : index
    %45 = vector.load %arg3[%c3, %c0_25, %c0_26] : memref<9x64x64xf32, #tpu.memory_space<vmem>>, vector<1x64x64xf32>
    %46 = vector.shape_cast %45 : vector<1x64x64xf32> to vector<64x64xf32>
    %cst_27 = arith.constant -1.000000e+00 : f32
    %cst_28 = arith.constant 1.000000e+00 : f32
    %47 = vector.broadcast %cst_27 : f32 to vector<64x64xf32>
    %48 = arith.maximumf %47, %46 : vector<64x64xf32>
    %49 = vector.broadcast %cst_28 : f32 to vector<64x64xf32>
    %50 = arith.minimumf %49, %48 : vector<64x64xf32>
    %cst_29 = arith.constant dense<0.000000e+00> : vector<16x64xf32>
    %51 = tpu.matmul %44, %50, %cst_29 {dimension_numbers = #tpu.dot_dimension_numbers<[1], [0], [0], [1], [0, 0, 1, 1], [], []>} : vector<16x64xf32>, vector<64x64xf32>, vector<16x64xf32> -> vector<16x64xf32>
    %52 = arith.addf %39, %51 : vector<16x64xf32>
    %c1_i32_30 = arith.constant 1 : i32
    %53 = arith.addi %arg1, %c1_i32_30 : i32
    %54 = arith.index_cast %arg0 : i32 to index
    %55 = arith.index_cast %53 : i32 to index
    %c1_31 = arith.constant 1 : index
    %c0_32 = arith.constant 0 : index
    %56 = vector.load %arg2[%54, %55, %c1_31, %c0_32] : memref<2x18x18x64xf32, #tpu.memory_space<vmem>>, vector<1x1x16x64xf32>
    %57 = vector.shape_cast %56 : vector<1x1x16x64xf32> to vector<16x64xf32>
    %c4 = arith.constant 4 : index
    %c0_33 = arith.constant 0 : index
    %c0_34 = arith.constant 0 : index
    %58 = vector.load %arg3[%c4, %c0_33, %c0_34] : memref<9x64x64xf32, #tpu.memory_space<vmem>>, vector<1x64x64xf32>
    %59 = vector.shape_cast %58 : vector<1x64x64xf32> to vector<64x64xf32>
    %cst_35 = arith.constant -1.000000e+00 : f32
    %cst_36 = arith.constant 1.000000e+00 : f32
    %60 = vector.broadcast %cst_35 : f32 to vector<64x64xf32>
    %61 = arith.maximumf %60, %59 : vector<64x64xf32>
    %62 = vector.broadcast %cst_36 : f32 to vector<64x64xf32>
    %63 = arith.minimumf %62, %61 : vector<64x64xf32>
    %cst_37 = arith.constant dense<0.000000e+00> : vector<16x64xf32>
    %64 = tpu.matmul %57, %63, %cst_37 {dimension_numbers = #tpu.dot_dimension_numbers<[1], [0], [0], [1], [0, 0, 1, 1], [], []>} : vector<16x64xf32>, vector<64x64xf32>, vector<16x64xf32> -> vector<16x64xf32>
    %65 = arith.addf %52, %64 : vector<16x64xf32>
    %c1_i32_38 = arith.constant 1 : i32
    %66 = arith.addi %arg1, %c1_i32_38 : i32
    %67 = arith.index_cast %arg0 : i32 to index
    %68 = arith.index_cast %66 : i32 to index
    %c2_39 = arith.constant 2 : index
    %c0_40 = arith.constant 0 : index
    %69 = vector.load %arg2[%67, %68, %c2_39, %c0_40] : memref<2x18x18x64xf32, #tpu.memory_space<vmem>>, vector<1x1x16x64xf32>
    %70 = vector.shape_cast %69 : vector<1x1x16x64xf32> to vector<16x64xf32>
    %c5 = arith.constant 5 : index
    %c0_41 = arith.constant 0 : index
    %c0_42 = arith.constant 0 : index
    %71 = vector.load %arg3[%c5, %c0_41, %c0_42] : memref<9x64x64xf32, #tpu.memory_space<vmem>>, vector<1x64x64xf32>
    %72 = vector.shape_cast %71 : vector<1x64x64xf32> to vector<64x64xf32>
    %cst_43 = arith.constant -1.000000e+00 : f32
    %cst_44 = arith.constant 1.000000e+00 : f32
    %73 = vector.broadcast %cst_43 : f32 to vector<64x64xf32>
    %74 = arith.maximumf %73, %72 : vector<64x64xf32>
    %75 = vector.broadcast %cst_44 : f32 to vector<64x64xf32>
    %76 = arith.minimumf %75, %74 : vector<64x64xf32>
    %cst_45 = arith.constant dense<0.000000e+00> : vector<16x64xf32>
    %77 = tpu.matmul %70, %76, %cst_45 {dimension_numbers = #tpu.dot_dimension_numbers<[1], [0], [0], [1], [0, 0, 1, 1], [], []>} : vector<16x64xf32>, vector<64x64xf32>, vector<16x64xf32> -> vector<16x64xf32>
    %78 = arith.addf %65, %77 : vector<16x64xf32>
    %c2_i32 = arith.constant 2 : i32
    %79 = arith.addi %arg1, %c2_i32 : i32
    %80 = arith.index_cast %arg0 : i32 to index
    %81 = arith.index_cast %79 : i32 to index
    %c0_46 = arith.constant 0 : index
    %c0_47 = arith.constant 0 : index
    %82 = vector.load %arg2[%80, %81, %c0_46, %c0_47] : memref<2x18x18x64xf32, #tpu.memory_space<vmem>>, vector<1x1x16x64xf32>
    %83 = vector.shape_cast %82 : vector<1x1x16x64xf32> to vector<16x64xf32>
    %c6 = arith.constant 6 : index
    %c0_48 = arith.constant 0 : index
    %c0_49 = arith.constant 0 : index
    %84 = vector.load %arg3[%c6, %c0_48, %c0_49] : memref<9x64x64xf32, #tpu.memory_space<vmem>>, vector<1x64x64xf32>
    %85 = vector.shape_cast %84 : vector<1x64x64xf32> to vector<64x64xf32>
    %cst_50 = arith.constant -1.000000e+00 : f32
    %cst_51 = arith.constant 1.000000e+00 : f32
    %86 = vector.broadcast %cst_50 : f32 to vector<64x64xf32>
    %87 = arith.maximumf %86, %85 : vector<64x64xf32>
    %88 = vector.broadcast %cst_51 : f32 to vector<64x64xf32>
    %89 = arith.minimumf %88, %87 : vector<64x64xf32>
    %cst_52 = arith.constant dense<0.000000e+00> : vector<16x64xf32>
    %90 = tpu.matmul %83, %89, %cst_52 {dimension_numbers = #tpu.dot_dimension_numbers<[1], [0], [0], [1], [0, 0, 1, 1], [], []>} : vector<16x64xf32>, vector<64x64xf32>, vector<16x64xf32> -> vector<16x64xf32>
    %91 = arith.addf %78, %90 : vector<16x64xf32>
    %c2_i32_53 = arith.constant 2 : i32
    %92 = arith.addi %arg1, %c2_i32_53 : i32
    %93 = arith.index_cast %arg0 : i32 to index
    %94 = arith.index_cast %92 : i32 to index
    %c1_54 = arith.constant 1 : index
    %c0_55 = arith.constant 0 : index
    %95 = vector.load %arg2[%93, %94, %c1_54, %c0_55] : memref<2x18x18x64xf32, #tpu.memory_space<vmem>>, vector<1x1x16x64xf32>
    %96 = vector.shape_cast %95 : vector<1x1x16x64xf32> to vector<16x64xf32>
    %c7 = arith.constant 7 : index
    %c0_56 = arith.constant 0 : index
    %c0_57 = arith.constant 0 : index
    %97 = vector.load %arg3[%c7, %c0_56, %c0_57] : memref<9x64x64xf32, #tpu.memory_space<vmem>>, vector<1x64x64xf32>
    %98 = vector.shape_cast %97 : vector<1x64x64xf32> to vector<64x64xf32>
    %cst_58 = arith.constant -1.000000e+00 : f32
    %cst_59 = arith.constant 1.000000e+00 : f32
    %99 = vector.broadcast %cst_58 : f32 to vector<64x64xf32>
    %100 = arith.maximumf %99, %98 : vector<64x64xf32>
    %101 = vector.broadcast %cst_59 : f32 to vector<64x64xf32>
    %102 = arith.minimumf %101, %100 : vector<64x64xf32>
    %cst_60 = arith.constant dense<0.000000e+00> : vector<16x64xf32>
    %103 = tpu.matmul %96, %102, %cst_60 {dimension_numbers = #tpu.dot_dimension_numbers<[1], [0], [0], [1], [0, 0, 1, 1], [], []>} : vector<16x64xf32>, vector<64x64xf32>, vector<16x64xf32> -> vector<16x64xf32>
    %104 = arith.addf %91, %103 : vector<16x64xf32>
    %c2_i32_61 = arith.constant 2 : i32
    %105 = arith.addi %arg1, %c2_i32_61 : i32
    %106 = arith.index_cast %arg0 : i32 to index
    %107 = arith.index_cast %105 : i32 to index
    %c2_62 = arith.constant 2 : index
    %c0_63 = arith.constant 0 : index
    %108 = vector.load %arg2[%106, %107, %c2_62, %c0_63] : memref<2x18x18x64xf32, #tpu.memory_space<vmem>>, vector<1x1x16x64xf32>
    %109 = vector.shape_cast %108 : vector<1x1x16x64xf32> to vector<16x64xf32>
    %c8 = arith.constant 8 : index
    %c0_64 = arith.constant 0 : index
    %c0_65 = arith.constant 0 : index
    %110 = vector.load %arg3[%c8, %c0_64, %c0_65] : memref<9x64x64xf32, #tpu.memory_space<vmem>>, vector<1x64x64xf32>
    %111 = vector.shape_cast %110 : vector<1x64x64xf32> to vector<64x64xf32>
    %cst_66 = arith.constant -1.000000e+00 : f32
    %cst_67 = arith.constant 1.000000e+00 : f32
    %112 = vector.broadcast %cst_66 : f32 to vector<64x64xf32>
    %113 = arith.maximumf %112, %111 : vector<64x64xf32>
    %114 = vector.broadcast %cst_67 : f32 to vector<64x64xf32>
    %115 = arith.minimumf %114, %113 : vector<64x64xf32>
    %cst_68 = arith.constant dense<0.000000e+00> : vector<16x64xf32>
    %116 = tpu.matmul %109, %115, %cst_68 {dimension_numbers = #tpu.dot_dimension_numbers<[1], [0], [0], [1], [0, 0, 1, 1], [], []>} : vector<16x64xf32>, vector<64x64xf32>, vector<16x64xf32> -> vector<16x64xf32>
    %117 = arith.addf %104, %116 : vector<16x64xf32>
    %c0_69 = arith.constant 0 : index
    %c0_70 = arith.constant 0 : index
    %c0_71 = arith.constant 0 : index
    %c0_72 = arith.constant 0 : index
    %118 = vector.load %arg4[%c0_69, %c0_70, %c0_71, %c0_72] : memref<1x1x16x64xf32, #tpu.memory_space<vmem>>, vector<1x1x16x64xf32>
    %119 = vector.shape_cast %118 : vector<1x1x16x64xf32> to vector<16x64xf32>
    %120 = vector.shape_cast %117 : vector<16x64xf32> to vector<1x1x16x64xf32>
    tpu.vector_store %arg4[%c0_69, %c0_70, %c0_71, %c0_72], %120 {strides = array<i32>} : memref<1x1x16x64xf32, #tpu.memory_space<vmem>>, vector<1x1x16x64xf32>,
    return
  }
  func.func @transform_0(%arg0: i32, %arg1: i32) -> (i32, i32, i32, i32) {
    %c0_i32 = arith.constant 0 : i32
    %c0_i32_0 = arith.constant 0 : i32
    %c0_i32_1 = arith.constant 0 : i32
    %c0_i32_2 = arith.constant 0 : i32
    %c0_i32_3 = arith.constant 0 : i32
    return %c0_i32, %c0_i32_0, %c0_i32_1, %c0_i32_2 : i32, i32, i32, i32
  }
  func.func @transform_1(%arg0: i32, %arg1: i32) -> (i32, i32, i32) {
    %c0_i32 = arith.constant 0 : i32
    %c0_i32_0 = arith.constant 0 : i32
    %c0_i32_1 = arith.constant 0 : i32
    %c0_i32_2 = arith.constant 0 : i32
    return %c0_i32, %c0_i32_0, %c0_i32_1 : i32, i32, i32
  }
  func.func @transform_2(%arg0: i32, %arg1: i32) -> (i32, i32, i32, i32) {
    %c0_i32 = arith.constant 0 : i32
    %c0_i32_0 = arith.constant 0 : i32
    %c0_i32_1 = arith.constant 0 : i32
    return %arg0, %arg1, %c0_i32, %c0_i32_0 : i32, i32, i32, i32
  }
}

module attributes {stable_mosaic.version = 11 : i64} {
  func.func @bias_sign_kernel(%arg0: i32, %arg1: memref<512x64xf32, #tpu.memory_space<vmem>>, %arg2: memref<1x64xf32, #tpu.memory_space<vmem>>, %arg3: memref<512x64xf32, #tpu.memory_space<vmem>>) attributes {dimension_semantics = [#tpu.dimension_semantics<parallel>], iteration_bounds = array<i64: 1>, scalar_prefetch = 0 : i64, scratch_operands = 0 : i64, tpu.core_type = #tpu.core_type<tc>, window_params = [{transform_indices = @transform_0, window_bounds = array<i64: 512, 64>}, {pipeline_mode = #tpu.pipeline_mode<synchronous>, transform_indices = @transform_1, window_bounds = array<i64: 1, 64>}, {transform_indices = @transform_2, window_bounds = array<i64: 512, 64>}]} {
    %c0 = arith.constant 0 : index
    %c0_0 = arith.constant 0 : index
    %0 = vector.load %arg1[%c0, %c0_0] : memref<512x64xf32, #tpu.memory_space<vmem>>, vector<512x64xf32>
    %c0_1 = arith.constant 0 : index
    %c0_2 = arith.constant 0 : index
    %1 = vector.load %arg2[%c0_1, %c0_2] : memref<1x64xf32, #tpu.memory_space<vmem>>, vector<1x64xf32>
    %2 = vector.broadcast %1 : vector<1x64xf32> to vector<512x64xf32>
    %3 = arith.addf %0, %2 : vector<512x64xf32>
    %cst = arith.constant 0.000000e+00 : f32
    %4 = vector.broadcast %cst : f32 to vector<512x64xf32>
    %5 = arith.cmpf ogt, %3, %4 : vector<512x64xf32>
    %cst_3 = arith.constant 0.000000e+00 : f32
    %6 = vector.broadcast %cst_3 : f32 to vector<512x64xf32>
    %7 = arith.cmpf olt, %3, %6 : vector<512x64xf32>
    %cst_4 = arith.constant -1.000000e+00 : f32
    %cst_5 = arith.constant 0.000000e+00 : f32
    %8 = vector.broadcast %cst_4 : f32 to vector<512x64xf32>
    %9 = vector.broadcast %cst_5 : f32 to vector<512x64xf32>
    %10 = arith.select %7, %8, %9 : vector<512x64xi1>, vector<512x64xf32>
    %cst_6 = arith.constant 1.000000e+00 : f32
    %11 = vector.broadcast %cst_6 : f32 to vector<512x64xf32>
    %12 = arith.select %5, %11, %10 : vector<512x64xi1>, vector<512x64xf32>
    %c0_7 = arith.constant 0 : index
    %c0_8 = arith.constant 0 : index
    %13 = vector.load %arg3[%c0_7, %c0_8] : memref<512x64xf32, #tpu.memory_space<vmem>>, vector<512x64xf32>
    tpu.vector_store %arg3[%c0_7, %c0_8], %12 {strides = array<i32>} : memref<512x64xf32, #tpu.memory_space<vmem>>, vector<512x64xf32>,
    return
  }
  func.func @transform_0(%arg0: i32) -> (i32, i32) {
    %c0_i32 = arith.constant 0 : i32
    %c0_i32_0 = arith.constant 0 : i32
    return %arg0, %c0_i32 : i32, i32
  }
  func.func @transform_1(%arg0: i32) -> (i32, i32) {
    %c0_i32 = arith.constant 0 : i32
    %c0_i32_0 = arith.constant 0 : i32
    %c0_i32_1 = arith.constant 0 : i32
    return %c0_i32, %c0_i32_0 : i32, i32
  }
  func.func @transform_2(%arg0: i32) -> (i32, i32) {
    %c0_i32 = arith.constant 0 : i32
    %c0_i32_0 = arith.constant 0 : i32
    return %arg0, %c0_i32 : i32, i32
  }
}

module attributes {stable_mosaic.version = 11 : i64} {
  func.func @bn_prelu_mix_res_kernel(%arg0: i32, %arg1: memref<512x64xf32, #tpu.memory_space<vmem>>, %arg2: memref<512x64xf32, #tpu.memory_space<vmem>>, %arg3: memref<1x64xf32, #tpu.memory_space<vmem>>, %arg4: memref<1x64xf32, #tpu.memory_space<vmem>>, %arg5: memref<1x64xf32, #tpu.memory_space<vmem>>, %arg6: memref<1x64xf32, #tpu.memory_space<vmem>>, %arg7: memref<1x64xf32, #tpu.memory_space<vmem>>, %arg8: memref<512x64xf32, #tpu.memory_space<vmem>>, %arg9: memref<512x64xf32, #tpu.memory_space<vmem>>, %arg10: memref<512x64xf32, #tpu.memory_space<vmem>>) attributes {dimension_semantics = [#tpu.dimension_semantics<parallel>], iteration_bounds = array<i64: 1>, scalar_prefetch = 0 : i64, scratch_operands = 0 : i64, tpu.core_type = #tpu.core_type<tc>, window_params = [{transform_indices = @transform_0, window_bounds = array<i64: 512, 64>}, {transform_indices = @transform_1, window_bounds = array<i64: 512, 64>}, {pipeline_mode = #tpu.pipeline_mode<synchronous>, transform_indices = @transform_2, window_bounds = array<i64: 1, 64>}, {pipeline_mode = #tpu.pipeline_mode<synchronous>, transform_indices = @transform_3, window_bounds = array<i64: 1, 64>}, {pipeline_mode = #tpu.pipeline_mode<synchronous>, transform_indices = @transform_4, window_bounds = array<i64: 1, 64>}, {pipeline_mode = #tpu.pipeline_mode<synchronous>, transform_indices = @transform_5, window_bounds = array<i64: 1, 64>}, {pipeline_mode = #tpu.pipeline_mode<synchronous>, transform_indices = @transform_6, window_bounds = array<i64: 1, 64>}, {transform_indices = @transform_7, window_bounds = array<i64: 512, 64>}, {transform_indices = @transform_8, window_bounds = array<i64: 512, 64>}, {transform_indices = @transform_9, window_bounds = array<i64: 512, 64>}]} {
    %c0 = arith.constant 0 : index
    %c0_0 = arith.constant 0 : index
    %0 = vector.load %arg1[%c0, %c0_0] : memref<512x64xf32, #tpu.memory_space<vmem>>, vector<512x64xf32>
    %c0_1 = arith.constant 0 : index
    %c0_2 = arith.constant 0 : index
    %1 = vector.load %arg2[%c0_1, %c0_2] : memref<512x64xf32, #tpu.memory_space<vmem>>, vector<512x64xf32>
    %c0_3 = arith.constant 0 : index
    %c0_4 = arith.constant 0 : index
    %2 = vector.load %arg3[%c0_3, %c0_4] : memref<1x64xf32, #tpu.memory_space<vmem>>, vector<1x64xf32>
    %3 = vector.broadcast %2 : vector<1x64xf32> to vector<512x64xf32>
    %4 = arith.mulf %0, %3 : vector<512x64xf32>
    %c0_5 = arith.constant 0 : index
    %c0_6 = arith.constant 0 : index
    %5 = vector.load %arg4[%c0_5, %c0_6] : memref<1x64xf32, #tpu.memory_space<vmem>>, vector<1x64xf32>
    %6 = vector.broadcast %5 : vector<1x64xf32> to vector<512x64xf32>
    %7 = arith.addf %4, %6 : vector<512x64xf32>
    %cst = arith.constant 0.000000e+00 : f32
    %8 = vector.broadcast %cst : f32 to vector<512x64xf32>
    %9 = arith.cmpf oge, %7, %8 : vector<512x64xf32>
    %c0_7 = arith.constant 0 : index
    %c0_8 = arith.constant 0 : index
    %10 = vector.load %arg5[%c0_7, %c0_8] : memref<1x64xf32, #tpu.memory_space<vmem>>, vector<1x64xf32>
    %11 = vector.broadcast %10 : vector<1x64xf32> to vector<512x64xf32>
    %12 = arith.mulf %7, %11 : vector<512x64xf32>
    %13 = arith.select %9, %7, %12 : vector<512x64xi1>, vector<512x64xf32>
    %c0_9 = arith.constant 0 : index
    %c0_10 = arith.constant 0 : index
    %14 = vector.load %arg6[%c0_9, %c0_10] : memref<1x64xf32, #tpu.memory_space<vmem>>, vector<1x64xf32>
    %15 = vector.broadcast %14 : vector<1x64xf32> to vector<512x64xf32>
    %16 = arith.mulf %15, %1 : vector<512x64xf32>
    %cst_11 = arith.constant 1.000000e+00 : f32
    %17 = vector.broadcast %cst_11 : f32 to vector<1x64xf32>
    %18 = arith.subf %17, %14 : vector<1x64xf32>
    %19 = vector.broadcast %18 : vector<1x64xf32> to vector<512x64xf32>
    %20 = arith.mulf %19, %13 : vector<512x64xf32>
    %21 = arith.addf %16, %20 : vector<512x64xf32>
    %cst_12 = arith.constant 0.000000e+00 : f32
    %22 = vector.broadcast %cst_12 : f32 to vector<512x64xf32>
    %23 = arith.cmpf oge, %1, %22 : vector<512x64xf32>
    %c0_13 = arith.constant 0 : index
    %c0_14 = arith.constant 0 : index
    %24 = vector.load %arg7[%c0_13, %c0_14] : memref<1x64xf32, #tpu.memory_space<vmem>>, vector<1x64xf32>
    %25 = vector.broadcast %24 : vector<1x64xf32> to vector<512x64xf32>
    %26 = arith.mulf %1, %25 : vector<512x64xf32>
    %27 = arith.select %23, %1, %26 : vector<512x64xi1>, vector<512x64xf32>
    %c0_15 = arith.constant 0 : index
    %c0_16 = arith.constant 0 : index
    %28 = vector.load %arg8[%c0_15, %c0_16] : memref<512x64xf32, #tpu.memory_space<vmem>>, vector<512x64xf32>
    tpu.vector_store %arg8[%c0_15, %c0_16], %13 {strides = array<i32>} : memref<512x64xf32, #tpu.memory_space<vmem>>, vector<512x64xf32>,
    %c0_17 = arith.constant 0 : index
    %c0_18 = arith.constant 0 : index
    %29 = vector.load %arg9[%c0_17, %c0_18] : memref<512x64xf32, #tpu.memory_space<vmem>>, vector<512x64xf32>
    tpu.vector_store %arg9[%c0_17, %c0_18], %21 {strides = array<i32>} : memref<512x64xf32, #tpu.memory_space<vmem>>, vector<512x64xf32>,
    %c0_19 = arith.constant 0 : index
    %c0_20 = arith.constant 0 : index
    %30 = vector.load %arg10[%c0_19, %c0_20] : memref<512x64xf32, #tpu.memory_space<vmem>>, vector<512x64xf32>
    tpu.vector_store %arg10[%c0_19, %c0_20], %27 {strides = array<i32>} : memref<512x64xf32, #tpu.memory_space<vmem>>, vector<512x64xf32>,
    return
  }
  func.func @transform_0(%arg0: i32) -> (i32, i32) {
    %c0_i32 = arith.constant 0 : i32
    %c0_i32_0 = arith.constant 0 : i32
    return %arg0, %c0_i32 : i32, i32
  }
  func.func @transform_1(%arg0: i32) -> (i32, i32) {
    %c0_i32 = arith.constant 0 : i32
    %c0_i32_0 = arith.constant 0 : i32
    return %arg0, %c0_i32 : i32, i32
  }
  func.func @transform_2(%arg0: i32) -> (i32, i32) {
    %c0_i32 = arith.constant 0 : i32
    %c0_i32_0 = arith.constant 0 : i32
    %c0_i32_1 = arith.constant 0 : i32
    return %c0_i32, %c0_i32_0 : i32, i32
  }
  func.func @transform_3(%arg0: i32) -> (i32, i32) {
    %c0_i32 = arith.constant 0 : i32
    %c0_i32_0 = arith.constant 0 : i32
    %c0_i32_1 = arith.constant 0 : i32
    return %c0_i32, %c0_i32_0 : i32, i32
  }
  func.func @transform_4(%arg0: i32) -> (i32, i32) {
    %c0_i32 = arith.constant 0 : i32
    %c0_i32_0 = arith.constant 0 : i32
    %c0_i32_1 = arith.constant 0 : i32
    return %c0_i32, %c0_i32_0 : i32, i32
  }
  func.func @transform_5(%arg0: i32) -> (i32, i32) {
    %c0_i32 = arith.constant 0 : i32
    %c0_i32_0 = arith.constant 0 : i32
    %c0_i32_1 = arith.constant 0 : i32
    return %c0_i32, %c0_i32_0 : i32, i32
  }
  func.func @transform_6(%arg0: i32) -> (i32, i32) {
    %c0_i32 = arith.constant 0 : i32
    %c0_i32_0 = arith.constant 0 : i32
    %c0_i32_1 = arith.constant 0 : i32
    return %c0_i32, %c0_i32_0 : i32, i32
  }
  func.func @transform_7(%arg0: i32) -> (i32, i32) {
    %c0_i32 = arith.constant 0 : i32
    %c0_i32_0 = arith.constant 0 : i32
    return %arg0, %c0_i32 : i32, i32
  }
  func.func @transform_8(%arg0: i32) -> (i32, i32) {
    %c0_i32 = arith.constant 0 : i32
    %c0_i32_0 = arith.constant 0 : i32
    return %arg0, %c0_i32 : i32, i32
  }
  func.func @transform_9(%arg0: i32) -> (i32, i32) {
    %c0_i32 = arith.constant 0 : i32
    %c0_i32_0 = arith.constant 0 : i32
    return %arg0, %c0_i32 : i32, i32
  }
}

module attributes {stable_mosaic.version = 11 : i64} {
  func.func @se_kernel(%arg0: i32, %arg1: i32, %arg2: memref<1x128x64xf32, #tpu.memory_space<vmem>>, %arg3: memref<64x8xf32, #tpu.memory_space<vmem>>, %arg4: memref<1x8xf32, #tpu.memory_space<vmem>>, %arg5: memref<8x64xf32, #tpu.memory_space<vmem>>, %arg6: memref<1x64xf32, #tpu.memory_space<vmem>>, %arg7: memref<1x1x64xf32, #tpu.memory_space<vmem>>, %arg8: memref<1x64xf32, #tpu.memory_space<vmem>>) attributes {dimension_semantics = [#tpu.dimension_semantics<parallel>, #tpu.dimension_semantics<arbitrary>], iteration_bounds = array<i64: 2, 2>, scalar_prefetch = 0 : i64, scratch_operands = 1 : i64, tpu.core_type = #tpu.core_type<tc>, window_params = [{transform_indices = @transform_0, window_bounds = array<i64: 1, 128, 64>}, {pipeline_mode = #tpu.pipeline_mode<synchronous>, transform_indices = @transform_1, window_bounds = array<i64: 64, 8>}, {pipeline_mode = #tpu.pipeline_mode<synchronous>, transform_indices = @transform_2, window_bounds = array<i64: 1, 8>}, {pipeline_mode = #tpu.pipeline_mode<synchronous>, transform_indices = @transform_3, window_bounds = array<i64: 8, 64>}, {pipeline_mode = #tpu.pipeline_mode<synchronous>, transform_indices = @transform_4, window_bounds = array<i64: 1, 64>}, {transform_indices = @transform_5, window_bounds = array<i64: 1, 1, 64>}]} {
    %c0_i32 = arith.constant 0 : i32
    %0 = arith.cmpi eq, %arg1, %c0_i32 : i32
    %1 = arith.extui %0 : i1 to i32
    %c0_i32_0 = arith.constant 0 : i32
    %2 = arith.cmpi ne, %1, %c0_i32_0 : i32
    scf.if %2 {
      %cst_8 = arith.constant 0.000000e+00 : f32
      %11 = vector.broadcast %cst_8 : f32 to vector<1x64xf32>
      %c0_9 = arith.constant 0 : index
      %c0_10 = arith.constant 0 : index
      %12 = vector.load %arg8[%c0_9, %c0_10] : memref<1x64xf32, #tpu.memory_space<vmem>>, vector<1x64xf32>
      tpu.vector_store %arg8[%c0_9, %c0_10], %11 {strides = array<i32>} : memref<1x64xf32, #tpu.memory_space<vmem>>, vector<1x64xf32>,
    } else {
    }
    %c0 = arith.constant 0 : index
    %c0_1 = arith.constant 0 : index
    %3 = vector.load %arg8[%c0, %c0_1] : memref<1x64xf32, #tpu.memory_space<vmem>>, vector<1x64xf32>
    %c0_2 = arith.constant 0 : index
    %c0_3 = arith.constant 0 : index
    %c0_4 = arith.constant 0 : index
    %4 = vector.load %arg2[%c0_2, %c0_3, %c0_4] : memref<1x128x64xf32, #tpu.memory_space<vmem>>, vector<1x128x64xf32>
    %cst = arith.constant dense<0.000000e+00> : vector<1x64xf32>
    %5 = vector.multi_reduction <add>, %4, %cst [1] : vector<1x128x64xf32> to vector<1x64xf32>
    %6 = arith.addf %3, %5 : vector<1x64xf32>
    %c0_5 = arith.constant 0 : index
    %c0_6 = arith.constant 0 : index
    %7 = vector.load %arg8[%c0_5, %c0_6] : memref<1x64xf32, #tpu.memory_space<vmem>>, vector<1x64xf32>
    tpu.vector_store %arg8[%c0_5, %c0_6], %6 {strides = array<i32>} : memref<1x64xf32, #tpu.memory_space<vmem>>, vector<1x64xf32>,
    %c1_i32 = arith.constant 1 : i32
    %8 = arith.cmpi eq, %arg1, %c1_i32 : i32
    %9 = arith.extui %8 : i1 to i32
    %c0_i32_7 = arith.constant 0 : i32
    %10 = arith.cmpi ne, %9, %c0_i32_7 : i32
    scf.if %10 {
      %c0_8 = arith.constant 0 : index
      %c0_9 = arith.constant 0 : index
      %11 = vector.load %arg8[%c0_8, %c0_9] : memref<1x64xf32, #tpu.memory_space<vmem>>, vector<1x64xf32>
      %cst_10 = arith.constant 3.906250e-03 : f32
      %12 = vector.broadcast %cst_10 : f32 to vector<1x64xf32>
      %13 = arith.mulf %11, %12 : vector<1x64xf32>
      %c0_11 = arith.constant 0 : index
      %c0_12 = arith.constant 0 : index
      %14 = vector.load %arg3[%c0_11, %c0_12] : memref<64x8xf32, #tpu.memory_space<vmem>>, vector<64x8xf32>
      %cst_13 = arith.constant dense<0.000000e+00> : vector<1x8xf32>
      %15 = tpu.matmul %13, %14, %cst_13 {dimension_numbers = #tpu.dot_dimension_numbers<[1], [0], [0], [1], [0, 0, 1, 1], [], []>} : vector<1x64xf32>, vector<64x8xf32>, vector<1x8xf32> -> vector<1x8xf32>
      %c0_14 = arith.constant 0 : index
      %c0_15 = arith.constant 0 : index
      %16 = vector.load %arg4[%c0_14, %c0_15] : memref<1x8xf32, #tpu.memory_space<vmem>>, vector<1x8xf32>
      %17 = arith.addf %15, %16 : vector<1x8xf32>
      %cst_16 = arith.constant 0.000000e+00 : f32
      %18 = vector.broadcast %cst_16 : f32 to vector<1x8xf32>
      %19 = arith.maximumf %17, %18 : vector<1x8xf32>
      %c0_17 = arith.constant 0 : index
      %c0_18 = arith.constant 0 : index
      %20 = vector.load %arg5[%c0_17, %c0_18] : memref<8x64xf32, #tpu.memory_space<vmem>>, vector<8x64xf32>
      %cst_19 = arith.constant dense<0.000000e+00> : vector<1x64xf32>
      %21 = tpu.matmul %19, %20, %cst_19 {dimension_numbers = #tpu.dot_dimension_numbers<[1], [0], [0], [1], [0, 0, 1, 1], [], []>} : vector<1x8xf32>, vector<8x64xf32>, vector<1x64xf32> -> vector<1x64xf32>
      %c0_20 = arith.constant 0 : index
      %c0_21 = arith.constant 0 : index
      %22 = vector.load %arg6[%c0_20, %c0_21] : memref<1x64xf32, #tpu.memory_space<vmem>>, vector<1x64xf32>
      %23 = arith.addf %21, %22 : vector<1x64xf32>
      %cst_22 = arith.constant 0.000000e+00 : f32
      %24 = vector.broadcast %cst_22 : f32 to vector<1x64xf32>
      %25 = arith.subf %24, %23 : vector<1x64xf32>
      %26 = math.exp %25 : vector<1x64xf32>
      %cst_23 = arith.constant 1.000000e+00 : f32
      %27 = vector.broadcast %cst_23 : f32 to vector<1x64xf32>
      %28 = arith.addf %27, %26 : vector<1x64xf32>
      %cst_24 = arith.constant 1.000000e+00 : f32
      %29 = vector.broadcast %cst_24 : f32 to vector<1x64xf32>
      %30 = arith.divf %29, %28 : vector<1x64xf32>
      %c0_25 = arith.constant 0 : index
      %c0_26 = arith.constant 0 : index
      %c0_27 = arith.constant 0 : index
      %31 = vector.load %arg7[%c0_25, %c0_26, %c0_27] : memref<1x1x64xf32, #tpu.memory_space<vmem>>, vector<1x1x64xf32>
      %32 = vector.shape_cast %31 : vector<1x1x64xf32> to vector<1x64xf32>
      %33 = vector.shape_cast %30 : vector<1x64xf32> to vector<1x1x64xf32>
      tpu.vector_store %arg7[%c0_25, %c0_26, %c0_27], %33 {strides = array<i32>} : memref<1x1x64xf32, #tpu.memory_space<vmem>>, vector<1x1x64xf32>,
    } else {
    }
    return
  }
  func.func @transform_0(%arg0: i32, %arg1: i32) -> (i32, i32, i32) {
    %c0_i32 = arith.constant 0 : i32
    %c0_i32_0 = arith.constant 0 : i32
    return %arg0, %arg1, %c0_i32 : i32, i32, i32
  }
  func.func @transform_1(%arg0: i32, %arg1: i32) -> (i32, i32) {
    %c0_i32 = arith.constant 0 : i32
    %c0_i32_0 = arith.constant 0 : i32
    %c0_i32_1 = arith.constant 0 : i32
    return %c0_i32, %c0_i32_0 : i32, i32
  }
  func.func @transform_2(%arg0: i32, %arg1: i32) -> (i32, i32) {
    %c0_i32 = arith.constant 0 : i32
    %c0_i32_0 = arith.constant 0 : i32
    %c0_i32_1 = arith.constant 0 : i32
    return %c0_i32, %c0_i32_0 : i32, i32
  }
  func.func @transform_3(%arg0: i32, %arg1: i32) -> (i32, i32) {
    %c0_i32 = arith.constant 0 : i32
    %c0_i32_0 = arith.constant 0 : i32
    %c0_i32_1 = arith.constant 0 : i32
    return %c0_i32, %c0_i32_0 : i32, i32
  }
  func.func @transform_4(%arg0: i32, %arg1: i32) -> (i32, i32) {
    %c0_i32 = arith.constant 0 : i32
    %c0_i32_0 = arith.constant 0 : i32
    %c0_i32_1 = arith.constant 0 : i32
    return %c0_i32, %c0_i32_0 : i32, i32
  }
  func.func @transform_5(%arg0: i32, %arg1: i32) -> (i32, i32, i32) {
    %c0_i32 = arith.constant 0 : i32
    %c0_i32_0 = arith.constant 0 : i32
    %c0_i32_1 = arith.constant 0 : i32
    return %arg0, %c0_i32, %c0_i32_0 : i32, i32, i32
  }
}

module attributes {stable_mosaic.version = 11 : i64} {
  func.func @tail_kernel(%arg0: i32, %arg1: i32, %arg2: memref<1x128x64xf32, #tpu.memory_space<vmem>>, %arg3: memref<1x128x64xf32, #tpu.memory_space<vmem>>, %arg4: memref<1x1x64xf32, #tpu.memory_space<vmem>>, %arg5: memref<1x1x64xf32, #tpu.memory_space<vmem>>, %arg6: memref<1x1x64xf32, #tpu.memory_space<vmem>>, %arg7: memref<1x128x64xf32, #tpu.memory_space<vmem>>) attributes {dimension_semantics = [#tpu.dimension_semantics<parallel>, #tpu.dimension_semantics<arbitrary>], iteration_bounds = array<i64: 2, 2>, scalar_prefetch = 0 : i64, scratch_operands = 0 : i64, tpu.core_type = #tpu.core_type<tc>, window_params = [{transform_indices = @transform_0, window_bounds = array<i64: 1, 128, 64>}, {transform_indices = @transform_1, window_bounds = array<i64: 1, 128, 64>}, {transform_indices = @transform_2, window_bounds = array<i64: 1, 1, 64>}, {pipeline_mode = #tpu.pipeline_mode<synchronous>, transform_indices = @transform_3, window_bounds = array<i64: 1, 1, 64>}, {pipeline_mode = #tpu.pipeline_mode<synchronous>, transform_indices = @transform_4, window_bounds = array<i64: 1, 1, 64>}, {transform_indices = @transform_5, window_bounds = array<i64: 1, 128, 64>}]} {
    %c0 = arith.constant 0 : index
    %c0_0 = arith.constant 0 : index
    %c0_1 = arith.constant 0 : index
    %0 = vector.load %arg2[%c0, %c0_0, %c0_1] : memref<1x128x64xf32, #tpu.memory_space<vmem>>, vector<1x128x64xf32>
    %c0_2 = arith.constant 0 : index
    %c0_3 = arith.constant 0 : index
    %c0_4 = arith.constant 0 : index
    %1 = vector.load %arg3[%c0_2, %c0_3, %c0_4] : memref<1x128x64xf32, #tpu.memory_space<vmem>>, vector<1x128x64xf32>
    %c0_5 = arith.constant 0 : index
    %c0_6 = arith.constant 0 : index
    %c0_7 = arith.constant 0 : index
    %2 = vector.load %arg4[%c0_5, %c0_6, %c0_7] : memref<1x1x64xf32, #tpu.memory_space<vmem>>, vector<1x1x64xf32>
    %3 = vector.broadcast %2 : vector<1x1x64xf32> to vector<1x128x64xf32>
    %4 = arith.mulf %3, %0 : vector<1x128x64xf32>
    %5 = arith.mulf %4, %1 : vector<1x128x64xf32>
    %c0_8 = arith.constant 0 : index
    %c0_9 = arith.constant 0 : index
    %c0_10 = arith.constant 0 : index
    %6 = vector.load %arg5[%c0_8, %c0_9, %c0_10] : memref<1x1x64xf32, #tpu.memory_space<vmem>>, vector<1x1x64xf32>
    %7 = vector.broadcast %6 : vector<1x1x64xf32> to vector<1x128x64xf32>
    %8 = arith.mulf %5, %7 : vector<1x128x64xf32>
    %c0_11 = arith.constant 0 : index
    %c0_12 = arith.constant 0 : index
    %c0_13 = arith.constant 0 : index
    %9 = vector.load %arg6[%c0_11, %c0_12, %c0_13] : memref<1x1x64xf32, #tpu.memory_space<vmem>>, vector<1x1x64xf32>
    %10 = vector.broadcast %9 : vector<1x1x64xf32> to vector<1x128x64xf32>
    %11 = arith.addf %8, %10 : vector<1x128x64xf32>
    %12 = arith.addf %11, %1 : vector<1x128x64xf32>
    %c0_14 = arith.constant 0 : index
    %c0_15 = arith.constant 0 : index
    %c0_16 = arith.constant 0 : index
    %13 = vector.load %arg7[%c0_14, %c0_15, %c0_16] : memref<1x128x64xf32, #tpu.memory_space<vmem>>, vector<1x128x64xf32>
    tpu.vector_store %arg7[%c0_14, %c0_15, %c0_16], %12 {strides = array<i32>} : memref<1x128x64xf32, #tpu.memory_space<vmem>>, vector<1x128x64xf32>,
    return
  }
  func.func @transform_0(%arg0: i32, %arg1: i32) -> (i32, i32, i32) {
    %c0_i32 = arith.constant 0 : i32
    %c0_i32_0 = arith.constant 0 : i32
    return %arg0, %arg1, %c0_i32 : i32, i32, i32
  }
  func.func @transform_1(%arg0: i32, %arg1: i32) -> (i32, i32, i32) {
    %c0_i32 = arith.constant 0 : i32
    %c0_i32_0 = arith.constant 0 : i32
    return %arg0, %arg1, %c0_i32 : i32, i32, i32
  }
  func.func @transform_2(%arg0: i32, %arg1: i32) -> (i32, i32, i32) {
    %c0_i32 = arith.constant 0 : i32
    %c0_i32_0 = arith.constant 0 : i32
    %c0_i32_1 = arith.constant 0 : i32
    return %arg0, %c0_i32, %c0_i32_0 : i32, i32, i32
  }
  func.func @transform_3(%arg0: i32, %arg1: i32) -> (i32, i32, i32) {
    %c0_i32 = arith.constant 0 : i32
    %c0_i32_0 = arith.constant 0 : i32
    %c0_i32_1 = arith.constant 0 : i32
    %c0_i32_2 = arith.constant 0 : i32
    return %c0_i32, %c0_i32_0, %c0_i32_1 : i32, i32, i32
  }
  func.func @transform_4(%arg0: i32, %arg1: i32) -> (i32, i32, i32) {
    %c0_i32 = arith.constant 0 : i32
    %c0_i32_0 = arith.constant 0 : i32
    %c0_i32_1 = arith.constant 0 : i32
    %c0_i32_2 = arith.constant 0 : i32
    return %c0_i32, %c0_i32_0, %c0_i32_1 : i32, i32, i32
  }
  func.func @transform_5(%arg0: i32, %arg1: i32) -> (i32, i32, i32) {
    %c0_i32 = arith.constant 0 : i32
    %c0_i32_0 = arith.constant 0 : i32
    return %arg0, %arg1, %c0_i32 : i32, i32, i32
  }
}

module attributes {stable_mosaic.version = 11 : i64} {
  func.func @sign_conv1x1_kernel(%arg0: i32, %arg1: memref<512x64xf32, #tpu.memory_space<vmem>>, %arg2: memref<1x64xf32, #tpu.memory_space<vmem>>, %arg3: memref<64x64xf32, #tpu.memory_space<vmem>>, %arg4: memref<512x64xf32, #tpu.memory_space<vmem>>) attributes {dimension_semantics = [#tpu.dimension_semantics<parallel>], iteration_bounds = array<i64: 1>, scalar_prefetch = 0 : i64, scratch_operands = 0 : i64, tpu.core_type = #tpu.core_type<tc>, window_params = [{transform_indices = @transform_0, window_bounds = array<i64: 512, 64>}, {pipeline_mode = #tpu.pipeline_mode<synchronous>, transform_indices = @transform_1, window_bounds = array<i64: 1, 64>}, {pipeline_mode = #tpu.pipeline_mode<synchronous>, transform_indices = @transform_2, window_bounds = array<i64: 64, 64>}, {transform_indices = @transform_3, window_bounds = array<i64: 512, 64>}]} {
    %c0 = arith.constant 0 : index
    %c0_0 = arith.constant 0 : index
    %0 = vector.load %arg1[%c0, %c0_0] : memref<512x64xf32, #tpu.memory_space<vmem>>, vector<512x64xf32>
    %c0_1 = arith.constant 0 : index
    %c0_2 = arith.constant 0 : index
    %1 = vector.load %arg2[%c0_1, %c0_2] : memref<1x64xf32, #tpu.memory_space<vmem>>, vector<1x64xf32>
    %2 = vector.broadcast %1 : vector<1x64xf32> to vector<512x64xf32>
    %3 = arith.addf %0, %2 : vector<512x64xf32>
    %cst = arith.constant 0.000000e+00 : f32
    %4 = vector.broadcast %cst : f32 to vector<512x64xf32>
    %5 = arith.cmpf ogt, %3, %4 : vector<512x64xf32>
    %cst_3 = arith.constant 0.000000e+00 : f32
    %6 = vector.broadcast %cst_3 : f32 to vector<512x64xf32>
    %7 = arith.cmpf olt, %3, %6 : vector<512x64xf32>
    %cst_4 = arith.constant -1.000000e+00 : f32
    %cst_5 = arith.constant 0.000000e+00 : f32
    %8 = vector.broadcast %cst_4 : f32 to vector<512x64xf32>
    %9 = vector.broadcast %cst_5 : f32 to vector<512x64xf32>
    %10 = arith.select %7, %8, %9 : vector<512x64xi1>, vector<512x64xf32>
    %cst_6 = arith.constant 1.000000e+00 : f32
    %11 = vector.broadcast %cst_6 : f32 to vector<512x64xf32>
    %12 = arith.select %5, %11, %10 : vector<512x64xi1>, vector<512x64xf32>
    %c0_7 = arith.constant 0 : index
    %c0_8 = arith.constant 0 : index
    %13 = vector.load %arg3[%c0_7, %c0_8] : memref<64x64xf32, #tpu.memory_space<vmem>>, vector<64x64xf32>
    %cst_9 = arith.constant -1.000000e+00 : f32
    %cst_10 = arith.constant 1.000000e+00 : f32
    %14 = vector.broadcast %cst_9 : f32 to vector<64x64xf32>
    %15 = arith.maximumf %14, %13 : vector<64x64xf32>
    %16 = vector.broadcast %cst_10 : f32 to vector<64x64xf32>
    %17 = arith.minimumf %16, %15 : vector<64x64xf32>
    %cst_11 = arith.constant dense<0.000000e+00> : vector<512x64xf32>
    %18 = tpu.matmul %12, %17, %cst_11 {dimension_numbers = #tpu.dot_dimension_numbers<[1], [0], [0], [1], [0, 0, 1, 1], [], []>} : vector<512x64xf32>, vector<64x64xf32>, vector<512x64xf32> -> vector<512x64xf32>
    %c0_12 = arith.constant 0 : index
    %c0_13 = arith.constant 0 : index
    %19 = vector.load %arg4[%c0_12, %c0_13] : memref<512x64xf32, #tpu.memory_space<vmem>>, vector<512x64xf32>
    tpu.vector_store %arg4[%c0_12, %c0_13], %18 {strides = array<i32>} : memref<512x64xf32, #tpu.memory_space<vmem>>, vector<512x64xf32>,
    return
  }
  func.func @transform_0(%arg0: i32) -> (i32, i32) {
    %c0_i32 = arith.constant 0 : i32
    %c0_i32_0 = arith.constant 0 : i32
    return %arg0, %c0_i32 : i32, i32
  }
  func.func @transform_1(%arg0: i32) -> (i32, i32) {
    %c0_i32 = arith.constant 0 : i32
    %c0_i32_0 = arith.constant 0 : i32
    %c0_i32_1 = arith.constant 0 : i32
    return %c0_i32, %c0_i32_0 : i32, i32
  }
  func.func @transform_2(%arg0: i32) -> (i32, i32) {
    %c0_i32 = arith.constant 0 : i32
    %c0_i32_0 = arith.constant 0 : i32
    %c0_i32_1 = arith.constant 0 : i32
    return %c0_i32, %c0_i32_0 : i32, i32
  }
  func.func @transform_3(%arg0: i32) -> (i32, i32) {
    %c0_i32 = arith.constant 0 : i32
    %c0_i32_0 = arith.constant 0 : i32
    return %arg0, %c0_i32 : i32, i32
  }
}

module attributes {stable_mosaic.version = 11 : i64} {
  func.func @tail_kernel(%arg0: i32, %arg1: i32, %arg2: memref<1x128x64xf32, #tpu.memory_space<vmem>>, %arg3: memref<1x128x64xf32, #tpu.memory_space<vmem>>, %arg4: memref<1x1x64xf32, #tpu.memory_space<vmem>>, %arg5: memref<1x1x64xf32, #tpu.memory_space<vmem>>, %arg6: memref<1x1x64xf32, #tpu.memory_space<vmem>>, %arg7: memref<1x128x64xf32, #tpu.memory_space<vmem>>) attributes {dimension_semantics = [#tpu.dimension_semantics<parallel>, #tpu.dimension_semantics<arbitrary>], iteration_bounds = array<i64: 2, 2>, scalar_prefetch = 0 : i64, scratch_operands = 0 : i64, tpu.core_type = #tpu.core_type<tc>, window_params = [{transform_indices = @transform_0, window_bounds = array<i64: 1, 128, 64>}, {transform_indices = @transform_1, window_bounds = array<i64: 1, 128, 64>}, {transform_indices = @transform_2, window_bounds = array<i64: 1, 1, 64>}, {pipeline_mode = #tpu.pipeline_mode<synchronous>, transform_indices = @transform_3, window_bounds = array<i64: 1, 1, 64>}, {pipeline_mode = #tpu.pipeline_mode<synchronous>, transform_indices = @transform_4, window_bounds = array<i64: 1, 1, 64>}, {transform_indices = @transform_5, window_bounds = array<i64: 1, 128, 64>}]} {
    %c0 = arith.constant 0 : index
    %c0_0 = arith.constant 0 : index
    %c0_1 = arith.constant 0 : index
    %0 = vector.load %arg2[%c0, %c0_0, %c0_1] : memref<1x128x64xf32, #tpu.memory_space<vmem>>, vector<1x128x64xf32>
    %c0_2 = arith.constant 0 : index
    %c0_3 = arith.constant 0 : index
    %c0_4 = arith.constant 0 : index
    %1 = vector.load %arg3[%c0_2, %c0_3, %c0_4] : memref<1x128x64xf32, #tpu.memory_space<vmem>>, vector<1x128x64xf32>
    %c0_5 = arith.constant 0 : index
    %c0_6 = arith.constant 0 : index
    %c0_7 = arith.constant 0 : index
    %2 = vector.load %arg4[%c0_5, %c0_6, %c0_7] : memref<1x1x64xf32, #tpu.memory_space<vmem>>, vector<1x1x64xf32>
    %3 = vector.broadcast %2 : vector<1x1x64xf32> to vector<1x128x64xf32>
    %4 = arith.mulf %3, %0 : vector<1x128x64xf32>
    %c0_8 = arith.constant 0 : index
    %c0_9 = arith.constant 0 : index
    %c0_10 = arith.constant 0 : index
    %5 = vector.load %arg5[%c0_8, %c0_9, %c0_10] : memref<1x1x64xf32, #tpu.memory_space<vmem>>, vector<1x1x64xf32>
    %6 = vector.broadcast %5 : vector<1x1x64xf32> to vector<1x128x64xf32>
    %7 = arith.mulf %4, %6 : vector<1x128x64xf32>
    %c0_11 = arith.constant 0 : index
    %c0_12 = arith.constant 0 : index
    %c0_13 = arith.constant 0 : index
    %8 = vector.load %arg6[%c0_11, %c0_12, %c0_13] : memref<1x1x64xf32, #tpu.memory_space<vmem>>, vector<1x1x64xf32>
    %9 = vector.broadcast %8 : vector<1x1x64xf32> to vector<1x128x64xf32>
    %10 = arith.addf %7, %9 : vector<1x128x64xf32>
    %11 = arith.addf %10, %1 : vector<1x128x64xf32>
    %c0_14 = arith.constant 0 : index
    %c0_15 = arith.constant 0 : index
    %c0_16 = arith.constant 0 : index
    %12 = vector.load %arg7[%c0_14, %c0_15, %c0_16] : memref<1x128x64xf32, #tpu.memory_space<vmem>>, vector<1x128x64xf32>
    tpu.vector_store %arg7[%c0_14, %c0_15, %c0_16], %11 {strides = array<i32>} : memref<1x128x64xf32, #tpu.memory_space<vmem>>, vector<1x128x64xf32>,
    return
  }
  func.func @transform_0(%arg0: i32, %arg1: i32) -> (i32, i32, i32) {
    %c0_i32 = arith.constant 0 : i32
    %c0_i32_0 = arith.constant 0 : i32
    return %arg0, %arg1, %c0_i32 : i32, i32, i32
  }
  func.func @transform_1(%arg0: i32, %arg1: i32) -> (i32, i32, i32) {
    %c0_i32 = arith.constant 0 : i32
    %c0_i32_0 = arith.constant 0 : i32
    return %arg0, %arg1, %c0_i32 : i32, i32, i32
  }
  func.func @transform_2(%arg0: i32, %arg1: i32) -> (i32, i32, i32) {
    %c0_i32 = arith.constant 0 : i32
    %c0_i32_0 = arith.constant 0 : i32
    %c0_i32_1 = arith.constant 0 : i32
    return %arg0, %c0_i32, %c0_i32_0 : i32, i32, i32
  }
  func.func @transform_3(%arg0: i32, %arg1: i32) -> (i32, i32, i32) {
    %c0_i32 = arith.constant 0 : i32
    %c0_i32_0 = arith.constant 0 : i32
    %c0_i32_1 = arith.constant 0 : i32
    %c0_i32_2 = arith.constant 0 : i32
    return %c0_i32, %c0_i32_0, %c0_i32_1 : i32, i32, i32
  }
  func.func @transform_4(%arg0: i32, %arg1: i32) -> (i32, i32, i32) {
    %c0_i32 = arith.constant 0 : i32
    %c0_i32_0 = arith.constant 0 : i32
    %c0_i32_1 = arith.constant 0 : i32
    %c0_i32_2 = arith.constant 0 : i32
    return %c0_i32, %c0_i32_0, %c0_i32_1 : i32, i32, i32
  }
  func.func @transform_5(%arg0: i32, %arg1: i32) -> (i32, i32, i32) {
    %c0_i32 = arith.constant 0 : i32
    %c0_i32_0 = arith.constant 0 : i32
    return %arg0, %arg1, %c0_i32 : i32, i32, i32
  }
}

</mosaic_0001>

<llo_original>
// kernel: basic_block_forward.9
$region0: #{basic_block_forward.9}
  #allocation0 [shape = 'u32[]', space=smem, size = 0x4, offset = 0x4, fixed_abs, tag = 'smem constant byte address 0x4 - core index']
  #allocation1 [shape = 'u32[144,128]{1,0:T(1,128)}', space=vmem, size = 0x12000, scoped, tag = 'internal scratch']
  %s0 = inlined_call_operand.hbm [shape: f32[512,64], index: 0, kind: input, shape index: {}]
  %s1 = inlined_call_operand.vmem [shape: f32[1,64], index: 1, kind: input, shape index: {}]
  %s2 = inlined_call_operand.vmem [shape: f32[512,64], index: 2, kind: output, shape index: {}]
  %s3 = sld [smem:[#allocation0]]
  $region22: #{basic_block_forward.9} parent=0
    _
  %s5 = ssub.s32 1, %s3
  %s6 = scalar_select 0, %s5, %s3
  $region1: #{basic_block_forward.9} parent=0
    #allocation2 [shape = 'u8[262144]{0}', space=vmem, size = 0x40000, scoped, tag = 'input window, operand 0, single buffered']
    #allocation3 [shape = 's32[1]{0}', space=sflag, size = 0x4, scoped, tag = 'scoped memory for basic_block_forward.9']
    %7 = vsyncpa [#allocation3], 0
    // Predicated region
    $region2: #{basic_block_forward.9} parent=1 // pred_check
      _
    $region3: #{basic_block_forward.9} parent=1 // pred_check_branch
      %9 = sbr.rel (0) target = $region5
    $region4: #{basic_block_forward.9} parent=1 // pred_region
      %s11 = ssub.s32 8192, 8192
      %12 = vsyncadd [#allocation3], %s11
      %s13 = sshll.u32 [#allocation2], 4
      %s14 = int_to_ptr.vmem [resolvable:$true] %s13
      %19 = dma.hbm_to_vmem [thread:$0]  %s0, 8192, %s14, [#allocation3], 128, 128, 8
    $region5: #{basic_block_forward.9} parent=1 // pred_fallthru
      _
    // Predicated region
    $region6: #{basic_block_forward.9} parent=1 // pred_check
      _
    $region7: #{basic_block_forward.9} parent=1 // pred_check_branch
      %21 = sbr.rel (0) target = $region9
    $region8: #{basic_block_forward.9} parent=1 // pred_region
      _
    $region9: #{basic_block_forward.9} parent=1 // pred_fallthru
      _
    // Predicated region
    $region10: #{basic_block_forward.9} parent=1 // pred_check
      _
    $region11: #{basic_block_forward.9} parent=1 // pred_check_branch
      %23 = sbr.rel (0) target = $region13
    $region12: #{basic_block_forward.9} parent=1 // pred_region
      %24 = dma.done [#allocation3], 8192
    $region13: #{basic_block_forward.9} parent=1 // pred_fallthru
      _
    %v25 = vld [vmem:[#allocation2] sm:$0xff]
    %v26 = vld [vmem:[#allocation2 + $0x8] sm:$0xff]
    %v27 = vld [vmem:[#allocation2 + $0x10] sm:$0xff]
    %v28 = vld [vmem:[#allocation2 + $0x18] sm:$0xff]
    %v29 = vld [vmem:[#allocation2 + $0x20] sm:$0xff]
    %v30 = vld [vmem:[#allocation2 + $0x28] sm:$0xff]
    %v31 = vld [vmem:[#allocation2 + $0x30] sm:$0xff]
    %v32 = vld [vmem:[#allocation2 + $0x38] sm:$0xff]
    %v33 = vld [vmem:[#allocation2 + $0x40] sm:$0xff]
    %v34 = vld [vmem:[#allocation2 + $0x48] sm:$0xff]
    %v35 = vld [vmem:[#allocation2 + $0x50] sm:$0xff]
    %v36 = vld [vmem:[#allocation2 + $0x58] sm:$0xff]
    %v37 = vld [vmem:[#allocation2 + $0x60] sm:$0xff]
    %v38 = vld [vmem:[#allocation2 + $0x68] sm:$0xff]
    %v39 = vld [vmem:[#allocation2 + $0x70] sm:$0xff]
    %v40 = vld [vmem:[#allocation2 + $0x78] sm:$0xff]
    %v41 = vld [vmem:[#allocation2 + $0x80] sm:$0xff]
    %v42 = vld [vmem:[#allocation2 + $0x88] sm:$0xff]
    %v43 = vld [vmem:[#allocation2 + $0x90] sm:$0xff]
    %v44 = vld [vmem:[#allocation2 + $0x98] sm:$0xff]
    %v45 = vld [vmem:[#allocation2 + $0xa0] sm:$0xff]
    %v46 = vld [vmem:[#allocation2 + $0xa8] sm:$0xff]
    %v47 = vld [vmem:[#allocation2 + $0xb0] sm:$0xff]
    %v48 = vld [vmem:[#allocation2 + $0xb8] sm:$0xff]
    %v49 = vld [vmem:[#allocation2 + $0xc0] sm:$0xff]
    %v50 = vld [vmem:[#allocation2 + $0xc8] sm:$0xff]
    %v51 = vld [vmem:[#allocation2 + $0xd0] sm:$0xff]
    %v52 = vld [vmem:[#allocation2 + $0xd8] sm:$0xff]
    %v53 = vld [vmem:[#allocation2 + $0xe0] sm:$0xff]
    %v54 = vld [vmem:[#allocation2 + $0xe8] sm:$0xff]
    %v55 = vld [vmem:[#allocation2 + $0xf0] sm:$0xff]
    %v56 = vld [vmem:[#allocation2 + $0xf8] sm:$0xff]
    %v57 = vld [vmem:[#allocation2 + $0x100] sm:$0xff]
    %v58 = vld [vmem:[#allocation2 + $0x108] sm:$0xff]
    %v59 = vld [vmem:[#allocation2 + $0x110] sm:$0xff]
    %v60 = vld [vmem:[#allocation2 + $0x118] sm:$0xff]
    %v61 = vld [vmem:[#allocation2 + $0x120] sm:$0xff]
    %v62 = vld [vmem:[#allocation2 + $0x128] sm:$0xff]
    %v63 = vld [vmem:[#allocation2 + $0x130] sm:$0xff]
    %v64 = vld [vmem:[#allocation2 + $0x138] sm:$0xff]
    %v65 = vld [vmem:[#allocation2 + $0x140] sm:$0xff]
    %v66 = vld [vmem:[#allocation2 + $0x148] sm:$0xff]
    %v67 = vld [vmem:[#allocation2 + $0x150] sm:$0xff]
    %v68 = vld [vmem:[#allocation2 + $0x158] sm:$0xff]
    %v69 = vld [vmem:[#allocation2 + $0x160] sm:$0xff]
    %v70 = vld [vmem:[#allocation2 + $0x168] sm:$0xff]
    %v71 = vld [vmem:[#allocation2 + $0x170] sm:$0xff]
    %v72 = vld [vmem:[#allocation2 + $0x178] sm:$0xff]
    %v73 = vld [vmem:[#allocation2 + $0x180] sm:$0xff]
    %v74 = vld [vmem:[#allocation2 + $0x188] sm:$0xff]
    %v75 = vld [vmem:[#allocation2 + $0x190] sm:$0xff]
    %v76 = vld [vmem:[#allocation2 + $0x198] sm:$0xff]
    %v77 = vld [vmem:[#allocation2 + $0x1a0] sm:$0xff]
    %v78 = vld [vmem:[#allocation2 + $0x1a8] sm:$0xff]
    %v79 = vld [vmem:[#allocation2 + $0x1b0] sm:$0xff]
    %v80 = vld [vmem:[#allocation2 + $0x1b8] sm:$0xff]
    %v81 = vld [vmem:[#allocation2 + $0x1c0] sm:$0xff]
    %v82 = vld [vmem:[#allocation2 + $0x1c8] sm:$0xff]
    %v83 = vld [vmem:[#allocation2 + $0x1d0] sm:$0xff]
    %v84 = vld [vmem:[#allocation2 + $0x1d8] sm:$0xff]
    %v85 = vld [vmem:[#allocation2 + $0x1e0] sm:$0xff]
    %v86 = vld [vmem:[#allocation2 + $0x1e8] sm:$0xff]
    %v87 = vld [vmem:[#allocation2 + $0x1f0] sm:$0xff]
    %v88 = vld [vmem:[#allocation2 + $0x1f8] sm:$0xff]
    %v89 = vld [vmem:[%s1] sm:$0x1]
    %v91 = vlaneseq
    %v92 = vshrl.u32 %v91, 7
    %v93 = vsub.s32 0, %v92
    %v94 = vrot.slane %v89, %v93
    %v96 = vadd.f32 %v25, %v94
    %v97 = vadd.f32 %v26, %v94
    %v98 = vadd.f32 %v27, %v94
    %v99 = vadd.f32 %v28, %v94
    %v100 = vadd.f32 %v29, %v94
    %v101 = vadd.f32 %v30, %v94
    %v102 = vadd.f32 %v31, %v94
    %v103 = vadd.f32 %v32, %v94
    %v104 = vadd.f32 %v33, %v94
    %v105 = vadd.f32 %v34, %v94
    %v106 = vadd.f32 %v35, %v94
    %v107 = vadd.f32 %v36, %v94
    %v108 = vadd.f32 %v37, %v94
    %v109 = vadd.f32 %v38, %v94
    %v110 = vadd.f32 %v39, %v94
    %v111 = vadd.f32 %v40, %v94
    %v112 = vadd.f32 %v41, %v94
    %v113 = vadd.f32 %v42, %v94
    %v114 = vadd.f32 %v43, %v94
    %v115 = vadd.f32 %v44, %v94
    %v116 = vadd.f32 %v45, %v94
    %v117 = vadd.f32 %v46, %v94
    %v118 = vadd.f32 %v47, %v94
    %v119 = vadd.f32 %v48, %v94
    %v120 = vadd.f32 %v49, %v94
    %v121 = vadd.f32 %v50, %v94
    %v122 = vadd.f32 %v51, %v94
    %v123 = vadd.f32 %v52, %v94
    %v124 = vadd.f32 %v53, %v94
    %v125 = vadd.f32 %v54, %v94
    %v126 = vadd.f32 %v55, %v94
    %v127 = vadd.f32 %v56, %v94
    %v128 = vadd.f32 %v57, %v94
    %v129 = vadd.f32 %v58, %v94
    %v130 = vadd.f32 %v59, %v94
    %v131 = vadd.f32 %v60, %v94
    %v132 = vadd.f32 %v61, %v94
    %v133 = vadd.f32 %v62, %v94
    %v134 = vadd.f32 %v63, %v94
    %v135 = vadd.f32 %v64, %v94
    %v136 = vadd.f32 %v65, %v94
    %v137 = vadd.f32 %v66, %v94
    %v138 = vadd.f32 %v67, %v94
    %v139 = vadd.f32 %v68, %v94
    %v140 = vadd.f32 %v69, %v94
    %v141 = vadd.f32 %v70, %v94
    %v142 = vadd.f32 %v71, %v94
    %v143 = vadd.f32 %v72, %v94
    %v144 = vadd.f32 %v73, %v94
    %v145 = vadd.f32 %v74, %v94
    %v146 = vadd.f32 %v75, %v94
    %v147 = vadd.f32 %v76, %v94
    %v148 = vadd.f32 %v77, %v94
    %v149 = vadd.f32 %v78, %v94
    %v150 = vadd.f32 %v79, %v94
    %v151 = vadd.f32 %v80, %v94
    %v152 = vadd.f32 %v81, %v94
    %v153 = vadd.f32 %v82, %v94
    %v154 = vadd.f32 %v83, %v94
    %v155 = vadd.f32 %v84, %v94
    %v156 = vadd.f32 %v85, %v94
    %v157 = vadd.f32 %v86, %v94
    %v158 = vadd.f32 %v87, %v94
    %v159 = vadd.f32 %v88, %v94
    %vm160 = vcmp.gt.f32.partialorder %v96, 0.0
    %vm161 = vcmp.gt.f32.partialorder %v97, 0.0
    %vm162 = vcmp.gt.f32.partialorder %v98, 0.0
    %vm163 = vcmp.gt.f32.partialorder %v99, 0.0
    %vm164 = vcmp.gt.f32.partialorder %v100, 0.0
    %vm165 = vcmp.gt.f32.partialorder %v101, 0.0
    %vm166 = vcmp.gt.f32.partialorder %v102, 0.0
    %vm167 = vcmp.gt.f32.partialorder %v103, 0.0
    %vm168 = vcmp.gt.f32.partialorder %v104, 0.0
    %vm169 = vcmp.gt.f32.partialorder %v105, 0.0
    %vm170 = vcmp.gt.f32.partialorder %v106, 0.0
    %vm171 = vcmp.gt.f32.partialorder %v107, 0.0
    %vm172 = vcmp.gt.f32.partialorder %v108, 0.0
    %vm173 = vcmp.gt.f32.partialorder %v109, 0.0
    %vm174 = vcmp.gt.f32.partialorder %v110, 0.0
    %vm175 = vcmp.gt.f32.partialorder %v111, 0.0
    %vm176 = vcmp.gt.f32.partialorder %v112, 0.0
    %vm177 = vcmp.gt.f32.partialorder %v113, 0.0
    %vm178 = vcmp.gt.f32.partialorder %v114, 0.0
    %vm179 = vcmp.gt.f32.partialorder %v115, 0.0
    %vm180 = vcmp.gt.f32.partialorder %v116, 0.0
    %vm181 = vcmp.gt.f32.partialorder %v117, 0.0
    %vm182 = vcmp.gt.f32.partialorder %v118, 0.0
    %vm183 = vcmp.gt.f32.partialorder %v119, 0.0
    %vm184 = vcmp.gt.f32.partialorder %v120, 0.0
    %vm185 = vcmp.gt.f32.partialorder %v121, 0.0
    %vm186 = vcmp.gt.f32.partialorder %v122, 0.0
    %vm187 = vcmp.gt.f32.partialorder %v123, 0.0
    %vm188 = vcmp.gt.f32.partialorder %v124, 0.0
    %vm189 = vcmp.gt.f32.partialorder %v125, 0.0
    %vm190 = vcmp.gt.f32.partialorder %v126, 0.0
    %vm191 = vcmp.gt.f32.partialorder %v127, 0.0
    %vm192 = vcmp.gt.f32.partialorder %v128, 0.0
    %vm193 = vcmp.gt.f32.partialorder %v129, 0.0
    %vm194 = vcmp.gt.f32.partialorder %v130, 0.0
    %vm195 = vcmp.gt.f32.partialorder %v131, 0.0
    %vm196 = vcmp.gt.f32.partialorder %v132, 0.0
    %vm197 = vcmp.gt.f32.partialorder %v133, 0.0
    %vm198 = vcmp.gt.f32.partialorder %v134, 0.0
    %vm199 = vcmp.gt.f32.partialorder %v135, 0.0
    %vm200 = vcmp.gt.f32.partialorder %v136, 0.0
    %vm201 = vcmp.gt.f32.partialorder %v137, 0.0
    %vm202 = vcmp.gt.f32.partialorder %v138, 0.0
    %vm203 = vcmp.gt.f32.partialorder %v139, 0.0
    %vm204 = vcmp.gt.f32.partialorder %v140, 0.0
    %vm205 = vcmp.gt.f32.partialorder %v141, 0.0
    %vm206 = vcmp.gt.f32.partialorder %v142, 0.0
    %vm207 = vcmp.gt.f32.partialorder %v143, 0.0
    %vm208 = vcmp.gt.f32.partialorder %v144, 0.0
    %vm209 = vcmp.gt.f32.partialorder %v145, 0.0
    %vm210 = vcmp.gt.f32.partialorder %v146, 0.0
    %vm211 = vcmp.gt.f32.partialorder %v147, 0.0
    %vm212 = vcmp.gt.f32.partialorder %v148, 0.0
    %vm213 = vcmp.gt.f32.partialorder %v149, 0.0
    %vm214 = vcmp.gt.f32.partialorder %v150, 0.0
    %vm215 = vcmp.gt.f32.partialorder %v151, 0.0
    %vm216 = vcmp.gt.f32.partialorder %v152, 0.0
    %vm217 = vcmp.gt.f32.partialorder %v153, 0.0
    %vm218 = vcmp.gt.f32.partialorder %v154, 0.0
    %vm219 = vcmp.gt.f32.partialorder %v155, 0.0
    %vm220 = vcmp.gt.f32.partialorder %v156, 0.0
    %vm221 = vcmp.gt.f32.partialorder %v157, 0.0
    %vm222 = vcmp.gt.f32.partialorder %v158, 0.0
    %vm223 = vcmp.gt.f32.partialorder %v159, 0.0
    %vm224 = vcmp.lt.f32.partialorder %v96, 0.0
    %vm225 = vcmp.lt.f32.partialorder %v97, 0.0
    %vm226 = vcmp.lt.f32.partialorder %v98, 0.0
    %vm227 = vcmp.lt.f32.partialorder %v99, 0.0
    %vm228 = vcmp.lt.f32.partialorder %v100, 0.0
    %vm229 = vcmp.lt.f32.partialorder %v101, 0.0
    %vm230 = vcmp.lt.f32.partialorder %v102, 0.0
    %vm231 = vcmp.lt.f32.partialorder %v103, 0.0
    %vm232 = vcmp.lt.f32.partialorder %v104, 0.0
    %vm233 = vcmp.lt.f32.partialorder %v105, 0.0
    %vm234 = vcmp.lt.f32.partialorder %v106, 0.0
    %vm235 = vcmp.lt.f32.partialorder %v107, 0.0
    %vm236 = vcmp.lt.f32.partialorder %v108, 0.0
    %vm237 = vcmp.lt.f32.partialorder %v109, 0.0
    %vm238 = vcmp.lt.f32.partialorder %v110, 0.0
    %vm239 = vcmp.lt.f32.partialorder %v111, 0.0
    %vm240 = vcmp.lt.f32.partialorder %v112, 0.0
    %vm241 = vcmp.lt.f32.partialorder %v113, 0.0
    %vm242 = vcmp.lt.f32.partialorder %v114, 0.0
    %vm243 = vcmp.lt.f32.partialorder %v115, 0.0
    %vm244 = vcmp.lt.f32.partialorder %v116, 0.0
    %vm245 = vcmp.lt.f32.partialorder %v117, 0.0
    %vm246 = vcmp.lt.f32.partialorder %v118, 0.0
    %vm247 = vcmp.lt.f32.partialorder %v119, 0.0
    %vm248 = vcmp.lt.f32.partialorder %v120, 0.0
    %vm249 = vcmp.lt.f32.partialorder %v121, 0.0
    %vm250 = vcmp.lt.f32.partialorder %v122, 0.0
    %vm251 = vcmp.lt.f32.partialorder %v123, 0.0
    %vm252 = vcmp.lt.f32.partialorder %v124, 0.0
    %vm253 = vcmp.lt.f32.partialorder %v125, 0.0
    %vm254 = vcmp.lt.f32.partialorder %v126, 0.0
    %vm255 = vcmp.lt.f32.partialorder %v127, 0.0
    %vm256 = vcmp.lt.f32.partialorder %v128, 0.0
    %vm257 = vcmp.lt.f32.partialorder %v129, 0.0
    %vm258 = vcmp.lt.f32.partialorder %v130, 0.0
    %vm259 = vcmp.lt.f32.partialorder %v131, 0.0
    %vm260 = vcmp.lt.f32.partialorder %v132, 0.0
    %vm261 = vcmp.lt.f32.partialorder %v133, 0.0
    %vm262 = vcmp.lt.f32.partialorder %v134, 0.0
    %vm263 = vcmp.lt.f32.partialorder %v135, 0.0
    %vm264 = vcmp.lt.f32.partialorder %v136, 0.0
    %vm265 = vcmp.lt.f32.partialorder %v137, 0.0
    %vm266 = vcmp.lt.f32.partialorder %v138, 0.0
    %vm267 = vcmp.lt.f32.partialorder %v139, 0.0
    %vm268 = vcmp.lt.f32.partialorder %v140, 0.0
    %vm269 = vcmp.lt.f32.partialorder %v141, 0.0
    %vm270 = vcmp.lt.f32.partialorder %v142, 0.0
    %vm271 = vcmp.lt.f32.partialorder %v143, 0.0
    %vm272 = vcmp.lt.f32.partialorder %v144, 0.0
    %vm273 = vcmp.lt.f32.partialorder %v145, 0.0
    %vm274 = vcmp.lt.f32.partialorder %v146, 0.0
    %vm275 = vcmp.lt.f32.partialorder %v147, 0.0
    %vm276 = vcmp.lt.f32.partialorder %v148, 0.0
    %vm277 = vcmp.lt.f32.partialorder %v149, 0.0
    %vm278 = vcmp.lt.f32.partialorder %v150, 0.0
    %vm279 = vcmp.lt.f32.partialorder %v151, 0.0
    %vm280 = vcmp.lt.f32.partialorder %v152, 0.0
    %vm281 = vcmp.lt.f32.partialorder %v153, 0.0
    %vm282 = vcmp.lt.f32.partialorder %v154, 0.0
    %vm283 = vcmp.lt.f32.partialorder %v155, 0.0
    %vm284 = vcmp.lt.f32.partialorder %v156, 0.0
    %vm285 = vcmp.lt.f32.partialorder %v157, 0.0
    %vm286 = vcmp.lt.f32.partialorder %v158, 0.0
    %vm287 = vcmp.lt.f32.partialorder %v159, 0.0
    %v288 = vsel %vm224, -1.0, 0.0
    %v289 = vsel %vm225, -1.0, 0.0
    %v290 = vsel %vm226, -1.0, 0.0
    %v291 = vsel %vm227, -1.0, 0.0
    %v292 = vsel %vm228, -1.0, 0.0
    %v293 = vsel %vm229, -1.0, 0.0
    %v294 = vsel %vm230, -1.0, 0.0
    %v295 = vsel %vm231, -1.0, 0.0
    %v296 = vsel %vm232, -1.0, 0.0
    %v297 = vsel %vm233, -1.0, 0.0
    %v298 = vsel %vm234, -1.0, 0.0
    %v299 = vsel %vm235, -1.0, 0.0
    %v300 = vsel %vm236, -1.0, 0.0
    %v301 = vsel %vm237, -1.0, 0.0
    %v302 = vsel %vm238, -1.0, 0.0
    %v303 = vsel %vm239, -1.0, 0.0
    %v304 = vsel %vm240, -1.0, 0.0
    %v305 = vsel %vm241, -1.0, 0.0
    %v306 = vsel %vm242, -1.0, 0.0
    %v307 = vsel %vm243, -1.0, 0.0
    %v308 = vsel %vm244, -1.0, 0.0
    %v309 = vsel %vm245, -1.0, 0.0
    %v310 = vsel %vm246, -1.0, 0.0
    %v311 = vsel %vm247, -1.0, 0.0
    %v312 = vsel %vm248, -1.0, 0.0
    %v313 = vsel %vm249, -1.0, 0.0
    %v314 = vsel %vm250, -1.0, 0.0
    %v315 = vsel %vm251, -1.0, 0.0
    %v316 = vsel %vm252, -1.0, 0.0
    %v317 = vsel %vm253, -1.0, 0.0
    %v318 = vsel %vm254, -1.0, 0.0
    %v319 = vsel %vm255, -1.0, 0.0
    %v320 = vsel %vm256, -1.0, 0.0
    %v321 = vsel %vm257, -1.0, 0.0
    %v322 = vsel %vm258, -1.0, 0.0
    %v323 = vsel %vm259, -1.0, 0.0
    %v324 = vsel %vm260, -1.0, 0.0
    %v325 = vsel %vm261, -1.0, 0.0
    %v326 = vsel %vm262, -1.0, 0.0
    %v327 = vsel %vm263, -1.0, 0.0
    %v328 = vsel %vm264, -1.0, 0.0
    %v329 = vsel %vm265, -1.0, 0.0
    %v330 = vsel %vm266, -1.0, 0.0
    %v331 = vsel %vm267, -1.0, 0.0
    %v332 = vsel %vm268, -1.0, 0.0
    %v333 = vsel %vm269, -1.0, 0.0
    %v334 = vsel %vm270, -1.0, 0.0
    %v335 = vsel %vm271, -1.0, 0.0
    %v336 = vsel %vm272, -1.0, 0.0
    %v337 = vsel %vm273, -1.0, 0.0
    %v338 = vsel %vm274, -1.0, 0.0
    %v339 = vsel %vm275, -1.0, 0.0
    %v340 = vsel %vm276, -1.0, 0.0
    %v341 = vsel %vm277, -1.0, 0.0
    %v342 = vsel %vm278, -1.0, 0.0
    %v343 = vsel %vm279, -1.0, 0.0
    %v344 = vsel %vm280, -1.0, 0.0
    %v345 = vsel %vm281, -1.0, 0.0
    %v346 = vsel %vm282, -1.0, 0.0
    %v347 = vsel %vm283, -1.0, 0.0
    %v348 = vsel %vm284, -1.0, 0.0
    %v349 = vsel %vm285, -1.0, 0.0
    %v350 = vsel %vm286, -1.0, 0.0
    %v351 = vsel %vm287, -1.0, 0.0
    %v352 = vsel %vm160, 1.0, %v288
    %v353 = vsel %vm161, 1.0, %v289
    %v354 = vsel %vm162, 1.0, %v290
    %v355 = vsel %vm163, 1.0, %v291
    %v356 = vsel %vm164, 1.0, %v292
    %v357 = vsel %vm165, 1.0, %v293
    %v358 = vsel %vm166, 1.0, %v294
    %v359 = vsel %vm167, 1.0, %v295
    %v360 = vsel %vm168, 1.0, %v296
    %v361 = vsel %vm169, 1.0, %v297
    %v362 = vsel %vm170, 1.0, %v298
    %v363 = vsel %vm171, 1.0, %v299
    %v364 = vsel %vm172, 1.0, %v300
    %v365 = vsel %vm173, 1.0, %v301
    %v366 = vsel %vm174, 1.0, %v302
    %v367 = vsel %vm175, 1.0, %v303
    %v368 = vsel %vm176, 1.0, %v304
    %v369 = vsel %vm177, 1.0, %v305
    %v370 = vsel %vm178, 1.0, %v306
    %v371 = vsel %vm179, 1.0, %v307
    %v372 = vsel %vm180, 1.0, %v308
    %v373 = vsel %vm181, 1.0, %v309
    %v374 = vsel %vm182, 1.0, %v310
    %v375 = vsel %vm183, 1.0, %v311
    %v376 = vsel %vm184, 1.0, %v312
    %v377 = vsel %vm185, 1.0, %v313
    %v378 = vsel %vm186, 1.0, %v314
    %v379 = vsel %vm187, 1.0, %v315
    %v380 = vsel %vm188, 1.0, %v316
    %v381 = vsel %vm189, 1.0, %v317
    %v382 = vsel %vm190, 1.0, %v318
    %v383 = vsel %vm191, 1.0, %v319
    %v384 = vsel %vm192, 1.0, %v320
    %v385 = vsel %vm193, 1.0, %v321
    %v386 = vsel %vm194, 1.0, %v322
    %v387 = vsel %vm195, 1.0, %v323
    %v388 = vsel %vm196, 1.0, %v324
    %v389 = vsel %vm197, 1.0, %v325
    %v390 = vsel %vm198, 1.0, %v326
    %v391 = vsel %vm199, 1.0, %v327
    %v392 = vsel %vm200, 1.0, %v328
    %v393 = vsel %vm201, 1.0, %v329
    %v394 = vsel %vm202, 1.0, %v330
    %v395 = vsel %vm203, 1.0, %v331
    %v396 = vsel %vm204, 1.0, %v332
    %v397 = vsel %vm205, 1.0, %v333
    %v398 = vsel %vm206, 1.0, %v334
    %v399 = vsel %vm207, 1.0, %v335
    %v400 = vsel %vm208, 1.0, %v336
    %v401 = vsel %vm209, 1.0, %v337
    %v402 = vsel %vm210, 1.0, %v338
    %v403 = vsel %vm211, 1.0, %v339
    %v404 = vsel %vm212, 1.0, %v340
    %v405 = vsel %vm213, 1.0, %v341
    %v406 = vsel %vm214, 1.0, %v342
    %v407 = vsel %vm215, 1.0, %v343
    %v408 = vsel %vm216, 1.0, %v344
    %v409 = vsel %vm217, 1.0, %v345
    %v410 = vsel %vm218, 1.0, %v346
    %v411 = vsel %vm219, 1.0, %v347
    %v412 = vsel %vm220, 1.0, %v348
    %v413 = vsel %vm221, 1.0, %v349
    %v414 = vsel %vm222, 1.0, %v350
    %v415 = vsel %vm223, 1.0, %v351
    %vm416 = vcmask 523264
    %417 = vst.msk [vmem:[%s2] sm:$0xff] %vm416, %v352
    %418 = vst.msk [vmem:[%s2 + $0x8] sm:$0xff] %vm416, %v353
    %419 = vst.msk [vmem:[%s2 + $0x10] sm:$0xff] %vm416, %v354
    %420 = vst.msk [vmem:[%s2 + $0x18] sm:$0xff] %vm416, %v355
    %421 = vst.msk [vmem:[%s2 + $0x20] sm:$0xff] %vm416, %v356
    %422 = vst.msk [vmem:[%s2 + $0x28] sm:$0xff] %vm416, %v357
    %423 = vst.msk [vmem:[%s2 + $0x30] sm:$0xff] %vm416, %v358
    %424 = vst.msk [vmem:[%s2 + $0x38] sm:$0xff] %vm416, %v359
    %425 = vst.msk [vmem:[%s2 + $0x40] sm:$0xff] %vm416, %v360
    %426 = vst.msk [vmem:[%s2 + $0x48] sm:$0xff] %vm416, %v361
    %427 = vst.msk [vmem:[%s2 + $0x50] sm:$0xff] %vm416, %v362
    %428 = vst.msk [vmem:[%s2 + $0x58] sm:$0xff] %vm416, %v363
    %429 = vst.msk [vmem:[%s2 + $0x60] sm:$0xff] %vm416, %v364
    %430 = vst.msk [vmem:[%s2 + $0x68] sm:$0xff] %vm416, %v365
    %431 = vst.msk [vmem:[%s2 + $0x70] sm:$0xff] %vm416, %v366
    %432 = vst.msk [vmem:[%s2 + $0x78] sm:$0xff] %vm416, %v367
    %433 = vst.msk [vmem:[%s2 + $0x80] sm:$0xff] %vm416, %v368
    %434 = vst.msk [vmem:[%s2 + $0x88] sm:$0xff] %vm416, %v369
    %435 = vst.msk [vmem:[%s2 + $0x90] sm:$0xff] %vm416, %v370
    %436 = vst.msk [vmem:[%s2 + $0x98] sm:$0xff] %vm416, %v371
    %437 = vst.msk [vmem:[%s2 + $0xa0] sm:$0xff] %vm416, %v372
    %438 = vst.msk [vmem:[%s2 + $0xa8] sm:$0xff] %vm416, %v373
    %439 = vst.msk [vmem:[%s2 + $0xb0] sm:$0xff] %vm416, %v374
    %440 = vst.msk [vmem:[%s2 + $0xb8] sm:$0xff] %vm416, %v375
    %441 = vst.msk [vmem:[%s2 + $0xc0] sm:$0xff] %vm416, %v376
    %442 = vst.msk [vmem:[%s2 + $0xc8] sm:$0xff] %vm416, %v377
    %443 = vst.msk [vmem:[%s2 + $0xd0] sm:$0xff] %vm416, %v378
    %444 = vst.msk [vmem:[%s2 + $0xd8] sm:$0xff] %vm416, %v379
    %445 = vst.msk [vmem:[%s2 + $0xe0] sm:$0xff] %vm416, %v380
    %446 = vst.msk [vmem:[%s2 + $0xe8] sm:$0xff] %vm416, %v381
    %447 = vst.msk [vmem:[%s2 + $0xf0] sm:$0xff] %vm416, %v382
    %448 = vst.msk [vmem:[%s2 + $0xf8] sm:$0xff] %vm416, %v383
    %449 = vst.msk [vmem:[%s2 + $0x100] sm:$0xff] %vm416, %v384
    %450 = vst.msk [vmem:[%s2 + $0x108] sm:$0xff] %vm416, %v385
    %451 = vst.msk [vmem:[%s2 + $0x110] sm:$0xff] %vm416, %v386
    %452 = vst.msk [vmem:[%s2 + $0x118] sm:$0xff] %vm416, %v387
    %453 = vst.msk [vmem:[%s2 + $0x120] sm:$0xff] %vm416, %v388
    %454 = vst.msk [vmem:[%s2 + $0x128] sm:$0xff] %vm416, %v389
    %455 = vst.msk [vmem:[%s2 + $0x130] sm:$0xff] %vm416, %v390
    %456 = vst.msk [vmem:[%s2 + $0x138] sm:$0xff] %vm416, %v391
    %457 = vst.msk [vmem:[%s2 + $0x140] sm:$0xff] %vm416, %v392
    %458 = vst.msk [vmem:[%s2 + $0x148] sm:$0xff] %vm416, %v393
    %459 = vst.msk [vmem:[%s2 + $0x150] sm:$0xff] %vm416, %v394
    %460 = vst.msk [vmem:[%s2 + $0x158] sm:$0xff] %vm416, %v395
    %461 = vst.msk [vmem:[%s2 + $0x160] sm:$0xff] %vm416, %v396
    %462 = vst.msk [vmem:[%s2 + $0x168] sm:$0xff] %vm416, %v397
    %463 = vst.msk [vmem:[%s2 + $0x170] sm:$0xff] %vm416, %v398
    %464 = vst.msk [vmem:[%s2 + $0x178] sm:$0xff] %vm416, %v399
    %465 = vst.msk [vmem:[%s2 + $0x180] sm:$0xff] %vm416, %v400
    %466 = vst.msk [vmem:[%s2 + $0x188] sm:$0xff] %vm416, %v401
    %467 = vst.msk [vmem:[%s2 + $0x190] sm:$0xff] %vm416, %v402
    %468 = vst.msk [vmem:[%s2 + $0x198] sm:$0xff] %vm416, %v403
    %469 = vst.msk [vmem:[%s2 + $0x1a0] sm:$0xff] %vm416, %v404
    %470 = vst.msk [vmem:[%s2 + $0x1a8] sm:$0xff] %vm416, %v405
    %471 = vst.msk [vmem:[%s2 + $0x1b0] sm:$0xff] %vm416, %v406
    %472 = vst.msk [vmem:[%s2 + $0x1b8] sm:$0xff] %vm416, %v407
    %473 = vst.msk [vmem:[%s2 + $0x1c0] sm:$0xff] %vm416, %v408
    %474 = vst.msk [vmem:[%s2 + $0x1c8] sm:$0xff] %vm416, %v409
    %475 = vst.msk [vmem:[%s2 + $0x1d0] sm:$0xff] %vm416, %v410
    %476 = vst.msk [vmem:[%s2 + $0x1d8] sm:$0xff] %vm416, %v411
    %477 = vst.msk [vmem:[%s2 + $0x1e0] sm:$0xff] %vm416, %v412
    %478 = vst.msk [vmem:[%s2 + $0x1e8] sm:$0xff] %vm416, %v413
    %479 = vst.msk [vmem:[%s2 + $0x1f0] sm:$0xff] %vm416, %v414
    %480 = vst.msk [vmem:[%s2 + $0x1f8] sm:$0xff] %vm416, %v415
    // Predicated region
    $region14: #{basic_block_forward.9} parent=1 // pred_check
      _
    $region15: #{basic_block_forward.9} parent=1 // pred_check_branch
      %482 = sbr.rel (0) target = $region17
    $region16: #{basic_block_forward.9} parent=1 // pred_region
      _
    $region17: #{basic_block_forward.9} parent=1 // pred_fallthru
      _
    // Predicated region
    $region18: #{basic_block_forward.9} parent=1 // pred_check
      _
    $region19: #{basic_block_forward.9} parent=1 // pred_check_branch
      %484 = sbr.rel (0) target = $region21
    $region20: #{basic_block_forward.9} parent=1 // pred_region
      _
    $region21: #{basic_block_forward.9} parent=1 // pred_fallthru
      _
    %485 = vsyncpa [#allocation3], 1

// kernel: basic_block_forward.10
$region0: #{basic_block_forward.10}
  #allocation0 [shape = 'u32[]', space=smem, size = 0x4, offset = 0x4, fixed_abs, tag = 'smem constant byte address 0x4 - core index']
  #allocation1 [shape = 'u32[144,128]{1,0:T(1,128)}', space=vmem, size = 0x12000, scoped, tag = 'internal scratch']
  %s0 = inlined_call_operand.vmem [shape: f32[2,18,18,64], index: 0, kind: input, shape index: {}]
  %s1 = inlined_call_operand.vmem [shape: f32[9,64,64], index: 1, kind: input, shape index: {}]
  %s2 = inlined_call_operand.vmem [shape: f32[2,16,16,64], index: 2, kind: output, shape index: {}]
  %s3 = sld [smem:[#allocation0]]
  $region41: #{basic_block_forward.10} parent=0
    _
  %s5 = ssub.s32 1, %s3
  %s6 = scalar_select 0, %s5, %s3
  loop: start=0, step=1, limit=34
  $region2: #{basic_block_forward.10} parent=0 // loop_pre_header
    _
  $region3: #{basic_block_forward.10} parent=0 // loop_header
    %s8 = sphi 0, %s12
    %p9 = scmp.ge.s32.totalorder %s8, 34
    %s15 = sphi 0, %s27
    %s16 = sphi 0, %s23
    %s17 = sphi 0, %s15
    %s18 = sphi 0, %s16
    %s19 = sphi 0, %s17
    %s20 = sphi 0, %s18
    %s28 = sphi 0, %s28
    %s30 = sphi 0, %s28
    %s31 = sphi 0, %s30
    %s45 = sphi 0, %s31
    %s49 = sphi 0, %s49
    %s51 = sphi 0, %s49
    %s52 = sphi 0, %s51
    %s66 = sphi 0, %s52
    %s74 = sphi 0, %s76
    %s77 = sphi 0, %s74
    %s78 = sphi 0, %s77
    %s94 = sphi 0, %s78
  $region4: #{basic_block_forward.10} parent=0 // loop_header_branch
    %11 = sbr.rel (%p9) target = $region8
  $region5: #{basic_block_forward.10} parent=0 // loop_body
    %s13 = ssub.s32 %s8, 1
    %s14 = ssub.s32 %s8, 2
    %s21 = sadd.s32 1, %s16
    %p22 = scmp.ge.s32.totalorder %s21, 16
    %s23 = scalar_select %p22, 0, %s21
    %s24 = sadd.s32 1, %s15
    %s25 = scalar_select %p22, %s24, %s15
    %p26 = scmp.ge.s32.totalorder %s25, 2
    %s27 = scalar_select %p26, 0, %s25
    %s29 = sadd.s32 %s28, 1
    %p32 = scmp.eq.s32.totalorder %s8, 31
    %p33 = scmp.ne.s32.totalorder %s28, %s30
    %p34 = scmp.eq.s32.totalorder %s8, 0
    %p35 = por %p33, %p34
    %p36 = scmp.ne.s32.totalorder %s28, %s30
    %p37 = scmp.eq.s32.totalorder %s13, 31
    %p38 = por %p36, %p37
    %p39 = scmp.ne.s32.totalorder %s30, %s31
    %p40 = scmp.eq.s32.totalorder %s13, 0
    %p41 = por %p39, %p40
    %p42 = scmp.ne.s32.totalorder %s30, %s31
    %p43 = scmp.eq.s32.totalorder %s14, 31
    %p44 = por %p42, %p43
    %p46 = scmp.ne.s32.totalorder %s31, %s45
    %p47 = scmp.eq.s32.totalorder %s14, 0
    %p48 = por %p46, %p47
    %s50 = sadd.s32 %s49, 1
    %p53 = scmp.eq.s32.totalorder %s8, 31
    %p54 = scmp.ne.s32.totalorder %s49, %s51
    %p55 = scmp.eq.s32.totalorder %s8, 0
    %p56 = por %p54, %p55
    %p57 = scmp.ne.s32.totalorder %s49, %s51
    %p58 = scmp.eq.s32.totalorder %s13, 31
    %p59 = por %p57, %p58
    %p60 = scmp.ne.s32.totalorder %s51, %s52
    %p61 = scmp.eq.s32.totalorder %s13, 0
    %p62 = por %p60, %p61
    %p63 = scmp.ne.s32.totalorder %s51, %s52
    %p64 = scmp.eq.s32.totalorder %s14, 31
    %p65 = por %p63, %p64
    %p67 = scmp.ne.s32.totalorder %s52, %s66
    %p68 = scmp.eq.s32.totalorder %s14, 0
    %p69 = por %p67, %p68
    %s70 = ssub.s32 %s15, %s27
    %s71 = ssub.s32 %s16, %s23
    %s72 = sor.u32 %s70, %s71
    %p73 = scmp.eq.s32.totalorder %s72, 0
    %s75 = sadd.s32 %s74, 1
    %s76 = scalar_select %p73, %s74, %s75
    %p79 = pneg %p73
    %p80 = scmp.eq.s32.totalorder %s8, 31
    %p81 = por %p79, %p80
    %p82 = scmp.ne.s32.totalorder %s74, %s77
    %p83 = scmp.eq.s32.totalorder %s8, 0
    %p84 = por %p82, %p83
    %p85 = scmp.ne.s32.totalorder %s74, %s77
    %p86 = scmp.eq.s32.totalorder %s13, 31
    %p87 = por %p85, %p86
    %p88 = scmp.ne.s32.totalorder %s77, %s78
    %p89 = scmp.eq.s32.totalorder %s13, 0
    %p90 = por %p88, %p89
    %p91 = scmp.ne.s32.totalorder %s77, %s78
    %p92 = scmp.eq.s32.totalorder %s14, 31
    %p93 = por %p91, %p92
    %p95 = scmp.ne.s32.totalorder %s78, %s94
    %p96 = scmp.eq.s32.totalorder %s14, 0
    %p97 = por %p95, %p96
    %p98 = scmp.le.s32.totalorder 1, %s8
    %p99 = scmp.lt.s32.totalorder %s8, 33
    %p100 = pnand %p98, %p99
    %p101 = pneg %p100
    // Predicated region
    $region9: #{basic_block_forward.10} parent=5 // pred_check
      _
    $region10: #{basic_block_forward.10} parent=5 // pred_check_branch
      %103 = sbr.rel (%p100) target = $region12
    $region11: #{basic_block_forward.10} parent=5 // pred_region
      %s104 = ssub.s32 %s8, 1
      // Predicated region
      $region13: #{basic_block_forward.10} parent=11 // pred_check
        %p105 = pneg %p41
      $region14: #{basic_block_forward.10} parent=11 // pred_check_branch
        %107 = sbr.rel (%p105) target = $region16
      $region15: #{basic_block_forward.10} parent=11 // pred_region
        _
      $region16: #{basic_block_forward.10} parent=11 // pred_fallthru
        _
      // Predicated region
      $region17: #{basic_block_forward.10} parent=11 // pred_check
        %p108 = pneg %p62
      $region18: #{basic_block_forward.10} parent=11 // pred_check_branch
        %110 = sbr.rel (%p108) target = $region20
      $region19: #{basic_block_forward.10} parent=11 // pred_region
        _
      $region20: #{basic_block_forward.10} parent=11 // pred_fallthru
        _
    $region12: #{basic_block_forward.10} parent=5 // pred_fallthru
      _
    %p111 = scmp.lt.s32.totalorder %s8, 32
    // Predicated region
    $region21: #{basic_block_forward.10} parent=5 // pred_check
      %p112 = pneg %p111
    $region22: #{basic_block_forward.10} parent=5 // pred_check_branch
      %114 = sbr.rel (%p112) target = $region24
    $region23: #{basic_block_forward.10} parent=5 // pred_region
      _
    $region24: #{basic_block_forward.10} parent=5 // pred_fallthru
      _
    %p115 = scmp.le.s32.totalorder 1, %s8
    %p116 = scmp.lt.s32.totalorder %s8, 33
    %p117 = pnand %p115, %p116
    %p118 = pneg %p117
    // Predicated region
    $region25: #{basic_block_forward.10} parent=5 // pred_check
      _
    $region26: #{basic_block_forward.10} parent=5 // pred_check_branch
      %120 = sbr.rel (%p117) target = $region28
    $region27: #{basic_block_forward.10} parent=5 // pred_region
      %s121 = ssub.s32 %s8, 1
      %p122 = pneg %p41
      %p123 = pneg %p38
      %p124 = pneg %p62
      %p125 = pneg %p59
      %p126 = pneg %p90
      %p127 = pneg %p87
      %p128 = scmp.lt.s32.totalorder %s17, 1
      %s129 = scalar_select %p128, %s17, 1
      %p130 = scmp.lt.s32.totalorder %s18, 15
      %s131 = scalar_select %p130, %s18, 15
      %s132 = smul.addr %s131, 2
      %s133 = smul.addr %s129, 32
      %s134 = sadd.s32 %s132, %s133
      %s135 = smul.addr %s134, 8
      %s136 = scalar_lea.vmem %s2, %s135
      %p137 = scmp.lt.s32.totalorder %s17, 1
      %s138 = scalar_select %p137, %s17, 1
      %p139 = scmp.lt.s32.totalorder %s18, 15
      %s140 = scalar_select %p139, %s18, 15
      %s141 = smul.addr %s140, 2
      %s142 = smul.addr %s138, 32
      %s143 = sadd.s32 %s141, %s142
      %s144 = smul.addr %s143, 8
      %s145 = scalar_lea.vmem %s2, %s144
      %s146 = smul.u32 %s18, 24
      %s147 = smul.u32 %s17, 432
      %s148 = sadd.s32 %s146, %s147
      %s149 = scalar_lea.vmem %s0, %s148
      %v150 = vld [vmem:[%s149] sm:$0xff]
      %v151 = vld [vmem:[%s149 + $0x8] sm:$0xff]
      %v152 = vld [vmem:[%s1] sm:$0xff]
      %v153 = vld [vmem:[%s1 + $0x8] sm:$0xff]
      %v154 = vld [vmem:[%s1 + $0x10] sm:$0xff]
      %v155 = vld [vmem:[%s1 + $0x18] sm:$0xff]
      %v156 = vld [vmem:[%s1 + $0x20] sm:$0xff]
      %v157 = vld [vmem:[%s1 + $0x28] sm:$0xff]
      %v158 = vld [vmem:[%s1 + $0x30] sm:$0xff]
      %v159 = vld [vmem:[%s1 + $0x38] sm:$0xff]
      %v160 = vmax.f32 %v152, -1.0
      %v161 = vmax.f32 %v153, -1.0
      %v162 = vmax.f32 %v154, -1.0
      %v163 = vmax.f32 %v155, -1.0
      %v164 = vmax.f32 %v156, -1.0
      %v165 = vmax.f32 %v157, -1.0
      %v166 = vmax.f32 %v158, -1.0
      %v167 = vmax.f32 %v159, -1.0
      %v168 = vmin.f32 %v160, 1.0
      %v169 = vmin.f32 %v161, 1.0
      %v170 = vmin.f32 %v162, 1.0
      %v171 = vmin.f32 %v163, 1.0
      %v172 = vmin.f32 %v164, 1.0
      %v173 = vmin.f32 %v165, 1.0
      %v174 = vmin.f32 %v166, 1.0
      %v175 = vmin.f32 %v167, 1.0
      %v176 = vld [vmem:[%s149 + $0x1] sm:$0xff]
      %v177 = vld [vmem:[%s149 + $0x9] sm:$0xff]
      %s178 = scalar_lea.vmem %s1, 64
      %v179 = vld [vmem:[%s178] sm:$0xff]
      %v180 = vld [vmem:[%s178 + $0x8] sm:$0xff]
      %v181 = vld [vmem:[%s178 + $0x10] sm:$0xff]
      %v182 = vld [vmem:[%s178 + $0x18] sm:$0xff]
      %v183 = vld [vmem:[%s178 + $0x20] sm:$0xff]
      %v184 = vld [vmem:[%s178 + $0x28] sm:$0xff]
      %v185 = vld [vmem:[%s178 + $0x30] sm:$0xff]
      %v186 = vld [vmem:[%s178 + $0x38] sm:$0xff]
      %v187 = vmax.f32 %v179, -1.0
      %v188 = vmax.f32 %v180, -1.0
      %v189 = vmax.f32 %v181, -1.0
      %v190 = vmax.f32 %v182, -1.0
      %v191 = vmax.f32 %v183, -1.0
      %v192 = vmax.f32 %v184, -1.0
      %v193 = vmax.f32 %v185, -1.0
      %v194 = vmax.f32 %v186, -1.0
      %v195 = vmin.f32 %v187, 1.0
      %v196 = vmin.f32 %v188, 1.0
      %v197 = vmin.f32 %v189, 1.0
      %v198 = vmin.f32 %v190, 1.0
      %v199 = vmin.f32 %v191, 1.0
      %v200 = vmin.f32 %v192, 1.0
      %v201 = vmin.f32 %v193, 1.0
      %v202 = vmin.f32 %v194, 1.0
      %vm203 = vcmask 523264
      %v205 = vsel %vm203, %v176, 0
      %v208 = vsel %vm203, %v177, 0
      %210 = vmatprep.subr.mxu0 0.0
      %211 = vmatpush1.msra.mxu0 %v195
      %212 = vmatprep.subr.mxu0 0.0
      %213 = vmatpush1.msra.mxu0 %v196
      %214 = vmatprep.subr.mxu0 0.0
      %215 = vmatpush1.msra.mxu0 %v197
      %216 = vmatprep.subr.mxu0 0.0
      %217 = vmatpush1.msra.mxu0 %v198
      %218 = vmatprep.subr.mxu0 0.0
      %219 = vmatpush1.msra.mxu0 %v199
      %220 = vmatprep.subr.mxu0 0.0
      %221 = vmatpush1.msra.mxu0 %v200
      %222 = vmatprep.subr.mxu0 0.0
      %223 = vmatpush1.msra.mxu0 %v201
      %224 = vmatprep.subr.mxu0 0.0
      %225 = vmatpush1.msra.mxu0 %v202
      %226 = vmatprep.subr.mxu0 0.0
      %227 = vmatpush1.msra.mxu0 0.0
      %228 = vmatprep.subr.mxu0 0.0
      %229 = vmatpush1.msra.mxu0 0.0
      %230 = vmatprep.subr.mxu0 0.0
      %231 = vmatpush1.msra.mxu0 0.0
      %232 = vmatprep.subr.mxu0 0.0
      %233 = vmatpush1.msra.mxu0 0.0
      %234 = vmatprep.subr.mxu0 0.0
      %235 = vmatpush1.msra.mxu0 0.0
      %236 = vmatprep.subr.mxu0 0.0
      %237 = vmatpush1.msra.mxu0 0.0
      %238 = vmatprep.subr.mxu0 0.0
      %239 = vmatpush1.msra.mxu0 0.0
      %240 = vmatprep.subr.mxu0 0.0
      %241 = vmatpush1.msra.mxu0 0.0
      %242 = vmatprep.subr.mxu0 0.0
      %243 = vmatpush1.msra.mxu0 0.0
      %244 = vmatprep.subr.mxu0 0.0
      %245 = vmatpush1.msra.mxu0 0.0
      %246 = vmatprep.subr.mxu0 0.0
      %247 = vmatpush1.msra.mxu0 0.0
      %248 = vmatprep.subr.mxu0 0.0
      %249 = vmatpush1.msra.mxu0 0.0
      %250 = vmatprep.subr.mxu0 0.0
      %251 = vmatpush1.msra.mxu0 0.0
      %252 = vmatprep.subr.mxu0 0.0
      %253 = vmatpush1.msra.mxu0 0.0
      %254 = vmatprep.subr.mxu0 0.0
      %255 = vmatpush1.msra.mxu0 0.0
      %256 = vmatprep.subr.mxu0 0.0
      %257 = vmatpush1.msra.mxu0 0.0
      %258 = vmatprep.subr.mxu0 0.0
      %259 = vmatpush1.msra.mxu0 0.0
      %260 = vmatprep.subr.mxu0 0.0
      %261 = vmatpush1.msra.mxu0 0.0
      %262 = vmatprep.subr.mxu0 0.0
      %263 = vmatpush1.msra.mxu0 0.0
      %264 = vmatprep.subr.mxu0 0.0
      %265 = vmatpush1.msra.mxu0 0.0
      %266 = vmatprep.subr.mxu0 0.0
      %267 = vmatpush1.msra.mxu0 0.0
      %268 = vmatprep.subr.mxu0 0.0
      %269 = vmatpush1.msra.mxu0 0.0
      %270 = vmatprep.subr.mxu0 0.0
      %271 = vmatpush1.msra.mxu0 0.0
      %272 = vmatprep.subr.mxu0 0.0
      %273 = vmatpush1.msra.mxu0 0.0
      %274 = vmatprep.mubr.f32.mxu0 0.0
      %275 = vmatmul.mubr.f32.gmra.mrb[0].mxu0 %v205
      %v276 = vpop.f32.mrb[0].mxu0
      %v277 = vadd.f32 0.0, %v276
      %v278 = vpop.f32.mrb[0].mxu0
      %279 = vmatprep.mubr.f32.mxu0 0.0
      %280 = vmatmul.mubr.f32.gmra.mrb[0].mxu0 %v208
      %v281 = vpop.f32.mrb[0].mxu0
      %v282 = vadd.f32 0.0, %v281
      %v283 = vpop.f32.mrb[0].mxu0
      %284 = vdwg.mxu0
      %v286 = vsel %vm203, %v150, 0
      %v289 = vsel %vm203, %v151, 0
      %291 = vmatprep.subr.mxu0 0.0
      %292 = vmatpush1.msra.mxu0 %v168
      %293 = vmatprep.subr.mxu0 0.0
      %294 = vmatpush1.msra.mxu0 %v169
      %295 = vmatprep.subr.mxu0 0.0
      %296 = vmatpush1.msra.mxu0 %v170
      %297 = vmatprep.subr.mxu0 0.0
      %298 = vmatpush1.msra.mxu0 %v171
      %299 = vmatprep.subr.mxu0 0.0
      %300 = vmatpush1.msra.mxu0 %v172
      %301 = vmatprep.subr.mxu0 0.0
      %302 = vmatpush1.msra.mxu0 %v173
      %303 = vmatprep.subr.mxu0 0.0
      %304 = vmatpush1.msra.mxu0 %v174
      %305 = vmatprep.subr.mxu0 0.0
      %306 = vmatpush1.msra.mxu0 %v175
      %307 = vmatprep.subr.mxu0 0.0
      %308 = vmatpush1.msra.mxu0 0.0
      %309 = vmatprep.subr.mxu0 0.0
      %310 = vmatpush1.msra.mxu0 0.0
      %311 = vmatprep.subr.mxu0 0.0
      %312 = vmatpush1.msra.mxu0 0.0
      %313 = vmatprep.subr.mxu0 0.0
      %314 = vmatpush1.msra.mxu0 0.0
      %315 = vmatprep.subr.mxu0 0.0
      %316 = vmatpush1.msra.mxu0 0.0
      %317 = vmatprep.subr.mxu0 0.0
      %318 = vmatpush1.msra.mxu0 0.0
      %319 = vmatprep.subr.mxu0 0.0
      %320 = vmatpush1.msra.mxu0 0.0
      %321 = vmatprep.subr.mxu0 0.0
      %322 = vmatpush1.msra.mxu0 0.0
      %323 = vmatprep.subr.mxu0 0.0
      %324 = vmatpush1.msra.mxu0 0.0
      %325 = vmatprep.subr.mxu0 0.0
      %326 = vmatpush1.msra.mxu0 0.0
      %327 = vmatprep.subr.mxu0 0.0
      %328 = vmatpush1.msra.mxu0 0.0
      %329 = vmatprep.subr.mxu0 0.0
      %330 = vmatpush1.msra.mxu0 0.0
      %331 = vmatprep.subr.mxu0 0.0
      %332 = vmatpush1.msra.mxu0 0.0
      %333 = vmatprep.subr.mxu0 0.0
      %334 = vmatpush1.msra.mxu0 0.0
      %335 = vmatprep.subr.mxu0 0.0
      %336 = vmatpush1.msra.mxu0 0.0
      %337 = vmatprep.subr.mxu0 0.0
      %338 = vmatpush1.msra.mxu0 0.0
      %339 = vmatprep.subr.mxu0 0.0
      %340 = vmatpush1.msra.mxu0 0.0
      %341 = vmatprep.subr.mxu0 0.0
      %342 = vmatpush1.msra.mxu0 0.0
      %343 = vmatprep.subr.mxu0 0.0
      %344 = vmatpush1.msra.mxu0 0.0
      %345 = vmatprep.subr.mxu0 0.0
      %346 = vmatpush1.msra.mxu0 0.0
      %347 = vmatprep.subr.mxu0 0.0
      %348 = vmatpush1.msra.mxu0 0.0
      %349 = vmatprep.subr.mxu0 0.0
      %350 = vmatpush1.msra.mxu0 0.0
      %351 = vmatprep.subr.mxu0 0.0
      %352 = vmatpush1.msra.mxu0 0.0
      %353 = vmatprep.subr.mxu0 0.0
      %354 = vmatpush1.msra.mxu0 0.0
      %355 = vmatprep.mubr.f32.mxu0 0.0
      %356 = vmatmul.mubr.f32.gmra.mrb[0].mxu0 %v286
      %v357 = vpop.f32.mrb[0].mxu0
      %v358 = vadd.f32 %v277, %v357
      %v359 = vpop.f32.mrb[0].mxu0
      %360 = vmatprep.mubr.f32.mxu0 0.0
      %361 = vmatmul.mubr.f32.gmra.mrb[0].mxu0 %v289
      %v362 = vpop.f32.mrb[0].mxu0
      %v363 = vadd.f32 %v282, %v362
      %v364 = vpop.f32.mrb[0].mxu0
      %365 = vdwg.mxu0
      %v366 = vld [vmem:[%s149 + $0x2] sm:$0xff]
      %v367 = vld [vmem:[%s149 + $0xa] sm:$0xff]
      %s368 = scalar_lea.vmem %s1, 128
      %v369 = vld [vmem:[%s368] sm:$0xff]
      %v370 = vld [vmem:[%s368 + $0x8] sm:$0xff]
      %v371 = vld [vmem:[%s368 + $0x10] sm:$0xff]
      %v372 = vld [vmem:[%s368 + $0x18] sm:$0xff]
      %v373 = vld [vmem:[%s368 + $0x20] sm:$0xff]
      %v374 = vld [vmem:[%s368 + $0x28] sm:$0xff]
      %v375 = vld [vmem:[%s368 + $0x30] sm:$0xff]
      %v376 = vld [vmem:[%s368 + $0x38] sm:$0xff]
      %v377 = vmax.f32 %v369, -1.0
      %v378 = vmax.f32 %v370, -1.0
      %v379 = vmax.f32 %v371, -1.0
      %v380 = vmax.f32 %v372, -1.0
      %v381 = vmax.f32 %v373, -1.0
      %v382 = vmax.f32 %v374, -1.0
      %v383 = vmax.f32 %v375, -1.0
      %v384 = vmax.f32 %v376, -1.0
      %v385 = vmin.f32 %v377, 1.0
      %v386 = vmin.f32 %v378, 1.0
      %v387 = vmin.f32 %v379, 1.0
      %v388 = vmin.f32 %v380, 1.0
      %v389 = vmin.f32 %v381, 1.0
      %v390 = vmin.f32 %v382, 1.0
      %v391 = vmin.f32 %v383, 1.0
      %v392 = vmin.f32 %v384, 1.0
      %v394 = vsel %vm203, %v366, 0
      %v397 = vsel %vm203, %v367, 0
      %399 = vmatprep.subr.mxu0 0.0
      %400 = vmatpush1.msra.mxu0 %v385
      %401 = vmatprep.subr.mxu0 0.0
      %402 = vmatpush1.msra.mxu0 %v386
      %403 = vmatprep.subr.mxu0 0.0
      %404 = vmatpush1.msra.mxu0 %v387
      %405 = vmatprep.subr.mxu0 0.0
      %406 = vmatpush1.msra.mxu0 %v388
      %407 = vmatprep.subr.mxu0 0.0
      %408 = vmatpush1.msra.mxu0 %v389
      %409 = vmatprep.subr.mxu0 0.0
      %410 = vmatpush1.msra.mxu0 %v390
      %411 = vmatprep.subr.mxu0 0.0
      %412 = vmatpush1.msra.mxu0 %v391
      %413 = vmatprep.subr.mxu0 0.0
      %414 = vmatpush1.msra.mxu0 %v392
      %415 = vmatprep.subr.mxu0 0.0
      %416 = vmatpush1.msra.mxu0 0.0
      %417 = vmatprep.subr.mxu0 0.0
      %418 = vmatpush1.msra.mxu0 0.0
      %419 = vmatprep.subr.mxu0 0.0
      %420 = vmatpush1.msra.mxu0 0.0
      %421 = vmatprep.subr.mxu0 0.0
      %422 = vmatpush1.msra.mxu0 0.0
      %423 = vmatprep.subr.mxu0 0.0
      %424 = vmatpush1.msra.mxu0 0.0
      %425 = vmatprep.subr.mxu0 0.0
      %426 = vmatpush1.msra.mxu0 0.0
      %427 = vmatprep.subr.mxu0 0.0
      %428 = vmatpush1.msra.mxu0 0.0
      %429 = vmatprep.subr.mxu0 0.0
      %430 = vmatpush1.msra.mxu0 0.0
      %431 = vmatprep.subr.mxu0 0.0
      %432 = vmatpush1.msra.mxu0 0.0
      %433 = vmatprep.subr.mxu0 0.0
      %434 = vmatpush1.msra.mxu0 0.0
      %435 = vmatprep.subr.mxu0 0.0
      %436 = vmatpush1.msra.mxu0 0.0
      %437 = vmatprep.subr.mxu0 0.0
      %438 = vmatpush1.msra.mxu0 0.0
      %439 = vmatprep.subr.mxu0 0.0
      %440 = vmatpush1.msra.mxu0 0.0
      %441 = vmatprep.subr.mxu0 0.0
      %442 = vmatpush1.msra.mxu0 0.0
      %443 = vmatprep.subr.mxu0 0.0
      %444 = vmatpush1.msra.mxu0 0.0
      %445 = vmatprep.subr.mxu0 0.0
      %446 = vmatpush1.msra.mxu0 0.0
      %447 = vmatprep.subr.mxu0 0.0
      %448 = vmatpush1.msra.mxu0 0.0
      %449 = vmatprep.subr.mxu0 0.0
      %450 = vmatpush1.msra.mxu0 0.0
      %451 = vmatprep.subr.mxu0 0.0
      %452 = vmatpush1.msra.mxu0 0.0
      %453 = vmatprep.subr.mxu0 0.0
      %454 = vmatpush1.msra.mxu0 0.0
      %455 = vmatprep.subr.mxu0 0.0
      %456 = vmatpush1.msra.mxu0 0.0
      %457 = vmatprep.subr.mxu0 0.0
      %458 = vmatpush1.msra.mxu0 0.0
      %459 = vmatprep.subr.mxu0 0.0
      %460 = vmatpush1.msra.mxu0 0.0
      %461 = vmatprep.subr.mxu0 0.0
      %462 = vmatpush1.msra.mxu0 0.0
      %463 = vmatprep.mubr.f32.mxu0 0.0
      %464 = vmatmul.mubr.f32.gmra.mrb[0].mxu0 %v394
      %v465 = vpop.f32.mrb[0].mxu0
      %v466 = vadd.f32 0.0, %v465
      %v467 = vpop.f32.mrb[0].mxu0
      %468 = vmatprep.mubr.f32.mxu0 0.0
      %469 = vmatmul.mubr.f32.gmra.mrb[0].mxu0 %v397
      %v470 = vpop.f32.mrb[0].mxu0
      %v471 = vadd.f32 0.0, %v470
      %v472 = vpop.f32.mrb[0].mxu0
      %473 = vdwg.mxu0
      %v474 = vadd.f32 %v358, %v466
      %v475 = vadd.f32 %v363, %v471
      %s476 = sadd.s32 %s18, 1
      %s477 = smul.u32 %s476, 24
      %s478 = sadd.s32 %s477, %s147
      %s479 = scalar_lea.vmem %s0, %s478
      %v480 = vld [vmem:[%s479] sm:$0xff]
      %v481 = vld [vmem:[%s479 + $0x8] sm:$0xff]
      %s482 = scalar_lea.vmem %s1, 192
      %v483 = vld [vmem:[%s482] sm:$0xff]
      %v484 = vld [vmem:[%s482 + $0x8] sm:$0xff]
      %v485 = vld [vmem:[%s482 + $0x10] sm:$0xff]
      %v486 = vld [vmem:[%s482 + $0x18] sm:$0xff]
      %v487 = vld [vmem:[%s482 + $0x20] sm:$0xff]
      %v488 = vld [vmem:[%s482 + $0x28] sm:$0xff]
      %v489 = vld [vmem:[%s482 + $0x30] sm:$0xff]
      %v490 = vld [vmem:[%s482 + $0x38] sm:$0xff]
      %v491 = vmax.f32 %v483, -1.0
      %v492 = vmax.f32 %v484, -1.0
      %v493 = vmax.f32 %v485, -1.0
      %v494 = vmax.f32 %v486, -1.0
      %v495 = vmax.f32 %v487, -1.0
      %v496 = vmax.f32 %v488, -1.0
      %v497 = vmax.f32 %v489, -1.0
      %v498 = vmax.f32 %v490, -1.0
      %v499 = vmin.f32 %v491, 1.0
      %v500 = vmin.f32 %v492, 1.0
      %v501 = vmin.f32 %v493, 1.0
      %v502 = vmin.f32 %v494, 1.0
      %v503 = vmin.f32 %v495, 1.0
      %v504 = vmin.f32 %v496, 1.0
      %v505 = vmin.f32 %v497, 1.0
      %v506 = vmin.f32 %v498, 1.0
      %v508 = vsel %vm203, %v480, 0
      %v511 = vsel %vm203, %v481, 0
      %513 = vmatprep.subr.mxu0 0.0
      %514 = vmatpush1.msra.mxu0 %v499
      %515 = vmatprep.subr.mxu0 0.0
      %516 = vmatpush1.msra.mxu0 %v500
      %517 = vmatprep.subr.mxu0 0.0
      %518 = vmatpush1.msra.mxu0 %v501
      %519 = vmatprep.subr.mxu0 0.0
      %520 = vmatpush1.msra.mxu0 %v502
      %521 = vmatprep.subr.mxu0 0.0
      %522 = vmatpush1.msra.mxu0 %v503
      %523 = vmatprep.subr.mxu0 0.0
      %524 = vmatpush1.msra.mxu0 %v504
      %525 = vmatprep.subr.mxu0 0.0
      %526 = vmatpush1.msra.mxu0 %v505
      %527 = vmatprep.subr.mxu0 0.0
      %528 = vmatpush1.msra.mxu0 %v506
      %529 = vmatprep.subr.mxu0 0.0
      %530 = vmatpush1.msra.mxu0 0.0
      %531 = vmatprep.subr.mxu0 0.0
      %532 = vmatpush1.msra.mxu0 0.0
      %533 = vmatprep.subr.mxu0 0.0
      %534 = vmatpush1.msra.mxu0 0.0
      %535 = vmatprep.subr.mxu0 0.0
      %536 = vmatpush1.msra.mxu0 0.0
      %537 = vmatprep.subr.mxu0 0.0
      %538 = vmatpush1.msra.mxu0 0.0
      %539 = vmatprep.subr.mxu0 0.0
      %540 = vmatpush1.msra.mxu0 0.0
      %541 = vmatprep.subr.mxu0 0.0
      %542 = vmatpush1.msra.mxu0 0.0
      %543 = vmatprep.subr.mxu0 0.0
      %544 = vmatpush1.msra.mxu0 0.0
      %545 = vmatprep.subr.mxu0 0.0
      %546 = vmatpush1.msra.mxu0 0.0
      %547 = vmatprep.subr.mxu0 0.0
      %548 = vmatpush1.msra.mxu0 0.0
      %549 = vmatprep.subr.mxu0 0.0
      %550 = vmatpush1.msra.mxu0 0.0
      %551 = vmatprep.subr.mxu0 0.0
      %552 = vmatpush1.msra.mxu0 0.0
      %553 = vmatprep.subr.mxu0 0.0
      %554 = vmatpush1.msra.mxu0 0.0
      %555 = vmatprep.subr.mxu0 0.0
      %556 = vmatpush1.msra.mxu0 0.0
      %557 = vmatprep.subr.mxu0 0.0
      %558 = vmatpush1.msra.mxu0 0.0
      %559 = vmatprep.subr.mxu0 0.0
      %560 = vmatpush1.msra.mxu0 0.0
      %561 = vmatprep.subr.mxu0 0.0
      %562 = vmatpush1.msra.mxu0 0.0
      %563 = vmatprep.subr.mxu0 0.0
      %564 = vmatpush1.msra.mxu0 0.0
      %565 = vmatprep.subr.mxu0 0.0
      %566 = vmatpush1.msra.mxu0 0.0
      %567 = vmatprep.subr.mxu0 0.0
      %568 = vmatpush1.msra.mxu0 0.0
      %569 = vmatprep.subr.mxu0 0.0
      %570 = vmatpush1.msra.mxu0 0.0
      %571 = vmatprep.subr.mxu0 0.0
      %572 = vmatpush1.msra.mxu0 0.0
      %573 = vmatprep.subr.mxu0 0.0
      %574 = vmatpush1.msra.mxu0 0.0
      %575 = vmatprep.subr.mxu0 0.0
      %576 = vmatpush1.msra.mxu0 0.0
      %577 = vmatprep.mubr.f32.mxu0 0.0
      %578 = vmatmul.mubr.f32.gmra.mrb[0].mxu0 %v508
      %v579 = vpop.f32.mrb[0].mxu0
      %v580 = vadd.f32 0.0, %v579
      %v581 = vpop.f32.mrb[0].mxu0
      %582 = vmatprep.mubr.f32.mxu0 0.0
      %583 = vmatmul.mubr.f32.gmra.mrb[0].mxu0 %v511
      %v584 = vpop.f32.mrb[0].mxu0
      %v585 = vadd.f32 0.0, %v584
      %v586 = vpop.f32.mrb[0].mxu0
      %587 = vdwg.mxu0
      %v588 = vadd.f32 %v474, %v580
      %v589 = vadd.f32 %v475, %v585
      %v590 = vld [vmem:[%s479 + $0x1] sm:$0xff]
      %v591 = vld [vmem:[%s479 + $0x9] sm:$0xff]
      %s592 = scalar_lea.vmem %s1, 256
      %v593 = vld [vmem:[%s592] sm:$0xff]
      %v594 = vld [vmem:[%s592 + $0x8] sm:$0xff]
      %v595 = vld [vmem:[%s592 + $0x10] sm:$0xff]
      %v596 = vld [vmem:[%s592 + $0x18] sm:$0xff]
      %v597 = vld [vmem:[%s592 + $0x20] sm:$0xff]
      %v598 = vld [vmem:[%s592 + $0x28] sm:$0xff]
      %v599 = vld [vmem:[%s592 + $0x30] sm:$0xff]
      %v600 = vld [vmem:[%s592 + $0x38] sm:$0xff]
      %v601 = vmax.f32 %v593, -1.0
      %v602 = vmax.f32 %v594, -1.0
      %v603 = vmax.f32 %v595, -1.0
      %v604 = vmax.f32 %v596, -1.0
      %v605 = vmax.f32 %v597, -1.0
      %v606 = vmax.f32 %v598, -1.0
      %v607 = vmax.f32 %v599, -1.0
      %v608 = vmax.f32 %v600, -1.0
      %v609 = vmin.f32 %v601, 1.0
      %v610 = vmin.f32 %v602, 1.0
      %v611 = vmin.f32 %v603, 1.0
      %v612 = vmin.f32 %v604, 1.0
      %v613 = vmin.f32 %v605, 1.0
      %v614 = vmin.f32 %v606, 1.0
      %v615 = vmin.f32 %v607, 1.0
      %v616 = vmin.f32 %v608, 1.0
      %v618 = vsel %vm203, %v590, 0
      %v621 = vsel %vm203, %v591, 0
      %623 = vmatprep.subr.mxu0 0.0
      %624 = vmatpush1.msra.mxu0 %v609
      %625 = vmatprep.subr.mxu0 0.0
      %626 = vmatpush1.msra.mxu0 %v610
      %627 = vmatprep.subr.mxu0 0.0
      %628 = vmatpush1.msra.mxu0 %v611
      %629 = vmatprep.subr.mxu0 0.0
      %630 = vmatpush1.msra.mxu0 %v612
      %631 = vmatprep.subr.mxu0 0.0
      %632 = vmatpush1.msra.mxu0 %v613
      %633 = vmatprep.subr.mxu0 0.0
      %634 = vmatpush1.msra.mxu0 %v614
      %635 = vmatprep.subr.mxu0 0.0
      %636 = vmatpush1.msra.mxu0 %v615
      %637 = vmatprep.subr.mxu0 0.0
      %638 = vmatpush1.msra.mxu0 %v616
      %639 = vmatprep.subr.mxu0 0.0
      %640 = vmatpush1.msra.mxu0 0.0
      %641 = vmatprep.subr.mxu0 0.0
      %642 = vmatpush1.msra.mxu0 0.0
      %643 = vmatprep.subr.mxu0 0.0
      %644 = vmatpush1.msra.mxu0 0.0
      %645 = vmatprep.subr.mxu0 0.0
      %646 = vmatpush1.msra.mxu0 0.0
      %647 = vmatprep.subr.mxu0 0.0
      %648 = vmatpush1.msra.mxu0 0.0
      %649 = vmatprep.subr.mxu0 0.0
      %650 = vmatpush1.msra.mxu0 0.0
      %651 = vmatprep.subr.mxu0 0.0
      %652 = vmatpush1.msra.mxu0 0.0
      %653 = vmatprep.subr.mxu0 0.0
      %654 = vmatpush1.msra.mxu0 0.0
      %655 = vmatprep.subr.mxu0 0.0
      %656 = vmatpush1.msra.mxu0 0.0
      %657 = vmatprep.subr.mxu0 0.0
      %658 = vmatpush1.msra.mxu0 0.0
      %659 = vmatprep.subr.mxu0 0.0
      %660 = vmatpush1.msra.mxu0 0.0
      %661 = vmatprep.subr.mxu0 0.0
      %662 = vmatpush1.msra.mxu0 0.0
      %663 = vmatprep.subr.mxu0 0.0
      %664 = vmatpush1.msra.mxu0 0.0
      %665 = vmatprep.subr.mxu0 0.0
      %666 = vmatpush1.msra.mxu0 0.0
      %667 = vmatprep.subr.mxu0 0.0
      %668 = vmatpush1.msra.mxu0 0.0
      %669 = vmatprep.subr.mxu0 0.0
      %670 = vmatpush1.msra.mxu0 0.0
      %671 = vmatprep.subr.mxu0 0.0
      %672 = vmatpush1.msra.mxu0 0.0
      %673 = vmatprep.subr.mxu0 0.0
      %674 = vmatpush1.msra.mxu0 0.0
      %675 = vmatprep.subr.mxu0 0.0
      %676 = vmatpush1.msra.mxu0 0.0
      %677 = vmatprep.subr.mxu0 0.0
      %678 = vmatpush1.msra.mxu0 0.0
      %679 = vmatprep.subr.mxu0 0.0
      %680 = vmatpush1.msra.mxu0 0.0
      %681 = vmatprep.subr.mxu0 0.0
      %682 = vmatpush1.msra.mxu0 0.0
      %683 = vmatprep.subr.mxu0 0.0
      %684 = vmatpush1.msra.mxu0 0.0
      %685 = vmatprep.subr.mxu0 0.0
      %686 = vmatpush1.msra.mxu0 0.0
      %687 = vmatprep.mubr.f32.mxu0 0.0
      %688 = vmatmul.mubr.f32.gmra.mrb[0].mxu0 %v618
      %v689 = vpop.f32.mrb[0].mxu0
      %v690 = vadd.f32 0.0, %v689
      %v691 = vpop.f32.mrb[0].mxu0
      %692 = vmatprep.mubr.f32.mxu0 0.0
      %693 = vmatmul.mubr.f32.gmra.mrb[0].mxu0 %v621
      %v694 = vpop.f32.mrb[0].mxu0
      %v695 = vadd.f32 0.0, %v694
      %v696 = vpop.f32.mrb[0].mxu0
      %697 = vdwg.mxu0
      %v698 = vadd.f32 %v588, %v690
      %v699 = vadd.f32 %v589, %v695
      %v700 = vld [vmem:[%s479 + $0x2] sm:$0xff]
      %v701 = vld [vmem:[%s479 + $0xa] sm:$0xff]
      %s702 = scalar_lea.vmem %s1, 320
      %v703 = vld [vmem:[%s702] sm:$0xff]
      %v704 = vld [vmem:[%s702 + $0x8] sm:$0xff]
      %v705 = vld [vmem:[%s702 + $0x10] sm:$0xff]
      %v706 = vld [vmem:[%s702 + $0x18] sm:$0xff]
      %v707 = vld [vmem:[%s702 + $0x20] sm:$0xff]
      %v708 = vld [vmem:[%s702 + $0x28] sm:$0xff]
      %v709 = vld [vmem:[%s702 + $0x30] sm:$0xff]
      %v710 = vld [vmem:[%s702 + $0x38] sm:$0xff]
      %v711 = vmax.f32 %v703, -1.0
      %v712 = vmax.f32 %v704, -1.0
      %v713 = vmax.f32 %v705, -1.0
      %v714 = vmax.f32 %v706, -1.0
      %v715 = vmax.f32 %v707, -1.0
      %v716 = vmax.f32 %v708, -1.0
      %v717 = vmax.f32 %v709, -1.0
      %v718 = vmax.f32 %v710, -1.0
      %v719 = vmin.f32 %v711, 1.0
      %v720 = vmin.f32 %v712, 1.0
      %v721 = vmin.f32 %v713, 1.0
      %v722 = vmin.f32 %v714, 1.0
      %v723 = vmin.f32 %v715, 1.0
      %v724 = vmin.f32 %v716, 1.0
      %v725 = vmin.f32 %v717, 1.0
      %v726 = vmin.f32 %v718, 1.0
      %v728 = vsel %vm203, %v700, 0
      %v731 = vsel %vm203, %v701, 0
      %733 = vmatprep.subr.mxu0 0.0
      %734 = vmatpush1.msra.mxu0 %v719
      %735 = vmatprep.subr.mxu0 0.0
      %736 = vmatpush1.msra.mxu0 %v720
      %737 = vmatprep.subr.mxu0 0.0
      %738 = vmatpush1.msra.mxu0 %v721
      %739 = vmatprep.subr.mxu0 0.0
      %740 = vmatpush1.msra.mxu0 %v722
      %741 = vmatprep.subr.mxu0 0.0
      %742 = vmatpush1.msra.mxu0 %v723
      %743 = vmatprep.subr.mxu0 0.0
      %744 = vmatpush1.msra.mxu0 %v724
      %745 = vmatprep.subr.mxu0 0.0
      %746 = vmatpush1.msra.mxu0 %v725
      %747 = vmatprep.subr.mxu0 0.0
      %748 = vmatpush1.msra.mxu0 %v726
      %749 = vmatprep.subr.mxu0 0.0
      %750 = vmatpush1.msra.mxu0 0.0
      %751 = vmatprep.subr.mxu0 0.0
      %752 = vmatpush1.msra.mxu0 0.0
      %753 = vmatprep.subr.mxu0 0.0
      %754 = vmatpush1.msra.mxu0 0.0
      %755 = vmatprep.subr.mxu0 0.0
      %756 = vmatpush1.msra.mxu0 0.0
      %757 = vmatprep.subr.mxu0 0.0
      %758 = vmatpush1.msra.mxu0 0.0
      %759 = vmatprep.subr.mxu0 0.0
      %760 = vmatpush1.msra.mxu0 0.0
      %761 = vmatprep.subr.mxu0 0.0
      %762 = vmatpush1.msra.mxu0 0.0
      %763 = vmatprep.subr.mxu0 0.0
      %764 = vmatpush1.msra.mxu0 0.0
      %765 = vmatprep.subr.mxu0 0.0
      %766 = vmatpush1.msra.mxu0 0.0
      %767 = vmatprep.subr.mxu0 0.0
      %768 = vmatpush1.msra.mxu0 0.0
      %769 = vmatprep.subr.mxu0 0.0
      %770 = vmatpush1.msra.mxu0 0.0
      %771 = vmatprep.subr.mxu0 0.0
      %772 = vmatpush1.msra.mxu0 0.0
      %773 = vmatprep.subr.mxu0 0.0
      %774 = vmatpush1.msra.mxu0 0.0
      %775 = vmatprep.subr.mxu0 0.0
      %776 = vmatpush1.msra.mxu0 0.0
      %777 = vmatprep.subr.mxu0 0.0
      %778 = vmatpush1.msra.mxu0 0.0
      %779 = vmatprep.subr.mxu0 0.0
      %780 = vmatpush1.msra.mxu0 0.0
      %781 = vmatprep.subr.mxu0 0.0
      %782 = vmatpush1.msra.mxu0 0.0
      %783 = vmatprep.subr.mxu0 0.0
      %784 = vmatpush1.msra.mxu0 0.0
      %785 = vmatprep.subr.mxu0 0.0
      %786 = vmatpush1.msra.mxu0 0.0
      %787 = vmatprep.subr.mxu0 0.0
      %788 = vmatpush1.msra.mxu0 0.0
      %789 = vmatprep.subr.mxu0 0.0
      %790 = vmatpush1.msra.mxu0 0.0
      %791 = vmatprep.subr.mxu0 0.0
      %792 = vmatpush1.msra.mxu0 0.0
      %793 = vmatprep.subr.mxu0 0.0
      %794 = vmatpush1.msra.mxu0 0.0
      %795 = vmatprep.subr.mxu0 0.0
      %796 = vmatpush1.msra.mxu0 0.0
      %797 = vmatprep.mubr.f32.mxu0 0.0
      %798 = vmatmul.mubr.f32.gmra.mrb[0].mxu0 %v728
      %v799 = vpop.f32.mrb[0].mxu0
      %v800 = vadd.f32 0.0, %v799
      %v801 = vpop.f32.mrb[0].mxu0
      %802 = vmatprep.mubr.f32.mxu0 0.0
      %803 = vmatmul.mubr.f32.gmra.mrb[0].mxu0 %v731
      %v804 = vpop.f32.mrb[0].mxu0
      %v805 = vadd.f32 0.0, %v804
      %v806 = vpop.f32.mrb[0].mxu0
      %807 = vdwg.mxu0
      %v808 = vadd.f32 %v698, %v800
      %v809 = vadd.f32 %v699, %v805
      %s810 = sadd.s32 %s18, 2
      %s811 = smul.u32 %s810, 24
      %s812 = sadd.s32 %s811, %s147
      %s813 = scalar_lea.vmem %s0, %s812
      %v814 = vld [vmem:[%s813] sm:$0xff]
      %v815 = vld [vmem:[%s813 + $0x8] sm:$0xff]
      %s816 = scalar_lea.vmem %s1, 384
      %v817 = vld [vmem:[%s816] sm:$0xff]
      %v818 = vld [vmem:[%s816 + $0x8] sm:$0xff]
      %v819 = vld [vmem:[%s816 + $0x10] sm:$0xff]
      %v820 = vld [vmem:[%s816 + $0x18] sm:$0xff]
      %v821 = vld [vmem:[%s816 + $0x20] sm:$0xff]
      %v822 = vld [vmem:[%s816 + $0x28] sm:$0xff]
      %v823 = vld [vmem:[%s816 + $0x30] sm:$0xff]
      %v824 = vld [vmem:[%s816 + $0x38] sm:$0xff]
      %v825 = vmax.f32 %v817, -1.0
      %v826 = vmax.f32 %v818, -1.0
      %v827 = vmax.f32 %v819, -1.0
      %v828 = vmax.f32 %v820, -1.0
      %v829 = vmax.f32 %v821, -1.0
      %v830 = vmax.f32 %v822, -1.0
      %v831 = vmax.f32 %v823, -1.0
      %v832 = vmax.f32 %v824, -1.0
      %v833 = vmin.f32 %v825, 1.0
      %v834 = vmin.f32 %v826, 1.0
      %v835 = vmin.f32 %v827, 1.0
      %v836 = vmin.f32 %v828, 1.0
      %v837 = vmin.f32 %v829, 1.0
      %v838 = vmin.f32 %v830, 1.0
      %v839 = vmin.f32 %v831, 1.0
      %v840 = vmin.f32 %v832, 1.0
      %v842 = vsel %vm203, %v814, 0
      %v845 = vsel %vm203, %v815, 0
      %847 = vmatprep.subr.mxu0 0.0
      %848 = vmatpush1.msra.mxu0 %v833
      %849 = vmatprep.subr.mxu0 0.0
      %850 = vmatpush1.msra.mxu0 %v834
      %851 = vmatprep.subr.mxu0 0.0
      %852 = vmatpush1.msra.mxu0 %v835
      %853 = vmatprep.subr.mxu0 0.0
      %854 = vmatpush1.msra.mxu0 %v836
      %855 = vmatprep.subr.mxu0 0.0
      %856 = vmatpush1.msra.mxu0 %v837
      %857 = vmatprep.subr.mxu0 0.0
      %858 = vmatpush1.msra.mxu0 %v838
      %859 = vmatprep.subr.mxu0 0.0
      %860 = vmatpush1.msra.mxu0 %v839
      %861 = vmatprep.subr.mxu0 0.0
      %862 = vmatpush1.msra.mxu0 %v840
      %863 = vmatprep.subr.mxu0 0.0
      %864 = vmatpush1.msra.mxu0 0.0
      %865 = vmatprep.subr.mxu0 0.0
      %866 = vmatpush1.msra.mxu0 0.0
      %867 = vmatprep.subr.mxu0 0.0
      %868 = vmatpush1.msra.mxu0 0.0
      %869 = vmatprep.subr.mxu0 0.0
      %870 = vmatpush1.msra.mxu0 0.0
      %871 = vmatprep.subr.mxu0 0.0
      %872 = vmatpush1.msra.mxu0 0.0
      %873 = vmatprep.subr.mxu0 0.0
      %874 = vmatpush1.msra.mxu0 0.0
      %875 = vmatprep.subr.mxu0 0.0
      %876 = vmatpush1.msra.mxu0 0.0
      %877 = vmatprep.subr.mxu0 0.0
      %878 = vmatpush1.msra.mxu0 0.0
      %879 = vmatprep.subr.mxu0 0.0
      %880 = vmatpush1.msra.mxu0 0.0
      %881 = vmatprep.subr.mxu0 0.0
      %882 = vmatpush1.msra.mxu0 0.0
      %883 = vmatprep.subr.mxu0 0.0
      %884 = vmatpush1.msra.mxu0 0.0
      %885 = vmatprep.subr.mxu0 0.0
      %886 = vmatpush1.msra.mxu0 0.0
      %887 = vmatprep.subr.mxu0 0.0
      %888 = vmatpush1.msra.mxu0 0.0
      %889 = vmatprep.subr.mxu0 0.0
      %890 = vmatpush1.msra.mxu0 0.0
      %891 = vmatprep.subr.mxu0 0.0
      %892 = vmatpush1.msra.mxu0 0.0
      %893 = vmatprep.subr.mxu0 0.0
      %894 = vmatpush1.msra.mxu0 0.0
      %895 = vmatprep.subr.mxu0 0.0
      %896 = vmatpush1.msra.mxu0 0.0
      %897 = vmatprep.subr.mxu0 0.0
      %898 = vmatpush1.msra.mxu0 0.0
      %899 = vmatprep.subr.mxu0 0.0
      %900 = vmatpush1.msra.mxu0 0.0
      %901 = vmatprep.subr.mxu0 0.0
      %902 = vmatpush1.msra.mxu0 0.0
      %903 = vmatprep.subr.mxu0 0.0
      %904 = vmatpush1.msra.mxu0 0.0
      %905 = vmatprep.subr.mxu0 0.0
      %906 = vmatpush1.msra.mxu0 0.0
      %907 = vmatprep.subr.mxu0 0.0
      %908 = vmatpush1.msra.mxu0 0.0
      %909 = vmatprep.subr.mxu0 0.0
      %910 = vmatpush1.msra.mxu0 0.0
      %911 = vmatprep.mubr.f32.mxu0 0.0
      %912 = vmatmul.mubr.f32.gmra.mrb[0].mxu0 %v842
      %v913 = vpop.f32.mrb[0].mxu0
      %v914 = vadd.f32 0.0, %v913
      %v915 = vpop.f32.mrb[0].mxu0
      %916 = vmatprep.mubr.f32.mxu0 0.0
      %917 = vmatmul.mubr.f32.gmra.mrb[0].mxu0 %v845
      %v918 = vpop.f32.mrb[0].mxu0
      %v919 = vadd.f32 0.0, %v918
      %v920 = vpop.f32.mrb[0].mxu0
      %921 = vdwg.mxu0
      %v922 = vadd.f32 %v808, %v914
      %v923 = vadd.f32 %v809, %v919
      %v924 = vld [vmem:[%s813 + $0x1] sm:$0xff]
      %v925 = vld [vmem:[%s813 + $0x9] sm:$0xff]
      %s926 = scalar_lea.vmem %s1, 448
      %v927 = vld [vmem:[%s926] sm:$0xff]
      %v928 = vld [vmem:[%s926 + $0x8] sm:$0xff]
      %v929 = vld [vmem:[%s926 + $0x10] sm:$0xff]
      %v930 = vld [vmem:[%s926 + $0x18] sm:$0xff]
      %v931 = vld [vmem:[%s926 + $0x20] sm:$0xff]
      %v932 = vld [vmem:[%s926 + $0x28] sm:$0xff]
      %v933 = vld [vmem:[%s926 + $0x30] sm:$0xff]
      %v934 = vld [vmem:[%s926 + $0x38] sm:$0xff]
      %v935 = vmax.f32 %v927, -1.0
      %v936 = vmax.f32 %v928, -1.0
      %v937 = vmax.f32 %v929, -1.0
      %v938 = vmax.f32 %v930, -1.0
      %v939 = vmax.f32 %v931, -1.0
      %v940 = vmax.f32 %v932, -1.0
      %v941 = vmax.f32 %v933, -1.0
      %v942 = vmax.f32 %v934, -1.0
      %v943 = vmin.f32 %v935, 1.0
      %v944 = vmin.f32 %v936, 1.0
      %v945 = vmin.f32 %v937, 1.0
      %v946 = vmin.f32 %v938, 1.0
      %v947 = vmin.f32 %v939, 1.0
      %v948 = vmin.f32 %v940, 1.0
      %v949 = vmin.f32 %v941, 1.0
      %v950 = vmin.f32 %v942, 1.0
      %v952 = vsel %vm203, %v924, 0
      %v955 = vsel %vm203, %v925, 0
      %957 = vmatprep.subr.mxu0 0.0
      %958 = vmatpush1.msra.mxu0 %v943
      %959 = vmatprep.subr.mxu0 0.0
      %960 = vmatpush1.msra.mxu0 %v944
      %961 = vmatprep.subr.mxu0 0.0
      %962 = vmatpush1.msra.mxu0 %v945
      %963 = vmatprep.subr.mxu0 0.0
      %964 = vmatpush1.msra.mxu0 %v946
      %965 = vmatprep.subr.mxu0 0.0
      %966 = vmatpush1.msra.mxu0 %v947
      %967 = vmatprep.subr.mxu0 0.0
      %968 = vmatpush1.msra.mxu0 %v948
      %969 = vmatprep.subr.mxu0 0.0
      %970 = vmatpush1.msra.mxu0 %v949
      %971 = vmatprep.subr.mxu0 0.0
      %972 = vmatpush1.msra.mxu0 %v950
      %973 = vmatprep.subr.mxu0 0.0
      %974 = vmatpush1.msra.mxu0 0.0
      %975 = vmatprep.subr.mxu0 0.0
      %976 = vmatpush1.msra.mxu0 0.0
      %977 = vmatprep.subr.mxu0 0.0
      %978 = vmatpush1.msra.mxu0 0.0
      %979 = vmatprep.subr.mxu0 0.0
      %980 = vmatpush1.msra.mxu0 0.0
      %981 = vmatprep.subr.mxu0 0.0
      %982 = vmatpush1.msra.mxu0 0.0
      %983 = vmatprep.subr.mxu0 0.0
      %984 = vmatpush1.msra.mxu0 0.0
      %985 = vmatprep.subr.mxu0 0.0
      %986 = vmatpush1.msra.mxu0 0.0
      %987 = vmatprep.subr.mxu0 0.0
      %988 = vmatpush1.msra.mxu0 0.0
      %989 = vmatprep.subr.mxu0 0.0
      %990 = vmatpush1.msra.mxu0 0.0
      %991 = vmatprep.subr.mxu0 0.0
      %992 = vmatpush1.msra.mxu0 0.0
      %993 = vmatprep.subr.mxu0 0.0
      %994 = vmatpush1.msra.mxu0 0.0
      %995 = vmatprep.subr.mxu0 0.0
      %996 = vmatpush1.msra.mxu0 0.0
      %997 = vmatprep.subr.mxu0 0.0
      %998 = vmatpush1.msra.mxu0 0.0
      %999 = vmatprep.subr.mxu0 0.0
      %1000 = vmatpush1.msra.mxu0 0.0
      %1001 = vmatprep.subr.mxu0 0.0
      %1002 = vmatpush1.msra.mxu0 0.0
      %1003 = vmatprep.subr.mxu0 0.0
      %1004 = vmatpush1.msra.mxu0 0.0
      %1005 = vmatprep.subr.mxu0 0.0
      %1006 = vmatpush1.msra.mxu0 0.0
      %1007 = vmatprep.subr.mxu0 0.0
      %1008 = vmatpush1.msra.mxu0 0.0
      %1009 = vmatprep.subr.mxu0 0.0
      %1010 = vmatpush1.msra.mxu0 0.0
      %1011 = vmatprep.subr.mxu0 0.0
      %1012 = vmatpush1.msra.mxu0 0.0
      %1013 = vmatprep.subr.mxu0 0.0
      %1014 = vmatpush1.msra.mxu0 0.0
      %1015 = vmatprep.subr.mxu0 0.0
      %1016 = vmatpush1.msra.mxu0 0.0
      %1017 = vmatprep.subr.mxu0 0.0
      %1018 = vmatpush1.msra.mxu0 0.0
      %1019 = vmatprep.subr.mxu0 0.0
      %1020 = vmatpush1.msra.mxu0 0.0
      %1021 = vmatprep.mubr.f32.mxu0 0.0
      %1022 = vmatmul.mubr.f32.gmra.mrb[0].mxu0 %v952
      %v1023 = vpop.f32.mrb[0].mxu0
      %v1024 = vadd.f32 0.0, %v1023
      %v1025 = vpop.f32.mrb[0].mxu0
      %1026 = vmatprep.mubr.f32.mxu0 0.0
      %1027 = vmatmul.mubr.f32.gmra.mrb[0].mxu0 %v955
      %v1028 = vpop.f32.mrb[0].mxu0
      %v1029 = vadd.f32 0.0, %v1028
      %v1030 = vpop.f32.mrb[0].mxu0
      %1031 = vdwg.mxu0
      %v1032 = vadd.f32 %v922, %v1024
      %v1033 = vadd.f32 %v923, %v1029
      %v1034 = vld [vmem:[%s813 + $0x2] sm:$0xff]
      %v1035 = vld [vmem:[%s813 + $0xa] sm:$0xff]
      %s1036 = scalar_lea.vmem %s1, 512
      %v1037 = vld [vmem:[%s1036] sm:$0xff]
      %v1038 = vld [vmem:[%s1036 + $0x8] sm:$0xff]
      %v1039 = vld [vmem:[%s1036 + $0x10] sm:$0xff]
      %v1040 = vld [vmem:[%s1036 + $0x18] sm:$0xff]
      %v1041 = vld [vmem:[%s1036 + $0x20] sm:$0xff]
      %v1042 = vld [vmem:[%s1036 + $0x28] sm:$0xff]
      %v1043 = vld [vmem:[%s1036 + $0x30] sm:$0xff]
      %v1044 = vld [vmem:[%s1036 + $0x38] sm:$0xff]
      %v1045 = vmax.f32 %v1037, -1.0
      %v1046 = vmax.f32 %v1038, -1.0
      %v1047 = vmax.f32 %v1039, -1.0
      %v1048 = vmax.f32 %v1040, -1.0
      %v1049 = vmax.f32 %v1041, -1.0
      %v1050 = vmax.f32 %v1042, -1.0
      %v1051 = vmax.f32 %v1043, -1.0
      %v1052 = vmax.f32 %v1044, -1.0
      %v1053 = vmin.f32 %v1045, 1.0
      %v1054 = vmin.f32 %v1046, 1.0
      %v1055 = vmin.f32 %v1047, 1.0
      %v1056 = vmin.f32 %v1048, 1.0
      %v1057 = vmin.f32 %v1049, 1.0
      %v1058 = vmin.f32 %v1050, 1.0
      %v1059 = vmin.f32 %v1051, 1.0
      %v1060 = vmin.f32 %v1052, 1.0
      %v1062 = vsel %vm203, %v1034, 0
      %v1065 = vsel %vm203, %v1035, 0
      %1067 = vmatprep.subr.mxu0 0.0
      %1068 = vmatpush1.msra.mxu0 %v1053
      %1069 = vmatprep.subr.mxu0 0.0
      %1070 = vmatpush1.msra.mxu0 %v1054
      %1071 = vmatprep.subr.mxu0 0.0
      %1072 = vmatpush1.msra.mxu0 %v1055
      %1073 = vmatprep.subr.mxu0 0.0
      %1074 = vmatpush1.msra.mxu0 %v1056
      %1075 = vmatprep.subr.mxu0 0.0
      %1076 = vmatpush1.msra.mxu0 %v1057
      %1077 = vmatprep.subr.mxu0 0.0
      %1078 = vmatpush1.msra.mxu0 %v1058
      %1079 = vmatprep.subr.mxu0 0.0
      %1080 = vmatpush1.msra.mxu0 %v1059
      %1081 = vmatprep.subr.mxu0 0.0
      %1082 = vmatpush1.msra.mxu0 %v1060
      %1083 = vmatprep.subr.mxu0 0.0
      %1084 = vmatpush1.msra.mxu0 0.0
      %1085 = vmatprep.subr.mxu0 0.0
      %1086 = vmatpush1.msra.mxu0 0.0
      %1087 = vmatprep.subr.mxu0 0.0
      %1088 = vmatpush1.msra.mxu0 0.0
      %1089 = vmatprep.subr.mxu0 0.0
      %1090 = vmatpush1.msra.mxu0 0.0
      %1091 = vmatprep.subr.mxu0 0.0
      %1092 = vmatpush1.msra.mxu0 0.0
      %1093 = vmatprep.subr.mxu0 0.0
      %1094 = vmatpush1.msra.mxu0 0.0
      %1095 = vmatprep.subr.mxu0 0.0
      %1096 = vmatpush1.msra.mxu0 0.0
      %1097 = vmatprep.subr.mxu0 0.0
      %1098 = vmatpush1.msra.mxu0 0.0
      %1099 = vmatprep.subr.mxu0 0.0
      %1100 = vmatpush1.msra.mxu0 0.0
      %1101 = vmatprep.subr.mxu0 0.0
      %1102 = vmatpush1.msra.mxu0 0.0
      %1103 = vmatprep.subr.mxu0 0.0
      %1104 = vmatpush1.msra.mxu0 0.0
      %1105 = vmatprep.subr.mxu0 0.0
      %1106 = vmatpush1.msra.mxu0 0.0
      %1107 = vmatprep.subr.mxu0 0.0
      %1108 = vmatpush1.msra.mxu0 0.0
      %1109 = vmatprep.subr.mxu0 0.0
      %1110 = vmatpush1.msra.mxu0 0.0
      %1111 = vmatprep.subr.mxu0 0.0
      %1112 = vmatpush1.msra.mxu0 0.0
      %1113 = vmatprep.subr.mxu0 0.0
      %1114 = vmatpush1.msra.mxu0 0.0
      %1115 = vmatprep.subr.mxu0 0.0
      %1116 = vmatpush1.msra.mxu0 0.0
      %1117 = vmatprep.subr.mxu0 0.0
      %1118 = vmatpush1.msra.mxu0 0.0
      %1119 = vmatprep.subr.mxu0 0.0
      %1120 = vmatpush1.msra.mxu0 0.0
      %1121 = vmatprep.subr.mxu0 0.0
      %1122 = vmatpush1.msra.mxu0 0.0
      %1123 = vmatprep.subr.mxu0 0.0
      %1124 = vmatpush1.msra.mxu0 0.0
      %1125 = vmatprep.subr.mxu0 0.0
      %1126 = vmatpush1.msra.mxu0 0.0
      %1127 = vmatprep.subr.mxu0 0.0
      %1128 = vmatpush1.msra.mxu0 0.0
      %1129 = vmatprep.subr.mxu0 0.0
      %1130 = vmatpush1.msra.mxu0 0.0
      %1131 = vmatprep.mubr.f32.mxu0 0.0
      %1132 = vmatmul.mubr.f32.gmra.mrb[0].mxu0 %v1062
      %v1133 = vpop.f32.mrb[0].mxu0
      %v1134 = vadd.f32 0.0, %v1133
      %v1135 = vpop.f32.mrb[0].mxu0
      %1136 = vmatprep.mubr.f32.mxu0 0.0
      %1137 = vmatmul.mubr.f32.gmra.mrb[0].mxu0 %v1065
      %v1138 = vpop.f32.mrb[0].mxu0
      %v1139 = vadd.f32 0.0, %v1138
      %v1140 = vpop.f32.mrb[0].mxu0
      %1141 = vdwg.mxu0
      %v1142 = vadd.f32 %v1032, %v1134
      %v1143 = vadd.f32 %v1033, %v1139
      %1144 = vst.msk [vmem:[%s145] sm:$0xff] %vm203, %v1142
      %1145 = vst.msk [vmem:[%s145 + $0x8] sm:$0xff] %vm203, %v1143
      %p1146 = scmp.lt.s32.totalorder %s17, 1
      %s1147 = scalar_select %p1146, %s17, 1
      %p1148 = scmp.lt.s32.totalorder %s18, 15
      %s1149 = scalar_select %p1148, %s18, 15
      %s1150 = smul.addr %s1149, 2
      %s1151 = smul.addr %s1147, 32
      %s1152 = sadd.s32 %s1150, %s1151
      %s1153 = smul.addr %s1152, 8
      %s1154 = scalar_lea.vmem %s2, %s1153
      // Predicated region
      $region29: #{basic_block_forward.10} parent=27 // pred_check
        %p1155 = pneg %p87
      $region30: #{basic_block_forward.10} parent=27 // pred_check_branch
        %1157 = sbr.rel (%p1155) target = $region32
      $region31: #{basic_block_forward.10} parent=27 // pred_region
        _
      $region32: #{basic_block_forward.10} parent=27 // pred_fallthru
        _
    $region28: #{basic_block_forward.10} parent=5 // pred_fallthru
      _
    %p1158 = scmp.le.s32.totalorder 2, %s8
    // Predicated region
    $region33: #{basic_block_forward.10} parent=5 // pred_check
      %p1159 = pneg %p1158
    $region34: #{basic_block_forward.10} parent=5 // pred_check_branch
      %1161 = sbr.rel (%p1159) target = $region36
    $region35: #{basic_block_forward.10} parent=5 // pred_region
      %s1162 = ssub.s32 %s8, 2
      // Predicated region
      $region37: #{basic_block_forward.10} parent=35 // pred_check
        %p1163 = pneg %p93
      $region38: #{basic_block_forward.10} parent=35 // pred_check_branch
        %1165 = sbr.rel (%p1163) target = $region40
      $region39: #{basic_block_forward.10} parent=35 // pred_region
        %p1166 = scmp.lt.s32.totalorder %s19, 1
        %s1167 = scalar_select %p1166, %s19, 1
        %p1168 = scmp.lt.s32.totalorder %s20, 15
        %s1169 = scalar_select %p1168, %s20, 15
        %s1170 = smul.addr %s1169, 2
        %s1171 = smul.addr %s1167, 32
        %s1172 = sadd.s32 %s1170, %s1171
        %s1173 = smul.addr %s1172, 8
        %s1174 = scalar_lea.vmem %s2, %s1173
      $region40: #{basic_block_forward.10} parent=35 // pred_fallthru
        _
    $region36: #{basic_block_forward.10} parent=5 // pred_fallthru
      _
  $region6: #{basic_block_forward.10} parent=0 // loop_footer
    %s12 = sadd.s32 1, %s8
  $region7: #{basic_block_forward.10} parent=0 // loop_footer_branch
    %7 = sbr.rel target = $region3
  $region8: #{basic_block_forward.10} parent=0 // loop_exit
    _

// kernel: basic_block_forward.12
$region0: #{basic_block_forward.12}
  #allocation0 [shape = 'u32[]', space=smem, size = 0x4, offset = 0x4, fixed_abs, tag = 'smem constant byte address 0x4 - core index']
  #allocation1 [shape = 'u32[144,128]{1,0:T(1,128)}', space=vmem, size = 0x12000, scoped, tag = 'internal scratch']
  #allocation2 [shape = 'f32[1,64]{1,0:T(1,128)}', space=vmem, size = 0x200, scoped, tag = 'scratch operand']
  %s0 = inlined_call_operand.vmem [shape: f32[2,256,64], index: 0, kind: input, shape index: {}]
  %s1 = inlined_call_operand.vmem [shape: f32[64,8], index: 1, kind: input, shape index: {}]
  %s2 = inlined_call_operand.vmem [shape: f32[1,8], index: 2, kind: input, shape index: {}]
  %s3 = inlined_call_operand.vmem [shape: f32[8,64], index: 3, kind: input, shape index: {}]
  %s4 = inlined_call_operand.vmem [shape: f32[1,64], index: 4, kind: input, shape index: {}]
  %s5 = inlined_call_operand.vmem [shape: f32[2,1,64], index: 5, kind: output, shape index: {}]
  %s6 = sld [smem:[#allocation0]]
  $region61: #{basic_block_forward.12} parent=0
    _
  %s8 = ssub.s32 1, %s6
  %s9 = scalar_select 0, %s8, %s6
  loop: start=0, step=1, limit=6
  $region2: #{basic_block_forward.12} parent=0 // loop_pre_header
    _
  $region3: #{basic_block_forward.12} parent=0 // loop_header
    %s11 = sphi 0, %s15
    %p12 = scmp.ge.s32.totalorder %s11, 6
    %s18 = sphi 0, %s30
    %s19 = sphi 0, %s26
    %s20 = sphi 0, %s18
    %s21 = sphi 0, %s19
    %s22 = sphi 0, %s20
    %s23 = sphi 0, %s21
    %s35 = sphi 0, %s37
    %s38 = sphi 0, %s35
    %s39 = sphi 0, %s38
    %s55 = sphi 0, %s39
    %s59 = sphi 0, %s59
    %s61 = sphi 0, %s59
    %s62 = sphi 0, %s61
    %s76 = sphi 0, %s62
    %s80 = sphi 0, %s80
    %s82 = sphi 0, %s80
    %s83 = sphi 0, %s82
    %s97 = sphi 0, %s83
    %s101 = sphi 0, %s101
    %s103 = sphi 0, %s101
    %s104 = sphi 0, %s103
    %s118 = sphi 0, %s104
    %s122 = sphi 0, %s122
    %s124 = sphi 0, %s122
    %s125 = sphi 0, %s124
    %s139 = sphi 0, %s125
    %s145 = sphi 0, %s147
    %s148 = sphi 0, %s145
    %s149 = sphi 0, %s148
    %s165 = sphi 0, %s149
  $region4: #{basic_block_forward.12} parent=0 // loop_header_branch
    %14 = sbr.rel (%p12) target = $region8
  $region5: #{basic_block_forward.12} parent=0 // loop_body
    %s16 = ssub.s32 %s11, 1
    %s17 = ssub.s32 %s11, 2
    %s24 = sadd.s32 1, %s19
    %p25 = scmp.ge.s32.totalorder %s24, 2
    %s26 = scalar_select %p25, 0, %s24
    %s27 = sadd.s32 1, %s18
    %s28 = scalar_select %p25, %s27, %s18
    %p29 = scmp.ge.s32.totalorder %s28, 2
    %s30 = scalar_select %p29, 0, %s28
    %s31 = ssub.s32 %s18, %s30
    %s32 = ssub.s32 %s19, %s26
    %s33 = sor.u32 %s31, %s32
    %p34 = scmp.eq.s32.totalorder %s33, 0
    %s36 = sadd.s32 %s35, 1
    %s37 = scalar_select %p34, %s35, %s36
    %p40 = pneg %p34
    %p41 = scmp.eq.s32.totalorder %s11, 3
    %p42 = por %p40, %p41
    %p43 = scmp.ne.s32.totalorder %s35, %s38
    %p44 = scmp.eq.s32.totalorder %s11, 0
    %p45 = por %p43, %p44
    %p46 = scmp.ne.s32.totalorder %s35, %s38
    %p47 = scmp.eq.s32.totalorder %s16, 3
    %p48 = por %p46, %p47
    %p49 = scmp.ne.s32.totalorder %s38, %s39
    %p50 = scmp.eq.s32.totalorder %s16, 0
    %p51 = por %p49, %p50
    %p52 = scmp.ne.s32.totalorder %s38, %s39
    %p53 = scmp.eq.s32.totalorder %s17, 3
    %p54 = por %p52, %p53
    %p56 = scmp.ne.s32.totalorder %s39, %s55
    %p57 = scmp.eq.s32.totalorder %s17, 0
    %p58 = por %p56, %p57
    %s60 = sadd.s32 %s59, 1
    %p63 = scmp.eq.s32.totalorder %s11, 3
    %p64 = scmp.ne.s32.totalorder %s59, %s61
    %p65 = scmp.eq.s32.totalorder %s11, 0
    %p66 = por %p64, %p65
    %p67 = scmp.ne.s32.totalorder %s59, %s61
    %p68 = scmp.eq.s32.totalorder %s16, 3
    %p69 = por %p67, %p68
    %p70 = scmp.ne.s32.totalorder %s61, %s62
    %p71 = scmp.eq.s32.totalorder %s16, 0
    %p72 = por %p70, %p71
    %p73 = scmp.ne.s32.totalorder %s61, %s62
    %p74 = scmp.eq.s32.totalorder %s17, 3
    %p75 = por %p73, %p74
    %p77 = scmp.ne.s32.totalorder %s62, %s76
    %p78 = scmp.eq.s32.totalorder %s17, 0
    %p79 = por %p77, %p78
    %s81 = sadd.s32 %s80, 1
    %p84 = scmp.eq.s32.totalorder %s11, 3
    %p85 = scmp.ne.s32.totalorder %s80, %s82
    %p86 = scmp.eq.s32.totalorder %s11, 0
    %p87 = por %p85, %p86
    %p88 = scmp.ne.s32.totalorder %s80, %s82
    %p89 = scmp.eq.s32.totalorder %s16, 3
    %p90 = por %p88, %p89
    %p91 = scmp.ne.s32.totalorder %s82, %s83
    %p92 = scmp.eq.s32.totalorder %s16, 0
    %p93 = por %p91, %p92
    %p94 = scmp.ne.s32.totalorder %s82, %s83
    %p95 = scmp.eq.s32.totalorder %s17, 3
    %p96 = por %p94, %p95
    %p98 = scmp.ne.s32.totalorder %s83, %s97
    %p99 = scmp.eq.s32.totalorder %s17, 0
    %p100 = por %p98, %p99
    %s102 = sadd.s32 %s101, 1
    %p105 = scmp.eq.s32.totalorder %s11, 3
    %p106 = scmp.ne.s32.totalorder %s101, %s103
    %p107 = scmp.eq.s32.totalorder %s11, 0
    %p108 = por %p106, %p107
    %p109 = scmp.ne.s32.totalorder %s101, %s103
    %p110 = scmp.eq.s32.totalorder %s16, 3
    %p111 = por %p109, %p110
    %p112 = scmp.ne.s32.totalorder %s103, %s104
    %p113 = scmp.eq.s32.totalorder %s16, 0
    %p114 = por %p112, %p113
    %p115 = scmp.ne.s32.totalorder %s103, %s104
    %p116 = scmp.eq.s32.totalorder %s17, 3
    %p117 = por %p115, %p116
    %p119 = scmp.ne.s32.totalorder %s104, %s118
    %p120 = scmp.eq.s32.totalorder %s17, 0
    %p121 = por %p119, %p120
    %s123 = sadd.s32 %s122, 1
    %p126 = scmp.eq.s32.totalorder %s11, 3
    %p127 = scmp.ne.s32.totalorder %s122, %s124
    %p128 = scmp.eq.s32.totalorder %s11, 0
    %p129 = por %p127, %p128
    %p130 = scmp.ne.s32.totalorder %s122, %s124
    %p131 = scmp.eq.s32.totalorder %s16, 3
    %p132 = por %p130, %p131
    %p133 = scmp.ne.s32.totalorder %s124, %s125
    %p134 = scmp.eq.s32.totalorder %s16, 0
    %p135 = por %p133, %p134
    %p136 = scmp.ne.s32.totalorder %s124, %s125
    %p137 = scmp.eq.s32.totalorder %s17, 3
    %p138 = por %p136, %p137
    %p140 = scmp.ne.s32.totalorder %s125, %s139
    %p141 = scmp.eq.s32.totalorder %s17, 0
    %p142 = por %p140, %p141
    %s143 = ssub.s32 %s18, %s30
    %p144 = scmp.eq.s32.totalorder %s143, 0
    %s146 = sadd.s32 %s145, 1
    %s147 = scalar_select %p144, %s145, %s146
    %p150 = pneg %p144
    %p151 = scmp.eq.s32.totalorder %s11, 3
    %p152 = por %p150, %p151
    %p153 = scmp.ne.s32.totalorder %s145, %s148
    %p154 = scmp.eq.s32.totalorder %s11, 0
    %p155 = por %p153, %p154
    %p156 = scmp.ne.s32.totalorder %s145, %s148
    %p157 = scmp.eq.s32.totalorder %s16, 3
    %p158 = por %p156, %p157
    %p159 = scmp.ne.s32.totalorder %s148, %s149
    %p160 = scmp.eq.s32.totalorder %s16, 0
    %p161 = por %p159, %p160
    %p162 = scmp.ne.s32.totalorder %s148, %s149
    %p163 = scmp.eq.s32.totalorder %s17, 3
    %p164 = por %p162, %p163
    %p166 = scmp.ne.s32.totalorder %s149, %s165
    %p167 = scmp.eq.s32.totalorder %s17, 0
    %p168 = por %p166, %p167
    %p169 = scmp.le.s32.totalorder 1, %s11
    %p170 = scmp.lt.s32.totalorder %s11, 5
    %p171 = pnand %p169, %p170
    %p172 = pneg %p171
    // Predicated region
    $region9: #{basic_block_forward.12} parent=5 // pred_check
      _
    $region10: #{basic_block_forward.12} parent=5 // pred_check_branch
      %174 = sbr.rel (%p171) target = $region12
    $region11: #{basic_block_forward.12} parent=5 // pred_region
      %s175 = ssub.s32 %s11, 1
      // Predicated region
      $region13: #{basic_block_forward.12} parent=11 // pred_check
        %p176 = pneg %p72
      $region14: #{basic_block_forward.12} parent=11 // pred_check_branch
        %178 = sbr.rel (%p176) target = $region16
      $region15: #{basic_block_forward.12} parent=11 // pred_region
        _
      $region16: #{basic_block_forward.12} parent=11 // pred_fallthru
        _
      // Predicated region
      $region17: #{basic_block_forward.12} parent=11 // pred_check
        %p179 = pneg %p93
      $region18: #{basic_block_forward.12} parent=11 // pred_check_branch
        %181 = sbr.rel (%p179) target = $region20
      $region19: #{basic_block_forward.12} parent=11 // pred_region
        _
      $region20: #{basic_block_forward.12} parent=11 // pred_fallthru
        _
      // Predicated region
      $region21: #{basic_block_forward.12} parent=11 // pred_check
        %p182 = pneg %p114
      $region22: #{basic_block_forward.12} parent=11 // pred_check_branch
        %184 = sbr.rel (%p182) target = $region24
      $region23: #{basic_block_forward.12} parent=11 // pred_region
        _
      $region24: #{basic_block_forward.12} parent=11 // pred_fallthru
        _
      // Predicated region
      $region25: #{basic_block_forward.12} parent=11 // pred_check
        %p185 = pneg %p135
      $region26: #{basic_block_forward.12} parent=11 // pred_check_branch
        %187 = sbr.rel (%p185) target = $region28
      $region27: #{basic_block_forward.12} parent=11 // pred_region
        _
      $region28: #{basic_block_forward.12} parent=11 // pred_fallthru
        _
    $region12: #{basic_block_forward.12} parent=5 // pred_fallthru
      _
    %p188 = scmp.lt.s32.totalorder %s11, 4
    // Predicated region
    $region29: #{basic_block_forward.12} parent=5 // pred_check
      %p189 = pneg %p188
    $region30: #{basic_block_forward.12} parent=5 // pred_check_branch
      %191 = sbr.rel (%p189) target = $region32
    $region31: #{basic_block_forward.12} parent=5 // pred_region
      // Predicated region
      $region33: #{basic_block_forward.12} parent=31 // pred_check
        %p192 = pneg %p45
      $region34: #{basic_block_forward.12} parent=31 // pred_check_branch
        %194 = sbr.rel (%p192) target = $region36
      $region35: #{basic_block_forward.12} parent=31 // pred_region
        %s195 = smul.u32 16, %s19
        %p196 = scmp.lt.s32.totalorder %s18, 1
        %s197 = scalar_select %p196, %s18, 1
        %p198 = scmp.lt.s32.totalorder %s195, 31
        %s199 = scalar_select %p198, %s195, 31
        %s200 = smul.addr %s197, 32
        %s201 = sadd.s32 %s199, %s200
        %s202 = smul.addr %s201, 8
        %s203 = scalar_lea.vmem %s0, %s202
        %s204 = smul.u32 16, %s19
      $region36: #{basic_block_forward.12} parent=31 // pred_fallthru
        _
    $region32: #{basic_block_forward.12} parent=5 // pred_fallthru
      _
    %p205 = scmp.le.s32.totalorder 1, %s11
    %p206 = scmp.lt.s32.totalorder %s11, 5
    %p207 = pnand %p205, %p206
    %p208 = pneg %p207
    // Predicated region
    $region37: #{basic_block_forward.12} parent=5 // pred_check
      _
    $region38: #{basic_block_forward.12} parent=5 // pred_check_branch
      %210 = sbr.rel (%p207) target = $region40
    $region39: #{basic_block_forward.12} parent=5 // pred_region
      %s211 = ssub.s32 %s11, 1
      %s212 = smul.u32 16, %s21
      %p213 = scmp.lt.s32.totalorder %s20, 1
      %s214 = scalar_select %p213, %s20, 1
      %p215 = scmp.lt.s32.totalorder %s212, 31
      %s216 = scalar_select %p215, %s212, 31
      %s217 = smul.addr %s214, 32
      %s218 = sadd.s32 %s216, %s217
      %s219 = smul.addr %s218, 8
      %s220 = scalar_lea.vmem %s0, %s219
      %p221 = pneg %p51
      %p222 = pneg %p48
      %p223 = pneg %p72
      %p224 = pneg %p69
      %p225 = pneg %p93
      %p226 = pneg %p90
      %p227 = pneg %p114
      %p228 = pneg %p111
      %p229 = pneg %p135
      %p230 = pneg %p132
      %p231 = pneg %p161
      %p232 = pneg %p158
      %p233 = scmp.lt.s32.totalorder %s20, 1
      %s234 = scalar_select %p233, %s20, 1
      %s235 = scalar_lea.vmem %s5, %s234
      %s236 = smul.u32 16, %s21
      %p237 = scmp.lt.s32.totalorder %s20, 1
      %s238 = scalar_select %p237, %s20, 1
      %p239 = scmp.lt.s32.totalorder %s236, 31
      %s240 = scalar_select %p239, %s236, 31
      %s241 = smul.addr %s238, 32
      %s242 = sadd.s32 %s240, %s241
      %s243 = smul.addr %s242, 8
      %s244 = scalar_lea.vmem %s0, %s243
      %s245 = smul.u32 16, %s21
      %p246 = scmp.lt.s32.totalorder %s20, 1
      %s247 = scalar_select %p246, %s20, 1
      %s248 = scalar_lea.vmem %s5, %s247
      %p249 = scmp.eq.s32.totalorder %s21, 0
      // Predicated region
      $region41: #{basic_block_forward.12} parent=39 // pred_check
        %p250 = pneg %p249
      $region42: #{basic_block_forward.12} parent=39 // pred_check_branch
        %252 = sbr.rel (%p250) target = $region44
      $region43: #{basic_block_forward.12} parent=39 // pred_region
        %vm253 = vcmask 516096
        %254 = vst.msk [vmem:[#allocation2] sm:$0x1] %vm253, 0.0
      $region44: #{basic_block_forward.12} parent=39 // pred_fallthru
        _
      %v255 = vld [vmem:[#allocation2] sm:$0x1]
      %v256 = vld [vmem:[%s244] sm:$0xff]
      %v257 = vld [vmem:[%s244 + $0x8] sm:$0xff]
      %v258 = vld [vmem:[%s244 + $0x10] sm:$0xff]
      %v259 = vld [vmem:[%s244 + $0x18] sm:$0xff]
      %v260 = vld [vmem:[%s244 + $0x20] sm:$0xff]
      %v261 = vld [vmem:[%s244 + $0x28] sm:$0xff]
      %v262 = vld [vmem:[%s244 + $0x30] sm:$0xff]
      %v263 = vld [vmem:[%s244 + $0x38] sm:$0xff]
      %v264 = vld [vmem:[%s244 + $0x40] sm:$0xff]
      %v265 = vld [vmem:[%s244 + $0x48] sm:$0xff]
      %v266 = vld [vmem:[%s244 + $0x50] sm:$0xff]
      %v267 = vld [vmem:[%s244 + $0x58] sm:$0xff]
      %v268 = vld [vmem:[%s244 + $0x60] sm:$0xff]
      %v269 = vld [vmem:[%s244 + $0x68] sm:$0xff]
      %v270 = vld [vmem:[%s244 + $0x70] sm:$0xff]
      %v271 = vld [vmem:[%s244 + $0x78] sm:$0xff]
      %vm272 = vcmask 523264
      %v273 = vsel %vm272, %v256, 0.0
      %v274 = vsel %vm272, %v257, 0.0
      %v275 = vadd.f32 %v273, %v274
      %v276 = vsel %vm272, %v258, 0.0
      %v277 = vadd.f32 %v275, %v276
      %v278 = vsel %vm272, %v259, 0.0
      %v279 = vadd.f32 %v277, %v278
      %v280 = vsel %vm272, %v260, 0.0
      %v281 = vadd.f32 %v279, %v280
      %v282 = vsel %vm272, %v261, 0.0
      %v283 = vadd.f32 %v281, %v282
      %v284 = vsel %vm272, %v262, 0.0
      %v285 = vadd.f32 %v283, %v284
      %v286 = vsel %vm272, %v263, 0.0
      %v287 = vadd.f32 %v285, %v286
      %v288 = vsel %vm272, %v264, 0.0
      %v289 = vadd.f32 %v287, %v288
      %v290 = vsel %vm272, %v265, 0.0
      %v291 = vadd.f32 %v289, %v290
      %v292 = vsel %vm272, %v266, 0.0
      %v293 = vadd.f32 %v291, %v292
      %v294 = vsel %vm272, %v267, 0.0
      %v295 = vadd.f32 %v293, %v294
      %v296 = vsel %vm272, %v268, 0.0
      %v297 = vadd.f32 %v295, %v296
      %v298 = vsel %vm272, %v269, 0.0
      %v299 = vadd.f32 %v297, %v298
      %v300 = vsel %vm272, %v270, 0.0
      %v301 = vadd.f32 %v299, %v300
      %v302 = vsel %vm272, %v271, 0.0
      %v303 = vadd.f32 %v301, %v302
      %v304 = vrot.slane %v303, 4
      %v305 = vadd.f32 %v303, %v304
      %v306 = vrot.slane %v305, 2
      %v307 = vadd.f32 %v305, %v306
      %v308 = vrot.slane %v307, 1
      %v309 = vadd.f32 %v307, %v308
      %v310 = vadd.f32 %v255, %v309
      %vm311 = vcmask 516096
      %312 = vst.msk [vmem:[#allocation2] sm:$0x1] %vm311, %v310
      %p313 = scmp.eq.s32.totalorder %s21, 1
      // Predicated region
      $region45: #{basic_block_forward.12} parent=39 // pred_check
        %p314 = pneg %p313
      $region46: #{basic_block_forward.12} parent=39 // pred_check_branch
        %316 = sbr.rel (%p314) target = $region48
      $region47: #{basic_block_forward.12} parent=39 // pred_region
        %v317 = vld [vmem:[#allocation2] sm:$0x1]
        %v318 = vmul.f32 %v317, 0.00390625
        %v319 = vld [vmem:[%s1] sm:$0xff]
        %v320 = vld [vmem:[%s1 + $0x8] sm:$0xff]
        %v321 = vld [vmem:[%s1 + $0x10] sm:$0xff]
        %v322 = vld [vmem:[%s1 + $0x18] sm:$0xff]
        %v323 = vld [vmem:[%s1 + $0x20] sm:$0xff]
        %v324 = vld [vmem:[%s1 + $0x28] sm:$0xff]
        %v325 = vld [vmem:[%s1 + $0x30] sm:$0xff]
        %v326 = vld [vmem:[%s1 + $0x38] sm:$0xff]
        %v327 = vld [vmem:[%s2] sm:$0x1]
        %v329 = vsel %vm272, %v318, 0
        %331 = vmatprep.subr.mxu0 0.0
        %332 = vmatpush1.msra.mxu0 %v319
        %333 = vmatprep.subr.mxu0 0.0
        %334 = vmatpush1.msra.mxu0 %v320
        %335 = vmatprep.subr.mxu0 0.0
        %336 = vmatpush1.msra.mxu0 %v321
        %337 = vmatprep.subr.mxu0 0.0
        %338 = vmatpush1.msra.mxu0 %v322
        %339 = vmatprep.subr.mxu0 0.0
        %340 = vmatpush1.msra.mxu0 %v323
        %341 = vmatprep.subr.mxu0 0.0
        %342 = vmatpush1.msra.mxu0 %v324
        %343 = vmatprep.subr.mxu0 0.0
        %344 = vmatpush1.msra.mxu0 %v325
        %345 = vmatprep.subr.mxu0 0.0
        %346 = vmatpush1.msra.mxu0 %v326
        %347 = vmatprep.subr.mxu0 0.0
        %348 = vmatpush1.msra.mxu0 0.0
        %349 = vmatprep.subr.mxu0 0.0
        %350 = vmatpush1.msra.mxu0 0.0
        %351 = vmatprep.subr.mxu0 0.0
        %352 = vmatpush1.msra.mxu0 0.0
        %353 = vmatprep.subr.mxu0 0.0
        %354 = vmatpush1.msra.mxu0 0.0
        %355 = vmatprep.subr.mxu0 0.0
        %356 = vmatpush1.msra.mxu0 0.0
        %357 = vmatprep.subr.mxu0 0.0
        %358 = vmatpush1.msra.mxu0 0.0
        %359 = vmatprep.subr.mxu0 0.0
        %360 = vmatpush1.msra.mxu0 0.0
        %361 = vmatprep.subr.mxu0 0.0
        %362 = vmatpush1.msra.mxu0 0.0
        %363 = vmatprep.subr.mxu0 0.0
        %364 = vmatpush1.msra.mxu0 0.0
        %365 = vmatprep.subr.mxu0 0.0
        %366 = vmatpush1.msra.mxu0 0.0
        %367 = vmatprep.subr.mxu0 0.0
        %368 = vmatpush1.msra.mxu0 0.0
        %369 = vmatprep.subr.mxu0 0.0
        %370 = vmatpush1.msra.mxu0 0.0
        %371 = vmatprep.subr.mxu0 0.0
        %372 = vmatpush1.msra.mxu0 0.0
        %373 = vmatprep.subr.mxu0 0.0
        %374 = vmatpush1.msra.mxu0 0.0
        %375 = vmatprep.subr.mxu0 0.0
        %376 = vmatpush1.msra.mxu0 0.0
        %377 = vmatprep.subr.mxu0 0.0
        %378 = vmatpush1.msra.mxu0 0.0
        %379 = vmatprep.subr.mxu0 0.0
        %380 = vmatpush1.msra.mxu0 0.0
        %381 = vmatprep.subr.mxu0 0.0
        %382 = vmatpush1.msra.mxu0 0.0
        %383 = vmatprep.subr.mxu0 0.0
        %384 = vmatpush1.msra.mxu0 0.0
        %385 = vmatprep.subr.mxu0 0.0
        %386 = vmatpush1.msra.mxu0 0.0
        %387 = vmatprep.subr.mxu0 0.0
        %388 = vmatpush1.msra.mxu0 0.0
        %389 = vmatprep.subr.mxu0 0.0
        %390 = vmatpush1.msra.mxu0 0.0
        %391 = vmatprep.subr.mxu0 0.0
        %392 = vmatpush1.msra.mxu0 0.0
        %393 = vmatprep.subr.mxu0 0.0
        %394 = vmatpush1.msra.mxu0 0.0
        %395 = vmatprep.mubr.f32.mxu0 0.0
        %396 = vmatmul.mubr.f32.gmra.mrb[0].mxu0 %v329
        %v397 = vpop.f32.mrb[0].mxu0
        %v398 = vadd.f32 %v327, %v397
        %v399 = vpop.f32.mrb[0].mxu0
        %400 = vdwg.mxu0
        %v401 = vmax.f32 %v398, 0.0
        %v402 = vld [vmem:[%s3] sm:$0xff]
        %v403 = vld [vmem:[%s4] sm:$0x1]
        %vm404 = vcmask 64512
        %v406 = vsel %vm404, %v401, 0
        %408 = vmatprep.subr.mxu0 0.0
        %409 = vmatpush1.msra.mxu0 %v402
        %410 = vmatprep.subr.mxu0 0.0
        %411 = vmatpush1.msra.mxu0 0.0
        %412 = vmatprep.subr.mxu0 0.0
        %413 = vmatpush1.msra.mxu0 0.0
        %414 = vmatprep.subr.mxu0 0.0
        %415 = vmatpush1.msra.mxu0 0.0
        %416 = vmatprep.subr.mxu0 0.0
        %417 = vmatpush1.msra.mxu0 0.0
        %418 = vmatprep.subr.mxu0 0.0
        %419 = vmatpush1.msra.mxu0 0.0
        %420 = vmatprep.subr.mxu0 0.0
        %421 = vmatpush1.msra.mxu0 0.0
        %422 = vmatprep.subr.mxu0 0.0
        %423 = vmatpush1.msra.mxu0 0.0
        %424 = vmatprep.subr.mxu0 0.0
        %425 = vmatpush1.msra.mxu0 0.0
        %426 = vmatprep.subr.mxu0 0.0
        %427 = vmatpush1.msra.mxu0 0.0
        %428 = vmatprep.subr.mxu0 0.0
        %429 = vmatpush1.msra.mxu0 0.0
        %430 = vmatprep.subr.mxu0 0.0
        %431 = vmatpush1.msra.mxu0 0.0
        %432 = vmatprep.subr.mxu0 0.0
        %433 = vmatpush1.msra.mxu0 0.0
        %434 = vmatprep.subr.mxu0 0.0
        %435 = vmatpush1.msra.mxu0 0.0
        %436 = vmatprep.subr.mxu0 0.0
        %437 = vmatpush1.msra.mxu0 0.0
        %438 = vmatprep.subr.mxu0 0.0
        %439 = vmatpush1.msra.mxu0 0.0
        %440 = vmatprep.subr.mxu0 0.0
        %441 = vmatpush1.msra.mxu0 0.0
        %442 = vmatprep.subr.mxu0 0.0
        %443 = vmatpush1.msra.mxu0 0.0
        %444 = vmatprep.subr.mxu0 0.0
        %445 = vmatpush1.msra.mxu0 0.0
        %446 = vmatprep.subr.mxu0 0.0
        %447 = vmatpush1.msra.mxu0 0.0
        %448 = vmatprep.subr.mxu0 0.0
        %449 = vmatpush1.msra.mxu0 0.0
        %450 = vmatprep.subr.mxu0 0.0
        %451 = vmatpush1.msra.mxu0 0.0
        %452 = vmatprep.subr.mxu0 0.0
        %453 = vmatpush1.msra.mxu0 0.0
        %454 = vmatprep.subr.mxu0 0.0
        %455 = vmatpush1.msra.mxu0 0.0
        %456 = vmatprep.subr.mxu0 0.0
        %457 = vmatpush1.msra.mxu0 0.0
        %458 = vmatprep.subr.mxu0 0.0
        %459 = vmatpush1.msra.mxu0 0.0
        %460 = vmatprep.subr.mxu0 0.0
        %461 = vmatpush1.msra.mxu0 0.0
        %462 = vmatprep.subr.mxu0 0.0
        %463 = vmatpush1.msra.mxu0 0.0
        %464 = vmatprep.subr.mxu0 0.0
        %465 = vmatpush1.msra.mxu0 0.0
        %466 = vmatprep.subr.mxu0 0.0
        %467 = vmatpush1.msra.mxu0 0.0
        %468 = vmatprep.subr.mxu0 0.0
        %469 = vmatpush1.msra.mxu0 0.0
        %470 = vmatprep.subr.mxu0 0.0
        %471 = vmatpush1.msra.mxu0 0.0
        %472 = vmatprep.mubr.f32.mxu0 0.0
        %473 = vmatmul.mubr.f32.gmra.mrb[0].mxu0 %v406
        %v474 = vpop.f32.mrb[0].mxu0
        %v475 = vadd.f32 %v403, %v474
        %v476 = vpop.f32.mrb[0].mxu0
        %477 = vdwg.mxu0
        %v478 = vsub.f32 0.0, %v475
        %v479 = vmul.f32 %v478, 1.442695
        %v480 = vpow.pop %v479
        %v481 = vadd.f32 %v480, 1.0
        %v482 = vrcp.pop %v481
        %v483 = vmul.f32 1.0, %v482
        %484 = vst.msk [vmem:[%s248] sm:$0x1] %vm311, %v483
      $region48: #{basic_block_forward.12} parent=39 // pred_fallthru
        _
      %p485 = scmp.lt.s32.totalorder %s20, 1
      %s486 = scalar_select %p485, %s20, 1
      %s487 = scalar_lea.vmem %s5, %s486
      // Predicated region
      $region49: #{basic_block_forward.12} parent=39 // pred_check
        %p488 = pneg %p158
      $region50: #{basic_block_forward.12} parent=39 // pred_check_branch
        %490 = sbr.rel (%p488) target = $region52
      $region51: #{basic_block_forward.12} parent=39 // pred_region
        _
      $region52: #{basic_block_forward.12} parent=39 // pred_fallthru
        _
    $region40: #{basic_block_forward.12} parent=5 // pred_fallthru
      _
    %p491 = scmp.le.s32.totalorder 2, %s11
    // Predicated region
    $region53: #{basic_block_forward.12} parent=5 // pred_check
      %p492 = pneg %p491
    $region54: #{basic_block_forward.12} parent=5 // pred_check_branch
      %494 = sbr.rel (%p492) target = $region56
    $region55: #{basic_block_forward.12} parent=5 // pred_region
      %s495 = ssub.s32 %s11, 2
      // Predicated region
      $region57: #{basic_block_forward.12} parent=55 // pred_check
        %p496 = pneg %p164
      $region58: #{basic_block_forward.12} parent=55 // pred_check_branch
        %498 = sbr.rel (%p496) target = $region60
      $region59: #{basic_block_forward.12} parent=55 // pred_region
        %p499 = scmp.lt.s32.totalorder %s22, 1
        %s500 = scalar_select %p499, %s22, 1
        %s501 = scalar_lea.vmem %s5, %s500
      $region60: #{basic_block_forward.12} parent=55 // pred_fallthru
        _
    $region56: #{basic_block_forward.12} parent=5 // pred_fallthru
      _
  $region6: #{basic_block_forward.12} parent=0 // loop_footer
    %s15 = sadd.s32 1, %s11
  $region7: #{basic_block_forward.12} parent=0 // loop_footer_branch
    %10 = sbr.rel target = $region3
  $region8: #{basic_block_forward.12} parent=0 // loop_exit
    _

// kernel: basic_block_forward.13
$region0: #{basic_block_forward.13}
  #allocation0 [shape = 'u32[]', space=smem, size = 0x4, offset = 0x4, fixed_abs, tag = 'smem constant byte address 0x4 - core index']
  #allocation1 [shape = 'u32[144,128]{1,0:T(1,128)}', space=vmem, size = 0x12000, scoped, tag = 'internal scratch']
  %s0 = inlined_call_operand.vmem [shape: f32[2,256,64], index: 0, kind: input, shape index: {}]
  %s1 = inlined_call_operand.vmem [shape: f32[2,256,64], index: 1, kind: input, shape index: {}]
  %s2 = inlined_call_operand.vmem [shape: f32[2,1,64], index: 2, kind: input, shape index: {}]
  %s3 = inlined_call_operand.vmem [shape: f32[1,1,64], index: 3, kind: input, shape index: {}]
  %s4 = inlined_call_operand.vmem [shape: f32[1,1,64], index: 4, kind: input, shape index: {}]
  %s5 = inlined_call_operand.vmem [shape: f32[2,256,64], index: 5, kind: output, shape index: {}]
  %s6 = sld [smem:[#allocation0]]
  $region53: #{basic_block_forward.13} parent=0
    _
  %s8 = ssub.s32 1, %s6
  %s9 = scalar_select 0, %s8, %s6
  loop: start=0, step=1, limit=6
  $region2: #{basic_block_forward.13} parent=0 // loop_pre_header
    _
  $region3: #{basic_block_forward.13} parent=0 // loop_header
    %s11 = sphi 0, %s15
    %p12 = scmp.ge.s32.totalorder %s11, 6
    %s18 = sphi 0, %s30
    %s19 = sphi 0, %s26
    %s20 = sphi 0, %s18
    %s21 = sphi 0, %s19
    %s22 = sphi 0, %s20
    %s23 = sphi 0, %s21
    %s35 = sphi 0, %s37
    %s38 = sphi 0, %s35
    %s39 = sphi 0, %s38
    %s55 = sphi 0, %s39
    %s63 = sphi 0, %s65
    %s66 = sphi 0, %s63
    %s67 = sphi 0, %s66
    %s83 = sphi 0, %s67
    %s89 = sphi 0, %s91
    %s92 = sphi 0, %s89
    %s93 = sphi 0, %s92
    %s109 = sphi 0, %s93
    %s113 = sphi 0, %s113
    %s115 = sphi 0, %s113
    %s116 = sphi 0, %s115
    %s130 = sphi 0, %s116
    %s134 = sphi 0, %s134
    %s136 = sphi 0, %s134
    %s137 = sphi 0, %s136
    %s151 = sphi 0, %s137
    %s159 = sphi 0, %s161
    %s162 = sphi 0, %s159
    %s163 = sphi 0, %s162
    %s179 = sphi 0, %s163
  $region4: #{basic_block_forward.13} parent=0 // loop_header_branch
    %14 = sbr.rel (%p12) target = $region8
  $region5: #{basic_block_forward.13} parent=0 // loop_body
    %s16 = ssub.s32 %s11, 1
    %s17 = ssub.s32 %s11, 2
    %s24 = sadd.s32 1, %s19
    %p25 = scmp.ge.s32.totalorder %s24, 2
    %s26 = scalar_select %p25, 0, %s24
    %s27 = sadd.s32 1, %s18
    %s28 = scalar_select %p25, %s27, %s18
    %p29 = scmp.ge.s32.totalorder %s28, 2
    %s30 = scalar_select %p29, 0, %s28
    %s31 = ssub.s32 %s18, %s30
    %s32 = ssub.s32 %s19, %s26
    %s33 = sor.u32 %s31, %s32
    %p34 = scmp.eq.s32.totalorder %s33, 0
    %s36 = sadd.s32 %s35, 1
    %s37 = scalar_select %p34, %s35, %s36
    %p40 = pneg %p34
    %p41 = scmp.eq.s32.totalorder %s11, 3
    %p42 = por %p40, %p41
    %p43 = scmp.ne.s32.totalorder %s35, %s38
    %p44 = scmp.eq.s32.totalorder %s11, 0
    %p45 = por %p43, %p44
    %p46 = scmp.ne.s32.totalorder %s35, %s38
    %p47 = scmp.eq.s32.totalorder %s16, 3
    %p48 = por %p46, %p47
    %p49 = scmp.ne.s32.totalorder %s38, %s39
    %p50 = scmp.eq.s32.totalorder %s16, 0
    %p51 = por %p49, %p50
    %p52 = scmp.ne.s32.totalorder %s38, %s39
    %p53 = scmp.eq.s32.totalorder %s17, 3
    %p54 = por %p52, %p53
    %p56 = scmp.ne.s32.totalorder %s39, %s55
    %p57 = scmp.eq.s32.totalorder %s17, 0
    %p58 = por %p56, %p57
    %s59 = ssub.s32 %s18, %s30
    %s60 = ssub.s32 %s19, %s26
    %s61 = sor.u32 %s59, %s60
    %p62 = scmp.eq.s32.totalorder %s61, 0
    %s64 = sadd.s32 %s63, 1
    %s65 = scalar_select %p62, %s63, %s64
    %p68 = pneg %p62
    %p69 = scmp.eq.s32.totalorder %s11, 3
    %p70 = por %p68, %p69
    %p71 = scmp.ne.s32.totalorder %s63, %s66
    %p72 = scmp.eq.s32.totalorder %s11, 0
    %p73 = por %p71, %p72
    %p74 = scmp.ne.s32.totalorder %s63, %s66
    %p75 = scmp.eq.s32.totalorder %s16, 3
    %p76 = por %p74, %p75
    %p77 = scmp.ne.s32.totalorder %s66, %s67
    %p78 = scmp.eq.s32.totalorder %s16, 0
    %p79 = por %p77, %p78
    %p80 = scmp.ne.s32.totalorder %s66, %s67
    %p81 = scmp.eq.s32.totalorder %s17, 3
    %p82 = por %p80, %p81
    %p84 = scmp.ne.s32.totalorder %s67, %s83
    %p85 = scmp.eq.s32.totalorder %s17, 0
    %p86 = por %p84, %p85
    %s87 = ssub.s32 %s18, %s30
    %p88 = scmp.eq.s32.totalorder %s87, 0
    %s90 = sadd.s32 %s89, 1
    %s91 = scalar_select %p88, %s89, %s90
    %p94 = pneg %p88
    %p95 = scmp.eq.s32.totalorder %s11, 3
    %p96 = por %p94, %p95
    %p97 = scmp.ne.s32.totalorder %s89, %s92
    %p98 = scmp.eq.s32.totalorder %s11, 0
    %p99 = por %p97, %p98
    %p100 = scmp.ne.s32.totalorder %s89, %s92
    %p101 = scmp.eq.s32.totalorder %s16, 3
    %p102 = por %p100, %p101
    %p103 = scmp.ne.s32.totalorder %s92, %s93
    %p104 = scmp.eq.s32.totalorder %s16, 0
    %p105 = por %p103, %p104
    %p106 = scmp.ne.s32.totalorder %s92, %s93
    %p107 = scmp.eq.s32.totalorder %s17, 3
    %p108 = por %p106, %p107
    %p110 = scmp.ne.s32.totalorder %s93, %s109
    %p111 = scmp.eq.s32.totalorder %s17, 0
    %p112 = por %p110, %p111
    %s114 = sadd.s32 %s113, 1
    %p117 = scmp.eq.s32.totalorder %s11, 3
    %p118 = scmp.ne.s32.totalorder %s113, %s115
    %p119 = scmp.eq.s32.totalorder %s11, 0
    %p120 = por %p118, %p119
    %p121 = scmp.ne.s32.totalorder %s113, %s115
    %p122 = scmp.eq.s32.totalorder %s16, 3
    %p123 = por %p121, %p122
    %p124 = scmp.ne.s32.totalorder %s115, %s116
    %p125 = scmp.eq.s32.totalorder %s16, 0
    %p126 = por %p124, %p125
    %p127 = scmp.ne.s32.totalorder %s115, %s116
    %p128 = scmp.eq.s32.totalorder %s17, 3
    %p129 = por %p127, %p128
    %p131 = scmp.ne.s32.totalorder %s116, %s130
    %p132 = scmp.eq.s32.totalorder %s17, 0
    %p133 = por %p131, %p132
    %s135 = sadd.s32 %s134, 1
    %p138 = scmp.eq.s32.totalorder %s11, 3
    %p139 = scmp.ne.s32.totalorder %s134, %s136
    %p140 = scmp.eq.s32.totalorder %s11, 0
    %p141 = por %p139, %p140
    %p142 = scmp.ne.s32.totalorder %s134, %s136
    %p143 = scmp.eq.s32.totalorder %s16, 3
    %p144 = por %p142, %p143
    %p145 = scmp.ne.s32.totalorder %s136, %s137
    %p146 = scmp.eq.s32.totalorder %s16, 0
    %p147 = por %p145, %p146
    %p148 = scmp.ne.s32.totalorder %s136, %s137
    %p149 = scmp.eq.s32.totalorder %s17, 3
    %p150 = por %p148, %p149
    %p152 = scmp.ne.s32.totalorder %s137, %s151
    %p153 = scmp.eq.s32.totalorder %s17, 0
    %p154 = por %p152, %p153
    %s155 = ssub.s32 %s18, %s30
    %s156 = ssub.s32 %s19, %s26
    %s157 = sor.u32 %s155, %s156
    %p158 = scmp.eq.s32.totalorder %s157, 0
    %s160 = sadd.s32 %s159, 1
    %s161 = scalar_select %p158, %s159, %s160
    %p164 = pneg %p158
    %p165 = scmp.eq.s32.totalorder %s11, 3
    %p166 = por %p164, %p165
    %p167 = scmp.ne.s32.totalorder %s159, %s162
    %p168 = scmp.eq.s32.totalorder %s11, 0
    %p169 = por %p167, %p168
    %p170 = scmp.ne.s32.totalorder %s159, %s162
    %p171 = scmp.eq.s32.totalorder %s16, 3
    %p172 = por %p170, %p171
    %p173 = scmp.ne.s32.totalorder %s162, %s163
    %p174 = scmp.eq.s32.totalorder %s16, 0
    %p175 = por %p173, %p174
    %p176 = scmp.ne.s32.totalorder %s162, %s163
    %p177 = scmp.eq.s32.totalorder %s17, 3
    %p178 = por %p176, %p177
    %p180 = scmp.ne.s32.totalorder %s163, %s179
    %p181 = scmp.eq.s32.totalorder %s17, 0
    %p182 = por %p180, %p181
    %p183 = scmp.le.s32.totalorder 1, %s11
    %p184 = scmp.lt.s32.totalorder %s11, 5
    %p185 = pnand %p183, %p184
    %p186 = pneg %p185
    // Predicated region
    $region9: #{basic_block_forward.13} parent=5 // pred_check
      _
    $region10: #{basic_block_forward.13} parent=5 // pred_check_branch
      %188 = sbr.rel (%p185) target = $region12
    $region11: #{basic_block_forward.13} parent=5 // pred_region
      %s189 = ssub.s32 %s11, 1
      // Predicated region
      $region13: #{basic_block_forward.13} parent=11 // pred_check
        %p190 = pneg %p126
      $region14: #{basic_block_forward.13} parent=11 // pred_check_branch
        %192 = sbr.rel (%p190) target = $region16
      $region15: #{basic_block_forward.13} parent=11 // pred_region
        _
      $region16: #{basic_block_forward.13} parent=11 // pred_fallthru
        _
      // Predicated region
      $region17: #{basic_block_forward.13} parent=11 // pred_check
        %p193 = pneg %p147
      $region18: #{basic_block_forward.13} parent=11 // pred_check_branch
        %195 = sbr.rel (%p193) target = $region20
      $region19: #{basic_block_forward.13} parent=11 // pred_region
        _
      $region20: #{basic_block_forward.13} parent=11 // pred_fallthru
        _
    $region12: #{basic_block_forward.13} parent=5 // pred_fallthru
      _
    %p196 = scmp.lt.s32.totalorder %s11, 4
    // Predicated region
    $region21: #{basic_block_forward.13} parent=5 // pred_check
      %p197 = pneg %p196
    $region22: #{basic_block_forward.13} parent=5 // pred_check_branch
      %199 = sbr.rel (%p197) target = $region24
    $region23: #{basic_block_forward.13} parent=5 // pred_region
      // Predicated region
      $region25: #{basic_block_forward.13} parent=23 // pred_check
        %p200 = pneg %p45
      $region26: #{basic_block_forward.13} parent=23 // pred_check_branch
        %202 = sbr.rel (%p200) target = $region28
      $region27: #{basic_block_forward.13} parent=23 // pred_region
        %s203 = smul.u32 16, %s19
        %p204 = scmp.lt.s32.totalorder %s18, 1
        %s205 = scalar_select %p204, %s18, 1
        %p206 = scmp.lt.s32.totalorder %s203, 31
        %s207 = scalar_select %p206, %s203, 31
        %s208 = smul.addr %s205, 32
        %s209 = sadd.s32 %s207, %s208
        %s210 = smul.addr %s209, 8
        %s211 = scalar_lea.vmem %s0, %s210
        %s212 = smul.u32 16, %s19
      $region28: #{basic_block_forward.13} parent=23 // pred_fallthru
        _
      // Predicated region
      $region29: #{basic_block_forward.13} parent=23 // pred_check
        %p213 = pneg %p73
      $region30: #{basic_block_forward.13} parent=23 // pred_check_branch
        %215 = sbr.rel (%p213) target = $region32
      $region31: #{basic_block_forward.13} parent=23 // pred_region
        %s216 = smul.u32 16, %s19
        %p217 = scmp.lt.s32.totalorder %s18, 1
        %s218 = scalar_select %p217, %s18, 1
        %p219 = scmp.lt.s32.totalorder %s216, 31
        %s220 = scalar_select %p219, %s216, 31
        %s221 = smul.addr %s218, 32
        %s222 = sadd.s32 %s220, %s221
        %s223 = smul.addr %s222, 8
        %s224 = scalar_lea.vmem %s1, %s223
        %s225 = smul.u32 16, %s19
      $region32: #{basic_block_forward.13} parent=23 // pred_fallthru
        _
      // Predicated region
      $region33: #{basic_block_forward.13} parent=23 // pred_check
        %p226 = pneg %p99
      $region34: #{basic_block_forward.13} parent=23 // pred_check_branch
        %228 = sbr.rel (%p226) target = $region36
      $region35: #{basic_block_forward.13} parent=23 // pred_region
        %p229 = scmp.lt.s32.totalorder %s18, 1
        %s230 = scalar_select %p229, %s18, 1
        %s231 = scalar_lea.vmem %s2, %s230
      $region36: #{basic_block_forward.13} parent=23 // pred_fallthru
        _
    $region24: #{basic_block_forward.13} parent=5 // pred_fallthru
      _
    %p232 = scmp.le.s32.totalorder 1, %s11
    %p233 = scmp.lt.s32.totalorder %s11, 5
    %p234 = pnand %p232, %p233
    %p235 = pneg %p234
    // Predicated region
    $region37: #{basic_block_forward.13} parent=5 // pred_check
      _
    $region38: #{basic_block_forward.13} parent=5 // pred_check_branch
      %237 = sbr.rel (%p234) target = $region40
    $region39: #{basic_block_forward.13} parent=5 // pred_region
      %s238 = ssub.s32 %s11, 1
      %s239 = smul.u32 16, %s21
      %p240 = scmp.lt.s32.totalorder %s20, 1
      %s241 = scalar_select %p240, %s20, 1
      %p242 = scmp.lt.s32.totalorder %s239, 31
      %s243 = scalar_select %p242, %s239, 31
      %s244 = smul.addr %s241, 32
      %s245 = sadd.s32 %s243, %s244
      %s246 = smul.addr %s245, 8
      %s247 = scalar_lea.vmem %s0, %s246
      %p248 = pneg %p51
      %p249 = pneg %p48
      %s250 = smul.u32 16, %s21
      %p251 = scmp.lt.s32.totalorder %s20, 1
      %s252 = scalar_select %p251, %s20, 1
      %p253 = scmp.lt.s32.totalorder %s250, 31
      %s254 = scalar_select %p253, %s250, 31
      %s255 = smul.addr %s252, 32
      %s256 = sadd.s32 %s254, %s255
      %s257 = smul.addr %s256, 8
      %s258 = scalar_lea.vmem %s1, %s257
      %p259 = pneg %p79
      %p260 = pneg %p76
      %p261 = scmp.lt.s32.totalorder %s20, 1
      %s262 = scalar_select %p261, %s20, 1
      %s263 = scalar_lea.vmem %s2, %s262
      %p264 = pneg %p105
      %p265 = pneg %p102
      %p266 = pneg %p126
      %p267 = pneg %p123
      %p268 = pneg %p147
      %p269 = pneg %p144
      %p270 = pneg %p175
      %p271 = pneg %p172
      %s272 = smul.u32 16, %s21
      %p273 = scmp.lt.s32.totalorder %s20, 1
      %s274 = scalar_select %p273, %s20, 1
      %p275 = scmp.lt.s32.totalorder %s272, 31
      %s276 = scalar_select %p275, %s272, 31
      %s277 = smul.addr %s274, 32
      %s278 = sadd.s32 %s276, %s277
      %s279 = smul.addr %s278, 8
      %s280 = scalar_lea.vmem %s5, %s279
      %s281 = smul.u32 16, %s21
      %p282 = scmp.lt.s32.totalorder %s20, 1
      %s283 = scalar_select %p282, %s20, 1
      %p284 = scmp.lt.s32.totalorder %s281, 31
      %s285 = scalar_select %p284, %s281, 31
      %s286 = smul.addr %s283, 32
      %s287 = sadd.s32 %s285, %s286
      %s288 = smul.addr %s287, 8
      %s289 = scalar_lea.vmem %s0, %s288
      %s290 = smul.u32 16, %s21
      %s291 = smul.u32 16, %s21
      %p292 = scmp.lt.s32.totalorder %s20, 1
      %s293 = scalar_select %p292, %s20, 1
      %p294 = scmp.lt.s32.totalorder %s291, 31
      %s295 = scalar_select %p294, %s291, 31
      %s296 = smul.addr %s293, 32
      %s297 = sadd.s32 %s295, %s296
      %s298 = smul.addr %s297, 8
      %s299 = scalar_lea.vmem %s1, %s298
      %s300 = smul.u32 16, %s21
      %p301 = scmp.lt.s32.totalorder %s20, 1
      %s302 = scalar_select %p301, %s20, 1
      %s303 = scalar_lea.vmem %s2, %s302
      %s304 = smul.u32 16, %s21
      %p305 = scmp.lt.s32.totalorder %s20, 1
      %s306 = scalar_select %p305, %s20, 1
      %p307 = scmp.lt.s32.totalorder %s304, 31
      %s308 = scalar_select %p307, %s304, 31
      %s309 = smul.addr %s306, 32
      %s310 = sadd.s32 %s308, %s309
      %s311 = smul.addr %s310, 8
      %s312 = scalar_lea.vmem %s5, %s311
      %s313 = smul.u32 16, %s21
      %v314 = vld [vmem:[%s289] sm:$0xff]
      %v315 = vld [vmem:[%s289 + $0x8] sm:$0xff]
      %v316 = vld [vmem:[%s289 + $0x10] sm:$0xff]
      %v317 = vld [vmem:[%s289 + $0x18] sm:$0xff]
      %v318 = vld [vmem:[%s289 + $0x20] sm:$0xff]
      %v319 = vld [vmem:[%s289 + $0x28] sm:$0xff]
      %v320 = vld [vmem:[%s289 + $0x30] sm:$0xff]
      %v321 = vld [vmem:[%s289 + $0x38] sm:$0xff]
      %v322 = vld [vmem:[%s289 + $0x40] sm:$0xff]
      %v323 = vld [vmem:[%s289 + $0x48] sm:$0xff]
      %v324 = vld [vmem:[%s289 + $0x50] sm:$0xff]
      %v325 = vld [vmem:[%s289 + $0x58] sm:$0xff]
      %v326 = vld [vmem:[%s289 + $0x60] sm:$0xff]
      %v327 = vld [vmem:[%s289 + $0x68] sm:$0xff]
      %v328 = vld [vmem:[%s289 + $0x70] sm:$0xff]
      %v329 = vld [vmem:[%s289 + $0x78] sm:$0xff]
      %v330 = vld [vmem:[%s299] sm:$0xff]
      %v331 = vld [vmem:[%s299 + $0x8] sm:$0xff]
      %v332 = vld [vmem:[%s299 + $0x10] sm:$0xff]
      %v333 = vld [vmem:[%s299 + $0x18] sm:$0xff]
      %v334 = vld [vmem:[%s299 + $0x20] sm:$0xff]
      %v335 = vld [vmem:[%s299 + $0x28] sm:$0xff]
      %v336 = vld [vmem:[%s299 + $0x30] sm:$0xff]
      %v337 = vld [vmem:[%s299 + $0x38] sm:$0xff]
      %v338 = vld [vmem:[%s299 + $0x40] sm:$0xff]
      %v339 = vld [vmem:[%s299 + $0x48] sm:$0xff]
      %v340 = vld [vmem:[%s299 + $0x50] sm:$0xff]
      %v341 = vld [vmem:[%s299 + $0x58] sm:$0xff]
      %v342 = vld [vmem:[%s299 + $0x60] sm:$0xff]
      %v343 = vld [vmem:[%s299 + $0x68] sm:$0xff]
      %v344 = vld [vmem:[%s299 + $0x70] sm:$0xff]
      %v345 = vld [vmem:[%s299 + $0x78] sm:$0xff]
      %v346 = vld [vmem:[%s303] sm:$0x1]
      %v348 = vlaneseq
      %v349 = vshrl.u32 %v348, 7
      %v350 = vsub.s32 0, %v349
      %v351 = vrot.slane %v346, %v350
      %v353 = vmul.f32 %v351, %v314
      %v354 = vmul.f32 %v351, %v315
      %v355 = vmul.f32 %v351, %v316
      %v356 = vmul.f32 %v351, %v317
      %v357 = vmul.f32 %v351, %v318
      %v358 = vmul.f32 %v351, %v319
      %v359 = vmul.f32 %v351, %v320
      %v360 = vmul.f32 %v351, %v321
      %v361 = vmul.f32 %v351, %v322
      %v362 = vmul.f32 %v351, %v323
      %v363 = vmul.f32 %v351, %v324
      %v364 = vmul.f32 %v351, %v325
      %v365 = vmul.f32 %v351, %v326
      %v366 = vmul.f32 %v351, %v327
      %v367 = vmul.f32 %v351, %v328
      %v368 = vmul.f32 %v351, %v329
      %v369 = vmul.f32 %v353, %v330
      %v370 = vmul.f32 %v354, %v331
      %v371 = vmul.f32 %v355, %v332
      %v372 = vmul.f32 %v356, %v333
      %v373 = vmul.f32 %v357, %v334
      %v374 = vmul.f32 %v358, %v335
      %v375 = vmul.f32 %v359, %v336
      %v376 = vmul.f32 %v360, %v337
      %v377 = vmul.f32 %v361, %v338
      %v378 = vmul.f32 %v362, %v339
      %v379 = vmul.f32 %v363, %v340
      %v380 = vmul.f32 %v364, %v341
      %v381 = vmul.f32 %v365, %v342
      %v382 = vmul.f32 %v366, %v343
      %v383 = vmul.f32 %v367, %v344
      %v384 = vmul.f32 %v368, %v345
      %v385 = vld [vmem:[%s3] sm:$0x1]
      %v387 = vlaneseq
      %v388 = vshrl.u32 %v387, 7
      %v389 = vsub.s32 0, %v388
      %v390 = vrot.slane %v385, %v389
      %v392 = vmul.f32 %v369, %v390
      %v393 = vmul.f32 %v370, %v390
      %v394 = vmul.f32 %v371, %v390
      %v395 = vmul.f32 %v372, %v390
      %v396 = vmul.f32 %v373, %v390
      %v397 = vmul.f32 %v374, %v390
      %v398 = vmul.f32 %v375, %v390
      %v399 = vmul.f32 %v376, %v390
      %v400 = vmul.f32 %v377, %v390
      %v401 = vmul.f32 %v378, %v390
      %v402 = vmul.f32 %v379, %v390
      %v403 = vmul.f32 %v380, %v390
      %v404 = vmul.f32 %v381, %v390
      %v405 = vmul.f32 %v382, %v390
      %v406 = vmul.f32 %v383, %v390
      %v407 = vmul.f32 %v384, %v390
      %v408 = vld [vmem:[%s4] sm:$0x1]
      %v410 = vlaneseq
      %v411 = vshrl.u32 %v410, 7
      %v412 = vsub.s32 0, %v411
      %v413 = vrot.slane %v408, %v412
      %v415 = vadd.f32 %v392, %v413
      %v416 = vadd.f32 %v393, %v413
      %v417 = vadd.f32 %v394, %v413
      %v418 = vadd.f32 %v395, %v413
      %v419 = vadd.f32 %v396, %v413
      %v420 = vadd.f32 %v397, %v413
      %v421 = vadd.f32 %v398, %v413
      %v422 = vadd.f32 %v399, %v413
      %v423 = vadd.f32 %v400, %v413
      %v424 = vadd.f32 %v401, %v413
      %v425 = vadd.f32 %v402, %v413
      %v426 = vadd.f32 %v403, %v413
      %v427 = vadd.f32 %v404, %v413
      %v428 = vadd.f32 %v405, %v413
      %v429 = vadd.f32 %v406, %v413
      %v430 = vadd.f32 %v407, %v413
      %v431 = vadd.f32 %v415, %v330
      %v432 = vadd.f32 %v416, %v331
      %v433 = vadd.f32 %v417, %v332
      %v434 = vadd.f32 %v418, %v333
      %v435 = vadd.f32 %v419, %v334
      %v436 = vadd.f32 %v420, %v335
      %v437 = vadd.f32 %v421, %v336
      %v438 = vadd.f32 %v422, %v337
      %v439 = vadd.f32 %v423, %v338
      %v440 = vadd.f32 %v424, %v339
      %v441 = vadd.f32 %v425, %v340
      %v442 = vadd.f32 %v426, %v341
      %v443 = vadd.f32 %v427, %v342
      %v444 = vadd.f32 %v428, %v343
      %v445 = vadd.f32 %v429, %v344
      %v446 = vadd.f32 %v430, %v345
      %vm447 = vcmask 523264
      %448 = vst.msk [vmem:[%s312] sm:$0xff] %vm447, %v431
      %449 = vst.msk [vmem:[%s312 + $0x8] sm:$0xff] %vm447, %v432
      %450 = vst.msk [vmem:[%s312 + $0x10] sm:$0xff] %vm447, %v433
      %451 = vst.msk [vmem:[%s312 + $0x18] sm:$0xff] %vm447, %v434
      %452 = vst.msk [vmem:[%s312 + $0x20] sm:$0xff] %vm447, %v435
      %453 = vst.msk [vmem:[%s312 + $0x28] sm:$0xff] %vm447, %v436
      %454 = vst.msk [vmem:[%s312 + $0x30] sm:$0xff] %vm447, %v437
      %455 = vst.msk [vmem:[%s312 + $0x38] sm:$0xff] %vm447, %v438
      %456 = vst.msk [vmem:[%s312 + $0x40] sm:$0xff] %vm447, %v439
      %457 = vst.msk [vmem:[%s312 + $0x48] sm:$0xff] %vm447, %v440
      %458 = vst.msk [vmem:[%s312 + $0x50] sm:$0xff] %vm447, %v441
      %459 = vst.msk [vmem:[%s312 + $0x58] sm:$0xff] %vm447, %v442
      %460 = vst.msk [vmem:[%s312 + $0x60] sm:$0xff] %vm447, %v443
      %461 = vst.msk [vmem:[%s312 + $0x68] sm:$0xff] %vm447, %v444
      %462 = vst.msk [vmem:[%s312 + $0x70] sm:$0xff] %vm447, %v445
      %463 = vst.msk [vmem:[%s312 + $0x78] sm:$0xff] %vm447, %v446
      %s464 = smul.u32 16, %s21
      %p465 = scmp.lt.s32.totalorder %s20, 1
      %s466 = scalar_select %p465, %s20, 1
      %p467 = scmp.lt.s32.totalorder %s464, 31
      %s468 = scalar_select %p467, %s464, 31
      %s469 = smul.addr %s466, 32
      %s470 = sadd.s32 %s468, %s469
      %s471 = smul.addr %s470, 8
      %s472 = scalar_lea.vmem %s5, %s471
      // Predicated region
      $region41: #{basic_block_forward.13} parent=39 // pred_check
        %p473 = pneg %p172
      $region42: #{basic_block_forward.13} parent=39 // pred_check_branch
        %475 = sbr.rel (%p473) target = $region44
      $region43: #{basic_block_forward.13} parent=39 // pred_region
        %s476 = smul.u32 16, %s21
      $region44: #{basic_block_forward.13} parent=39 // pred_fallthru
        _
    $region40: #{basic_block_forward.13} parent=5 // pred_fallthru
      _
    %p477 = scmp.le.s32.totalorder 2, %s11
    // Predicated region
    $region45: #{basic_block_forward.13} parent=5 // pred_check
      %p478 = pneg %p477
    $region46: #{basic_block_forward.13} parent=5 // pred_check_branch
      %480 = sbr.rel (%p478) target = $region48
    $region47: #{basic_block_forward.13} parent=5 // pred_region
      %s481 = ssub.s32 %s11, 2
      // Predicated region
      $region49: #{basic_block_forward.13} parent=47 // pred_check
        %p482 = pneg %p178
      $region50: #{basic_block_forward.13} parent=47 // pred_check_branch
        %484 = sbr.rel (%p482) target = $region52
      $region51: #{basic_block_forward.13} parent=47 // pred_region
        %s485 = smul.u32 16, %s23
        %p486 = scmp.lt.s32.totalorder %s22, 1
        %s487 = scalar_select %p486, %s22, 1
        %p488 = scmp.lt.s32.totalorder %s485, 31
        %s489 = scalar_select %p488, %s485, 31
        %s490 = smul.addr %s487, 32
        %s491 = sadd.s32 %s489, %s490
        %s492 = smul.addr %s491, 8
        %s493 = scalar_lea.vmem %s5, %s492
      $region52: #{basic_block_forward.13} parent=47 // pred_fallthru
        _
    $region48: #{basic_block_forward.13} parent=5 // pred_fallthru
      _
  $region6: #{basic_block_forward.13} parent=0 // loop_footer
    %s15 = sadd.s32 1, %s11
  $region7: #{basic_block_forward.13} parent=0 // loop_footer_branch
    %10 = sbr.rel target = $region3
  $region8: #{basic_block_forward.13} parent=0 // loop_exit
    _

// kernel: basic_block_forward.11
$region0: #{basic_block_forward.11}
  #allocation0 [shape = 'u32[]', space=smem, size = 0x4, offset = 0x4, fixed_abs, tag = 'smem constant byte address 0x4 - core index']
  #allocation1 [shape = 'u32[144,128]{1,0:T(1,128)}', space=vmem, size = 0x12000, scoped, tag = 'internal scratch']
  %s0 = inlined_call_operand.vmem [shape: f32[512,64], index: 0, kind: input, shape index: {}]
  %s1 = inlined_call_operand.vmem [shape: f32[512,64], index: 1, kind: input, shape index: {}]
  %s2 = inlined_call_operand.vmem [shape: f32[1,64], index: 2, kind: input, shape index: {}]
  %s3 = inlined_call_operand.vmem [shape: f32[1,64], index: 3, kind: input, shape index: {}]
  %s4 = inlined_call_operand.vmem [shape: f32[1,64], index: 4, kind: input, shape index: {}]
  %s5 = inlined_call_operand.vmem [shape: f32[1,64], index: 5, kind: input, shape index: {}]
  %s6 = inlined_call_operand.vmem [shape: f32[1,64], index: 6, kind: input, shape index: {}]
  %s7 = inlined_call_operand.vmem [shape: f32[512,64], index: 7, kind: output, shape index: {0}]
  %s8 = inlined_call_operand.vmem [shape: f32[512,64], index: 8, kind: output, shape index: {1}]
  %s9 = inlined_call_operand.vmem [shape: f32[512,64], index: 9, kind: output, shape index: {2}]
  %10 = xla_tuple %s7, %s8, %s9
  %s11 = sld [smem:[#allocation0]]
  $region54: #{basic_block_forward.11} parent=0
    _
  %s13 = ssub.s32 1, %s11
  %s14 = scalar_select 0, %s13, %s11
  // Predicated region
  $region2: #{basic_block_forward.11} parent=0 // pred_check
    _
  $region3: #{basic_block_forward.11} parent=0 // pred_check_branch
    %16 = sbr.rel (0) target = $region5
  $region4: #{basic_block_forward.11} parent=0 // pred_region
    _
  $region5: #{basic_block_forward.11} parent=0 // pred_fallthru
    _
  // Predicated region
  $region6: #{basic_block_forward.11} parent=0 // pred_check
    _
  $region7: #{basic_block_forward.11} parent=0 // pred_check_branch
    %18 = sbr.rel (0) target = $region9
  $region8: #{basic_block_forward.11} parent=0 // pred_region
    _
  $region9: #{basic_block_forward.11} parent=0 // pred_fallthru
    _
  // Predicated region
  $region10: #{basic_block_forward.11} parent=0 // pred_check
    _
  $region11: #{basic_block_forward.11} parent=0 // pred_check_branch
    %20 = sbr.rel (0) target = $region13
  $region12: #{basic_block_forward.11} parent=0 // pred_region
    _
  $region13: #{basic_block_forward.11} parent=0 // pred_fallthru
    _
  // Predicated region
  $region14: #{basic_block_forward.11} parent=0 // pred_check
    _
  $region15: #{basic_block_forward.11} parent=0 // pred_check_branch
    %22 = sbr.rel (0) target = $region17
  $region16: #{basic_block_forward.11} parent=0 // pred_region
    _
  $region17: #{basic_block_forward.11} parent=0 // pred_fallthru
    _
  // Predicated region
  $region18: #{basic_block_forward.11} parent=0 // pred_check
    _
  $region19: #{basic_block_forward.11} parent=0 // pred_check_branch
    %24 = sbr.rel (0) target = $region21
  $region20: #{basic_block_forward.11} parent=0 // pred_region
    _
  $region21: #{basic_block_forward.11} parent=0 // pred_fallthru
    _
  // Predicated region
  $region22: #{basic_block_forward.11} parent=0 // pred_check
    _
  $region23: #{basic_block_forward.11} parent=0 // pred_check_branch
    %26 = sbr.rel (0) target = $region25
  $region24: #{basic_block_forward.11} parent=0 // pred_region
    _
  $region25: #{basic_block_forward.11} parent=0 // pred_fallthru
    _
  // Predicated region
  $region26: #{basic_block_forward.11} parent=0 // pred_check
    _
  $region27: #{basic_block_forward.11} parent=0 // pred_check_branch
    %28 = sbr.rel (0) target = $region29
  $region28: #{basic_block_forward.11} parent=0 // pred_region
    _
  $region29: #{basic_block_forward.11} parent=0 // pred_fallthru
    _
  %v29 = vld [vmem:[%s0] sm:$0xff]
  %v30 = vld [vmem:[%s0 + $0x8] sm:$0xff]
  %v31 = vld [vmem:[%s0 + $0x10] sm:$0xff]
  %v32 = vld [vmem:[%s0 + $0x18] sm:$0xff]
  %v33 = vld [vmem:[%s0 + $0x20] sm:$0xff]
  %v34 = vld [vmem:[%s0 + $0x28] sm:$0xff]
  %v35 = vld [vmem:[%s0 + $0x30] sm:$0xff]
  %v36 = vld [vmem:[%s0 + $0x38] sm:$0xff]
  %v37 = vld [vmem:[%s0 + $0x40] sm:$0xff]
  %v38 = vld [vmem:[%s0 + $0x48] sm:$0xff]
  %v39 = vld [vmem:[%s0 + $0x50] sm:$0xff]
  %v40 = vld [vmem:[%s0 + $0x58] sm:$0xff]
  %v41 = vld [vmem:[%s0 + $0x60] sm:$0xff]
  %v42 = vld [vmem:[%s0 + $0x68] sm:$0xff]
  %v43 = vld [vmem:[%s0 + $0x70] sm:$0xff]
  %v44 = vld [vmem:[%s0 + $0x78] sm:$0xff]
  %v45 = vld [vmem:[%s0 + $0x80] sm:$0xff]
  %v46 = vld [vmem:[%s0 + $0x88] sm:$0xff]
  %v47 = vld [vmem:[%s0 + $0x90] sm:$0xff]
  %v48 = vld [vmem:[%s0 + $0x98] sm:$0xff]
  %v49 = vld [vmem:[%s0 + $0xa0] sm:$0xff]
  %v50 = vld [vmem:[%s0 + $0xa8] sm:$0xff]
  %v51 = vld [vmem:[%s0 + $0xb0] sm:$0xff]
  %v52 = vld [vmem:[%s0 + $0xb8] sm:$0xff]
  %v53 = vld [vmem:[%s0 + $0xc0] sm:$0xff]
  %v54 = vld [vmem:[%s0 + $0xc8] sm:$0xff]
  %v55 = vld [vmem:[%s0 + $0xd0] sm:$0xff]
  %v56 = vld [vmem:[%s0 + $0xd8] sm:$0xff]
  %v57 = vld [vmem:[%s0 + $0xe0] sm:$0xff]
  %v58 = vld [vmem:[%s0 + $0xe8] sm:$0xff]
  %v59 = vld [vmem:[%s0 + $0xf0] sm:$0xff]
  %v60 = vld [vmem:[%s0 + $0xf8] sm:$0xff]
  %v61 = vld [vmem:[%s0 + $0x100] sm:$0xff]
  %v62 = vld [vmem:[%s0 + $0x108] sm:$0xff]
  %v63 = vld [vmem:[%s0 + $0x110] sm:$0xff]
  %v64 = vld [vmem:[%s0 + $0x118] sm:$0xff]
  %v65 = vld [vmem:[%s0 + $0x120] sm:$0xff]
  %v66 = vld [vmem:[%s0 + $0x128] sm:$0xff]
  %v67 = vld [vmem:[%s0 + $0x130] sm:$0xff]
  %v68 = vld [vmem:[%s0 + $0x138] sm:$0xff]
  %v69 = vld [vmem:[%s0 + $0x140] sm:$0xff]
  %v70 = vld [vmem:[%s0 + $0x148] sm:$0xff]
  %v71 = vld [vmem:[%s0 + $0x150] sm:$0xff]
  %v72 = vld [vmem:[%s0 + $0x158] sm:$0xff]
  %v73 = vld [vmem:[%s0 + $0x160] sm:$0xff]
  %v74 = vld [vmem:[%s0 + $0x168] sm:$0xff]
  %v75 = vld [vmem:[%s0 + $0x170] sm:$0xff]
  %v76 = vld [vmem:[%s0 + $0x178] sm:$0xff]
  %v77 = vld [vmem:[%s0 + $0x180] sm:$0xff]
  %v78 = vld [vmem:[%s0 + $0x188] sm:$0xff]
  %v79 = vld [vmem:[%s0 + $0x190] sm:$0xff]
  %v80 = vld [vmem:[%s0 + $0x198] sm:$0xff]
  %v81 = vld [vmem:[%s0 + $0x1a0] sm:$0xff]
  %v82 = vld [vmem:[%s0 + $0x1a8] sm:$0xff]
  %v83 = vld [vmem:[%s0 + $0x1b0] sm:$0xff]
  %v84 = vld [vmem:[%s0 + $0x1b8] sm:$0xff]
  %v85 = vld [vmem:[%s0 + $0x1c0] sm:$0xff]
  %v86 = vld [vmem:[%s0 + $0x1c8] sm:$0xff]
  %v87 = vld [vmem:[%s0 + $0x1d0] sm:$0xff]
  %v88 = vld [vmem:[%s0 + $0x1d8] sm:$0xff]
  %v89 = vld [vmem:[%s0 + $0x1e0] sm:$0xff]
  %v90 = vld [vmem:[%s0 + $0x1e8] sm:$0xff]
  %v91 = vld [vmem:[%s0 + $0x1f0] sm:$0xff]
  %v92 = vld [vmem:[%s0 + $0x1f8] sm:$0xff]
  %v93 = vld [vmem:[%s1] sm:$0xff]
  %v94 = vld [vmem:[%s1 + $0x8] sm:$0xff]
  %v95 = vld [vmem:[%s1 + $0x10] sm:$0xff]
  %v96 = vld [vmem:[%s1 + $0x18] sm:$0xff]
  %v97 = vld [vmem:[%s1 + $0x20] sm:$0xff]
  %v98 = vld [vmem:[%s1 + $0x28] sm:$0xff]
  %v99 = vld [vmem:[%s1 + $0x30] sm:$0xff]
  %v100 = vld [vmem:[%s1 + $0x38] sm:$0xff]
  %v101 = vld [vmem:[%s1 + $0x40] sm:$0xff]
  %v102 = vld [vmem:[%s1 + $0x48] sm:$0xff]
  %v103 = vld [vmem:[%s1 + $0x50] sm:$0xff]
  %v104 = vld [vmem:[%s1 + $0x58] sm:$0xff]
  %v105 = vld [vmem:[%s1 + $0x60] sm:$0xff]
  %v106 = vld [vmem:[%s1 + $0x68] sm:$0xff]
  %v107 = vld [vmem:[%s1 + $0x70] sm:$0xff]
  %v108 = vld [vmem:[%s1 + $0x78] sm:$0xff]
  %v109 = vld [vmem:[%s1 + $0x80] sm:$0xff]
  %v110 = vld [vmem:[%s1 + $0x88] sm:$0xff]
  %v111 = vld [vmem:[%s1 + $0x90] sm:$0xff]
  %v112 = vld [vmem:[%s1 + $0x98] sm:$0xff]
  %v113 = vld [vmem:[%s1 + $0xa0] sm:$0xff]
  %v114 = vld [vmem:[%s1 + $0xa8] sm:$0xff]
  %v115 = vld [vmem:[%s1 + $0xb0] sm:$0xff]
  %v116 = vld [vmem:[%s1 + $0xb8] sm:$0xff]
  %v117 = vld [vmem:[%s1 + $0xc0] sm:$0xff]
  %v118 = vld [vmem:[%s1 + $0xc8] sm:$0xff]
  %v119 = vld [vmem:[%s1 + $0xd0] sm:$0xff]
  %v120 = vld [vmem:[%s1 + $0xd8] sm:$0xff]
  %v121 = vld [vmem:[%s1 + $0xe0] sm:$0xff]
  %v122 = vld [vmem:[%s1 + $0xe8] sm:$0xff]
  %v123 = vld [vmem:[%s1 + $0xf0] sm:$0xff]
  %v124 = vld [vmem:[%s1 + $0xf8] sm:$0xff]
  %v125 = vld [vmem:[%s1 + $0x100] sm:$0xff]
  %v126 = vld [vmem:[%s1 + $0x108] sm:$0xff]
  %v127 = vld [vmem:[%s1 + $0x110] sm:$0xff]
  %v128 = vld [vmem:[%s1 + $0x118] sm:$0xff]
  %v129 = vld [vmem:[%s1 + $0x120] sm:$0xff]
  %v130 = vld [vmem:[%s1 + $0x128] sm:$0xff]
  %v131 = vld [vmem:[%s1 + $0x130] sm:$0xff]
  %v132 = vld [vmem:[%s1 + $0x138] sm:$0xff]
  %v133 = vld [vmem:[%s1 + $0x140] sm:$0xff]
  %v134 = vld [vmem:[%s1 + $0x148] sm:$0xff]
  %v135 = vld [vmem:[%s1 + $0x150] sm:$0xff]
  %v136 = vld [vmem:[%s1 + $0x158] sm:$0xff]
  %v137 = vld [vmem:[%s1 + $0x160] sm:$0xff]
  %v138 = vld [vmem:[%s1 + $0x168] sm:$0xff]
  %v139 = vld [vmem:[%s1 + $0x170] sm:$0xff]
  %v140 = vld [vmem:[%s1 + $0x178] sm:$0xff]
  %v141 = vld [vmem:[%s1 + $0x180] sm:$0xff]
  %v142 = vld [vmem:[%s1 + $0x188] sm:$0xff]
  %v143 = vld [vmem:[%s1 + $0x190] sm:$0xff]
  %v144 = vld [vmem:[%s1 + $0x198] sm:$0xff]
  %v145 = vld [vmem:[%s1 + $0x1a0] sm:$0xff]
  %v146 = vld [vmem:[%s1 + $0x1a8] sm:$0xff]
  %v147 = vld [vmem:[%s1 + $0x1b0] sm:$0xff]
  %v148 = vld [vmem:[%s1 + $0x1b8] sm:$0xff]
  %v149 = vld [vmem:[%s1 + $0x1c0] sm:$0xff]
  %v150 = vld [vmem:[%s1 + $0x1c8] sm:$0xff]
  %v151 = vld [vmem:[%s1 + $0x1d0] sm:$0xff]
  %v152 = vld [vmem:[%s1 + $0x1d8] sm:$0xff]
  %v153 = vld [vmem:[%s1 + $0x1e0] sm:$0xff]
  %v154 = vld [vmem:[%s1 + $0x1e8] sm:$0xff]
  %v155 = vld [vmem:[%s1 + $0x1f0] sm:$0xff]
  %v156 = vld [vmem:[%s1 + $0x1f8] sm:$0xff]
  %v157 = vld [vmem:[%s2] sm:$0x1]
  %v159 = vlaneseq
  %v160 = vshrl.u32 %v159, 7
  %v161 = vsub.s32 0, %v160
  %v162 = vrot.slane %v157, %v161
  %v164 = vmul.f32 %v29, %v162
  %v165 = vmul.f32 %v30, %v162
  %v166 = vmul.f32 %v31, %v162
  %v167 = vmul.f32 %v32, %v162
  %v168 = vmul.f32 %v33, %v162
  %v169 = vmul.f32 %v34, %v162
  %v170 = vmul.f32 %v35, %v162
  %v171 = vmul.f32 %v36, %v162
  %v172 = vmul.f32 %v37, %v162
  %v173 = vmul.f32 %v38, %v162
  %v174 = vmul.f32 %v39, %v162
  %v175 = vmul.f32 %v40, %v162
  %v176 = vmul.f32 %v41, %v162
  %v177 = vmul.f32 %v42, %v162
  %v178 = vmul.f32 %v43, %v162
  %v179 = vmul.f32 %v44, %v162
  %v180 = vmul.f32 %v45, %v162
  %v181 = vmul.f32 %v46, %v162
  %v182 = vmul.f32 %v47, %v162
  %v183 = vmul.f32 %v48, %v162
  %v184 = vmul.f32 %v49, %v162
  %v185 = vmul.f32 %v50, %v162
  %v186 = vmul.f32 %v51, %v162
  %v187 = vmul.f32 %v52, %v162
  %v188 = vmul.f32 %v53, %v162
  %v189 = vmul.f32 %v54, %v162
  %v190 = vmul.f32 %v55, %v162
  %v191 = vmul.f32 %v56, %v162
  %v192 = vmul.f32 %v57, %v162
  %v193 = vmul.f32 %v58, %v162
  %v194 = vmul.f32 %v59, %v162
  %v195 = vmul.f32 %v60, %v162
  %v196 = vmul.f32 %v61, %v162
  %v197 = vmul.f32 %v62, %v162
  %v198 = vmul.f32 %v63, %v162
  %v199 = vmul.f32 %v64, %v162
  %v200 = vmul.f32 %v65, %v162
  %v201 = vmul.f32 %v66, %v162
  %v202 = vmul.f32 %v67, %v162
  %v203 = vmul.f32 %v68, %v162
  %v204 = vmul.f32 %v69, %v162
  %v205 = vmul.f32 %v70, %v162
  %v206 = vmul.f32 %v71, %v162
  %v207 = vmul.f32 %v72, %v162
  %v208 = vmul.f32 %v73, %v162
  %v209 = vmul.f32 %v74, %v162
  %v210 = vmul.f32 %v75, %v162
  %v211 = vmul.f32 %v76, %v162
  %v212 = vmul.f32 %v77, %v162
  %v213 = vmul.f32 %v78, %v162
  %v214 = vmul.f32 %v79, %v162
  %v215 = vmul.f32 %v80, %v162
  %v216 = vmul.f32 %v81, %v162
  %v217 = vmul.f32 %v82, %v162
  %v218 = vmul.f32 %v83, %v162
  %v219 = vmul.f32 %v84, %v162
  %v220 = vmul.f32 %v85, %v162
  %v221 = vmul.f32 %v86, %v162
  %v222 = vmul.f32 %v87, %v162
  %v223 = vmul.f32 %v88, %v162
  %v224 = vmul.f32 %v89, %v162
  %v225 = vmul.f32 %v90, %v162
  %v226 = vmul.f32 %v91, %v162
  %v227 = vmul.f32 %v92, %v162
  %v228 = vld [vmem:[%s3] sm:$0x1]
  %v230 = vlaneseq
  %v231 = vshrl.u32 %v230, 7
  %v232 = vsub.s32 0, %v231
  %v233 = vrot.slane %v228, %v232
  %v235 = vadd.f32 %v164, %v233
  %v236 = vadd.f32 %v165, %v233
  %v237 = vadd.f32 %v166, %v233
  %v238 = vadd.f32 %v167, %v233
  %v239 = vadd.f32 %v168, %v233
  %v240 = vadd.f32 %v169, %v233
  %v241 = vadd.f32 %v170, %v233
  %v242 = vadd.f32 %v171, %v233
  %v243 = vadd.f32 %v172, %v233
  %v244 = vadd.f32 %v173, %v233
  %v245 = vadd.f32 %v174, %v233
  %v246 = vadd.f32 %v175, %v233
  %v247 = vadd.f32 %v176, %v233
  %v248 = vadd.f32 %v177, %v233
  %v249 = vadd.f32 %v178, %v233
  %v250 = vadd.f32 %v179, %v233
  %v251 = vadd.f32 %v180, %v233
  %v252 = vadd.f32 %v181, %v233
  %v253 = vadd.f32 %v182, %v233
  %v254 = vadd.f32 %v183, %v233
  %v255 = vadd.f32 %v184, %v233
  %v256 = vadd.f32 %v185, %v233
  %v257 = vadd.f32 %v186, %v233
  %v258 = vadd.f32 %v187, %v233
  %v259 = vadd.f32 %v188, %v233
  %v260 = vadd.f32 %v189, %v233
  %v261 = vadd.f32 %v190, %v233
  %v262 = vadd.f32 %v191, %v233
  %v263 = vadd.f32 %v192, %v233
  %v264 = vadd.f32 %v193, %v233
  %v265 = vadd.f32 %v194, %v233
  %v266 = vadd.f32 %v195, %v233
  %v267 = vadd.f32 %v196, %v233
  %v268 = vadd.f32 %v197, %v233
  %v269 = vadd.f32 %v198, %v233
  %v270 = vadd.f32 %v199, %v233
  %v271 = vadd.f32 %v200, %v233
  %v272 = vadd.f32 %v201, %v233
  %v273 = vadd.f32 %v202, %v233
  %v274 = vadd.f32 %v203, %v233
  %v275 = vadd.f32 %v204, %v233
  %v276 = vadd.f32 %v205, %v233
  %v277 = vadd.f32 %v206, %v233
  %v278 = vadd.f32 %v207, %v233
  %v279 = vadd.f32 %v208, %v233
  %v280 = vadd.f32 %v209, %v233
  %v281 = vadd.f32 %v210, %v233
  %v282 = vadd.f32 %v211, %v233
  %v283 = vadd.f32 %v212, %v233
  %v284 = vadd.f32 %v213, %v233
  %v285 = vadd.f32 %v214, %v233
  %v286 = vadd.f32 %v215, %v233
  %v287 = vadd.f32 %v216, %v233
  %v288 = vadd.f32 %v217, %v233
  %v289 = vadd.f32 %v218, %v233
  %v290 = vadd.f32 %v219, %v233
  %v291 = vadd.f32 %v220, %v233
  %v292 = vadd.f32 %v221, %v233
  %v293 = vadd.f32 %v222, %v233
  %v294 = vadd.f32 %v223, %v233
  %v295 = vadd.f32 %v224, %v233
  %v296 = vadd.f32 %v225, %v233
  %v297 = vadd.f32 %v226, %v233
  %v298 = vadd.f32 %v227, %v233
  %vm299 = vcmp.ge.f32.partialorder %v235, 0.0
  %vm300 = vcmp.ge.f32.partialorder %v236, 0.0
  %vm301 = vcmp.ge.f32.partialorder %v237, 0.0
  %vm302 = vcmp.ge.f32.partialorder %v238, 0.0
  %vm303 = vcmp.ge.f32.partialorder %v239, 0.0
  %vm304 = vcmp.ge.f32.partialorder %v240, 0.0
  %vm305 = vcmp.ge.f32.partialorder %v241, 0.0
  %vm306 = vcmp.ge.f32.partialorder %v242, 0.0
  %vm307 = vcmp.ge.f32.partialorder %v243, 0.0
  %vm308 = vcmp.ge.f32.partialorder %v244, 0.0
  %vm309 = vcmp.ge.f32.partialorder %v245, 0.0
  %vm310 = vcmp.ge.f32.partialorder %v246, 0.0
  %vm311 = vcmp.ge.f32.partialorder %v247, 0.0
  %vm312 = vcmp.ge.f32.partialorder %v248, 0.0
  %vm313 = vcmp.ge.f32.partialorder %v249, 0.0
  %vm314 = vcmp.ge.f32.partialorder %v250, 0.0
  %vm315 = vcmp.ge.f32.partialorder %v251, 0.0
  %vm316 = vcmp.ge.f32.partialorder %v252, 0.0
  %vm317 = vcmp.ge.f32.partialorder %v253, 0.0
  %vm318 = vcmp.ge.f32.partialorder %v254, 0.0
  %vm319 = vcmp.ge.f32.partialorder %v255, 0.0
  %vm320 = vcmp.ge.f32.partialorder %v256, 0.0
  %vm321 = vcmp.ge.f32.partialorder %v257, 0.0
  %vm322 = vcmp.ge.f32.partialorder %v258, 0.0
  %vm323 = vcmp.ge.f32.partialorder %v259, 0.0
  %vm324 = vcmp.ge.f32.partialorder %v260, 0.0
  %vm325 = vcmp.ge.f32.partialorder %v261, 0.0
  %vm326 = vcmp.ge.f32.partialorder %v262, 0.0
  %vm327 = vcmp.ge.f32.partialorder %v263, 0.0
  %vm328 = vcmp.ge.f32.partialorder %v264, 0.0
  %vm329 = vcmp.ge.f32.partialorder %v265, 0.0
  %vm330 = vcmp.ge.f32.partialorder %v266, 0.0
  %vm331 = vcmp.ge.f32.partialorder %v267, 0.0
  %vm332 = vcmp.ge.f32.partialorder %v268, 0.0
  %vm333 = vcmp.ge.f32.partialorder %v269, 0.0
  %vm334 = vcmp.ge.f32.partialorder %v270, 0.0
  %vm335 = vcmp.ge.f32.partialorder %v271, 0.0
  %vm336 = vcmp.ge.f32.partialorder %v272, 0.0
  %vm337 = vcmp.ge.f32.partialorder %v273, 0.0
  %vm338 = vcmp.ge.f32.partialorder %v274, 0.0
  %vm339 = vcmp.ge.f32.partialorder %v275, 0.0
  %vm340 = vcmp.ge.f32.partialorder %v276, 0.0
  %vm341 = vcmp.ge.f32.partialorder %v277, 0.0
  %vm342 = vcmp.ge.f32.partialorder %v278, 0.0
  %vm343 = vcmp.ge.f32.partialorder %v279, 0.0
  %vm344 = vcmp.ge.f32.partialorder %v280, 0.0
  %vm345 = vcmp.ge.f32.partialorder %v281, 0.0
  %vm346 = vcmp.ge.f32.partialorder %v282, 0.0
  %vm347 = vcmp.ge.f32.partialorder %v283, 0.0
  %vm348 = vcmp.ge.f32.partialorder %v284, 0.0
  %vm349 = vcmp.ge.f32.partialorder %v285, 0.0
  %vm350 = vcmp.ge.f32.partialorder %v286, 0.0
  %vm351 = vcmp.ge.f32.partialorder %v287, 0.0
  %vm352 = vcmp.ge.f32.partialorder %v288, 0.0
  %vm353 = vcmp.ge.f32.partialorder %v289, 0.0
  %vm354 = vcmp.ge.f32.partialorder %v290, 0.0
  %vm355 = vcmp.ge.f32.partialorder %v291, 0.0
  %vm356 = vcmp.ge.f32.partialorder %v292, 0.0
  %vm357 = vcmp.ge.f32.partialorder %v293, 0.0
  %vm358 = vcmp.ge.f32.partialorder %v294, 0.0
  %vm359 = vcmp.ge.f32.partialorder %v295, 0.0
  %vm360 = vcmp.ge.f32.partialorder %v296, 0.0
  %vm361 = vcmp.ge.f32.partialorder %v297, 0.0
  %vm362 = vcmp.ge.f32.partialorder %v298, 0.0
  %v363 = vld [vmem:[%s4] sm:$0x1]
  %v365 = vlaneseq
  %v366 = vshrl.u32 %v365, 7
  %v367 = vsub.s32 0, %v366
  %v368 = vrot.slane %v363, %v367
  %v370 = vmul.f32 %v235, %v368
  %v371 = vmul.f32 %v236, %v368
  %v372 = vmul.f32 %v237, %v368
  %v373 = vmul.f32 %v238, %v368
  %v374 = vmul.f32 %v239, %v368
  %v375 = vmul.f32 %v240, %v368
  %v376 = vmul.f32 %v241, %v368
  %v377 = vmul.f32 %v242, %v368
  %v378 = vmul.f32 %v243, %v368
  %v379 = vmul.f32 %v244, %v368
  %v380 = vmul.f32 %v245, %v368
  %v381 = vmul.f32 %v246, %v368
  %v382 = vmul.f32 %v247, %v368
  %v383 = vmul.f32 %v248, %v368
  %v384 = vmul.f32 %v249, %v368
  %v385 = vmul.f32 %v250, %v368
  %v386 = vmul.f32 %v251, %v368
  %v387 = vmul.f32 %v252, %v368
  %v388 = vmul.f32 %v253, %v368
  %v389 = vmul.f32 %v254, %v368
  %v390 = vmul.f32 %v255, %v368
  %v391 = vmul.f32 %v256, %v368
  %v392 = vmul.f32 %v257, %v368
  %v393 = vmul.f32 %v258, %v368
  %v394 = vmul.f32 %v259, %v368
  %v395 = vmul.f32 %v260, %v368
  %v396 = vmul.f32 %v261, %v368
  %v397 = vmul.f32 %v262, %v368
  %v398 = vmul.f32 %v263, %v368
  %v399 = vmul.f32 %v264, %v368
  %v400 = vmul.f32 %v265, %v368
  %v401 = vmul.f32 %v266, %v368
  %v402 = vmul.f32 %v267, %v368
  %v403 = vmul.f32 %v268, %v368
  %v404 = vmul.f32 %v269, %v368
  %v405 = vmul.f32 %v270, %v368
  %v406 = vmul.f32 %v271, %v368
  %v407 = vmul.f32 %v272, %v368
  %v408 = vmul.f32 %v273, %v368
  %v409 = vmul.f32 %v274, %v368
  %v410 = vmul.f32 %v275, %v368
  %v411 = vmul.f32 %v276, %v368
  %v412 = vmul.f32 %v277, %v368
  %v413 = vmul.f32 %v278, %v368
  %v414 = vmul.f32 %v279, %v368
  %v415 = vmul.f32 %v280, %v368
  %v416 = vmul.f32 %v281, %v368
  %v417 = vmul.f32 %v282, %v368
  %v418 = vmul.f32 %v283, %v368
  %v419 = vmul.f32 %v284, %v368
  %v420 = vmul.f32 %v285, %v368
  %v421 = vmul.f32 %v286, %v368
  %v422 = vmul.f32 %v287, %v368
  %v423 = vmul.f32 %v288, %v368
  %v424 = vmul.f32 %v289, %v368
  %v425 = vmul.f32 %v290, %v368
  %v426 = vmul.f32 %v291, %v368
  %v427 = vmul.f32 %v292, %v368
  %v428 = vmul.f32 %v293, %v368
  %v429 = vmul.f32 %v294, %v368
  %v430 = vmul.f32 %v295, %v368
  %v431 = vmul.f32 %v296, %v368
  %v432 = vmul.f32 %v297, %v368
  %v433 = vmul.f32 %v298, %v368
  %v434 = vsel %vm299, %v235, %v370
  %v435 = vsel %vm300, %v236, %v371
  %v436 = vsel %vm301, %v237, %v372
  %v437 = vsel %vm302, %v238, %v373
  %v438 = vsel %vm303, %v239, %v374
  %v439 = vsel %vm304, %v240, %v375
  %v440 = vsel %vm305, %v241, %v376
  %v441 = vsel %vm306, %v242, %v377
  %v442 = vsel %vm307, %v243, %v378
  %v443 = vsel %vm308, %v244, %v379
  %v444 = vsel %vm309, %v245, %v380
  %v445 = vsel %vm310, %v246, %v381
  %v446 = vsel %vm311, %v247, %v382
  %v447 = vsel %vm312, %v248, %v383
  %v448 = vsel %vm313, %v249, %v384
  %v449 = vsel %vm314, %v250, %v385
  %v450 = vsel %vm315, %v251, %v386
  %v451 = vsel %vm316, %v252, %v387
  %v452 = vsel %vm317, %v253, %v388
  %v453 = vsel %vm318, %v254, %v389
  %v454 = vsel %vm319, %v255, %v390
  %v455 = vsel %vm320, %v256, %v391
  %v456 = vsel %vm321, %v257, %v392
  %v457 = vsel %vm322, %v258, %v393
  %v458 = vsel %vm323, %v259, %v394
  %v459 = vsel %vm324, %v260, %v395
  %v460 = vsel %vm325, %v261, %v396
  %v461 = vsel %vm326, %v262, %v397
  %v462 = vsel %vm327, %v263, %v398
  %v463 = vsel %vm328, %v264, %v399
  %v464 = vsel %vm329, %v265, %v400
  %v465 = vsel %vm330, %v266, %v401
  %v466 = vsel %vm331, %v267, %v402
  %v467 = vsel %vm332, %v268, %v403
  %v468 = vsel %vm333, %v269, %v404
  %v469 = vsel %vm334, %v270, %v405
  %v470 = vsel %vm335, %v271, %v406
  %v471 = vsel %vm336, %v272, %v407
  %v472 = vsel %vm337, %v273, %v408
  %v473 = vsel %vm338, %v274, %v409
  %v474 = vsel %vm339, %v275, %v410
  %v475 = vsel %vm340, %v276, %v411
  %v476 = vsel %vm341, %v277, %v412
  %v477 = vsel %vm342, %v278, %v413
  %v478 = vsel %vm343, %v279, %v414
  %v479 = vsel %vm344, %v280, %v415
  %v480 = vsel %vm345, %v281, %v416
  %v481 = vsel %vm346, %v282, %v417
  %v482 = vsel %vm347, %v283, %v418
  %v483 = vsel %vm348, %v284, %v419
  %v484 = vsel %vm349, %v285, %v420
  %v485 = vsel %vm350, %v286, %v421
  %v486 = vsel %vm351, %v287, %v422
  %v487 = vsel %vm352, %v288, %v423
  %v488 = vsel %vm353, %v289, %v424
  %v489 = vsel %vm354, %v290, %v425
  %v490 = vsel %vm355, %v291, %v426
  %v491 = vsel %vm356, %v292, %v427
  %v492 = vsel %vm357, %v293, %v428
  %v493 = vsel %vm358, %v294, %v429
  %v494 = vsel %vm359, %v295, %v430
  %v495 = vsel %vm360, %v296, %v431
  %v496 = vsel %vm361, %v297, %v432
  %v497 = vsel %vm362, %v298, %v433
  %v498 = vld [vmem:[%s5] sm:$0x1]
  %v500 = vlaneseq
  %v501 = vshrl.u32 %v500, 7
  %v502 = vsub.s32 0, %v501
  %v503 = vrot.slane %v498, %v502
  %v505 = vmul.f32 %v503, %v93
  %v506 = vmul.f32 %v503, %v94
  %v507 = vmul.f32 %v503, %v95
  %v508 = vmul.f32 %v503, %v96
  %v509 = vmul.f32 %v503, %v97
  %v510 = vmul.f32 %v503, %v98
  %v511 = vmul.f32 %v503, %v99
  %v512 = vmul.f32 %v503, %v100
  %v513 = vmul.f32 %v503, %v101
  %v514 = vmul.f32 %v503, %v102
  %v515 = vmul.f32 %v503, %v103
  %v516 = vmul.f32 %v503, %v104
  %v517 = vmul.f32 %v503, %v105
  %v518 = vmul.f32 %v503, %v106
  %v519 = vmul.f32 %v503, %v107
  %v520 = vmul.f32 %v503, %v108
  %v521 = vmul.f32 %v503, %v109
  %v522 = vmul.f32 %v503, %v110
  %v523 = vmul.f32 %v503, %v111
  %v524 = vmul.f32 %v503, %v112
  %v525 = vmul.f32 %v503, %v113
  %v526 = vmul.f32 %v503, %v114
  %v527 = vmul.f32 %v503, %v115
  %v528 = vmul.f32 %v503, %v116
  %v529 = vmul.f32 %v503, %v117
  %v530 = vmul.f32 %v503, %v118
  %v531 = vmul.f32 %v503, %v119
  %v532 = vmul.f32 %v503, %v120
  %v533 = vmul.f32 %v503, %v121
  %v534 = vmul.f32 %v503, %v122
  %v535 = vmul.f32 %v503, %v123
  %v536 = vmul.f32 %v503, %v124
  %v537 = vmul.f32 %v503, %v125
  %v538 = vmul.f32 %v503, %v126
  %v539 = vmul.f32 %v503, %v127
  %v540 = vmul.f32 %v503, %v128
  %v541 = vmul.f32 %v503, %v129
  %v542 = vmul.f32 %v503, %v130
  %v543 = vmul.f32 %v503, %v131
  %v544 = vmul.f32 %v503, %v132
  %v545 = vmul.f32 %v503, %v133
  %v546 = vmul.f32 %v503, %v134
  %v547 = vmul.f32 %v503, %v135
  %v548 = vmul.f32 %v503, %v136
  %v549 = vmul.f32 %v503, %v137
  %v550 = vmul.f32 %v503, %v138
  %v551 = vmul.f32 %v503, %v139
  %v552 = vmul.f32 %v503, %v140
  %v553 = vmul.f32 %v503, %v141
  %v554 = vmul.f32 %v503, %v142
  %v555 = vmul.f32 %v503, %v143
  %v556 = vmul.f32 %v503, %v144
  %v557 = vmul.f32 %v503, %v145
  %v558 = vmul.f32 %v503, %v146
  %v559 = vmul.f32 %v503, %v147
  %v560 = vmul.f32 %v503, %v148
  %v561 = vmul.f32 %v503, %v149
  %v562 = vmul.f32 %v503, %v150
  %v563 = vmul.f32 %v503, %v151
  %v564 = vmul.f32 %v503, %v152
  %v565 = vmul.f32 %v503, %v153
  %v566 = vmul.f32 %v503, %v154
  %v567 = vmul.f32 %v503, %v155
  %v568 = vmul.f32 %v503, %v156
  %v569 = vsub.f32 1.0, %v498
  %v571 = vlaneseq
  %v572 = vshrl.u32 %v571, 7
  %v573 = vsub.s32 0, %v572
  %v574 = vrot.slane %v569, %v573
  %v576 = vmul.f32 %v574, %v434
  %v577 = vmul.f32 %v574, %v435
  %v578 = vmul.f32 %v574, %v436
  %v579 = vmul.f32 %v574, %v437
  %v580 = vmul.f32 %v574, %v438
  %v581 = vmul.f32 %v574, %v439
  %v582 = vmul.f32 %v574, %v440
  %v583 = vmul.f32 %v574, %v441
  %v584 = vmul.f32 %v574, %v442
  %v585 = vmul.f32 %v574, %v443
  %v586 = vmul.f32 %v574, %v444
  %v587 = vmul.f32 %v574, %v445
  %v588 = vmul.f32 %v574, %v446
  %v589 = vmul.f32 %v574, %v447
  %v590 = vmul.f32 %v574, %v448
  %v591 = vmul.f32 %v574, %v449
  %v592 = vmul.f32 %v574, %v450
  %v593 = vmul.f32 %v574, %v451
  %v594 = vmul.f32 %v574, %v452
  %v595 = vmul.f32 %v574, %v453
  %v596 = vmul.f32 %v574, %v454
  %v597 = vmul.f32 %v574, %v455
  %v598 = vmul.f32 %v574, %v456
  %v599 = vmul.f32 %v574, %v457
  %v600 = vmul.f32 %v574, %v458
  %v601 = vmul.f32 %v574, %v459
  %v602 = vmul.f32 %v574, %v460
  %v603 = vmul.f32 %v574, %v461
  %v604 = vmul.f32 %v574, %v462
  %v605 = vmul.f32 %v574, %v463
  %v606 = vmul.f32 %v574, %v464
  %v607 = vmul.f32 %v574, %v465
  %v608 = vmul.f32 %v574, %v466
  %v609 = vmul.f32 %v574, %v467
  %v610 = vmul.f32 %v574, %v468
  %v611 = vmul.f32 %v574, %v469
  %v612 = vmul.f32 %v574, %v470
  %v613 = vmul.f32 %v574, %v471
  %v614 = vmul.f32 %v574, %v472
  %v615 = vmul.f32 %v574, %v473
  %v616 = vmul.f32 %v574, %v474
  %v617 = vmul.f32 %v574, %v475
  %v618 = vmul.f32 %v574, %v476
  %v619 = vmul.f32 %v574, %v477
  %v620 = vmul.f32 %v574, %v478
  %v621 = vmul.f32 %v574, %v479
  %v622 = vmul.f32 %v574, %v480
  %v623 = vmul.f32 %v574, %v481
  %v624 = vmul.f32 %v574, %v482
  %v625 = vmul.f32 %v574, %v483
  %v626 = vmul.f32 %v574, %v484
  %v627 = vmul.f32 %v574, %v485
  %v628 = vmul.f32 %v574, %v486
  %v629 = vmul.f32 %v574, %v487
  %v630 = vmul.f32 %v574, %v488
  %v631 = vmul.f32 %v574, %v489
  %v632 = vmul.f32 %v574, %v490
  %v633 = vmul.f32 %v574, %v491
  %v634 = vmul.f32 %v574, %v492
  %v635 = vmul.f32 %v574, %v493
  %v636 = vmul.f32 %v574, %v494
  %v637 = vmul.f32 %v574, %v495
  %v638 = vmul.f32 %v574, %v496
  %v639 = vmul.f32 %v574, %v497
  %v640 = vadd.f32 %v505, %v576
  %v641 = vadd.f32 %v506, %v577
  %v642 = vadd.f32 %v507, %v578
  %v643 = vadd.f32 %v508, %v579
  %v644 = vadd.f32 %v509, %v580
  %v645 = vadd.f32 %v510, %v581
  %v646 = vadd.f32 %v511, %v582
  %v647 = vadd.f32 %v512, %v583
  %v648 = vadd.f32 %v513, %v584
  %v649 = vadd.f32 %v514, %v585
  %v650 = vadd.f32 %v515, %v586
  %v651 = vadd.f32 %v516, %v587
  %v652 = vadd.f32 %v517, %v588
  %v653 = vadd.f32 %v518, %v589
  %v654 = vadd.f32 %v519, %v590
  %v655 = vadd.f32 %v520, %v591
  %v656 = vadd.f32 %v521, %v592
  %v657 = vadd.f32 %v522, %v593
  %v658 = vadd.f32 %v523, %v594
  %v659 = vadd.f32 %v524, %v595
  %v660 = vadd.f32 %v525, %v596
  %v661 = vadd.f32 %v526, %v597
  %v662 = vadd.f32 %v527, %v598
  %v663 = vadd.f32 %v528, %v599
  %v664 = vadd.f32 %v529, %v600
  %v665 = vadd.f32 %v530, %v601
  %v666 = vadd.f32 %v531, %v602
  %v667 = vadd.f32 %v532, %v603
  %v668 = vadd.f32 %v533, %v604
  %v669 = vadd.f32 %v534, %v605
  %v670 = vadd.f32 %v535, %v606
  %v671 = vadd.f32 %v536, %v607
  %v672 = vadd.f32 %v537, %v608
  %v673 = vadd.f32 %v538, %v609
  %v674 = vadd.f32 %v539, %v610
  %v675 = vadd.f32 %v540, %v611
  %v676 = vadd.f32 %v541, %v612
  %v677 = vadd.f32 %v542, %v613
  %v678 = vadd.f32 %v543, %v614
  %v679 = vadd.f32 %v544, %v615
  %v680 = vadd.f32 %v545, %v616
  %v681 = vadd.f32 %v546, %v617
  %v682 = vadd.f32 %v547, %v618
  %v683 = vadd.f32 %v548, %v619
  %v684 = vadd.f32 %v549, %v620
  %v685 = vadd.f32 %v550, %v621
  %v686 = vadd.f32 %v551, %v622
  %v687 = vadd.f32 %v552, %v623
  %v688 = vadd.f32 %v553, %v624
  %v689 = vadd.f32 %v554, %v625
  %v690 = vadd.f32 %v555, %v626
  %v691 = vadd.f32 %v556, %v627
  %v692 = vadd.f32 %v557, %v628
  %v693 = vadd.f32 %v558, %v629
  %v694 = vadd.f32 %v559, %v630
  %v695 = vadd.f32 %v560, %v631
  %v696 = vadd.f32 %v561, %v632
  %v697 = vadd.f32 %v562, %v633
  %v698 = vadd.f32 %v563, %v634
  %v699 = vadd.f32 %v564, %v635
  %v700 = vadd.f32 %v565, %v636
  %v701 = vadd.f32 %v566, %v637
  %v702 = vadd.f32 %v567, %v638
  %v703 = vadd.f32 %v568, %v639
  %vm704 = vcmp.ge.f32.partialorder %v93, 0.0
  %vm705 = vcmp.ge.f32.partialorder %v94, 0.0
  %vm706 = vcmp.ge.f32.partialorder %v95, 0.0
  %vm707 = vcmp.ge.f32.partialorder %v96, 0.0
  %vm708 = vcmp.ge.f32.partialorder %v97, 0.0
  %vm709 = vcmp.ge.f32.partialorder %v98, 0.0
  %vm710 = vcmp.ge.f32.partialorder %v99, 0.0
  %vm711 = vcmp.ge.f32.partialorder %v100, 0.0
  %vm712 = vcmp.ge.f32.partialorder %v101, 0.0
  %vm713 = vcmp.ge.f32.partialorder %v102, 0.0
  %vm714 = vcmp.ge.f32.partialorder %v103, 0.0
  %vm715 = vcmp.ge.f32.partialorder %v104, 0.0
  %vm716 = vcmp.ge.f32.partialorder %v105, 0.0
  %vm717 = vcmp.ge.f32.partialorder %v106, 0.0
  %vm718 = vcmp.ge.f32.partialorder %v107, 0.0
  %vm719 = vcmp.ge.f32.partialorder %v108, 0.0
  %vm720 = vcmp.ge.f32.partialorder %v109, 0.0
  %vm721 = vcmp.ge.f32.partialorder %v110, 0.0
  %vm722 = vcmp.ge.f32.partialorder %v111, 0.0
  %vm723 = vcmp.ge.f32.partialorder %v112, 0.0
  %vm724 = vcmp.ge.f32.partialorder %v113, 0.0
  %vm725 = vcmp.ge.f32.partialorder %v114, 0.0
  %vm726 = vcmp.ge.f32.partialorder %v115, 0.0
  %vm727 = vcmp.ge.f32.partialorder %v116, 0.0
  %vm728 = vcmp.ge.f32.partialorder %v117, 0.0
  %vm729 = vcmp.ge.f32.partialorder %v118, 0.0
  %vm730 = vcmp.ge.f32.partialorder %v119, 0.0
  %vm731 = vcmp.ge.f32.partialorder %v120, 0.0
  %vm732 = vcmp.ge.f32.partialorder %v121, 0.0
  %vm733 = vcmp.ge.f32.partialorder %v122, 0.0
  %vm734 = vcmp.ge.f32.partialorder %v123, 0.0
  %vm735 = vcmp.ge.f32.partialorder %v124, 0.0
  %vm736 = vcmp.ge.f32.partialorder %v125, 0.0
  %vm737 = vcmp.ge.f32.partialorder %v126, 0.0
  %vm738 = vcmp.ge.f32.partialorder %v127, 0.0
  %vm739 = vcmp.ge.f32.partialorder %v128, 0.0
  %vm740 = vcmp.ge.f32.partialorder %v129, 0.0
  %vm741 = vcmp.ge.f32.partialorder %v130, 0.0
  %vm742 = vcmp.ge.f32.partialorder %v131, 0.0
  %vm743 = vcmp.ge.f32.partialorder %v132, 0.0
  %vm744 = vcmp.ge.f32.partialorder %v133, 0.0
  %vm745 = vcmp.ge.f32.partialorder %v134, 0.0
  %vm746 = vcmp.ge.f32.partialorder %v135, 0.0
  %vm747 = vcmp.ge.f32.partialorder %v136, 0.0
  %vm748 = vcmp.ge.f32.partialorder %v137, 0.0
  %vm749 = vcmp.ge.f32.partialorder %v138, 0.0
  %vm750 = vcmp.ge.f32.partialorder %v139, 0.0
  %vm751 = vcmp.ge.f32.partialorder %v140, 0.0
  %vm752 = vcmp.ge.f32.partialorder %v141, 0.0
  %vm753 = vcmp.ge.f32.partialorder %v142, 0.0
  %vm754 = vcmp.ge.f32.partialorder %v143, 0.0
  %vm755 = vcmp.ge.f32.partialorder %v144, 0.0
  %vm756 = vcmp.ge.f32.partialorder %v145, 0.0
  %vm757 = vcmp.ge.f32.partialorder %v146, 0.0
  %vm758 = vcmp.ge.f32.partialorder %v147, 0.0
  %vm759 = vcmp.ge.f32.partialorder %v148, 0.0
  %vm760 = vcmp.ge.f32.partialorder %v149, 0.0
  %vm761 = vcmp.ge.f32.partialorder %v150, 0.0
  %vm762 = vcmp.ge.f32.partialorder %v151, 0.0
  %vm763 = vcmp.ge.f32.partialorder %v152, 0.0
  %vm764 = vcmp.ge.f32.partialorder %v153, 0.0
  %vm765 = vcmp.ge.f32.partialorder %v154, 0.0
  %vm766 = vcmp.ge.f32.partialorder %v155, 0.0
  %vm767 = vcmp.ge.f32.partialorder %v156, 0.0
  %v768 = vld [vmem:[%s6] sm:$0x1]
  %v770 = vlaneseq
  %v771 = vshrl.u32 %v770, 7
  %v772 = vsub.s32 0, %v771
  %v773 = vrot.slane %v768, %v772
  %v775 = vmul.f32 %v93, %v773
  %v776 = vmul.f32 %v94, %v773
  %v777 = vmul.f32 %v95, %v773
  %v778 = vmul.f32 %v96, %v773
  %v779 = vmul.f32 %v97, %v773
  %v780 = vmul.f32 %v98, %v773
  %v781 = vmul.f32 %v99, %v773
  %v782 = vmul.f32 %v100, %v773
  %v783 = vmul.f32 %v101, %v773
  %v784 = vmul.f32 %v102, %v773
  %v785 = vmul.f32 %v103, %v773
  %v786 = vmul.f32 %v104, %v773
  %v787 = vmul.f32 %v105, %v773
  %v788 = vmul.f32 %v106, %v773
  %v789 = vmul.f32 %v107, %v773
  %v790 = vmul.f32 %v108, %v773
  %v791 = vmul.f32 %v109, %v773
  %v792 = vmul.f32 %v110, %v773
  %v793 = vmul.f32 %v111, %v773
  %v794 = vmul.f32 %v112, %v773
  %v795 = vmul.f32 %v113, %v773
  %v796 = vmul.f32 %v114, %v773
  %v797 = vmul.f32 %v115, %v773
  %v798 = vmul.f32 %v116, %v773
  %v799 = vmul.f32 %v117, %v773
  %v800 = vmul.f32 %v118, %v773
  %v801 = vmul.f32 %v119, %v773
  %v802 = vmul.f32 %v120, %v773
  %v803 = vmul.f32 %v121, %v773
  %v804 = vmul.f32 %v122, %v773
  %v805 = vmul.f32 %v123, %v773
  %v806 = vmul.f32 %v124, %v773
  %v807 = vmul.f32 %v125, %v773
  %v808 = vmul.f32 %v126, %v773
  %v809 = vmul.f32 %v127, %v773
  %v810 = vmul.f32 %v128, %v773
  %v811 = vmul.f32 %v129, %v773
  %v812 = vmul.f32 %v130, %v773
  %v813 = vmul.f32 %v131, %v773
  %v814 = vmul.f32 %v132, %v773
  %v815 = vmul.f32 %v133, %v773
  %v816 = vmul.f32 %v134, %v773
  %v817 = vmul.f32 %v135, %v773
  %v818 = vmul.f32 %v136, %v773
  %v819 = vmul.f32 %v137, %v773
  %v820 = vmul.f32 %v138, %v773
  %v821 = vmul.f32 %v139, %v773
  %v822 = vmul.f32 %v140, %v773
  %v823 = vmul.f32 %v141, %v773
  %v824 = vmul.f32 %v142, %v773
  %v825 = vmul.f32 %v143, %v773
  %v826 = vmul.f32 %v144, %v773
  %v827 = vmul.f32 %v145, %v773
  %v828 = vmul.f32 %v146, %v773
  %v829 = vmul.f32 %v147, %v773
  %v830 = vmul.f32 %v148, %v773
  %v831 = vmul.f32 %v149, %v773
  %v832 = vmul.f32 %v150, %v773
  %v833 = vmul.f32 %v151, %v773
  %v834 = vmul.f32 %v152, %v773
  %v835 = vmul.f32 %v153, %v773
  %v836 = vmul.f32 %v154, %v773
  %v837 = vmul.f32 %v155, %v773
  %v838 = vmul.f32 %v156, %v773
  %v839 = vsel %vm704, %v93, %v775
  %v840 = vsel %vm705, %v94, %v776
  %v841 = vsel %vm706, %v95, %v777
  %v842 = vsel %vm707, %v96, %v778
  %v843 = vsel %vm708, %v97, %v779
  %v844 = vsel %vm709, %v98, %v780
  %v845 = vsel %vm710, %v99, %v781
  %v846 = vsel %vm711, %v100, %v782
  %v847 = vsel %vm712, %v101, %v783
  %v848 = vsel %vm713, %v102, %v784
  %v849 = vsel %vm714, %v103, %v785
  %v850 = vsel %vm715, %v104, %v786
  %v851 = vsel %vm716, %v105, %v787
  %v852 = vsel %vm717, %v106, %v788
  %v853 = vsel %vm718, %v107, %v789
  %v854 = vsel %vm719, %v108, %v790
  %v855 = vsel %vm720, %v109, %v791
  %v856 = vsel %vm721, %v110, %v792
  %v857 = vsel %vm722, %v111, %v793
  %v858 = vsel %vm723, %v112, %v794
  %v859 = vsel %vm724, %v113, %v795
  %v860 = vsel %vm725, %v114, %v796
  %v861 = vsel %vm726, %v115, %v797
  %v862 = vsel %vm727, %v116, %v798
  %v863 = vsel %vm728, %v117, %v799
  %v864 = vsel %vm729, %v118, %v800
  %v865 = vsel %vm730, %v119, %v801
  %v866 = vsel %vm731, %v120, %v802
  %v867 = vsel %vm732, %v121, %v803
  %v868 = vsel %vm733, %v122, %v804
  %v869 = vsel %vm734, %v123, %v805
  %v870 = vsel %vm735, %v124, %v806
  %v871 = vsel %vm736, %v125, %v807
  %v872 = vsel %vm737, %v126, %v808
  %v873 = vsel %vm738, %v127, %v809
  %v874 = vsel %vm739, %v128, %v810
  %v875 = vsel %vm740, %v129, %v811
  %v876 = vsel %vm741, %v130, %v812
  %v877 = vsel %vm742, %v131, %v813
  %v878 = vsel %vm743, %v132, %v814
  %v879 = vsel %vm744, %v133, %v815
  %v880 = vsel %vm745, %v134, %v816
  %v881 = vsel %vm746, %v135, %v817
  %v882 = vsel %vm747, %v136, %v818
  %v883 = vsel %vm748, %v137, %v819
  %v884 = vsel %vm749, %v138, %v820
  %v885 = vsel %vm750, %v139, %v821
  %v886 = vsel %vm751, %v140, %v822
  %v887 = vsel %vm752, %v141, %v823
  %v888 = vsel %vm753, %v142, %v824
  %v889 = vsel %vm754, %v143, %v825
  %v890 = vsel %vm755, %v144, %v826
  %v891 = vsel %vm756, %v145, %v827
  %v892 = vsel %vm757, %v146, %v828
  %v893 = vsel %vm758, %v147, %v829
  %v894 = vsel %vm759, %v148, %v830
  %v895 = vsel %vm760, %v149, %v831
  %v896 = vsel %vm761, %v150, %v832
  %v897 = vsel %vm762, %v151, %v833
  %v898 = vsel %vm763, %v152, %v834
  %v899 = vsel %vm764, %v153, %v835
  %v900 = vsel %vm765, %v154, %v836
  %v901 = vsel %vm766, %v155, %v837
  %v902 = vsel %vm767, %v156, %v838
  %vm903 = vcmask 523264
  %904 = vst.msk [vmem:[%s7] sm:$0xff] %vm903, %v434
  %905 = vst.msk [vmem:[%s7 + $0x8] sm:$0xff] %vm903, %v435
  %906 = vst.msk [vmem:[%s7 + $0x10] sm:$0xff] %vm903, %v436
  %907 = vst.msk [vmem:[%s7 + $0x18] sm:$0xff] %vm903, %v437
  %908 = vst.msk [vmem:[%s7 + $0x20] sm:$0xff] %vm903, %v438
  %909 = vst.msk [vmem:[%s7 + $0x28] sm:$0xff] %vm903, %v439
  %910 = vst.msk [vmem:[%s7 + $0x30] sm:$0xff] %vm903, %v440
  %911 = vst.msk [vmem:[%s7 + $0x38] sm:$0xff] %vm903, %v441
  %912 = vst.msk [vmem:[%s7 + $0x40] sm:$0xff] %vm903, %v442
  %913 = vst.msk [vmem:[%s7 + $0x48] sm:$0xff] %vm903, %v443
  %914 = vst.msk [vmem:[%s7 + $0x50] sm:$0xff] %vm903, %v444
  %915 = vst.msk [vmem:[%s7 + $0x58] sm:$0xff] %vm903, %v445
  %916 = vst.msk [vmem:[%s7 + $0x60] sm:$0xff] %vm903, %v446
  %917 = vst.msk [vmem:[%s7 + $0x68] sm:$0xff] %vm903, %v447
  %918 = vst.msk [vmem:[%s7 + $0x70] sm:$0xff] %vm903, %v448
  %919 = vst.msk [vmem:[%s7 + $0x78] sm:$0xff] %vm903, %v449
  %920 = vst.msk [vmem:[%s7 + $0x80] sm:$0xff] %vm903, %v450
  %921 = vst.msk [vmem:[%s7 + $0x88] sm:$0xff] %vm903, %v451
  %922 = vst.msk [vmem:[%s7 + $0x90] sm:$0xff] %vm903, %v452
  %923 = vst.msk [vmem:[%s7 + $0x98] sm:$0xff] %vm903, %v453
  %924 = vst.msk [vmem:[%s7 + $0xa0] sm:$0xff] %vm903, %v454
  %925 = vst.msk [vmem:[%s7 + $0xa8] sm:$0xff] %vm903, %v455
  %926 = vst.msk [vmem:[%s7 + $0xb0] sm:$0xff] %vm903, %v456
  %927 = vst.msk [vmem:[%s7 + $0xb8] sm:$0xff] %vm903, %v457
  %928 = vst.msk [vmem:[%s7 + $0xc0] sm:$0xff] %vm903, %v458
  %929 = vst.msk [vmem:[%s7 + $0xc8] sm:$0xff] %vm903, %v459
  %930 = vst.msk [vmem:[%s7 + $0xd0] sm:$0xff] %vm903, %v460
  %931 = vst.msk [vmem:[%s7 + $0xd8] sm:$0xff] %vm903, %v461
  %932 = vst.msk [vmem:[%s7 + $0xe0] sm:$0xff] %vm903, %v462
  %933 = vst.msk [vmem:[%s7 + $0xe8] sm:$0xff] %vm903, %v463
  %934 = vst.msk [vmem:[%s7 + $0xf0] sm:$0xff] %vm903, %v464
  %935 = vst.msk [vmem:[%s7 + $0xf8] sm:$0xff] %vm903, %v465
  %936 = vst.msk [vmem:[%s7 + $0x100] sm:$0xff] %vm903, %v466
  %937 = vst.msk [vmem:[%s7 + $0x108] sm:$0xff] %vm903, %v467
  %938 = vst.msk [vmem:[%s7 + $0x110] sm:$0xff] %vm903, %v468
  %939 = vst.msk [vmem:[%s7 + $0x118] sm:$0xff] %vm903, %v469
  %940 = vst.msk [vmem:[%s7 + $0x120] sm:$0xff] %vm903, %v470
  %941 = vst.msk [vmem:[%s7 + $0x128] sm:$0xff] %vm903, %v471
  %942 = vst.msk [vmem:[%s7 + $0x130] sm:$0xff] %vm903, %v472
  %943 = vst.msk [vmem:[%s7 + $0x138] sm:$0xff] %vm903, %v473
  %944 = vst.msk [vmem:[%s7 + $0x140] sm:$0xff] %vm903, %v474
  %945 = vst.msk [vmem:[%s7 + $0x148] sm:$0xff] %vm903, %v475
  %946 = vst.msk [vmem:[%s7 + $0x150] sm:$0xff] %vm903, %v476
  %947 = vst.msk [vmem:[%s7 + $0x158] sm:$0xff] %vm903, %v477
  %948 = vst.msk [vmem:[%s7 + $0x160] sm:$0xff] %vm903, %v478
  %949 = vst.msk [vmem:[%s7 + $0x168] sm:$0xff] %vm903, %v479
  %950 = vst.msk [vmem:[%s7 + $0x170] sm:$0xff] %vm903, %v480
  %951 = vst.msk [vmem:[%s7 + $0x178] sm:$0xff] %vm903, %v481
  %952 = vst.msk [vmem:[%s7 + $0x180] sm:$0xff] %vm903, %v482
  %953 = vst.msk [vmem:[%s7 + $0x188] sm:$0xff] %vm903, %v483
  %954 = vst.msk [vmem:[%s7 + $0x190] sm:$0xff] %vm903, %v484
  %955 = vst.msk [vmem:[%s7 + $0x198] sm:$0xff] %vm903, %v485
  %956 = vst.msk [vmem:[%s7 + $0x1a0] sm:$0xff] %vm903, %v486
  %957 = vst.msk [vmem:[%s7 + $0x1a8] sm:$0xff] %vm903, %v487
  %958 = vst.msk [vmem:[%s7 + $0x1b0] sm:$0xff] %vm903, %v488
  %959 = vst.msk [vmem:[%s7 + $0x1b8] sm:$0xff] %vm903, %v489
  %960 = vst.msk [vmem:[%s7 + $0x1c0] sm:$0xff] %vm903, %v490
  %961 = vst.msk [vmem:[%s7 + $0x1c8] sm:$0xff] %vm903, %v491
  %962 = vst.msk [vmem:[%s7 + $0x1d0] sm:$0xff] %vm903, %v492
  %963 = vst.msk [vmem:[%s7 + $0x1d8] sm:$0xff] %vm903, %v493
  %964 = vst.msk [vmem:[%s7 + $0x1e0] sm:$0xff] %vm903, %v494
  %965 = vst.msk [vmem:[%s7 + $0x1e8] sm:$0xff] %vm903, %v495
  %966 = vst.msk [vmem:[%s7 + $0x1f0] sm:$0xff] %vm903, %v496
  %967 = vst.msk [vmem:[%s7 + $0x1f8] sm:$0xff] %vm903, %v497
  %968 = vst.msk [vmem:[%s8] sm:$0xff] %vm903, %v640
  %969 = vst.msk [vmem:[%s8 + $0x8] sm:$0xff] %vm903, %v641
  %970 = vst.msk [vmem:[%s8 + $0x10] sm:$0xff] %vm903, %v642
  %971 = vst.msk [vmem:[%s8 + $0x18] sm:$0xff] %vm903, %v643
  %972 = vst.msk [vmem:[%s8 + $0x20] sm:$0xff] %vm903, %v644
  %973 = vst.msk [vmem:[%s8 + $0x28] sm:$0xff] %vm903, %v645
  %974 = vst.msk [vmem:[%s8 + $0x30] sm:$0xff] %vm903, %v646
  %975 = vst.msk [vmem:[%s8 + $0x38] sm:$0xff] %vm903, %v647
  %976 = vst.msk [vmem:[%s8 + $0x40] sm:$0xff] %vm903, %v648
  %977 = vst.msk [vmem:[%s8 + $0x48] sm:$0xff] %vm903, %v649
  %978 = vst.msk [vmem:[%s8 + $0x50] sm:$0xff] %vm903, %v650
  %979 = vst.msk [vmem:[%s8 + $0x58] sm:$0xff] %vm903, %v651
  %980 = vst.msk [vmem:[%s8 + $0x60] sm:$0xff] %vm903, %v652
  %981 = vst.msk [vmem:[%s8 + $0x68] sm:$0xff] %vm903, %v653
  %982 = vst.msk [vmem:[%s8 + $0x70] sm:$0xff] %vm903, %v654
  %983 = vst.msk [vmem:[%s8 + $0x78] sm:$0xff] %vm903, %v655
  %984 = vst.msk [vmem:[%s8 + $0x80] sm:$0xff] %vm903, %v656
  %985 = vst.msk [vmem:[%s8 + $0x88] sm:$0xff] %vm903, %v657
  %986 = vst.msk [vmem:[%s8 + $0x90] sm:$0xff] %vm903, %v658
  %987 = vst.msk [vmem:[%s8 + $0x98] sm:$0xff] %vm903, %v659
  %988 = vst.msk [vmem:[%s8 + $0xa0] sm:$0xff] %vm903, %v660
  %989 = vst.msk [vmem:[%s8 + $0xa8] sm:$0xff] %vm903, %v661
  %990 = vst.msk [vmem:[%s8 + $0xb0] sm:$0xff] %vm903, %v662
  %991 = vst.msk [vmem:[%s8 + $0xb8] sm:$0xff] %vm903, %v663
  %992 = vst.msk [vmem:[%s8 + $0xc0] sm:$0xff] %vm903, %v664
  %993 = vst.msk [vmem:[%s8 + $0xc8] sm:$0xff] %vm903, %v665
  %994 = vst.msk [vmem:[%s8 + $0xd0] sm:$0xff] %vm903, %v666
  %995 = vst.msk [vmem:[%s8 + $0xd8] sm:$0xff] %vm903, %v667
  %996 = vst.msk [vmem:[%s8 + $0xe0] sm:$0xff] %vm903, %v668
  %997 = vst.msk [vmem:[%s8 + $0xe8] sm:$0xff] %vm903, %v669
  %998 = vst.msk [vmem:[%s8 + $0xf0] sm:$0xff] %vm903, %v670
  %999 = vst.msk [vmem:[%s8 + $0xf8] sm:$0xff] %vm903, %v671
  %1000 = vst.msk [vmem:[%s8 + $0x100] sm:$0xff] %vm903, %v672
  %1001 = vst.msk [vmem:[%s8 + $0x108] sm:$0xff] %vm903, %v673
  %1002 = vst.msk [vmem:[%s8 + $0x110] sm:$0xff] %vm903, %v674
  %1003 = vst.msk [vmem:[%s8 + $0x118] sm:$0xff] %vm903, %v675
  %1004 = vst.msk [vmem:[%s8 + $0x120] sm:$0xff] %vm903, %v676
  %1005 = vst.msk [vmem:[%s8 + $0x128] sm:$0xff] %vm903, %v677
  %1006 = vst.msk [vmem:[%s8 + $0x130] sm:$0xff] %vm903, %v678
  %1007 = vst.msk [vmem:[%s8 + $0x138] sm:$0xff] %vm903, %v679
  %1008 = vst.msk [vmem:[%s8 + $0x140] sm:$0xff] %vm903, %v680
  %1009 = vst.msk [vmem:[%s8 + $0x148] sm:$0xff] %vm903, %v681
  %1010 = vst.msk [vmem:[%s8 + $0x150] sm:$0xff] %vm903, %v682
  %1011 = vst.msk [vmem:[%s8 + $0x158] sm:$0xff] %vm903, %v683
  %1012 = vst.msk [vmem:[%s8 + $0x160] sm:$0xff] %vm903, %v684
  %1013 = vst.msk [vmem:[%s8 + $0x168] sm:$0xff] %vm903, %v685
  %1014 = vst.msk [vmem:[%s8 + $0x170] sm:$0xff] %vm903, %v686
  %1015 = vst.msk [vmem:[%s8 + $0x178] sm:$0xff] %vm903, %v687
  %1016 = vst.msk [vmem:[%s8 + $0x180] sm:$0xff] %vm903, %v688
  %1017 = vst.msk [vmem:[%s8 + $0x188] sm:$0xff] %vm903, %v689
  %1018 = vst.msk [vmem:[%s8 + $0x190] sm:$0xff] %vm903, %v690
  %1019 = vst.msk [vmem:[%s8 + $0x198] sm:$0xff] %vm903, %v691
  %1020 = vst.msk [vmem:[%s8 + $0x1a0] sm:$0xff] %vm903, %v692
  %1021 = vst.msk [vmem:[%s8 + $0x1a8] sm:$0xff] %vm903, %v693
  %1022 = vst.msk [vmem:[%s8 + $0x1b0] sm:$0xff] %vm903, %v694
  %1023 = vst.msk [vmem:[%s8 + $0x1b8] sm:$0xff] %vm903, %v695
  %1024 = vst.msk [vmem:[%s8 + $0x1c0] sm:$0xff] %vm903, %v696
  %1025 = vst.msk [vmem:[%s8 + $0x1c8] sm:$0xff] %vm903, %v697
  %1026 = vst.msk [vmem:[%s8 + $0x1d0] sm:$0xff] %vm903, %v698
  %1027 = vst.msk [vmem:[%s8 + $0x1d8] sm:$0xff] %vm903, %v699
  %1028 = vst.msk [vmem:[%s8 + $0x1e0] sm:$0xff] %vm903, %v700
  %1029 = vst.msk [vmem:[%s8 + $0x1e8] sm:$0xff] %vm903, %v701
  %1030 = vst.msk [vmem:[%s8 + $0x1f0] sm:$0xff] %vm903, %v702
  %1031 = vst.msk [vmem:[%s8 + $0x1f8] sm:$0xff] %vm903, %v703
  %1032 = vst.msk [vmem:[%s9] sm:$0xff] %vm903, %v839
  %1033 = vst.msk [vmem:[%s9 + $0x8] sm:$0xff] %vm903, %v840
  %1034 = vst.msk [vmem:[%s9 + $0x10] sm:$0xff] %vm903, %v841
  %1035 = vst.msk [vmem:[%s9 + $0x18] sm:$0xff] %vm903, %v842
  %1036 = vst.msk [vmem:[%s9 + $0x20] sm:$0xff] %vm903, %v843
  %1037 = vst.msk [vmem:[%s9 + $0x28] sm:$0xff] %vm903, %v844
  %1038 = vst.msk [vmem:[%s9 + $0x30] sm:$0xff] %vm903, %v845
  %1039 = vst.msk [vmem:[%s9 + $0x38] sm:$0xff] %vm903, %v846
  %1040 = vst.msk [vmem:[%s9 + $0x40] sm:$0xff] %vm903, %v847
  %1041 = vst.msk [vmem:[%s9 + $0x48] sm:$0xff] %vm903, %v848
  %1042 = vst.msk [vmem:[%s9 + $0x50] sm:$0xff] %vm903, %v849
  %1043 = vst.msk [vmem:[%s9 + $0x58] sm:$0xff] %vm903, %v850
  %1044 = vst.msk [vmem:[%s9 + $0x60] sm:$0xff] %vm903, %v851
  %1045 = vst.msk [vmem:[%s9 + $0x68] sm:$0xff] %vm903, %v852
  %1046 = vst.msk [vmem:[%s9 + $0x70] sm:$0xff] %vm903, %v853
  %1047 = vst.msk [vmem:[%s9 + $0x78] sm:$0xff] %vm903, %v854
  %1048 = vst.msk [vmem:[%s9 + $0x80] sm:$0xff] %vm903, %v855
  %1049 = vst.msk [vmem:[%s9 + $0x88] sm:$0xff] %vm903, %v856
  %1050 = vst.msk [vmem:[%s9 + $0x90] sm:$0xff] %vm903, %v857
  %1051 = vst.msk [vmem:[%s9 + $0x98] sm:$0xff] %vm903, %v858
  %1052 = vst.msk [vmem:[%s9 + $0xa0] sm:$0xff] %vm903, %v859
  %1053 = vst.msk [vmem:[%s9 + $0xa8] sm:$0xff] %vm903, %v860
  %1054 = vst.msk [vmem:[%s9 + $0xb0] sm:$0xff] %vm903, %v861
  %1055 = vst.msk [vmem:[%s9 + $0xb8] sm:$0xff] %vm903, %v862
  %1056 = vst.msk [vmem:[%s9 + $0xc0] sm:$0xff] %vm903, %v863
  %1057 = vst.msk [vmem:[%s9 + $0xc8] sm:$0xff] %vm903, %v864
  %1058 = vst.msk [vmem:[%s9 + $0xd0] sm:$0xff] %vm903, %v865
  %1059 = vst.msk [vmem:[%s9 + $0xd8] sm:$0xff] %vm903, %v866
  %1060 = vst.msk [vmem:[%s9 + $0xe0] sm:$0xff] %vm903, %v867
  %1061 = vst.msk [vmem:[%s9 + $0xe8] sm:$0xff] %vm903, %v868
  %1062 = vst.msk [vmem:[%s9 + $0xf0] sm:$0xff] %vm903, %v869
  %1063 = vst.msk [vmem:[%s9 + $0xf8] sm:$0xff] %vm903, %v870
  %1064 = vst.msk [vmem:[%s9 + $0x100] sm:$0xff] %vm903, %v871
  %1065 = vst.msk [vmem:[%s9 + $0x108] sm:$0xff] %vm903, %v872
  %1066 = vst.msk [vmem:[%s9 + $0x110] sm:$0xff] %vm903, %v873
  %1067 = vst.msk [vmem:[%s9 + $0x118] sm:$0xff] %vm903, %v874
  %1068 = vst.msk [vmem:[%s9 + $0x120] sm:$0xff] %vm903, %v875
  %1069 = vst.msk [vmem:[%s9 + $0x128] sm:$0xff] %vm903, %v876
  %1070 = vst.msk [vmem:[%s9 + $0x130] sm:$0xff] %vm903, %v877
  %1071 = vst.msk [vmem:[%s9 + $0x138] sm:$0xff] %vm903, %v878
  %1072 = vst.msk [vmem:[%s9 + $0x140] sm:$0xff] %vm903, %v879
  %1073 = vst.msk [vmem:[%s9 + $0x148] sm:$0xff] %vm903, %v880
  %1074 = vst.msk [vmem:[%s9 + $0x150] sm:$0xff] %vm903, %v881
  %1075 = vst.msk [vmem:[%s9 + $0x158] sm:$0xff] %vm903, %v882
  %1076 = vst.msk [vmem:[%s9 + $0x160] sm:$0xff] %vm903, %v883
  %1077 = vst.msk [vmem:[%s9 + $0x168] sm:$0xff] %vm903, %v884
  %1078 = vst.msk [vmem:[%s9 + $0x170] sm:$0xff] %vm903, %v885
  %1079 = vst.msk [vmem:[%s9 + $0x178] sm:$0xff] %vm903, %v886
  %1080 = vst.msk [vmem:[%s9 + $0x180] sm:$0xff] %vm903, %v887
  %1081 = vst.msk [vmem:[%s9 + $0x188] sm:$0xff] %vm903, %v888
  %1082 = vst.msk [vmem:[%s9 + $0x190] sm:$0xff] %vm903, %v889
  %1083 = vst.msk [vmem:[%s9 + $0x198] sm:$0xff] %vm903, %v890
  %1084 = vst.msk [vmem:[%s9 + $0x1a0] sm:$0xff] %vm903, %v891
  %1085 = vst.msk [vmem:[%s9 + $0x1a8] sm:$0xff] %vm903, %v892
  %1086 = vst.msk [vmem:[%s9 + $0x1b0] sm:$0xff] %vm903, %v893
  %1087 = vst.msk [vmem:[%s9 + $0x1b8] sm:$0xff] %vm903, %v894
  %1088 = vst.msk [vmem:[%s9 + $0x1c0] sm:$0xff] %vm903, %v895
  %1089 = vst.msk [vmem:[%s9 + $0x1c8] sm:$0xff] %vm903, %v896
  %1090 = vst.msk [vmem:[%s9 + $0x1d0] sm:$0xff] %vm903, %v897
  %1091 = vst.msk [vmem:[%s9 + $0x1d8] sm:$0xff] %vm903, %v898
  %1092 = vst.msk [vmem:[%s9 + $0x1e0] sm:$0xff] %vm903, %v899
  %1093 = vst.msk [vmem:[%s9 + $0x1e8] sm:$0xff] %vm903, %v900
  %1094 = vst.msk [vmem:[%s9 + $0x1f0] sm:$0xff] %vm903, %v901
  %1095 = vst.msk [vmem:[%s9 + $0x1f8] sm:$0xff] %vm903, %v902
  // Predicated region
  $region30: #{basic_block_forward.11} parent=0 // pred_check
    _
  $region31: #{basic_block_forward.11} parent=0 // pred_check_branch
    %1097 = sbr.rel (0) target = $region33
  $region32: #{basic_block_forward.11} parent=0 // pred_region
    _
  $region33: #{basic_block_forward.11} parent=0 // pred_fallthru
    _
  // Predicated region
  $region34: #{basic_block_forward.11} parent=0 // pred_check
    _
  $region35: #{basic_block_forward.11} parent=0 // pred_check_branch
    %1099 = sbr.rel (0) target = $region37
  $region36: #{basic_block_forward.11} parent=0 // pred_region
    _
  $region37: #{basic_block_forward.11} parent=0 // pred_fallthru
    _
  // Predicated region
  $region38: #{basic_block_forward.11} parent=0 // pred_check
    _
  $region39: #{basic_block_forward.11} parent=0 // pred_check_branch
    %1101 = sbr.rel (0) target = $region41
  $region40: #{basic_block_forward.11} parent=0 // pred_region
    _
  $region41: #{basic_block_forward.11} parent=0 // pred_fallthru
    _
  // Predicated region
  $region42: #{basic_block_forward.11} parent=0 // pred_check
    _
  $region43: #{basic_block_forward.11} parent=0 // pred_check_branch
    %1103 = sbr.rel (0) target = $region45
  $region44: #{basic_block_forward.11} parent=0 // pred_region
    _
  $region45: #{basic_block_forward.11} parent=0 // pred_fallthru
    _
  // Predicated region
  $region46: #{basic_block_forward.11} parent=0 // pred_check
    _
  $region47: #{basic_block_forward.11} parent=0 // pred_check_branch
    %1105 = sbr.rel (0) target = $region49
  $region48: #{basic_block_forward.11} parent=0 // pred_region
    _
  $region49: #{basic_block_forward.11} parent=0 // pred_fallthru
    _
  // Predicated region
  $region50: #{basic_block_forward.11} parent=0 // pred_check
    _
  $region51: #{basic_block_forward.11} parent=0 // pred_check_branch
    %1107 = sbr.rel (0) target = $region53
  $region52: #{basic_block_forward.11} parent=0 // pred_region
    _
  $region53: #{basic_block_forward.11} parent=0 // pred_fallthru
    _

// kernel: basic_block_forward.17
$region0: #{basic_block_forward.17}
  #allocation0 [shape = 'u32[]', space=smem, size = 0x4, offset = 0x4, fixed_abs, tag = 'smem constant byte address 0x4 - core index']
  #allocation1 [shape = 'u32[144,128]{1,0:T(1,128)}', space=vmem, size = 0x12000, scoped, tag = 'internal scratch']
  %s0 = inlined_call_operand.vmem [shape: f32[2,256,64], index: 0, kind: input, shape index: {}]
  %s1 = inlined_call_operand.vmem [shape: f32[2,256,64], index: 1, kind: input, shape index: {}]
  %s2 = inlined_call_operand.vmem [shape: f32[2,1,64], index: 2, kind: input, shape index: {}]
  %s3 = inlined_call_operand.vmem [shape: f32[1,1,64], index: 3, kind: input, shape index: {}]
  %s4 = inlined_call_operand.vmem [shape: f32[1,1,64], index: 4, kind: input, shape index: {}]
  %s5 = inlined_call_operand.hbm [shape: f32[2,256,64], index: 5, kind: output, shape index: {}]
  %s6 = sld [smem:[#allocation0]]
  $region53: #{basic_block_forward.17} parent=0
    _
  %s8 = ssub.s32 1, %s6
  %s9 = scalar_select 0, %s8, %s6
  $region1: #{basic_block_forward.17} parent=0
    #allocation2 [shape = 'u8[131072]{0}', space=vmem, size = 0x20000, scoped, tag = 'output window, operand 0']
    #allocation3 [shape = 's32[2]{0}', space=sflag, size = 0x8, scoped, tag = 'scoped memory for basic_block_forward.17']
    %10 = vsyncpa [#allocation3], 0
    %s11 = scalar_lea.sflag [#allocation3], 1
    %12 = vsyncpa %s11, 0
    loop: start=0, step=1, limit=6
    $region2: #{basic_block_forward.17} parent=1 // loop_pre_header
      _
    $region3: #{basic_block_forward.17} parent=1 // loop_header
      %s14 = sphi 0, %s18
      %p15 = scmp.ge.s32.totalorder %s14, 6
      %s21 = sphi 0, %s33
      %s22 = sphi 0, %s29
      %s23 = sphi 0, %s21
      %s24 = sphi 0, %s22
      %s25 = sphi 0, %s23
      %s26 = sphi 0, %s24
      %s38 = sphi 0, %s40
      %s41 = sphi 0, %s38
      %s42 = sphi 0, %s41
      %s58 = sphi 0, %s42
      %s66 = sphi 0, %s68
      %s69 = sphi 0, %s66
      %s70 = sphi 0, %s69
      %s86 = sphi 0, %s70
      %s92 = sphi 0, %s94
      %s95 = sphi 0, %s92
      %s96 = sphi 0, %s95
      %s112 = sphi 0, %s96
      %s116 = sphi 0, %s116
      %s118 = sphi 0, %s116
      %s119 = sphi 0, %s118
      %s133 = sphi 0, %s119
      %s137 = sphi 0, %s137
      %s139 = sphi 0, %s137
      %s140 = sphi 0, %s139
      %s154 = sphi 0, %s140
      %s162 = sphi 0, %s164
      %s165 = sphi 0, %s162
      %s166 = sphi 0, %s165
      %s182 = sphi 0, %s166
    $region4: #{basic_block_forward.17} parent=1 // loop_header_branch
      %17 = sbr.rel (%p15) target = $region8
    $region5: #{basic_block_forward.17} parent=1 // loop_body
      %s19 = ssub.s32 %s14, 1
      %s20 = ssub.s32 %s14, 2
      %s27 = sadd.s32 1, %s22
      %p28 = scmp.ge.s32.totalorder %s27, 2
      %s29 = scalar_select %p28, 0, %s27
      %s30 = sadd.s32 1, %s21
      %s31 = scalar_select %p28, %s30, %s21
      %p32 = scmp.ge.s32.totalorder %s31, 2
      %s33 = scalar_select %p32, 0, %s31
      %s34 = ssub.s32 %s21, %s33
      %s35 = ssub.s32 %s22, %s29
      %s36 = sor.u32 %s34, %s35
      %p37 = scmp.eq.s32.totalorder %s36, 0
      %s39 = sadd.s32 %s38, 1
      %s40 = scalar_select %p37, %s38, %s39
      %p43 = pneg %p37
      %p44 = scmp.eq.s32.totalorder %s14, 3
      %p45 = por %p43, %p44
      %p46 = scmp.ne.s32.totalorder %s38, %s41
      %p47 = scmp.eq.s32.totalorder %s14, 0
      %p48 = por %p46, %p47
      %p49 = scmp.ne.s32.totalorder %s38, %s41
      %p50 = scmp.eq.s32.totalorder %s19, 3
      %p51 = por %p49, %p50
      %p52 = scmp.ne.s32.totalorder %s41, %s42
      %p53 = scmp.eq.s32.totalorder %s19, 0
      %p54 = por %p52, %p53
      %p55 = scmp.ne.s32.totalorder %s41, %s42
      %p56 = scmp.eq.s32.totalorder %s20, 3
      %p57 = por %p55, %p56
      %p59 = scmp.ne.s32.totalorder %s42, %s58
      %p60 = scmp.eq.s32.totalorder %s20, 0
      %p61 = por %p59, %p60
      %s62 = ssub.s32 %s21, %s33
      %s63 = ssub.s32 %s22, %s29
      %s64 = sor.u32 %s62, %s63
      %p65 = scmp.eq.s32.totalorder %s64, 0
      %s67 = sadd.s32 %s66, 1
      %s68 = scalar_select %p65, %s66, %s67
      %p71 = pneg %p65
      %p72 = scmp.eq.s32.totalorder %s14, 3
      %p73 = por %p71, %p72
      %p74 = scmp.ne.s32.totalorder %s66, %s69
      %p75 = scmp.eq.s32.totalorder %s14, 0
      %p76 = por %p74, %p75
      %p77 = scmp.ne.s32.totalorder %s66, %s69
      %p78 = scmp.eq.s32.totalorder %s19, 3
      %p79 = por %p77, %p78
      %p80 = scmp.ne.s32.totalorder %s69, %s70
      %p81 = scmp.eq.s32.totalorder %s19, 0
      %p82 = por %p80, %p81
      %p83 = scmp.ne.s32.totalorder %s69, %s70
      %p84 = scmp.eq.s32.totalorder %s20, 3
      %p85 = por %p83, %p84
      %p87 = scmp.ne.s32.totalorder %s70, %s86
      %p88 = scmp.eq.s32.totalorder %s20, 0
      %p89 = por %p87, %p88
      %s90 = ssub.s32 %s21, %s33
      %p91 = scmp.eq.s32.totalorder %s90, 0
      %s93 = sadd.s32 %s92, 1
      %s94 = scalar_select %p91, %s92, %s93
      %p97 = pneg %p91
      %p98 = scmp.eq.s32.totalorder %s14, 3
      %p99 = por %p97, %p98
      %p100 = scmp.ne.s32.totalorder %s92, %s95
      %p101 = scmp.eq.s32.totalorder %s14, 0
      %p102 = por %p100, %p101
      %p103 = scmp.ne.s32.totalorder %s92, %s95
      %p104 = scmp.eq.s32.totalorder %s19, 3
      %p105 = por %p103, %p104
      %p106 = scmp.ne.s32.totalorder %s95, %s96
      %p107 = scmp.eq.s32.totalorder %s19, 0
      %p108 = por %p106, %p107
      %p109 = scmp.ne.s32.totalorder %s95, %s96
      %p110 = scmp.eq.s32.totalorder %s20, 3
      %p111 = por %p109, %p110
      %p113 = scmp.ne.s32.totalorder %s96, %s112
      %p114 = scmp.eq.s32.totalorder %s20, 0
      %p115 = por %p113, %p114
      %s117 = sadd.s32 %s116, 1
      %p120 = scmp.eq.s32.totalorder %s14, 3
      %p121 = scmp.ne.s32.totalorder %s116, %s118
      %p122 = scmp.eq.s32.totalorder %s14, 0
      %p123 = por %p121, %p122
      %p124 = scmp.ne.s32.totalorder %s116, %s118
      %p125 = scmp.eq.s32.totalorder %s19, 3
      %p126 = por %p124, %p125
      %p127 = scmp.ne.s32.totalorder %s118, %s119
      %p128 = scmp.eq.s32.totalorder %s19, 0
      %p129 = por %p127, %p128
      %p130 = scmp.ne.s32.totalorder %s118, %s119
      %p131 = scmp.eq.s32.totalorder %s20, 3
      %p132 = por %p130, %p131
      %p134 = scmp.ne.s32.totalorder %s119, %s133
      %p135 = scmp.eq.s32.totalorder %s20, 0
      %p136 = por %p134, %p135
      %s138 = sadd.s32 %s137, 1
      %p141 = scmp.eq.s32.totalorder %s14, 3
      %p142 = scmp.ne.s32.totalorder %s137, %s139
      %p143 = scmp.eq.s32.totalorder %s14, 0
      %p144 = por %p142, %p143
      %p145 = scmp.ne.s32.totalorder %s137, %s139
      %p146 = scmp.eq.s32.totalorder %s19, 3
      %p147 = por %p145, %p146
      %p148 = scmp.ne.s32.totalorder %s139, %s140
      %p149 = scmp.eq.s32.totalorder %s19, 0
      %p150 = por %p148, %p149
      %p151 = scmp.ne.s32.totalorder %s139, %s140
      %p152 = scmp.eq.s32.totalorder %s20, 3
      %p153 = por %p151, %p152
      %p155 = scmp.ne.s32.totalorder %s140, %s154
      %p156 = scmp.eq.s32.totalorder %s20, 0
      %p157 = por %p155, %p156
      %s158 = ssub.s32 %s21, %s33
      %s159 = ssub.s32 %s22, %s29
      %s160 = sor.u32 %s158, %s159
      %p161 = scmp.eq.s32.totalorder %s160, 0
      %s163 = sadd.s32 %s162, 1
      %s164 = scalar_select %p161, %s162, %s163
      %p167 = pneg %p161
      %p168 = scmp.eq.s32.totalorder %s14, 3
      %p169 = por %p167, %p168
      %p170 = scmp.ne.s32.totalorder %s162, %s165
      %p171 = scmp.eq.s32.totalorder %s14, 0
      %p172 = por %p170, %p171
      %p173 = scmp.ne.s32.totalorder %s162, %s165
      %p174 = scmp.eq.s32.totalorder %s19, 3
      %p175 = por %p173, %p174
      %p176 = scmp.ne.s32.totalorder %s165, %s166
      %p177 = scmp.eq.s32.totalorder %s19, 0
      %p178 = por %p176, %p177
      %p179 = scmp.ne.s32.totalorder %s165, %s166
      %p180 = scmp.eq.s32.totalorder %s20, 3
      %p181 = por %p179, %p180
      %p183 = scmp.ne.s32.totalorder %s166, %s182
      %p184 = scmp.eq.s32.totalorder %s20, 0
      %p185 = por %p183, %p184
      %p186 = scmp.le.s32.totalorder 1, %s14
      %p187 = scmp.lt.s32.totalorder %s14, 5
      %p188 = pnand %p186, %p187
      %p189 = pneg %p188
      // Predicated region
      $region9: #{basic_block_forward.17} parent=5 // pred_check
        _
      $region10: #{basic_block_forward.17} parent=5 // pred_check_branch
        %191 = sbr.rel (%p188) target = $region12
      $region11: #{basic_block_forward.17} parent=5 // pred_region
        %s192 = ssub.s32 %s14, 1
        // Predicated region
        $region13: #{basic_block_forward.17} parent=11 // pred_check
          %p193 = pneg %p129
        $region14: #{basic_block_forward.17} parent=11 // pred_check_branch
          %195 = sbr.rel (%p193) target = $region16
        $region15: #{basic_block_forward.17} parent=11 // pred_region
          _
        $region16: #{basic_block_forward.17} parent=11 // pred_fallthru
          _
        // Predicated region
        $region17: #{basic_block_forward.17} parent=11 // pred_check
          %p196 = pneg %p150
        $region18: #{basic_block_forward.17} parent=11 // pred_check_branch
          %198 = sbr.rel (%p196) target = $region20
        $region19: #{basic_block_forward.17} parent=11 // pred_region
          _
        $region20: #{basic_block_forward.17} parent=11 // pred_fallthru
          _
      $region12: #{basic_block_forward.17} parent=5 // pred_fallthru
        _
      %p199 = scmp.lt.s32.totalorder %s14, 4
      // Predicated region
      $region21: #{basic_block_forward.17} parent=5 // pred_check
        %p200 = pneg %p199
      $region22: #{basic_block_forward.17} parent=5 // pred_check_branch
        %202 = sbr.rel (%p200) target = $region24
      $region23: #{basic_block_forward.17} parent=5 // pred_region
        // Predicated region
        $region25: #{basic_block_forward.17} parent=23 // pred_check
          %p203 = pneg %p48
        $region26: #{basic_block_forward.17} parent=23 // pred_check_branch
          %205 = sbr.rel (%p203) target = $region28
        $region27: #{basic_block_forward.17} parent=23 // pred_region
          %s206 = smul.u32 16, %s22
          %p207 = scmp.lt.s32.totalorder %s21, 1
          %s208 = scalar_select %p207, %s21, 1
          %p209 = scmp.lt.s32.totalorder %s206, 31
          %s210 = scalar_select %p209, %s206, 31
          %s211 = smul.addr %s208, 32
          %s212 = sadd.s32 %s210, %s211
          %s213 = smul.addr %s212, 8
          %s214 = scalar_lea.vmem %s0, %s213
          %s215 = smul.u32 16, %s22
        $region28: #{basic_block_forward.17} parent=23 // pred_fallthru
          _
        // Predicated region
        $region29: #{basic_block_forward.17} parent=23 // pred_check
          %p216 = pneg %p76
        $region30: #{basic_block_forward.17} parent=23 // pred_check_branch
          %218 = sbr.rel (%p216) target = $region32
        $region31: #{basic_block_forward.17} parent=23 // pred_region
          %s219 = smul.u32 16, %s22
          %p220 = scmp.lt.s32.totalorder %s21, 1
          %s221 = scalar_select %p220, %s21, 1
          %p222 = scmp.lt.s32.totalorder %s219, 31
          %s223 = scalar_select %p222, %s219, 31
          %s224 = smul.addr %s221, 32
          %s225 = sadd.s32 %s223, %s224
          %s226 = smul.addr %s225, 8
          %s227 = scalar_lea.vmem %s1, %s226
          %s228 = smul.u32 16, %s22
        $region32: #{basic_block_forward.17} parent=23 // pred_fallthru
          _
        // Predicated region
        $region33: #{basic_block_forward.17} parent=23 // pred_check
          %p229 = pneg %p102
        $region34: #{basic_block_forward.17} parent=23 // pred_check_branch
          %231 = sbr.rel (%p229) target = $region36
        $region35: #{basic_block_forward.17} parent=23 // pred_region
          %p232 = scmp.lt.s32.totalorder %s21, 1
          %s233 = scalar_select %p232, %s21, 1
          %s234 = scalar_lea.vmem %s2, %s233
        $region36: #{basic_block_forward.17} parent=23 // pred_fallthru
          _
      $region24: #{basic_block_forward.17} parent=5 // pred_fallthru
        _
      %p235 = scmp.le.s32.totalorder 1, %s14
      %p236 = scmp.lt.s32.totalorder %s14, 5
      %p237 = pnand %p235, %p236
      %p238 = pneg %p237
      // Predicated region
      $region37: #{basic_block_forward.17} parent=5 // pred_check
        _
      $region38: #{basic_block_forward.17} parent=5 // pred_check_branch
        %240 = sbr.rel (%p237) target = $region40
      $region39: #{basic_block_forward.17} parent=5 // pred_region
        %s241 = ssub.s32 %s14, 1
        %s242 = smul.u32 16, %s24
        %p243 = scmp.lt.s32.totalorder %s23, 1
        %s244 = scalar_select %p243, %s23, 1
        %p245 = scmp.lt.s32.totalorder %s242, 31
        %s246 = scalar_select %p245, %s242, 31
        %s247 = smul.addr %s244, 32
        %s248 = sadd.s32 %s246, %s247
        %s249 = smul.addr %s248, 8
        %s250 = scalar_lea.vmem %s0, %s249
        %p251 = pneg %p54
        %p252 = pneg %p51
        %s253 = smul.u32 16, %s24
        %p254 = scmp.lt.s32.totalorder %s23, 1
        %s255 = scalar_select %p254, %s23, 1
        %p256 = scmp.lt.s32.totalorder %s253, 31
        %s257 = scalar_select %p256, %s253, 31
        %s258 = smul.addr %s255, 32
        %s259 = sadd.s32 %s257, %s258
        %s260 = smul.addr %s259, 8
        %s261 = scalar_lea.vmem %s1, %s260
        %p262 = pneg %p82
        %p263 = pneg %p79
        %p264 = scmp.lt.s32.totalorder %s23, 1
        %s265 = scalar_select %p264, %s23, 1
        %s266 = scalar_lea.vmem %s2, %s265
        %p267 = pneg %p108
        %p268 = pneg %p105
        %p269 = pneg %p129
        %p270 = pneg %p126
        %p271 = pneg %p150
        %p272 = pneg %p147
        %p273 = pneg %p178
        %p274 = pneg %p175
        %s275 = sand.u32 %s165, 1
        %s276 = scalar_lea.sflag [#allocation3], %s275
        %s277 = sand.u32 %s165, 1
        %s278 = smul.addr %s277, 128
        %s279 = scalar_lea.vmem [#allocation2], %s278
        %s280 = smul.u32 16, %s24
        %p281 = scmp.lt.s32.totalorder %s23, 1
        %s282 = scalar_select %p281, %s23, 1
        %p283 = scmp.lt.s32.totalorder %s280, 31
        %s284 = scalar_select %p283, %s280, 31
        %s285 = smul.addr %s282, 32
        %s286 = sadd.s32 %s284, %s285
        %s287 = smul.addr %s286, 8
        %s288 = scalar_lea.vmem %s0, %s287
        %s289 = smul.u32 16, %s24
        %s290 = smul.u32 16, %s24
        %p291 = scmp.lt.s32.totalorder %s23, 1
        %s292 = scalar_select %p291, %s23, 1
        %p293 = scmp.lt.s32.totalorder %s290, 31
        %s294 = scalar_select %p293, %s290, 31
        %s295 = smul.addr %s292, 32
        %s296 = sadd.s32 %s294, %s295
        %s297 = smul.addr %s296, 8
        %s298 = scalar_lea.vmem %s1, %s297
        %s299 = smul.u32 16, %s24
        %p300 = scmp.lt.s32.totalorder %s23, 1
        %s301 = scalar_select %p300, %s23, 1
        %s302 = scalar_lea.vmem %s2, %s301
        %s303 = smul.u32 16, %s24
        %v304 = vld [vmem:[%s288] sm:$0xff]
        %v305 = vld [vmem:[%s288 + $0x8] sm:$0xff]
        %v306 = vld [vmem:[%s288 + $0x10] sm:$0xff]
        %v307 = vld [vmem:[%s288 + $0x18] sm:$0xff]
        %v308 = vld [vmem:[%s288 + $0x20] sm:$0xff]
        %v309 = vld [vmem:[%s288 + $0x28] sm:$0xff]
        %v310 = vld [vmem:[%s288 + $0x30] sm:$0xff]
        %v311 = vld [vmem:[%s288 + $0x38] sm:$0xff]
        %v312 = vld [vmem:[%s288 + $0x40] sm:$0xff]
        %v313 = vld [vmem:[%s288 + $0x48] sm:$0xff]
        %v314 = vld [vmem:[%s288 + $0x50] sm:$0xff]
        %v315 = vld [vmem:[%s288 + $0x58] sm:$0xff]
        %v316 = vld [vmem:[%s288 + $0x60] sm:$0xff]
        %v317 = vld [vmem:[%s288 + $0x68] sm:$0xff]
        %v318 = vld [vmem:[%s288 + $0x70] sm:$0xff]
        %v319 = vld [vmem:[%s288 + $0x78] sm:$0xff]
        %v320 = vld [vmem:[%s298] sm:$0xff]
        %v321 = vld [vmem:[%s298 + $0x8] sm:$0xff]
        %v322 = vld [vmem:[%s298 + $0x10] sm:$0xff]
        %v323 = vld [vmem:[%s298 + $0x18] sm:$0xff]
        %v324 = vld [vmem:[%s298 + $0x20] sm:$0xff]
        %v325 = vld [vmem:[%s298 + $0x28] sm:$0xff]
        %v326 = vld [vmem:[%s298 + $0x30] sm:$0xff]
        %v327 = vld [vmem:[%s298 + $0x38] sm:$0xff]
        %v328 = vld [vmem:[%s298 + $0x40] sm:$0xff]
        %v329 = vld [vmem:[%s298 + $0x48] sm:$0xff]
        %v330 = vld [vmem:[%s298 + $0x50] sm:$0xff]
        %v331 = vld [vmem:[%s298 + $0x58] sm:$0xff]
        %v332 = vld [vmem:[%s298 + $0x60] sm:$0xff]
        %v333 = vld [vmem:[%s298 + $0x68] sm:$0xff]
        %v334 = vld [vmem:[%s298 + $0x70] sm:$0xff]
        %v335 = vld [vmem:[%s298 + $0x78] sm:$0xff]
        %v336 = vld [vmem:[%s302] sm:$0x1]
        %v338 = vlaneseq
        %v339 = vshrl.u32 %v338, 7
        %v340 = vsub.s32 0, %v339
        %v341 = vrot.slane %v336, %v340
        %v343 = vmul.f32 %v341, %v304
        %v344 = vmul.f32 %v341, %v305
        %v345 = vmul.f32 %v341, %v306
        %v346 = vmul.f32 %v341, %v307
        %v347 = vmul.f32 %v341, %v308
        %v348 = vmul.f32 %v341, %v309
        %v349 = vmul.f32 %v341, %v310
        %v350 = vmul.f32 %v341, %v311
        %v351 = vmul.f32 %v341, %v312
        %v352 = vmul.f32 %v341, %v313
        %v353 = vmul.f32 %v341, %v314
        %v354 = vmul.f32 %v341, %v315
        %v355 = vmul.f32 %v341, %v316
        %v356 = vmul.f32 %v341, %v317
        %v357 = vmul.f32 %v341, %v318
        %v358 = vmul.f32 %v341, %v319
        %v359 = vld [vmem:[%s3] sm:$0x1]
        %v361 = vlaneseq
        %v362 = vshrl.u32 %v361, 7
        %v363 = vsub.s32 0, %v362
        %v364 = vrot.slane %v359, %v363
        %v366 = vmul.f32 %v343, %v364
        %v367 = vmul.f32 %v344, %v364
        %v368 = vmul.f32 %v345, %v364
        %v369 = vmul.f32 %v346, %v364
        %v370 = vmul.f32 %v347, %v364
        %v371 = vmul.f32 %v348, %v364
        %v372 = vmul.f32 %v349, %v364
        %v373 = vmul.f32 %v350, %v364
        %v374 = vmul.f32 %v351, %v364
        %v375 = vmul.f32 %v352, %v364
        %v376 = vmul.f32 %v353, %v364
        %v377 = vmul.f32 %v354, %v364
        %v378 = vmul.f32 %v355, %v364
        %v379 = vmul.f32 %v356, %v364
        %v380 = vmul.f32 %v357, %v364
        %v381 = vmul.f32 %v358, %v364
        %v382 = vld [vmem:[%s4] sm:$0x1]
        %v384 = vlaneseq
        %v385 = vshrl.u32 %v384, 7
        %v386 = vsub.s32 0, %v385
        %v387 = vrot.slane %v382, %v386
        %v389 = vadd.f32 %v366, %v387
        %v390 = vadd.f32 %v367, %v387
        %v391 = vadd.f32 %v368, %v387
        %v392 = vadd.f32 %v369, %v387
        %v393 = vadd.f32 %v370, %v387
        %v394 = vadd.f32 %v371, %v387
        %v395 = vadd.f32 %v372, %v387
        %v396 = vadd.f32 %v373, %v387
        %v397 = vadd.f32 %v374, %v387
        %v398 = vadd.f32 %v375, %v387
        %v399 = vadd.f32 %v376, %v387
        %v400 = vadd.f32 %v377, %v387
        %v401 = vadd.f32 %v378, %v387
        %v402 = vadd.f32 %v379, %v387
        %v403 = vadd.f32 %v380, %v387
        %v404 = vadd.f32 %v381, %v387
        %v405 = vadd.f32 %v389, %v320
        %v406 = vadd.f32 %v390, %v321
        %v407 = vadd.f32 %v391, %v322
        %v408 = vadd.f32 %v392, %v323
        %v409 = vadd.f32 %v393, %v324
        %v410 = vadd.f32 %v394, %v325
        %v411 = vadd.f32 %v395, %v326
        %v412 = vadd.f32 %v396, %v327
        %v413 = vadd.f32 %v397, %v328
        %v414 = vadd.f32 %v398, %v329
        %v415 = vadd.f32 %v399, %v330
        %v416 = vadd.f32 %v400, %v331
        %v417 = vadd.f32 %v401, %v332
        %v418 = vadd.f32 %v402, %v333
        %v419 = vadd.f32 %v403, %v334
        %v420 = vadd.f32 %v404, %v335
        %vm421 = vcmask 523264
        %422 = vst.msk [vmem:[%s279] sm:$0xff] %vm421, %v405
        %423 = vst.msk [vmem:[%s279 + $0x8] sm:$0xff] %vm421, %v406
        %424 = vst.msk [vmem:[%s279 + $0x10] sm:$0xff] %vm421, %v407
        %425 = vst.msk [vmem:[%s279 + $0x18] sm:$0xff] %vm421, %v408
        %426 = vst.msk [vmem:[%s279 + $0x20] sm:$0xff] %vm421, %v409
        %427 = vst.msk [vmem:[%s279 + $0x28] sm:$0xff] %vm421, %v410
        %428 = vst.msk [vmem:[%s279 + $0x30] sm:$0xff] %vm421, %v411
        %429 = vst.msk [vmem:[%s279 + $0x38] sm:$0xff] %vm421, %v412
        %430 = vst.msk [vmem:[%s279 + $0x40] sm:$0xff] %vm421, %v413
        %431 = vst.msk [vmem:[%s279 + $0x48] sm:$0xff] %vm421, %v414
        %432 = vst.msk [vmem:[%s279 + $0x50] sm:$0xff] %vm421, %v415
        %433 = vst.msk [vmem:[%s279 + $0x58] sm:$0xff] %vm421, %v416
        %434 = vst.msk [vmem:[%s279 + $0x60] sm:$0xff] %vm421, %v417
        %435 = vst.msk [vmem:[%s279 + $0x68] sm:$0xff] %vm421, %v418
        %436 = vst.msk [vmem:[%s279 + $0x70] sm:$0xff] %vm421, %v419
        %437 = vst.msk [vmem:[%s279 + $0x78] sm:$0xff] %vm421, %v420
        %s438 = sand.u32 %s165, 1
        %s439 = scalar_lea.sflag [#allocation3], %s438
        %s440 = sand.u32 %s165, 1
        %s441 = smul.addr %s440, 128
        %s442 = scalar_lea.vmem [#allocation2], %s441
        // Predicated region
        $region41: #{basic_block_forward.17} parent=39 // pred_check
          %p443 = pneg %p175
        $region42: #{basic_block_forward.17} parent=39 // pred_check_branch
          %445 = sbr.rel (%p443) target = $region44
        $region43: #{basic_block_forward.17} parent=39 // pred_region
          %s446 = smul.u32 16, %s24
          %s448 = ssub.s32 2048, 2048
          %449 = vsyncadd %s439, %s448
          %s450 = smul.addr %s23, 32
          %s451 = sadd.s32 %s446, %s450
          %s452 = smul.addr %s451, 128
          %s453 = scalar_lea.hbm %s5, %s452
          %s454 = sshll.u32 %s442, 4
          %s455 = int_to_ptr.vmem [resolvable:$true] %s454
          %460 = dma.vmem_to_hbm [thread:$0]  %s455, 2048, %s453, %s439, 128, 128, 8
        $region44: #{basic_block_forward.17} parent=39 // pred_fallthru
          _
      $region40: #{basic_block_forward.17} parent=5 // pred_fallthru
        _
      %p461 = scmp.le.s32.totalorder 2, %s14
      // Predicated region
      $region45: #{basic_block_forward.17} parent=5 // pred_check
        %p462 = pneg %p461
      $region46: #{basic_block_forward.17} parent=5 // pred_check_branch
        %464 = sbr.rel (%p462) target = $region48
      $region47: #{basic_block_forward.17} parent=5 // pred_region
        %s465 = ssub.s32 %s14, 2
        // Predicated region
        $region49: #{basic_block_forward.17} parent=47 // pred_check
          %p466 = pneg %p181
        $region50: #{basic_block_forward.17} parent=47 // pred_check_branch
          %468 = sbr.rel (%p466) target = $region52
        $region51: #{basic_block_forward.17} parent=47 // pred_region
          %s469 = sand.u32 %s166, 1
          %s470 = scalar_lea.sflag [#allocation3], %s469
          %s471 = sand.u32 %s166, 1
          %s472 = smul.addr %s471, 128
          %s473 = scalar_lea.vmem [#allocation2], %s472
          %474 = dma.done %s470, 2048
        $region52: #{basic_block_forward.17} parent=47 // pred_fallthru
          _
      $region48: #{basic_block_forward.17} parent=5 // pred_fallthru
        _
    $region6: #{basic_block_forward.17} parent=1 // loop_footer
      %s18 = sadd.s32 1, %s14
    $region7: #{basic_block_forward.17} parent=1 // loop_footer_branch
      %13 = sbr.rel target = $region3
    $region8: #{basic_block_forward.17} parent=1 // loop_exit
      _
    %475 = vsyncpa [#allocation3], 1
    %s476 = scalar_lea.sflag [#allocation3], 1
    %477 = vsyncpa %s476, 1

// kernel: basic_block_forward.14
$region0: #{basic_block_forward.14}
  #allocation0 [shape = 'u32[]', space=smem, size = 0x4, offset = 0x4, fixed_abs, tag = 'smem constant byte address 0x4 - core index']
  #allocation1 [shape = 'u32[144,128]{1,0:T(1,128)}', space=vmem, size = 0x12000, scoped, tag = 'internal scratch']
  %s0 = inlined_call_operand.vmem [shape: f32[512,64], index: 0, kind: input, shape index: {}]
  %s1 = inlined_call_operand.vmem [shape: f32[1,64], index: 1, kind: input, shape index: {}]
  %s2 = inlined_call_operand.vmem [shape: f32[64,64], index: 2, kind: input, shape index: {}]
  %s3 = inlined_call_operand.vmem [shape: f32[512,64], index: 3, kind: output, shape index: {}]
  %s4 = sld [smem:[#allocation0]]
  $region22: #{basic_block_forward.14} parent=0
    _
  %s6 = ssub.s32 1, %s4
  %s7 = scalar_select 0, %s6, %s4
  // Predicated region
  $region2: #{basic_block_forward.14} parent=0 // pred_check
    _
  $region3: #{basic_block_forward.14} parent=0 // pred_check_branch
    %9 = sbr.rel (0) target = $region5
  $region4: #{basic_block_forward.14} parent=0 // pred_region
    _
  $region5: #{basic_block_forward.14} parent=0 // pred_fallthru
    _
  // Predicated region
  $region6: #{basic_block_forward.14} parent=0 // pred_check
    _
  $region7: #{basic_block_forward.14} parent=0 // pred_check_branch
    %11 = sbr.rel (0) target = $region9
  $region8: #{basic_block_forward.14} parent=0 // pred_region
    _
  $region9: #{basic_block_forward.14} parent=0 // pred_fallthru
    _
  // Predicated region
  $region10: #{basic_block_forward.14} parent=0 // pred_check
    _
  $region11: #{basic_block_forward.14} parent=0 // pred_check_branch
    %13 = sbr.rel (0) target = $region13
  $region12: #{basic_block_forward.14} parent=0 // pred_region
    _
  $region13: #{basic_block_forward.14} parent=0 // pred_fallthru
    _
  %v14 = vld [vmem:[%s0] sm:$0xff]
  %v15 = vld [vmem:[%s0 + $0x8] sm:$0xff]
  %v16 = vld [vmem:[%s0 + $0x10] sm:$0xff]
  %v17 = vld [vmem:[%s0 + $0x18] sm:$0xff]
  %v18 = vld [vmem:[%s0 + $0x20] sm:$0xff]
  %v19 = vld [vmem:[%s0 + $0x28] sm:$0xff]
  %v20 = vld [vmem:[%s0 + $0x30] sm:$0xff]
  %v21 = vld [vmem:[%s0 + $0x38] sm:$0xff]
  %v22 = vld [vmem:[%s0 + $0x40] sm:$0xff]
  %v23 = vld [vmem:[%s0 + $0x48] sm:$0xff]
  %v24 = vld [vmem:[%s0 + $0x50] sm:$0xff]
  %v25 = vld [vmem:[%s0 + $0x58] sm:$0xff]
  %v26 = vld [vmem:[%s0 + $0x60] sm:$0xff]
  %v27 = vld [vmem:[%s0 + $0x68] sm:$0xff]
  %v28 = vld [vmem:[%s0 + $0x70] sm:$0xff]
  %v29 = vld [vmem:[%s0 + $0x78] sm:$0xff]
  %v30 = vld [vmem:[%s0 + $0x80] sm:$0xff]
  %v31 = vld [vmem:[%s0 + $0x88] sm:$0xff]
  %v32 = vld [vmem:[%s0 + $0x90] sm:$0xff]
  %v33 = vld [vmem:[%s0 + $0x98] sm:$0xff]
  %v34 = vld [vmem:[%s0 + $0xa0] sm:$0xff]
  %v35 = vld [vmem:[%s0 + $0xa8] sm:$0xff]
  %v36 = vld [vmem:[%s0 + $0xb0] sm:$0xff]
  %v37 = vld [vmem:[%s0 + $0xb8] sm:$0xff]
  %v38 = vld [vmem:[%s0 + $0xc0] sm:$0xff]
  %v39 = vld [vmem:[%s0 + $0xc8] sm:$0xff]
  %v40 = vld [vmem:[%s0 + $0xd0] sm:$0xff]
  %v41 = vld [vmem:[%s0 + $0xd8] sm:$0xff]
  %v42 = vld [vmem:[%s0 + $0xe0] sm:$0xff]
  %v43 = vld [vmem:[%s0 + $0xe8] sm:$0xff]
  %v44 = vld [vmem:[%s0 + $0xf0] sm:$0xff]
  %v45 = vld [vmem:[%s0 + $0xf8] sm:$0xff]
  %v46 = vld [vmem:[%s0 + $0x100] sm:$0xff]
  %v47 = vld [vmem:[%s0 + $0x108] sm:$0xff]
  %v48 = vld [vmem:[%s0 + $0x110] sm:$0xff]
  %v49 = vld [vmem:[%s0 + $0x118] sm:$0xff]
  %v50 = vld [vmem:[%s0 + $0x120] sm:$0xff]
  %v51 = vld [vmem:[%s0 + $0x128] sm:$0xff]
  %v52 = vld [vmem:[%s0 + $0x130] sm:$0xff]
  %v53 = vld [vmem:[%s0 + $0x138] sm:$0xff]
  %v54 = vld [vmem:[%s0 + $0x140] sm:$0xff]
  %v55 = vld [vmem:[%s0 + $0x148] sm:$0xff]
  %v56 = vld [vmem:[%s0 + $0x150] sm:$0xff]
  %v57 = vld [vmem:[%s0 + $0x158] sm:$0xff]
  %v58 = vld [vmem:[%s0 + $0x160] sm:$0xff]
  %v59 = vld [vmem:[%s0 + $0x168] sm:$0xff]
  %v60 = vld [vmem:[%s0 + $0x170] sm:$0xff]
  %v61 = vld [vmem:[%s0 + $0x178] sm:$0xff]
  %v62 = vld [vmem:[%s0 + $0x180] sm:$0xff]
  %v63 = vld [vmem:[%s0 + $0x188] sm:$0xff]
  %v64 = vld [vmem:[%s0 + $0x190] sm:$0xff]
  %v65 = vld [vmem:[%s0 + $0x198] sm:$0xff]
  %v66 = vld [vmem:[%s0 + $0x1a0] sm:$0xff]
  %v67 = vld [vmem:[%s0 + $0x1a8] sm:$0xff]
  %v68 = vld [vmem:[%s0 + $0x1b0] sm:$0xff]
  %v69 = vld [vmem:[%s0 + $0x1b8] sm:$0xff]
  %v70 = vld [vmem:[%s0 + $0x1c0] sm:$0xff]
  %v71 = vld [vmem:[%s0 + $0x1c8] sm:$0xff]
  %v72 = vld [vmem:[%s0 + $0x1d0] sm:$0xff]
  %v73 = vld [vmem:[%s0 + $0x1d8] sm:$0xff]
  %v74 = vld [vmem:[%s0 + $0x1e0] sm:$0xff]
  %v75 = vld [vmem:[%s0 + $0x1e8] sm:$0xff]
  %v76 = vld [vmem:[%s0 + $0x1f0] sm:$0xff]
  %v77 = vld [vmem:[%s0 + $0x1f8] sm:$0xff]
  %v78 = vld [vmem:[%s1] sm:$0x1]
  %v80 = vlaneseq
  %v81 = vshrl.u32 %v80, 7
  %v82 = vsub.s32 0, %v81
  %v83 = vrot.slane %v78, %v82
  %v85 = vadd.f32 %v14, %v83
  %v86 = vadd.f32 %v15, %v83
  %v87 = vadd.f32 %v16, %v83
  %v88 = vadd.f32 %v17, %v83
  %v89 = vadd.f32 %v18, %v83
  %v90 = vadd.f32 %v19, %v83
  %v91 = vadd.f32 %v20, %v83
  %v92 = vadd.f32 %v21, %v83
  %v93 = vadd.f32 %v22, %v83
  %v94 = vadd.f32 %v23, %v83
  %v95 = vadd.f32 %v24, %v83
  %v96 = vadd.f32 %v25, %v83
  %v97 = vadd.f32 %v26, %v83
  %v98 = vadd.f32 %v27, %v83
  %v99 = vadd.f32 %v28, %v83
  %v100 = vadd.f32 %v29, %v83
  %v101 = vadd.f32 %v30, %v83
  %v102 = vadd.f32 %v31, %v83
  %v103 = vadd.f32 %v32, %v83
  %v104 = vadd.f32 %v33, %v83
  %v105 = vadd.f32 %v34, %v83
  %v106 = vadd.f32 %v35, %v83
  %v107 = vadd.f32 %v36, %v83
  %v108 = vadd.f32 %v37, %v83
  %v109 = vadd.f32 %v38, %v83
  %v110 = vadd.f32 %v39, %v83
  %v111 = vadd.f32 %v40, %v83
  %v112 = vadd.f32 %v41, %v83
  %v113 = vadd.f32 %v42, %v83
  %v114 = vadd.f32 %v43, %v83
  %v115 = vadd.f32 %v44, %v83
  %v116 = vadd.f32 %v45, %v83
  %v117 = vadd.f32 %v46, %v83
  %v118 = vadd.f32 %v47, %v83
  %v119 = vadd.f32 %v48, %v83
  %v120 = vadd.f32 %v49, %v83
  %v121 = vadd.f32 %v50, %v83
  %v122 = vadd.f32 %v51, %v83
  %v123 = vadd.f32 %v52, %v83
  %v124 = vadd.f32 %v53, %v83
  %v125 = vadd.f32 %v54, %v83
  %v126 = vadd.f32 %v55, %v83
  %v127 = vadd.f32 %v56, %v83
  %v128 = vadd.f32 %v57, %v83
  %v129 = vadd.f32 %v58, %v83
  %v130 = vadd.f32 %v59, %v83
  %v131 = vadd.f32 %v60, %v83
  %v132 = vadd.f32 %v61, %v83
  %v133 = vadd.f32 %v62, %v83
  %v134 = vadd.f32 %v63, %v83
  %v135 = vadd.f32 %v64, %v83
  %v136 = vadd.f32 %v65, %v83
  %v137 = vadd.f32 %v66, %v83
  %v138 = vadd.f32 %v67, %v83
  %v139 = vadd.f32 %v68, %v83
  %v140 = vadd.f32 %v69, %v83
  %v141 = vadd.f32 %v70, %v83
  %v142 = vadd.f32 %v71, %v83
  %v143 = vadd.f32 %v72, %v83
  %v144 = vadd.f32 %v73, %v83
  %v145 = vadd.f32 %v74, %v83
  %v146 = vadd.f32 %v75, %v83
  %v147 = vadd.f32 %v76, %v83
  %v148 = vadd.f32 %v77, %v83
  %vm149 = vcmp.gt.f32.partialorder %v85, 0.0
  %vm150 = vcmp.gt.f32.partialorder %v86, 0.0
  %vm151 = vcmp.gt.f32.partialorder %v87, 0.0
  %vm152 = vcmp.gt.f32.partialorder %v88, 0.0
  %vm153 = vcmp.gt.f32.partialorder %v89, 0.0
  %vm154 = vcmp.gt.f32.partialorder %v90, 0.0
  %vm155 = vcmp.gt.f32.partialorder %v91, 0.0
  %vm156 = vcmp.gt.f32.partialorder %v92, 0.0
  %vm157 = vcmp.gt.f32.partialorder %v93, 0.0
  %vm158 = vcmp.gt.f32.partialorder %v94, 0.0
  %vm159 = vcmp.gt.f32.partialorder %v95, 0.0
  %vm160 = vcmp.gt.f32.partialorder %v96, 0.0
  %vm161 = vcmp.gt.f32.partialorder %v97, 0.0
  %vm162 = vcmp.gt.f32.partialorder %v98, 0.0
  %vm163 = vcmp.gt.f32.partialorder %v99, 0.0
  %vm164 = vcmp.gt.f32.partialorder %v100, 0.0
  %vm165 = vcmp.gt.f32.partialorder %v101, 0.0
  %vm166 = vcmp.gt.f32.partialorder %v102, 0.0
  %vm167 = vcmp.gt.f32.partialorder %v103, 0.0
  %vm168 = vcmp.gt.f32.partialorder %v104, 0.0
  %vm169 = vcmp.gt.f32.partialorder %v105, 0.0
  %vm170 = vcmp.gt.f32.partialorder %v106, 0.0
  %vm171 = vcmp.gt.f32.partialorder %v107, 0.0
  %vm172 = vcmp.gt.f32.partialorder %v108, 0.0
  %vm173 = vcmp.gt.f32.partialorder %v109, 0.0
  %vm174 = vcmp.gt.f32.partialorder %v110, 0.0
  %vm175 = vcmp.gt.f32.partialorder %v111, 0.0
  %vm176 = vcmp.gt.f32.partialorder %v112, 0.0
  %vm177 = vcmp.gt.f32.partialorder %v113, 0.0
  %vm178 = vcmp.gt.f32.partialorder %v114, 0.0
  %vm179 = vcmp.gt.f32.partialorder %v115, 0.0
  %vm180 = vcmp.gt.f32.partialorder %v116, 0.0
  %vm181 = vcmp.gt.f32.partialorder %v117, 0.0
  %vm182 = vcmp.gt.f32.partialorder %v118, 0.0
  %vm183 = vcmp.gt.f32.partialorder %v119, 0.0
  %vm184 = vcmp.gt.f32.partialorder %v120, 0.0
  %vm185 = vcmp.gt.f32.partialorder %v121, 0.0
  %vm186 = vcmp.gt.f32.partialorder %v122, 0.0
  %vm187 = vcmp.gt.f32.partialorder %v123, 0.0
  %vm188 = vcmp.gt.f32.partialorder %v124, 0.0
  %vm189 = vcmp.gt.f32.partialorder %v125, 0.0
  %vm190 = vcmp.gt.f32.partialorder %v126, 0.0
  %vm191 = vcmp.gt.f32.partialorder %v127, 0.0
  %vm192 = vcmp.gt.f32.partialorder %v128, 0.0
  %vm193 = vcmp.gt.f32.partialorder %v129, 0.0
  %vm194 = vcmp.gt.f32.partialorder %v130, 0.0
  %vm195 = vcmp.gt.f32.partialorder %v131, 0.0
  %vm196 = vcmp.gt.f32.partialorder %v132, 0.0
  %vm197 = vcmp.gt.f32.partialorder %v133, 0.0
  %vm198 = vcmp.gt.f32.partialorder %v134, 0.0
  %vm199 = vcmp.gt.f32.partialorder %v135, 0.0
  %vm200 = vcmp.gt.f32.partialorder %v136, 0.0
  %vm201 = vcmp.gt.f32.partialorder %v137, 0.0
  %vm202 = vcmp.gt.f32.partialorder %v138, 0.0
  %vm203 = vcmp.gt.f32.partialorder %v139, 0.0
  %vm204 = vcmp.gt.f32.partialorder %v140, 0.0
  %vm205 = vcmp.gt.f32.partialorder %v141, 0.0
  %vm206 = vcmp.gt.f32.partialorder %v142, 0.0
  %vm207 = vcmp.gt.f32.partialorder %v143, 0.0
  %vm208 = vcmp.gt.f32.partialorder %v144, 0.0
  %vm209 = vcmp.gt.f32.partialorder %v145, 0.0
  %vm210 = vcmp.gt.f32.partialorder %v146, 0.0
  %vm211 = vcmp.gt.f32.partialorder %v147, 0.0
  %vm212 = vcmp.gt.f32.partialorder %v148, 0.0
  %vm213 = vcmp.lt.f32.partialorder %v85, 0.0
  %vm214 = vcmp.lt.f32.partialorder %v86, 0.0
  %vm215 = vcmp.lt.f32.partialorder %v87, 0.0
  %vm216 = vcmp.lt.f32.partialorder %v88, 0.0
  %vm217 = vcmp.lt.f32.partialorder %v89, 0.0
  %vm218 = vcmp.lt.f32.partialorder %v90, 0.0
  %vm219 = vcmp.lt.f32.partialorder %v91, 0.0
  %vm220 = vcmp.lt.f32.partialorder %v92, 0.0
  %vm221 = vcmp.lt.f32.partialorder %v93, 0.0
  %vm222 = vcmp.lt.f32.partialorder %v94, 0.0
  %vm223 = vcmp.lt.f32.partialorder %v95, 0.0
  %vm224 = vcmp.lt.f32.partialorder %v96, 0.0
  %vm225 = vcmp.lt.f32.partialorder %v97, 0.0
  %vm226 = vcmp.lt.f32.partialorder %v98, 0.0
  %vm227 = vcmp.lt.f32.partialorder %v99, 0.0
  %vm228 = vcmp.lt.f32.partialorder %v100, 0.0
  %vm229 = vcmp.lt.f32.partialorder %v101, 0.0
  %vm230 = vcmp.lt.f32.partialorder %v102, 0.0
  %vm231 = vcmp.lt.f32.partialorder %v103, 0.0
  %vm232 = vcmp.lt.f32.partialorder %v104, 0.0
  %vm233 = vcmp.lt.f32.partialorder %v105, 0.0
  %vm234 = vcmp.lt.f32.partialorder %v106, 0.0
  %vm235 = vcmp.lt.f32.partialorder %v107, 0.0
  %vm236 = vcmp.lt.f32.partialorder %v108, 0.0
  %vm237 = vcmp.lt.f32.partialorder %v109, 0.0
  %vm238 = vcmp.lt.f32.partialorder %v110, 0.0
  %vm239 = vcmp.lt.f32.partialorder %v111, 0.0
  %vm240 = vcmp.lt.f32.partialorder %v112, 0.0
  %vm241 = vcmp.lt.f32.partialorder %v113, 0.0
  %vm242 = vcmp.lt.f32.partialorder %v114, 0.0
  %vm243 = vcmp.lt.f32.partialorder %v115, 0.0
  %vm244 = vcmp.lt.f32.partialorder %v116, 0.0
  %vm245 = vcmp.lt.f32.partialorder %v117, 0.0
  %vm246 = vcmp.lt.f32.partialorder %v118, 0.0
  %vm247 = vcmp.lt.f32.partialorder %v119, 0.0
  %vm248 = vcmp.lt.f32.partialorder %v120, 0.0
  %vm249 = vcmp.lt.f32.partialorder %v121, 0.0
  %vm250 = vcmp.lt.f32.partialorder %v122, 0.0
  %vm251 = vcmp.lt.f32.partialorder %v123, 0.0
  %vm252 = vcmp.lt.f32.partialorder %v124, 0.0
  %vm253 = vcmp.lt.f32.partialorder %v125, 0.0
  %vm254 = vcmp.lt.f32.partialorder %v126, 0.0
  %vm255 = vcmp.lt.f32.partialorder %v127, 0.0
  %vm256 = vcmp.lt.f32.partialorder %v128, 0.0
  %vm257 = vcmp.lt.f32.partialorder %v129, 0.0
  %vm258 = vcmp.lt.f32.partialorder %v130, 0.0
  %vm259 = vcmp.lt.f32.partialorder %v131, 0.0
  %vm260 = vcmp.lt.f32.partialorder %v132, 0.0
  %vm261 = vcmp.lt.f32.partialorder %v133, 0.0
  %vm262 = vcmp.lt.f32.partialorder %v134, 0.0
  %vm263 = vcmp.lt.f32.partialorder %v135, 0.0
  %vm264 = vcmp.lt.f32.partialorder %v136, 0.0
  %vm265 = vcmp.lt.f32.partialorder %v137, 0.0
  %vm266 = vcmp.lt.f32.partialorder %v138, 0.0
  %vm267 = vcmp.lt.f32.partialorder %v139, 0.0
  %vm268 = vcmp.lt.f32.partialorder %v140, 0.0
  %vm269 = vcmp.lt.f32.partialorder %v141, 0.0
  %vm270 = vcmp.lt.f32.partialorder %v142, 0.0
  %vm271 = vcmp.lt.f32.partialorder %v143, 0.0
  %vm272 = vcmp.lt.f32.partialorder %v144, 0.0
  %vm273 = vcmp.lt.f32.partialorder %v145, 0.0
  %vm274 = vcmp.lt.f32.partialorder %v146, 0.0
  %vm275 = vcmp.lt.f32.partialorder %v147, 0.0
  %vm276 = vcmp.lt.f32.partialorder %v148, 0.0
  %v277 = vsel %vm213, -1.0, 0.0
  %v278 = vsel %vm214, -1.0, 0.0
  %v279 = vsel %vm215, -1.0, 0.0
  %v280 = vsel %vm216, -1.0, 0.0
  %v281 = vsel %vm217, -1.0, 0.0
  %v282 = vsel %vm218, -1.0, 0.0
  %v283 = vsel %vm219, -1.0, 0.0
  %v284 = vsel %vm220, -1.0, 0.0
  %v285 = vsel %vm221, -1.0, 0.0
  %v286 = vsel %vm222, -1.0, 0.0
  %v287 = vsel %vm223, -1.0, 0.0
  %v288 = vsel %vm224, -1.0, 0.0
  %v289 = vsel %vm225, -1.0, 0.0
  %v290 = vsel %vm226, -1.0, 0.0
  %v291 = vsel %vm227, -1.0, 0.0
  %v292 = vsel %vm228, -1.0, 0.0
  %v293 = vsel %vm229, -1.0, 0.0
  %v294 = vsel %vm230, -1.0, 0.0
  %v295 = vsel %vm231, -1.0, 0.0
  %v296 = vsel %vm232, -1.0, 0.0
  %v297 = vsel %vm233, -1.0, 0.0
  %v298 = vsel %vm234, -1.0, 0.0
  %v299 = vsel %vm235, -1.0, 0.0
  %v300 = vsel %vm236, -1.0, 0.0
  %v301 = vsel %vm237, -1.0, 0.0
  %v302 = vsel %vm238, -1.0, 0.0
  %v303 = vsel %vm239, -1.0, 0.0
  %v304 = vsel %vm240, -1.0, 0.0
  %v305 = vsel %vm241, -1.0, 0.0
  %v306 = vsel %vm242, -1.0, 0.0
  %v307 = vsel %vm243, -1.0, 0.0
  %v308 = vsel %vm244, -1.0, 0.0
  %v309 = vsel %vm245, -1.0, 0.0
  %v310 = vsel %vm246, -1.0, 0.0
  %v311 = vsel %vm247, -1.0, 0.0
  %v312 = vsel %vm248, -1.0, 0.0
  %v313 = vsel %vm249, -1.0, 0.0
  %v314 = vsel %vm250, -1.0, 0.0
  %v315 = vsel %vm251, -1.0, 0.0
  %v316 = vsel %vm252, -1.0, 0.0
  %v317 = vsel %vm253, -1.0, 0.0
  %v318 = vsel %vm254, -1.0, 0.0
  %v319 = vsel %vm255, -1.0, 0.0
  %v320 = vsel %vm256, -1.0, 0.0
  %v321 = vsel %vm257, -1.0, 0.0
  %v322 = vsel %vm258, -1.0, 0.0
  %v323 = vsel %vm259, -1.0, 0.0
  %v324 = vsel %vm260, -1.0, 0.0
  %v325 = vsel %vm261, -1.0, 0.0
  %v326 = vsel %vm262, -1.0, 0.0
  %v327 = vsel %vm263, -1.0, 0.0
  %v328 = vsel %vm264, -1.0, 0.0
  %v329 = vsel %vm265, -1.0, 0.0
  %v330 = vsel %vm266, -1.0, 0.0
  %v331 = vsel %vm267, -1.0, 0.0
  %v332 = vsel %vm268, -1.0, 0.0
  %v333 = vsel %vm269, -1.0, 0.0
  %v334 = vsel %vm270, -1.0, 0.0
  %v335 = vsel %vm271, -1.0, 0.0
  %v336 = vsel %vm272, -1.0, 0.0
  %v337 = vsel %vm273, -1.0, 0.0
  %v338 = vsel %vm274, -1.0, 0.0
  %v339 = vsel %vm275, -1.0, 0.0
  %v340 = vsel %vm276, -1.0, 0.0
  %v341 = vsel %vm149, 1.0, %v277
  %v342 = vsel %vm150, 1.0, %v278
  %v343 = vsel %vm151, 1.0, %v279
  %v344 = vsel %vm152, 1.0, %v280
  %v345 = vsel %vm153, 1.0, %v281
  %v346 = vsel %vm154, 1.0, %v282
  %v347 = vsel %vm155, 1.0, %v283
  %v348 = vsel %vm156, 1.0, %v284
  %v349 = vsel %vm157, 1.0, %v285
  %v350 = vsel %vm158, 1.0, %v286
  %v351 = vsel %vm159, 1.0, %v287
  %v352 = vsel %vm160, 1.0, %v288
  %v353 = vsel %vm161, 1.0, %v289
  %v354 = vsel %vm162, 1.0, %v290
  %v355 = vsel %vm163, 1.0, %v291
  %v356 = vsel %vm164, 1.0, %v292
  %v357 = vsel %vm165, 1.0, %v293
  %v358 = vsel %vm166, 1.0, %v294
  %v359 = vsel %vm167, 1.0, %v295
  %v360 = vsel %vm168, 1.0, %v296
  %v361 = vsel %vm169, 1.0, %v297
  %v362 = vsel %vm170, 1.0, %v298
  %v363 = vsel %vm171, 1.0, %v299
  %v364 = vsel %vm172, 1.0, %v300
  %v365 = vsel %vm173, 1.0, %v301
  %v366 = vsel %vm174, 1.0, %v302
  %v367 = vsel %vm175, 1.0, %v303
  %v368 = vsel %vm176, 1.0, %v304
  %v369 = vsel %vm177, 1.0, %v305
  %v370 = vsel %vm178, 1.0, %v306
  %v371 = vsel %vm179, 1.0, %v307
  %v372 = vsel %vm180, 1.0, %v308
  %v373 = vsel %vm181, 1.0, %v309
  %v374 = vsel %vm182, 1.0, %v310
  %v375 = vsel %vm183, 1.0, %v311
  %v376 = vsel %vm184, 1.0, %v312
  %v377 = vsel %vm185, 1.0, %v313
  %v378 = vsel %vm186, 1.0, %v314
  %v379 = vsel %vm187, 1.0, %v315
  %v380 = vsel %vm188, 1.0, %v316
  %v381 = vsel %vm189, 1.0, %v317
  %v382 = vsel %vm190, 1.0, %v318
  %v383 = vsel %vm191, 1.0, %v319
  %v384 = vsel %vm192, 1.0, %v320
  %v385 = vsel %vm193, 1.0, %v321
  %v386 = vsel %vm194, 1.0, %v322
  %v387 = vsel %vm195, 1.0, %v323
  %v388 = vsel %vm196, 1.0, %v324
  %v389 = vsel %vm197, 1.0, %v325
  %v390 = vsel %vm198, 1.0, %v326
  %v391 = vsel %vm199, 1.0, %v327
  %v392 = vsel %vm200, 1.0, %v328
  %v393 = vsel %vm201, 1.0, %v329
  %v394 = vsel %vm202, 1.0, %v330
  %v395 = vsel %vm203, 1.0, %v331
  %v396 = vsel %vm204, 1.0, %v332
  %v397 = vsel %vm205, 1.0, %v333
  %v398 = vsel %vm206, 1.0, %v334
  %v399 = vsel %vm207, 1.0, %v335
  %v400 = vsel %vm208, 1.0, %v336
  %v401 = vsel %vm209, 1.0, %v337
  %v402 = vsel %vm210, 1.0, %v338
  %v403 = vsel %vm211, 1.0, %v339
  %v404 = vsel %vm212, 1.0, %v340
  %v405 = vld [vmem:[%s2] sm:$0xff]
  %v406 = vld [vmem:[%s2 + $0x8] sm:$0xff]
  %v407 = vld [vmem:[%s2 + $0x10] sm:$0xff]
  %v408 = vld [vmem:[%s2 + $0x18] sm:$0xff]
  %v409 = vld [vmem:[%s2 + $0x20] sm:$0xff]
  %v410 = vld [vmem:[%s2 + $0x28] sm:$0xff]
  %v411 = vld [vmem:[%s2 + $0x30] sm:$0xff]
  %v412 = vld [vmem:[%s2 + $0x38] sm:$0xff]
  %v413 = vmax.f32 %v405, -1.0
  %v414 = vmax.f32 %v406, -1.0
  %v415 = vmax.f32 %v407, -1.0
  %v416 = vmax.f32 %v408, -1.0
  %v417 = vmax.f32 %v409, -1.0
  %v418 = vmax.f32 %v410, -1.0
  %v419 = vmax.f32 %v411, -1.0
  %v420 = vmax.f32 %v412, -1.0
  %v421 = vmin.f32 %v413, 1.0
  %v422 = vmin.f32 %v414, 1.0
  %v423 = vmin.f32 %v415, 1.0
  %v424 = vmin.f32 %v416, 1.0
  %v425 = vmin.f32 %v417, 1.0
  %v426 = vmin.f32 %v418, 1.0
  %v427 = vmin.f32 %v419, 1.0
  %v428 = vmin.f32 %v420, 1.0
  %vm429 = vcmask 523264
  %v431 = vsel %vm429, %v341, 0
  %v434 = vsel %vm429, %v342, 0
  %v437 = vsel %vm429, %v343, 0
  %v440 = vsel %vm429, %v344, 0
  %v443 = vsel %vm429, %v345, 0
  %v446 = vsel %vm429, %v346, 0
  %v449 = vsel %vm429, %v347, 0
  %v452 = vsel %vm429, %v348, 0
  %v455 = vsel %vm429, %v349, 0
  %v458 = vsel %vm429, %v350, 0
  %v461 = vsel %vm429, %v351, 0
  %v464 = vsel %vm429, %v352, 0
  %v467 = vsel %vm429, %v353, 0
  %v470 = vsel %vm429, %v354, 0
  %v473 = vsel %vm429, %v355, 0
  %v476 = vsel %vm429, %v356, 0
  %v479 = vsel %vm429, %v357, 0
  %v482 = vsel %vm429, %v358, 0
  %v485 = vsel %vm429, %v359, 0
  %v488 = vsel %vm429, %v360, 0
  %v491 = vsel %vm429, %v361, 0
  %v494 = vsel %vm429, %v362, 0
  %v497 = vsel %vm429, %v363, 0
  %v500 = vsel %vm429, %v364, 0
  %v503 = vsel %vm429, %v365, 0
  %v506 = vsel %vm429, %v366, 0
  %v509 = vsel %vm429, %v367, 0
  %v512 = vsel %vm429, %v368, 0
  %v515 = vsel %vm429, %v369, 0
  %v518 = vsel %vm429, %v370, 0
  %v521 = vsel %vm429, %v371, 0
  %v524 = vsel %vm429, %v372, 0
  %v527 = vsel %vm429, %v373, 0
  %v530 = vsel %vm429, %v374, 0
  %v533 = vsel %vm429, %v375, 0
  %v536 = vsel %vm429, %v376, 0
  %v539 = vsel %vm429, %v377, 0
  %v542 = vsel %vm429, %v378, 0
  %v545 = vsel %vm429, %v379, 0
  %v548 = vsel %vm429, %v380, 0
  %v551 = vsel %vm429, %v381, 0
  %v554 = vsel %vm429, %v382, 0
  %v557 = vsel %vm429, %v383, 0
  %v560 = vsel %vm429, %v384, 0
  %v563 = vsel %vm429, %v385, 0
  %v566 = vsel %vm429, %v386, 0
  %v569 = vsel %vm429, %v387, 0
  %v572 = vsel %vm429, %v388, 0
  %v575 = vsel %vm429, %v389, 0
  %v578 = vsel %vm429, %v390, 0
  %v581 = vsel %vm429, %v391, 0
  %v584 = vsel %vm429, %v392, 0
  %v587 = vsel %vm429, %v393, 0
  %v590 = vsel %vm429, %v394, 0
  %v593 = vsel %vm429, %v395, 0
  %v596 = vsel %vm429, %v396, 0
  %v599 = vsel %vm429, %v397, 0
  %v602 = vsel %vm429, %v398, 0
  %v605 = vsel %vm429, %v399, 0
  %v608 = vsel %vm429, %v400, 0
  %v611 = vsel %vm429, %v401, 0
  %v614 = vsel %vm429, %v402, 0
  %v617 = vsel %vm429, %v403, 0
  %v620 = vsel %vm429, %v404, 0
  %622 = vmatprep.subr.mxu0 0.0
  %623 = vmatpush1.msra.mxu0 %v421
  %624 = vmatprep.subr.mxu0 0.0
  %625 = vmatpush1.msra.mxu0 %v422
  %626 = vmatprep.subr.mxu0 0.0
  %627 = vmatpush1.msra.mxu0 %v423
  %628 = vmatprep.subr.mxu0 0.0
  %629 = vmatpush1.msra.mxu0 %v424
  %630 = vmatprep.subr.mxu0 0.0
  %631 = vmatpush1.msra.mxu0 %v425
  %632 = vmatprep.subr.mxu0 0.0
  %633 = vmatpush1.msra.mxu0 %v426
  %634 = vmatprep.subr.mxu0 0.0
  %635 = vmatpush1.msra.mxu0 %v427
  %636 = vmatprep.subr.mxu0 0.0
  %637 = vmatpush1.msra.mxu0 %v428
  %638 = vmatprep.subr.mxu0 0.0
  %639 = vmatpush1.msra.mxu0 0.0
  %640 = vmatprep.subr.mxu0 0.0
  %641 = vmatpush1.msra.mxu0 0.0
  %642 = vmatprep.subr.mxu0 0.0
  %643 = vmatpush1.msra.mxu0 0.0
  %644 = vmatprep.subr.mxu0 0.0
  %645 = vmatpush1.msra.mxu0 0.0
  %646 = vmatprep.subr.mxu0 0.0
  %647 = vmatpush1.msra.mxu0 0.0
  %648 = vmatprep.subr.mxu0 0.0
  %649 = vmatpush1.msra.mxu0 0.0
  %650 = vmatprep.subr.mxu0 0.0
  %651 = vmatpush1.msra.mxu0 0.0
  %652 = vmatprep.subr.mxu0 0.0
  %653 = vmatpush1.msra.mxu0 0.0
  %654 = vmatprep.subr.mxu0 0.0
  %655 = vmatpush1.msra.mxu0 0.0
  %656 = vmatprep.subr.mxu0 0.0
  %657 = vmatpush1.msra.mxu0 0.0
  %658 = vmatprep.subr.mxu0 0.0
  %659 = vmatpush1.msra.mxu0 0.0
  %660 = vmatprep.subr.mxu0 0.0
  %661 = vmatpush1.msra.mxu0 0.0
  %662 = vmatprep.subr.mxu0 0.0
  %663 = vmatpush1.msra.mxu0 0.0
  %664 = vmatprep.subr.mxu0 0.0
  %665 = vmatpush1.msra.mxu0 0.0
  %666 = vmatprep.subr.mxu0 0.0
  %667 = vmatpush1.msra.mxu0 0.0
  %668 = vmatprep.subr.mxu0 0.0
  %669 = vmatpush1.msra.mxu0 0.0
  %670 = vmatprep.subr.mxu0 0.0
  %671 = vmatpush1.msra.mxu0 0.0
  %672 = vmatprep.subr.mxu0 0.0
  %673 = vmatpush1.msra.mxu0 0.0
  %674 = vmatprep.subr.mxu0 0.0
  %675 = vmatpush1.msra.mxu0 0.0
  %676 = vmatprep.subr.mxu0 0.0
  %677 = vmatpush1.msra.mxu0 0.0
  %678 = vmatprep.subr.mxu0 0.0
  %679 = vmatpush1.msra.mxu0 0.0
  %680 = vmatprep.subr.mxu0 0.0
  %681 = vmatpush1.msra.mxu0 0.0
  %682 = vmatprep.subr.mxu0 0.0
  %683 = vmatpush1.msra.mxu0 0.0
  %684 = vmatprep.subr.mxu0 0.0
  %685 = vmatpush1.msra.mxu0 0.0
  %686 = vmatprep.mubr.f32.mxu0 0.0
  %687 = vmatmul.mubr.f32.gmra.mrb[0].mxu0 %v431
  %v688 = vpop.f32.mrb[0].mxu0
  %v689 = vadd.f32 0.0, %v688
  %v690 = vpop.f32.mrb[0].mxu0
  %691 = vmatprep.mubr.f32.mxu0 0.0
  %692 = vmatmul.mubr.f32.gmra.mrb[0].mxu0 %v434
  %v693 = vpop.f32.mrb[0].mxu0
  %v694 = vadd.f32 0.0, %v693
  %v695 = vpop.f32.mrb[0].mxu0
  %696 = vmatprep.mubr.f32.mxu0 0.0
  %697 = vmatmul.mubr.f32.gmra.mrb[0].mxu0 %v437
  %v698 = vpop.f32.mrb[0].mxu0
  %v699 = vadd.f32 0.0, %v698
  %v700 = vpop.f32.mrb[0].mxu0
  %701 = vmatprep.mubr.f32.mxu0 0.0
  %702 = vmatmul.mubr.f32.gmra.mrb[0].mxu0 %v440
  %v703 = vpop.f32.mrb[0].mxu0
  %v704 = vadd.f32 0.0, %v703
  %v705 = vpop.f32.mrb[0].mxu0
  %706 = vmatprep.mubr.f32.mxu0 0.0
  %707 = vmatmul.mubr.f32.gmra.mrb[0].mxu0 %v443
  %v708 = vpop.f32.mrb[0].mxu0
  %v709 = vadd.f32 0.0, %v708
  %v710 = vpop.f32.mrb[0].mxu0
  %711 = vmatprep.mubr.f32.mxu0 0.0
  %712 = vmatmul.mubr.f32.gmra.mrb[0].mxu0 %v446
  %v713 = vpop.f32.mrb[0].mxu0
  %v714 = vadd.f32 0.0, %v713
  %v715 = vpop.f32.mrb[0].mxu0
  %716 = vmatprep.mubr.f32.mxu0 0.0
  %717 = vmatmul.mubr.f32.gmra.mrb[0].mxu0 %v449
  %v718 = vpop.f32.mrb[0].mxu0
  %v719 = vadd.f32 0.0, %v718
  %v720 = vpop.f32.mrb[0].mxu0
  %721 = vmatprep.mubr.f32.mxu0 0.0
  %722 = vmatmul.mubr.f32.gmra.mrb[0].mxu0 %v452
  %v723 = vpop.f32.mrb[0].mxu0
  %v724 = vadd.f32 0.0, %v723
  %v725 = vpop.f32.mrb[0].mxu0
  %726 = vmatprep.mubr.f32.mxu0 0.0
  %727 = vmatmul.mubr.f32.gmra.mrb[0].mxu0 %v455
  %v728 = vpop.f32.mrb[0].mxu0
  %v729 = vadd.f32 0.0, %v728
  %v730 = vpop.f32.mrb[0].mxu0
  %731 = vmatprep.mubr.f32.mxu0 0.0
  %732 = vmatmul.mubr.f32.gmra.mrb[0].mxu0 %v458
  %v733 = vpop.f32.mrb[0].mxu0
  %v734 = vadd.f32 0.0, %v733
  %v735 = vpop.f32.mrb[0].mxu0
  %736 = vmatprep.mubr.f32.mxu0 0.0
  %737 = vmatmul.mubr.f32.gmra.mrb[0].mxu0 %v461
  %v738 = vpop.f32.mrb[0].mxu0
  %v739 = vadd.f32 0.0, %v738
  %v740 = vpop.f32.mrb[0].mxu0
  %741 = vmatprep.mubr.f32.mxu0 0.0
  %742 = vmatmul.mubr.f32.gmra.mrb[0].mxu0 %v464
  %v743 = vpop.f32.mrb[0].mxu0
  %v744 = vadd.f32 0.0, %v743
  %v745 = vpop.f32.mrb[0].mxu0
  %746 = vmatprep.mubr.f32.mxu0 0.0
  %747 = vmatmul.mubr.f32.gmra.mrb[0].mxu0 %v467
  %v748 = vpop.f32.mrb[0].mxu0
  %v749 = vadd.f32 0.0, %v748
  %v750 = vpop.f32.mrb[0].mxu0
  %751 = vmatprep.mubr.f32.mxu0 0.0
  %752 = vmatmul.mubr.f32.gmra.mrb[0].mxu0 %v470
  %v753 = vpop.f32.mrb[0].mxu0
  %v754 = vadd.f32 0.0, %v753
  %v755 = vpop.f32.mrb[0].mxu0
  %756 = vmatprep.mubr.f32.mxu0 0.0
  %757 = vmatmul.mubr.f32.gmra.mrb[0].mxu0 %v473
  %v758 = vpop.f32.mrb[0].mxu0
  %v759 = vadd.f32 0.0, %v758
  %v760 = vpop.f32.mrb[0].mxu0
  %761 = vmatprep.mubr.f32.mxu0 0.0
  %762 = vmatmul.mubr.f32.gmra.mrb[0].mxu0 %v476
  %v763 = vpop.f32.mrb[0].mxu0
  %v764 = vadd.f32 0.0, %v763
  %v765 = vpop.f32.mrb[0].mxu0
  %766 = vmatprep.mubr.f32.mxu0 0.0
  %767 = vmatmul.mubr.f32.gmra.mrb[0].mxu0 %v479
  %v768 = vpop.f32.mrb[0].mxu0
  %v769 = vadd.f32 0.0, %v768
  %v770 = vpop.f32.mrb[0].mxu0
  %771 = vmatprep.mubr.f32.mxu0 0.0
  %772 = vmatmul.mubr.f32.gmra.mrb[0].mxu0 %v482
  %v773 = vpop.f32.mrb[0].mxu0
  %v774 = vadd.f32 0.0, %v773
  %v775 = vpop.f32.mrb[0].mxu0
  %776 = vmatprep.mubr.f32.mxu0 0.0
  %777 = vmatmul.mubr.f32.gmra.mrb[0].mxu0 %v485
  %v778 = vpop.f32.mrb[0].mxu0
  %v779 = vadd.f32 0.0, %v778
  %v780 = vpop.f32.mrb[0].mxu0
  %781 = vmatprep.mubr.f32.mxu0 0.0
  %782 = vmatmul.mubr.f32.gmra.mrb[0].mxu0 %v488
  %v783 = vpop.f32.mrb[0].mxu0
  %v784 = vadd.f32 0.0, %v783
  %v785 = vpop.f32.mrb[0].mxu0
  %786 = vmatprep.mubr.f32.mxu0 0.0
  %787 = vmatmul.mubr.f32.gmra.mrb[0].mxu0 %v491
  %v788 = vpop.f32.mrb[0].mxu0
  %v789 = vadd.f32 0.0, %v788
  %v790 = vpop.f32.mrb[0].mxu0
  %791 = vmatprep.mubr.f32.mxu0 0.0
  %792 = vmatmul.mubr.f32.gmra.mrb[0].mxu0 %v494
  %v793 = vpop.f32.mrb[0].mxu0
  %v794 = vadd.f32 0.0, %v793
  %v795 = vpop.f32.mrb[0].mxu0
  %796 = vmatprep.mubr.f32.mxu0 0.0
  %797 = vmatmul.mubr.f32.gmra.mrb[0].mxu0 %v497
  %v798 = vpop.f32.mrb[0].mxu0
  %v799 = vadd.f32 0.0, %v798
  %v800 = vpop.f32.mrb[0].mxu0
  %801 = vmatprep.mubr.f32.mxu0 0.0
  %802 = vmatmul.mubr.f32.gmra.mrb[0].mxu0 %v500
  %v803 = vpop.f32.mrb[0].mxu0
  %v804 = vadd.f32 0.0, %v803
  %v805 = vpop.f32.mrb[0].mxu0
  %806 = vmatprep.mubr.f32.mxu0 0.0
  %807 = vmatmul.mubr.f32.gmra.mrb[0].mxu0 %v503
  %v808 = vpop.f32.mrb[0].mxu0
  %v809 = vadd.f32 0.0, %v808
  %v810 = vpop.f32.mrb[0].mxu0
  %811 = vmatprep.mubr.f32.mxu0 0.0
  %812 = vmatmul.mubr.f32.gmra.mrb[0].mxu0 %v506
  %v813 = vpop.f32.mrb[0].mxu0
  %v814 = vadd.f32 0.0, %v813
  %v815 = vpop.f32.mrb[0].mxu0
  %816 = vmatprep.mubr.f32.mxu0 0.0
  %817 = vmatmul.mubr.f32.gmra.mrb[0].mxu0 %v509
  %v818 = vpop.f32.mrb[0].mxu0
  %v819 = vadd.f32 0.0, %v818
  %v820 = vpop.f32.mrb[0].mxu0
  %821 = vmatprep.mubr.f32.mxu0 0.0
  %822 = vmatmul.mubr.f32.gmra.mrb[0].mxu0 %v512
  %v823 = vpop.f32.mrb[0].mxu0
  %v824 = vadd.f32 0.0, %v823
  %v825 = vpop.f32.mrb[0].mxu0
  %826 = vmatprep.mubr.f32.mxu0 0.0
  %827 = vmatmul.mubr.f32.gmra.mrb[0].mxu0 %v515
  %v828 = vpop.f32.mrb[0].mxu0
  %v829 = vadd.f32 0.0, %v828
  %v830 = vpop.f32.mrb[0].mxu0
  %831 = vmatprep.mubr.f32.mxu0 0.0
  %832 = vmatmul.mubr.f32.gmra.mrb[0].mxu0 %v518
  %v833 = vpop.f32.mrb[0].mxu0
  %v834 = vadd.f32 0.0, %v833
  %v835 = vpop.f32.mrb[0].mxu0
  %836 = vmatprep.mubr.f32.mxu0 0.0
  %837 = vmatmul.mubr.f32.gmra.mrb[0].mxu0 %v521
  %v838 = vpop.f32.mrb[0].mxu0
  %v839 = vadd.f32 0.0, %v838
  %v840 = vpop.f32.mrb[0].mxu0
  %841 = vmatprep.mubr.f32.mxu0 0.0
  %842 = vmatmul.mubr.f32.gmra.mrb[0].mxu0 %v524
  %v843 = vpop.f32.mrb[0].mxu0
  %v844 = vadd.f32 0.0, %v843
  %v845 = vpop.f32.mrb[0].mxu0
  %846 = vmatprep.mubr.f32.mxu0 0.0
  %847 = vmatmul.mubr.f32.gmra.mrb[0].mxu0 %v527
  %v848 = vpop.f32.mrb[0].mxu0
  %v849 = vadd.f32 0.0, %v848
  %v850 = vpop.f32.mrb[0].mxu0
  %851 = vmatprep.mubr.f32.mxu0 0.0
  %852 = vmatmul.mubr.f32.gmra.mrb[0].mxu0 %v530
  %v853 = vpop.f32.mrb[0].mxu0
  %v854 = vadd.f32 0.0, %v853
  %v855 = vpop.f32.mrb[0].mxu0
  %856 = vmatprep.mubr.f32.mxu0 0.0
  %857 = vmatmul.mubr.f32.gmra.mrb[0].mxu0 %v533
  %v858 = vpop.f32.mrb[0].mxu0
  %v859 = vadd.f32 0.0, %v858
  %v860 = vpop.f32.mrb[0].mxu0
  %861 = vmatprep.mubr.f32.mxu0 0.0
  %862 = vmatmul.mubr.f32.gmra.mrb[0].mxu0 %v536
  %v863 = vpop.f32.mrb[0].mxu0
  %v864 = vadd.f32 0.0, %v863
  %v865 = vpop.f32.mrb[0].mxu0
  %866 = vmatprep.mubr.f32.mxu0 0.0
  %867 = vmatmul.mubr.f32.gmra.mrb[0].mxu0 %v539
  %v868 = vpop.f32.mrb[0].mxu0
  %v869 = vadd.f32 0.0, %v868
  %v870 = vpop.f32.mrb[0].mxu0
  %871 = vmatprep.mubr.f32.mxu0 0.0
  %872 = vmatmul.mubr.f32.gmra.mrb[0].mxu0 %v542
  %v873 = vpop.f32.mrb[0].mxu0
  %v874 = vadd.f32 0.0, %v873
  %v875 = vpop.f32.mrb[0].mxu0
  %876 = vmatprep.mubr.f32.mxu0 0.0
  %877 = vmatmul.mubr.f32.gmra.mrb[0].mxu0 %v545
  %v878 = vpop.f32.mrb[0].mxu0
  %v879 = vadd.f32 0.0, %v878
  %v880 = vpop.f32.mrb[0].mxu0
  %881 = vmatprep.mubr.f32.mxu0 0.0
  %882 = vmatmul.mubr.f32.gmra.mrb[0].mxu0 %v548
  %v883 = vpop.f32.mrb[0].mxu0
  %v884 = vadd.f32 0.0, %v883
  %v885 = vpop.f32.mrb[0].mxu0
  %886 = vmatprep.mubr.f32.mxu0 0.0
  %887 = vmatmul.mubr.f32.gmra.mrb[0].mxu0 %v551
  %v888 = vpop.f32.mrb[0].mxu0
  %v889 = vadd.f32 0.0, %v888
  %v890 = vpop.f32.mrb[0].mxu0
  %891 = vmatprep.mubr.f32.mxu0 0.0
  %892 = vmatmul.mubr.f32.gmra.mrb[0].mxu0 %v554
  %v893 = vpop.f32.mrb[0].mxu0
  %v894 = vadd.f32 0.0, %v893
  %v895 = vpop.f32.mrb[0].mxu0
  %896 = vmatprep.mubr.f32.mxu0 0.0
  %897 = vmatmul.mubr.f32.gmra.mrb[0].mxu0 %v557
  %v898 = vpop.f32.mrb[0].mxu0
  %v899 = vadd.f32 0.0, %v898
  %v900 = vpop.f32.mrb[0].mxu0
  %901 = vmatprep.mubr.f32.mxu0 0.0
  %902 = vmatmul.mubr.f32.gmra.mrb[0].mxu0 %v560
  %v903 = vpop.f32.mrb[0].mxu0
  %v904 = vadd.f32 0.0, %v903
  %v905 = vpop.f32.mrb[0].mxu0
  %906 = vmatprep.mubr.f32.mxu0 0.0
  %907 = vmatmul.mubr.f32.gmra.mrb[0].mxu0 %v563
  %v908 = vpop.f32.mrb[0].mxu0
  %v909 = vadd.f32 0.0, %v908
  %v910 = vpop.f32.mrb[0].mxu0
  %911 = vmatprep.mubr.f32.mxu0 0.0
  %912 = vmatmul.mubr.f32.gmra.mrb[0].mxu0 %v566
  %v913 = vpop.f32.mrb[0].mxu0
  %v914 = vadd.f32 0.0, %v913
  %v915 = vpop.f32.mrb[0].mxu0
  %916 = vmatprep.mubr.f32.mxu0 0.0
  %917 = vmatmul.mubr.f32.gmra.mrb[0].mxu0 %v569
  %v918 = vpop.f32.mrb[0].mxu0
  %v919 = vadd.f32 0.0, %v918
  %v920 = vpop.f32.mrb[0].mxu0
  %921 = vmatprep.mubr.f32.mxu0 0.0
  %922 = vmatmul.mubr.f32.gmra.mrb[0].mxu0 %v572
  %v923 = vpop.f32.mrb[0].mxu0
  %v924 = vadd.f32 0.0, %v923
  %v925 = vpop.f32.mrb[0].mxu0
  %926 = vmatprep.mubr.f32.mxu0 0.0
  %927 = vmatmul.mubr.f32.gmra.mrb[0].mxu0 %v575
  %v928 = vpop.f32.mrb[0].mxu0
  %v929 = vadd.f32 0.0, %v928
  %v930 = vpop.f32.mrb[0].mxu0
  %931 = vmatprep.mubr.f32.mxu0 0.0
  %932 = vmatmul.mubr.f32.gmra.mrb[0].mxu0 %v578
  %v933 = vpop.f32.mrb[0].mxu0
  %v934 = vadd.f32 0.0, %v933
  %v935 = vpop.f32.mrb[0].mxu0
  %936 = vmatprep.mubr.f32.mxu0 0.0
  %937 = vmatmul.mubr.f32.gmra.mrb[0].mxu0 %v581
  %v938 = vpop.f32.mrb[0].mxu0
  %v939 = vadd.f32 0.0, %v938
  %v940 = vpop.f32.mrb[0].mxu0
  %941 = vmatprep.mubr.f32.mxu0 0.0
  %942 = vmatmul.mubr.f32.gmra.mrb[0].mxu0 %v584
  %v943 = vpop.f32.mrb[0].mxu0
  %v944 = vadd.f32 0.0, %v943
  %v945 = vpop.f32.mrb[0].mxu0
  %946 = vmatprep.mubr.f32.mxu0 0.0
  %947 = vmatmul.mubr.f32.gmra.mrb[0].mxu0 %v587
  %v948 = vpop.f32.mrb[0].mxu0
  %v949 = vadd.f32 0.0, %v948
  %v950 = vpop.f32.mrb[0].mxu0
  %951 = vmatprep.mubr.f32.mxu0 0.0
  %952 = vmatmul.mubr.f32.gmra.mrb[0].mxu0 %v590
  %v953 = vpop.f32.mrb[0].mxu0
  %v954 = vadd.f32 0.0, %v953
  %v955 = vpop.f32.mrb[0].mxu0
  %956 = vmatprep.mubr.f32.mxu0 0.0
  %957 = vmatmul.mubr.f32.gmra.mrb[0].mxu0 %v593
  %v958 = vpop.f32.mrb[0].mxu0
  %v959 = vadd.f32 0.0, %v958
  %v960 = vpop.f32.mrb[0].mxu0
  %961 = vmatprep.mubr.f32.mxu0 0.0
  %962 = vmatmul.mubr.f32.gmra.mrb[0].mxu0 %v596
  %v963 = vpop.f32.mrb[0].mxu0
  %v964 = vadd.f32 0.0, %v963
  %v965 = vpop.f32.mrb[0].mxu0
  %966 = vmatprep.mubr.f32.mxu0 0.0
  %967 = vmatmul.mubr.f32.gmra.mrb[0].mxu0 %v599
  %v968 = vpop.f32.mrb[0].mxu0
  %v969 = vadd.f32 0.0, %v968
  %v970 = vpop.f32.mrb[0].mxu0
  %971 = vmatprep.mubr.f32.mxu0 0.0
  %972 = vmatmul.mubr.f32.gmra.mrb[0].mxu0 %v602
  %v973 = vpop.f32.mrb[0].mxu0
  %v974 = vadd.f32 0.0, %v973
  %v975 = vpop.f32.mrb[0].mxu0
  %976 = vmatprep.mubr.f32.mxu0 0.0
  %977 = vmatmul.mubr.f32.gmra.mrb[0].mxu0 %v605
  %v978 = vpop.f32.mrb[0].mxu0
  %v979 = vadd.f32 0.0, %v978
  %v980 = vpop.f32.mrb[0].mxu0
  %981 = vmatprep.mubr.f32.mxu0 0.0
  %982 = vmatmul.mubr.f32.gmra.mrb[0].mxu0 %v608
  %v983 = vpop.f32.mrb[0].mxu0
  %v984 = vadd.f32 0.0, %v983
  %v985 = vpop.f32.mrb[0].mxu0
  %986 = vmatprep.mubr.f32.mxu0 0.0
  %987 = vmatmul.mubr.f32.gmra.mrb[0].mxu0 %v611
  %v988 = vpop.f32.mrb[0].mxu0
  %v989 = vadd.f32 0.0, %v988
  %v990 = vpop.f32.mrb[0].mxu0
  %991 = vmatprep.mubr.f32.mxu0 0.0
  %992 = vmatmul.mubr.f32.gmra.mrb[0].mxu0 %v614
  %v993 = vpop.f32.mrb[0].mxu0
  %v994 = vadd.f32 0.0, %v993
  %v995 = vpop.f32.mrb[0].mxu0
  %996 = vmatprep.mubr.f32.mxu0 0.0
  %997 = vmatmul.mubr.f32.gmra.mrb[0].mxu0 %v617
  %v998 = vpop.f32.mrb[0].mxu0
  %v999 = vadd.f32 0.0, %v998
  %v1000 = vpop.f32.mrb[0].mxu0
  %1001 = vmatprep.mubr.f32.mxu0 0.0
  %1002 = vmatmul.mubr.f32.gmra.mrb[0].mxu0 %v620
  %v1003 = vpop.f32.mrb[0].mxu0
  %v1004 = vadd.f32 0.0, %v1003
  %v1005 = vpop.f32.mrb[0].mxu0
  %1006 = vdwg.mxu0
  %1007 = vst.msk [vmem:[%s3] sm:$0xff] %vm429, %v689
  %1008 = vst.msk [vmem:[%s3 + $0x8] sm:$0xff] %vm429, %v694
  %1009 = vst.msk [vmem:[%s3 + $0x10] sm:$0xff] %vm429, %v699
  %1010 = vst.msk [vmem:[%s3 + $0x18] sm:$0xff] %vm429, %v704
  %1011 = vst.msk [vmem:[%s3 + $0x20] sm:$0xff] %vm429, %v709
  %1012 = vst.msk [vmem:[%s3 + $0x28] sm:$0xff] %vm429, %v714
  %1013 = vst.msk [vmem:[%s3 + $0x30] sm:$0xff] %vm429, %v719
  %1014 = vst.msk [vmem:[%s3 + $0x38] sm:$0xff] %vm429, %v724
  %1015 = vst.msk [vmem:[%s3 + $0x40] sm:$0xff] %vm429, %v729
  %1016 = vst.msk [vmem:[%s3 + $0x48] sm:$0xff] %vm429, %v734
  %1017 = vst.msk [vmem:[%s3 + $0x50] sm:$0xff] %vm429, %v739
  %1018 = vst.msk [vmem:[%s3 + $0x58] sm:$0xff] %vm429, %v744
  %1019 = vst.msk [vmem:[%s3 + $0x60] sm:$0xff] %vm429, %v749
  %1020 = vst.msk [vmem:[%s3 + $0x68] sm:$0xff] %vm429, %v754
  %1021 = vst.msk [vmem:[%s3 + $0x70] sm:$0xff] %vm429, %v759
  %1022 = vst.msk [vmem:[%s3 + $0x78] sm:$0xff] %vm429, %v764
  %1023 = vst.msk [vmem:[%s3 + $0x80] sm:$0xff] %vm429, %v769
  %1024 = vst.msk [vmem:[%s3 + $0x88] sm:$0xff] %vm429, %v774
  %1025 = vst.msk [vmem:[%s3 + $0x90] sm:$0xff] %vm429, %v779
  %1026 = vst.msk [vmem:[%s3 + $0x98] sm:$0xff] %vm429, %v784
  %1027 = vst.msk [vmem:[%s3 + $0xa0] sm:$0xff] %vm429, %v789
  %1028 = vst.msk [vmem:[%s3 + $0xa8] sm:$0xff] %vm429, %v794
  %1029 = vst.msk [vmem:[%s3 + $0xb0] sm:$0xff] %vm429, %v799
  %1030 = vst.msk [vmem:[%s3 + $0xb8] sm:$0xff] %vm429, %v804
  %1031 = vst.msk [vmem:[%s3 + $0xc0] sm:$0xff] %vm429, %v809
  %1032 = vst.msk [vmem:[%s3 + $0xc8] sm:$0xff] %vm429, %v814
  %1033 = vst.msk [vmem:[%s3 + $0xd0] sm:$0xff] %vm429, %v819
  %1034 = vst.msk [vmem:[%s3 + $0xd8] sm:$0xff] %vm429, %v824
  %1035 = vst.msk [vmem:[%s3 + $0xe0] sm:$0xff] %vm429, %v829
  %1036 = vst.msk [vmem:[%s3 + $0xe8] sm:$0xff] %vm429, %v834
  %1037 = vst.msk [vmem:[%s3 + $0xf0] sm:$0xff] %vm429, %v839
  %1038 = vst.msk [vmem:[%s3 + $0xf8] sm:$0xff] %vm429, %v844
  %1039 = vst.msk [vmem:[%s3 + $0x100] sm:$0xff] %vm429, %v849
  %1040 = vst.msk [vmem:[%s3 + $0x108] sm:$0xff] %vm429, %v854
  %1041 = vst.msk [vmem:[%s3 + $0x110] sm:$0xff] %vm429, %v859
  %1042 = vst.msk [vmem:[%s3 + $0x118] sm:$0xff] %vm429, %v864
  %1043 = vst.msk [vmem:[%s3 + $0x120] sm:$0xff] %vm429, %v869
  %1044 = vst.msk [vmem:[%s3 + $0x128] sm:$0xff] %vm429, %v874
  %1045 = vst.msk [vmem:[%s3 + $0x130] sm:$0xff] %vm429, %v879
  %1046 = vst.msk [vmem:[%s3 + $0x138] sm:$0xff] %vm429, %v884
  %1047 = vst.msk [vmem:[%s3 + $0x140] sm:$0xff] %vm429, %v889
  %1048 = vst.msk [vmem:[%s3 + $0x148] sm:$0xff] %vm429, %v894
  %1049 = vst.msk [vmem:[%s3 + $0x150] sm:$0xff] %vm429, %v899
  %1050 = vst.msk [vmem:[%s3 + $0x158] sm:$0xff] %vm429, %v904
  %1051 = vst.msk [vmem:[%s3 + $0x160] sm:$0xff] %vm429, %v909
  %1052 = vst.msk [vmem:[%s3 + $0x168] sm:$0xff] %vm429, %v914
  %1053 = vst.msk [vmem:[%s3 + $0x170] sm:$0xff] %vm429, %v919
  %1054 = vst.msk [vmem:[%s3 + $0x178] sm:$0xff] %vm429, %v924
  %1055 = vst.msk [vmem:[%s3 + $0x180] sm:$0xff] %vm429, %v929
  %1056 = vst.msk [vmem:[%s3 + $0x188] sm:$0xff] %vm429, %v934
  %1057 = vst.msk [vmem:[%s3 + $0x190] sm:$0xff] %vm429, %v939
  %1058 = vst.msk [vmem:[%s3 + $0x198] sm:$0xff] %vm429, %v944
  %1059 = vst.msk [vmem:[%s3 + $0x1a0] sm:$0xff] %vm429, %v949
  %1060 = vst.msk [vmem:[%s3 + $0x1a8] sm:$0xff] %vm429, %v954
  %1061 = vst.msk [vmem:[%s3 + $0x1b0] sm:$0xff] %vm429, %v959
  %1062 = vst.msk [vmem:[%s3 + $0x1b8] sm:$0xff] %vm429, %v964
  %1063 = vst.msk [vmem:[%s3 + $0x1c0] sm:$0xff] %vm429, %v969
  %1064 = vst.msk [vmem:[%s3 + $0x1c8] sm:$0xff] %vm429, %v974
  %1065 = vst.msk [vmem:[%s3 + $0x1d0] sm:$0xff] %vm429, %v979
  %1066 = vst.msk [vmem:[%s3 + $0x1d8] sm:$0xff] %vm429, %v984
  %1067 = vst.msk [vmem:[%s3 + $0x1e0] sm:$0xff] %vm429, %v989
  %1068 = vst.msk [vmem:[%s3 + $0x1e8] sm:$0xff] %vm429, %v994
  %1069 = vst.msk [vmem:[%s3 + $0x1f0] sm:$0xff] %vm429, %v999
  %1070 = vst.msk [vmem:[%s3 + $0x1f8] sm:$0xff] %vm429, %v1004
  // Predicated region
  $region14: #{basic_block_forward.14} parent=0 // pred_check
    _
  $region15: #{basic_block_forward.14} parent=0 // pred_check_branch
    %1072 = sbr.rel (0) target = $region17
  $region16: #{basic_block_forward.14} parent=0 // pred_region
    _
  $region17: #{basic_block_forward.14} parent=0 // pred_fallthru
    _
  // Predicated region
  $region18: #{basic_block_forward.14} parent=0 // pred_check
    _
  $region19: #{basic_block_forward.14} parent=0 // pred_check_branch
    %1074 = sbr.rel (0) target = $region21
  $region20: #{basic_block_forward.14} parent=0 // pred_region
    _
  $region21: #{basic_block_forward.14} parent=0 // pred_fallthru
    _

</llo_original>
